<compile_context>
chip_gen: v6e
topology: v6e:2x2x1
jax: 0.10.0
libtpu: 0.0.40
codegen_flags: <defaults>
</compile_context>

<pallas_src>
import functools

import numpy as np

import jax
import jax.numpy as jnp
from jax.experimental import pallas as pl
from jax.experimental.pallas import tpu as pltpu

# ----------------------- model hyper-parameters (args) -----------------------
VOCAB = 64          # len(word_dict)
NEMBED_WORD = 32    # args.nembed_word
NEMBED_CTX = 16     # args.nembed_ctx
NHID_CTX = 32       # args.nhid_ctx
NHID_LANG = 32      # args.nhid_lang   (reader GRU hidden = 2 * NHID_LANG)
NHID_ATTN = 32      # args.nhid_attn
NHID_SEL = 32       # args.nhid_sel
N_ITEMS = 8         # len(item_dict)
CTX_VOCAB = 16      # len(context_dict)
INPUT_LENGTH = 3    # domain.input_length()   (ctx has 2*INPUT_LENGTH rows)
SEL_LENGTH = 6      # domain.selection_length()
INIT_RANGE = 0.1    # args.init_range

SEQ = 8
BSZ = 2


# ----------------------------- fused Pallas kernel ---------------------------
def _build_fused_call(T, B):
    """Builds a single pallas_call computing the whole forward for (T, B)."""
    TB = T * B
    HR = 2 * NHID_LANG      # reader hidden
    L = NHID_LANG
    A = NHID_ATTN
    I = N_ITEMS

    def kernel(cnt_ref, val_ref, emb_ref,
               ctxw_ref, ctxb_ref,
               rww_ref, rwc_ref, rwh_ref, rbi_ref, rbh_ref,
               decw_ref, decb_ref, wout_ref,
               sfwm_ref, sfww_ref, sfwh_ref, sfbi_ref, sfbh_ref,
               sbwm_ref, sbww_ref, sbwh_ref, sbbi_ref, sbbh_ref,
               aw1f_ref, aw1b_ref, ab1_ref, aw2_ref, ab2_ref,
               sewf_ref, sewb_ref, sewc_ref, seb_ref,
               sdw_ref, sdb_ref,
               out_ref, sel_ref,
               gi_scr, gf_scr, gb_scr, mu_scr, hf_scr, hb_scr, sc_scr,
               logit_scr):
        f32 = jnp.float32

        def dot(a, b):
            return jnp.dot(a, b, preferred_element_type=f32)

        def gru_update(gi, gh, h, H):
            # PyTorch GRU gate order [r, z, n]; h' = (1-z)*n + z*h
            r = jax.nn.sigmoid(gi[:, :H] + gh[:, :H])
            z = jax.nn.sigmoid(gi[:, H:2 * H] + gh[:, H:2 * H])
            n = jnp.tanh(gi[:, 2 * H:] + r * gh[:, 2 * H:])
            return (1.0 - z) * n + z * h

        # ---- MlpContextEncoder core: Sequential(Tanh, Linear)  (tanh BEFORE
        #      the linear, matching the reference MlpContextEncoder).
        ctx_h = dot(jnp.tanh(cnt_ref[...] * val_ref[...]), ctxw_ref[...]) \
            + ctxb_ref[...]                                   # (B, C)

        emb = emb_ref[...]                                    # (T*B, W)

        # ---- reader GRU (hidden 2*nhid_lang), input = [word_emb | ctx_h].
        # Input projection hoisted: word part batched over all timesteps,
        # ctx part computed once (ctx is constant over time -> no broadcast
        # tensor is ever materialized).
        gi_scr[...] = dot(emb, rww_ref[...])                  # (T*B, 3*HR)
        gi_ctx = dot(ctx_h, rwc_ref[...]) + rbi_ref[...]      # (B, 3*HR)
        whh = rwh_ref[...]
        bhh = rbh_ref[...]
        h = jnp.zeros((B, HR), f32)
        for t in range(T):
            gi = gi_scr[t * B:(t + 1) * B, :] + gi_ctx
            gh = dot(h, whh) + bhh
            h = gru_update(gi, gh, h, HR)
            mu_scr[t * B:(t + 1) * B, :] = h[:, :L]           # mu = first half
        mu = mu_scr[...]                                      # (T*B, L)
        # TODO(synk): training-mode variational sampling (mu + std*randn) and
        # kl_div are skipped -- eval-mode forward (kl_div is None).

        # ---- decoder Linear + tied word projection (no bias), out = lm logits
        decoded = dot(mu, decw_ref[...]) + decb_ref[...]      # (T*B, W)
        out_ref[...] = dot(decoded, wout_ref[...])            # (T*B, VOCAB)

        # ---- bidirectional selection GRU, input = [mu | word_emb].
        # Both directions in the same unrolled loop (backward uses reversed
        # static indexing), input projections hoisted out of the recurrence.
        gf_scr[...] = dot(mu, sfwm_ref[...]) + dot(emb, sfww_ref[...]) + sfbi_ref[...]
        gb_scr[...] = dot(mu, sbwm_ref[...]) + dot(emb, sbww_ref[...]) + sbbi_ref[...]
        wf, bf = sfwh_ref[...], sfbh_ref[...]
        wb, bb = sbwh_ref[...], sbbh_ref[...]
        h_f = jnp.zeros((B, A), f32)
        h_b = jnp.zeros((B, A), f32)
        for s in range(T):
            tf, tb = s, T - 1 - s
            h_f = gru_update(gf_scr[tf * B:(tf + 1) * B, :],
                             dot(h_f, wf) + bf, h_f, A)
            hf_scr[tf * B:(tf + 1) * B, :] = h_f
            h_b = gru_update(gb_scr[tb * B:(tb + 1) * B, :],
                             dot(h_b, wb) + bb, h_b, A)
            hb_scr[tb * B:(tb + 1) * B, :] = h_b

        # ---- attention MLP (Linear+Tanh+Linear), softmax over time, pooling.
        # attn_w1 / the pooled vector are kept split into fwd/bwd halves so no
        # lane-concatenation is ever needed.
        hf_all = hf_scr[...]                                  # (T*B, A)
        hb_all = hb_scr[...]                                  # (T*B, A)
        a1 = jnp.tanh(dot(hf_all, aw1f_ref[...]) + dot(hb_all, aw1b_ref[...])
                      + ab1_ref[...])                         # (T*B, A)
        sc_scr[...] = jnp.sum(a1 * aw2_ref[...], axis=1, keepdims=True) \
            + ab2_ref[...]                                    # (T*B, 1)
        for t in range(T):
            logit_scr[:, t:t + 1] = sc_scr[t * B:(t + 1) * B, :]
        logit = logit_scr[...]                                # (B, T)
        m = jnp.max(logit, axis=1, keepdims=True)
        e = jnp.exp(logit - m)
        p = e / jnp.sum(e, axis=1, keepdims=True)             # (B, T)
        attn_f = jnp.zeros((B, A), f32)
        attn_b = jnp.zeros((B, A), f32)
        for t in range(T):
            wt = p[:, t:t + 1]
            attn_f = attn_f + hf_scr[t * B:(t + 1) * B, :] * wt
            attn_b = attn_b + hb_scr[t * B:(t + 1) * B, :] * wt

        # ---- selection encoder (Linear+Tanh) + stacked per-slot decoders
        sel_h = jnp.tanh(dot(attn_f, sewf_ref[...]) + dot(attn_b, sewb_ref[...])
                         + dot(ctx_h, sewc_ref[...]) + seb_ref[...])  # (B, S)
        dec_all = dot(sel_h, sdw_ref[...]) + sdb_ref[...]     # (B, SEL_LENGTH*I)
        for i in range(SEL_LENGTH):
            sel_ref[i * B:(i + 1) * B, :] = dec_all[:, i * I:(i + 1) * I]

    scratch = [
        pltpu.VMEM((TB, 3 * HR), jnp.float32),    # gi_scr  (reader input proj)
        pltpu.VMEM((TB, 3 * A), jnp.float32),     # gf_scr  (sel fwd input proj)
        pltpu.VMEM((TB, 3 * A), jnp.float32),     # gb_scr  (sel bwd input proj)
        pltpu.VMEM((TB, L), jnp.float32),         # mu_scr
        pltpu.VMEM((TB, A), jnp.float32),         # hf_scr
        pltpu.VMEM((TB, A), jnp.float32),         # hb_scr
        pltpu.VMEM((TB, 1), jnp.float32),         # sc_scr  (attn scores)
        pltpu.VMEM((B, T), jnp.float32),          # logit_scr
    ]
    out_shapes = (jax.ShapeDtypeStruct((TB, VOCAB), jnp.float32),
                  jax.ShapeDtypeStruct((SEL_LENGTH * B, N_ITEMS), jnp.float32))
    return pl.pallas_call(kernel, out_shape=out_shapes, scratch_shapes=scratch)


# ------------------------------ parameters -----------------------------------
def _uniform(key, shape, a=INIT_RANGE):
    return jax.random.uniform(key, shape, jnp.float32, -a, a)


def init_params(key):
    """Raw parameters in PyTorch layout (Linear: (out,in); GRU: (3H, in))."""
    keys = iter(jax.random.split(key, 32))
    H_r = 2 * NHID_LANG
    reader_in = NHID_CTX + NEMBED_WORD
    sel_in = NHID_LANG + NEMBED_WORD
    p = {}
    p["word_enc"] = _uniform(next(keys), (VOCAB, NEMBED_WORD))
    p["cnt_enc"] = _uniform(next(keys), (CTX_VOCAB, NEMBED_CTX))
    p["val_enc"] = _uniform(next(keys), (CTX_VOCAB, NEMBED_CTX))
    p["ctx_w"] = _uniform(next(keys), (NHID_CTX, INPUT_LENGTH * NEMBED_CTX))
    p["ctx_b"] = _uniform(next(keys), (NHID_CTX,))
    # reader GRU (hidden = 2*nhid_lang), input order [word_emb | ctx]
    p["reader_w_ih"] = _uniform(next(keys), (3 * H_r, reader_in))
    p["reader_w_hh"] = _uniform(next(keys), (3 * H_r, H_r))
    p["reader_b_ih"] = _uniform(next(keys), (3 * H_r,))
    p["reader_b_hh"] = _uniform(next(keys), (3 * H_r,))
    # decoder Linear(nhid_lang, nembed_word)
    p["dec_w"] = _uniform(next(keys), (NEMBED_WORD, NHID_LANG))
    p["dec_b"] = _uniform(next(keys), (NEMBED_WORD,))
    # bidirectional sel_rnn (hidden = nhid_attn), input order [mu | word_emb]
    for d in ("f", "b"):
        p[f"sel_w_ih_{d}"] = _uniform(next(keys), (3 * NHID_ATTN, sel_in))
        p[f"sel_w_hh_{d}"] = _uniform(next(keys), (3 * NHID_ATTN, NHID_ATTN))
        p[f"sel_b_ih_{d}"] = _uniform(next(keys), (3 * NHID_ATTN,))
        p[f"sel_b_hh_{d}"] = _uniform(next(keys), (3 * NHID_ATTN,))
    # attn MLP: Linear(2A, A) + Tanh + Linear(A, 1)
    p["attn_w1"] = _uniform(next(keys), (NHID_ATTN, 2 * NHID_ATTN))
    p["attn_b1"] = _uniform(next(keys), (NHID_ATTN,))
    p["attn_w2"] = _uniform(next(keys), (1, NHID_ATTN))
    p["attn_b2"] = _uniform(next(keys), (1,))
    # sel_encoder: Linear(2A + nhid_ctx, nhid_sel) + Tanh
    p["sel_enc_w"] = _uniform(next(keys), (NHID_SEL, 2 * NHID_ATTN + NHID_CTX))
    p["sel_enc_b"] = _uniform(next(keys), (NHID_SEL,))
    # sel_decoders stacked: SEL_LENGTH x Linear(nhid_sel, n_items)
    p["sel_dec_w"] = _uniform(next(keys), (SEL_LENGTH * N_ITEMS, NHID_SEL))
    p["sel_dec_b"] = _uniform(next(keys), (SEL_LENGTH * N_ITEMS,))
    return p


def prepare_params(raw):
    """One-time weight preparation: transpose / gate-concat / input-split so the
    per-call path emits zero weight transposes, slices or reshapes."""
    W, L, A, C = NEMBED_WORD, NHID_LANG, NHID_ATTN, NHID_CTX
    p = {}
    p["word_enc"] = raw["word_enc"]
    p["cnt_enc"] = raw["cnt_enc"]
    p["val_enc"] = raw["val_enc"]
    p["ctx_w_t"] = raw["ctx_w"].T                          # (K*E, C)
    p["ctx_b"] = raw["ctx_b"].reshape(1, -1)
    wih = raw["reader_w_ih"]                               # (3*2L, W + C)
    p["r_wih_word_t"] = wih[:, :W].T                       # (W, 6L)
    p["r_wih_ctx_t"] = wih[:, W:].T                        # (C, 6L)
    p["r_whh_t"] = raw["reader_w_hh"].T                    # (2L, 6L)
    p["r_bih"] = raw["reader_b_ih"].reshape(1, -1)
    p["r_bhh"] = raw["reader_b_hh"].reshape(1, -1)
    p["dec_w_t"] = raw["dec_w"].T                          # (L, W)
    p["dec_b"] = raw["dec_b"].reshape(1, -1)
    p["word_out_t"] = raw["word_enc"].T                    # (W, VOCAB)
    for d, tag in (("f", "sf"), ("b", "sb")):
        wih_s = raw[f"sel_w_ih_{d}"]                       # (3A, L + W)
        p[f"{tag}_wih_mu_t"] = wih_s[:, :L].T              # (L, 3A)
        p[f"{tag}_wih_word_t"] = wih_s[:, L:].T            # (W, 3A)
        p[f"{tag}_whh_t"] = raw[f"sel_w_hh_{d}"].T         # (A, 3A)
        p[f"{tag}_bih"] = raw[f"sel_b_ih_{d}"].reshape(1, -1)
        p[f"{tag}_bhh"] = raw[f"sel_b_hh_{d}"].reshape(1, -1)
    w1 = raw["attn_w1"]                                    # (A, 2A): [fwd|bwd]
    p["attn_w1_f_t"] = w1[:, :A].T
    p["attn_w1_b_t"] = w1[:, A:].T
    p["attn_b1"] = raw["attn_b1"].reshape(1, -1)
    p["attn_w2_row"] = raw["attn_w2"]                      # (1, A)
    p["attn_b2"] = raw["attn_b2"].reshape(1, 1)
    sew = raw["sel_enc_w"]                                 # (S, 2A + C)
    p["sel_enc_wf_t"] = sew[:, :A].T
    p["sel_enc_wb_t"] = sew[:, A:2 * A].T
    p["sel_enc_wc_t"] = sew[:, 2 * A:].T
    p["sel_enc_b"] = raw["sel_enc_b"].reshape(1, -1)
    p["sel_dec_w_t"] = raw["sel_dec_w"].T                  # (S, 6*I)
    p["sel_dec_b"] = raw["sel_dec_b"].reshape(1, -1)
    return jax.tree_util.tree_map(lambda x: jnp.asarray(x, jnp.float32), p)


# ------------------------------- forward --------------------------------------
def forward(prep, inpt, ctx):
    """inpt: (T, B) int32 word ids; ctx: (2*INPUT_LENGTH, B) int32 ctx ids."""
    T, B = inpt.shape
    K = ctx.shape[0] // 2
    # Embedding gathers stay in XLA glue (tiny); everything else is one kernel.
    cnt_idx = jnp.transpose(ctx[0::2], (1, 0))                        # (B, K)
    val_idx = jnp.transpose(ctx[1::2], (1, 0))
    cnt_flat = jnp.take(prep["cnt_enc"], cnt_idx, axis=0).reshape(B, K * NEMBED_CTX)
    val_flat = jnp.take(prep["val_enc"], val_idx, axis=0).reshape(B, K * NEMBED_CTX)
    emb_flat = jnp.take(prep["word_enc"], inpt.reshape(T * B), axis=0)  # (T*B, W)

    call = _build_fused_call(T, B)
    out, sel_out = call(
        cnt_flat, val_flat, emb_flat,
        prep["ctx_w_t"], prep["ctx_b"],
        prep["r_wih_word_t"], prep["r_wih_ctx_t"], prep["r_whh_t"],
        prep["r_bih"], prep["r_bhh"],
        prep["dec_w_t"], prep["dec_b"], prep["word_out_t"],
        prep["sf_wih_mu_t"], prep["sf_wih_word_t"], prep["sf_whh_t"],
        prep["sf_bih"], prep["sf_bhh"],
        prep["sb_wih_mu_t"], prep["sb_wih_word_t"], prep["sb_whh_t"],
        prep["sb_bih"], prep["sb_bhh"],
        prep["attn_w1_f_t"], prep["attn_w1_b_t"], prep["attn_b1"],
        prep["attn_w2_row"], prep["attn_b2"],
        prep["sel_enc_wf_t"], prep["sel_enc_wb_t"], prep["sel_enc_wc_t"],
        prep["sel_enc_b"],
        prep["sel_dec_w_t"], prep["sel_dec_b"],
    )
    # kl_div is None in eval mode (training-only variational branch skipped).
    return out, sel_out, None


# --------------------------- pure-JAX reference --------------------------------
def _ref_gru(x_seq, w_ih, w_hh, b_ih, b_hh):
    H = w_hh.shape[1]

    def step(h, x):
        gi = x @ w_ih.T + b_ih
        gh = h @ w_hh.T + b_hh
        r = jax.nn.sigmoid(gi[:, :H] + gh[:, :H])
        z = jax.nn.sigmoid(gi[:, H:2 * H] + gh[:, H:2 * H])
        n = jnp.tanh(gi[:, 2 * H:] + r * gh[:, 2 * H:])
        h_new = (1.0 - z) * n + z * h
        return h_new, h_new

    h0 = jnp.zeros((x_seq.shape[1], H), jnp.float32)
    _, hs = jax.lax.scan(step, h0, x_seq)
    return hs


def reference_forward(raw, inpt, ctx):
    T, B = inpt.shape
    cnt, val = ctx[0::2], ctx[1::2]
    cnt_e = jnp.take(raw["cnt_enc"], cnt, axis=0)
    val_e = jnp.take(raw["val_enc"], val, axis=0)
    hmul = jnp.tanh(jnp.transpose(cnt_e * val_e, (1, 0, 2)).reshape(B, -1))
    ctx_h = hmul @ raw["ctx_w"].T + raw["ctx_b"]                       # (B, C)

    emb = jnp.take(raw["word_enc"], inpt, axis=0)                      # (T, B, W)
    reader_in = jnp.concatenate(
        [emb, jnp.broadcast_to(ctx_h[None], (T, B, NHID_CTX))], axis=2)
    hr = _ref_gru(reader_in, raw["reader_w_ih"], raw["reader_w_hh"],
                  raw["reader_b_ih"], raw["reader_b_hh"])              # (T,B,2L)
    mu = hr[:, :, :NHID_LANG]
    decoded = mu.reshape(T * B, NHID_LANG) @ raw["dec_w"].T + raw["dec_b"]
    out = decoded @ raw["word_enc"].T

    sel_in = jnp.concatenate([mu, emb], axis=2)
    hf = _ref_gru(sel_in, raw["sel_w_ih_f"], raw["sel_w_hh_f"],
                  raw["sel_b_ih_f"], raw["sel_b_hh_f"])
    hb = _ref_gru(sel_in[::-1], raw["sel_w_ih_b"], raw["sel_w_hh_b"],
                  raw["sel_b_ih_b"], raw["sel_b_hh_b"])[::-1]
    hcat = jnp.concatenate([hf, hb], axis=2)                           # (T,B,2A)
    hbt = jnp.transpose(hcat, (1, 0, 2))                               # (B,T,2A)
    a1 = jnp.tanh(hbt.reshape(B * T, 2 * NHID_ATTN) @ raw["attn_w1"].T
                  + raw["attn_b1"])
    logit = (a1 @ raw["attn_w2"].T + raw["attn_b2"]).reshape(B, T)
    p = jax.nn.softmax(logit, axis=1)
    attn = jnp.sum(hbt * p[:, :, None], axis=1)                        # (B, 2A)
    sel_h = jnp.tanh(jnp.concatenate([attn, ctx_h], axis=1) @ raw["sel_enc_w"].T
                     + raw["sel_enc_b"])
    dec = sel_h @ raw["sel_dec_w"].T + raw["sel_dec_b"]                # (B, 6*I)
    sel_out = jnp.transpose(dec.reshape(B, SEL_LENGTH, N_ITEMS),
                            (1, 0, 2)).reshape(SEL_LENGTH * B, N_ITEMS)
    return out, sel_out


# --------------------------------- main ---------------------------------------
if __name__ == "__main__":
    key = jax.random.PRNGKey(0)
    k_inpt, k_ctx, k_params = jax.random.split(key, 3)
    inpt = jax.random.randint(k_inpt, (SEQ, BSZ), 0, VOCAB, dtype=jnp.int32)
    ctx = jax.random.randint(k_ctx, (2 * INPUT_LENGTH, BSZ), 0, CTX_VOCAB,
                             dtype=jnp.int32)
    raw = init_params(k_params)
    prep = prepare_params(raw)

    fwd = jax.jit(forward)
    out, sel_out, kl = fwd(prep, inpt, ctx)
    jax.block_until_ready((out, sel_out))

    # correctness check against a pure-JAX reference of the PyTorch forward
    ref_out, ref_sel = jax.jit(reference_forward)(raw, inpt, ctx)
    jax.block_until_ready((ref_out, ref_sel))
    np.testing.assert_allclose(np.asarray(out), np.asarray(ref_out),
                               rtol=1e-2, atol=5e-3)
    np.testing.assert_allclose(np.asarray(sel_out), np.asarray(ref_sel),
                               rtol=1e-2, atol=5e-3)

    assert out.shape == (SEQ * BSZ, VOCAB)
    assert sel_out.shape == (SEL_LENGTH * BSZ, N_ITEMS)
    assert kl is None
    print("KERNEL_OK")
</pallas_src>

<mosaic_0001>
module attributes {stable_mosaic.version = 11 : i64} {
  func.func @kernel(%arg0: memref<2x48xf32, #tpu.memory_space<vmem>>, %arg1: memref<2x48xf32, #tpu.memory_space<vmem>>, %arg2: memref<16x32xf32, #tpu.memory_space<vmem>>, %arg3: memref<48x32xf32, #tpu.memory_space<vmem>>, %arg4: memref<1x32xf32, #tpu.memory_space<vmem>>, %arg5: memref<32x192xf32, #tpu.memory_space<vmem>>, %arg6: memref<32x192xf32, #tpu.memory_space<vmem>>, %arg7: memref<64x192xf32, #tpu.memory_space<vmem>>, %arg8: memref<1x192xf32, #tpu.memory_space<vmem>>, %arg9: memref<1x192xf32, #tpu.memory_space<vmem>>, %arg10: memref<32x32xf32, #tpu.memory_space<vmem>>, %arg11: memref<1x32xf32, #tpu.memory_space<vmem>>, %arg12: memref<32x64xf32, #tpu.memory_space<vmem>>, %arg13: memref<32x96xf32, #tpu.memory_space<vmem>>, %arg14: memref<32x96xf32, #tpu.memory_space<vmem>>, %arg15: memref<32x96xf32, #tpu.memory_space<vmem>>, %arg16: memref<1x96xf32, #tpu.memory_space<vmem>>, %arg17: memref<1x96xf32, #tpu.memory_space<vmem>>, %arg18: memref<32x96xf32, #tpu.memory_space<vmem>>, %arg19: memref<32x96xf32, #tpu.memory_space<vmem>>, %arg20: memref<32x96xf32, #tpu.memory_space<vmem>>, %arg21: memref<1x96xf32, #tpu.memory_space<vmem>>, %arg22: memref<1x96xf32, #tpu.memory_space<vmem>>, %arg23: memref<32x32xf32, #tpu.memory_space<vmem>>, %arg24: memref<32x32xf32, #tpu.memory_space<vmem>>, %arg25: memref<1x32xf32, #tpu.memory_space<vmem>>, %arg26: memref<1x32xf32, #tpu.memory_space<vmem>>, %arg27: memref<1x1xf32, #tpu.memory_space<vmem>>, %arg28: memref<32x32xf32, #tpu.memory_space<vmem>>, %arg29: memref<32x32xf32, #tpu.memory_space<vmem>>, %arg30: memref<32x32xf32, #tpu.memory_space<vmem>>, %arg31: memref<1x32xf32, #tpu.memory_space<vmem>>, %arg32: memref<32x48xf32, #tpu.memory_space<vmem>>, %arg33: memref<1x48xf32, #tpu.memory_space<vmem>>, %arg34: memref<16x64xf32, #tpu.memory_space<vmem>>, %arg35: memref<12x8xf32, #tpu.memory_space<vmem>>, %arg36: memref<16x192xf32, #tpu.memory_space<vmem>>, %arg37: memref<16x96xf32, #tpu.memory_space<vmem>>, %arg38: memref<16x96xf32, #tpu.memory_space<vmem>>, %arg39: memref<16x32xf32, #tpu.memory_space<vmem>>, %arg40: memref<16x32xf32, #tpu.memory_space<vmem>>, %arg41: memref<16x32xf32, #tpu.memory_space<vmem>>, %arg42: memref<16x1xf32, #tpu.memory_space<vmem>>, %arg43: memref<2x8xf32, #tpu.memory_space<vmem>>) attributes {dimension_semantics = [], scalar_prefetch = 0 : i64, scratch_operands = 8 : i64, tpu.core_type = #tpu.core_type<tc>} {
    %c0 = arith.constant 0 : index
    %c0_0 = arith.constant 0 : index
    %0 = vector.load %arg0[%c0, %c0_0] : memref<2x48xf32, #tpu.memory_space<vmem>>, vector<2x48xf32>
    %c0_1 = arith.constant 0 : index
    %c0_2 = arith.constant 0 : index
    %1 = vector.load %arg1[%c0_1, %c0_2] : memref<2x48xf32, #tpu.memory_space<vmem>>, vector<2x48xf32>
    %2 = arith.mulf %0, %1 : vector<2x48xf32>
    %3 = math.tanh %2 : vector<2x48xf32>
    %c0_3 = arith.constant 0 : index
    %c0_4 = arith.constant 0 : index
    %4 = vector.load %arg3[%c0_3, %c0_4] : memref<48x32xf32, #tpu.memory_space<vmem>>, vector<48x32xf32>
    %cst = arith.constant dense<0.000000e+00> : vector<2x32xf32>
    %5 = tpu.matmul %3, %4, %cst {dimension_numbers = #tpu.dot_dimension_numbers<[1], [0], [0], [1], [0, 0, 1, 1], [], []>} : vector<2x48xf32>, vector<48x32xf32>, vector<2x32xf32> -> vector<2x32xf32>
    %c0_5 = arith.constant 0 : index
    %c0_6 = arith.constant 0 : index
    %6 = vector.load %arg4[%c0_5, %c0_6] : memref<1x32xf32, #tpu.memory_space<vmem>>, vector<1x32xf32>
    %7 = vector.broadcast %6 : vector<1x32xf32> to vector<2x32xf32>
    %8 = arith.addf %5, %7 : vector<2x32xf32>
    %c0_7 = arith.constant 0 : index
    %c0_8 = arith.constant 0 : index
    %9 = vector.load %arg2[%c0_7, %c0_8] : memref<16x32xf32, #tpu.memory_space<vmem>>, vector<16x32xf32>
    %c0_9 = arith.constant 0 : index
    %c0_10 = arith.constant 0 : index
    %10 = vector.load %arg5[%c0_9, %c0_10] : memref<32x192xf32, #tpu.memory_space<vmem>>, vector<32x192xf32>
    %cst_11 = arith.constant dense<0.000000e+00> : vector<16x192xf32>
    %11 = tpu.matmul %9, %10, %cst_11 {dimension_numbers = #tpu.dot_dimension_numbers<[1], [0], [0], [1], [0, 0, 1, 1], [], []>} : vector<16x32xf32>, vector<32x192xf32>, vector<16x192xf32> -> vector<16x192xf32>
    %c0_12 = arith.constant 0 : index
    %c0_13 = arith.constant 0 : index
    %12 = vector.load %arg36[%c0_12, %c0_13] : memref<16x192xf32, #tpu.memory_space<vmem>>, vector<16x192xf32>
    tpu.vector_store %arg36[%c0_12, %c0_13], %11 {strides = array<i32>} : memref<16x192xf32, #tpu.memory_space<vmem>>, vector<16x192xf32>,
    %c0_14 = arith.constant 0 : index
    %c0_15 = arith.constant 0 : index
    %13 = vector.load %arg6[%c0_14, %c0_15] : memref<32x192xf32, #tpu.memory_space<vmem>>, vector<32x192xf32>
    %cst_16 = arith.constant dense<0.000000e+00> : vector<2x192xf32>
    %14 = tpu.matmul %8, %13, %cst_16 {dimension_numbers = #tpu.dot_dimension_numbers<[1], [0], [0], [1], [0, 0, 1, 1], [], []>} : vector<2x32xf32>, vector<32x192xf32>, vector<2x192xf32> -> vector<2x192xf32>
    %c0_17 = arith.constant 0 : index
    %c0_18 = arith.constant 0 : index
    %15 = vector.load %arg8[%c0_17, %c0_18] : memref<1x192xf32, #tpu.memory_space<vmem>>, vector<1x192xf32>
    %16 = vector.broadcast %15 : vector<1x192xf32> to vector<2x192xf32>
    %17 = arith.addf %14, %16 : vector<2x192xf32>
    %c0_19 = arith.constant 0 : index
    %c0_20 = arith.constant 0 : index
    %18 = vector.load %arg7[%c0_19, %c0_20] : memref<64x192xf32, #tpu.memory_space<vmem>>, vector<64x192xf32>
    %c0_21 = arith.constant 0 : index
    %c0_22 = arith.constant 0 : index
    %19 = vector.load %arg9[%c0_21, %c0_22] : memref<1x192xf32, #tpu.memory_space<vmem>>, vector<1x192xf32>
    %cst_23 = arith.constant 0.000000e+00 : f32
    %20 = vector.broadcast %cst_23 : f32 to vector<2x64xf32>
    %c0_24 = arith.constant 0 : index
    %c0_25 = arith.constant 0 : index
    %21 = vector.load %arg36[%c0_24, %c0_25] : memref<16x192xf32, #tpu.memory_space<vmem>>, vector<2x192xf32>
    %22 = arith.addf %21, %17 : vector<2x192xf32>
    %cst_26 = arith.constant dense<0.000000e+00> : vector<2x192xf32>
    %23 = tpu.matmul %20, %18, %cst_26 {dimension_numbers = #tpu.dot_dimension_numbers<[1], [0], [0], [1], [0, 0, 1, 1], [], []>} : vector<2x64xf32>, vector<64x192xf32>, vector<2x192xf32> -> vector<2x192xf32>
    %24 = vector.broadcast %19 : vector<1x192xf32> to vector<2x192xf32>
    %25 = arith.addf %23, %24 : vector<2x192xf32>
    %26 = vector.extract_strided_slice %22 {offsets = [0, 0], sizes = [2, 64], strides = [1, 1]} : vector<2x192xf32> to vector<2x64xf32>
    %27 = vector.extract_strided_slice %25 {offsets = [0, 0], sizes = [2, 64], strides = [1, 1]} : vector<2x192xf32> to vector<2x64xf32>
    %28 = arith.addf %26, %27 : vector<2x64xf32>
    %29 = arith.negf %28 : vector<2x64xf32>
    %30 = math.exp %29 : vector<2x64xf32>
    %cst_27 = arith.constant 1.000000e+00 : f32
    %31 = vector.broadcast %cst_27 : f32 to vector<2x64xf32>
    %32 = arith.addf %31, %30 : vector<2x64xf32>
    %33 = arith.divf %31, %32 : vector<2x64xf32>
    %34 = vector.extract_strided_slice %22 {offsets = [0, 64], sizes = [2, 64], strides = [1, 1]} : vector<2x192xf32> to vector<2x64xf32>
    %35 = vector.extract_strided_slice %25 {offsets = [0, 64], sizes = [2, 64], strides = [1, 1]} : vector<2x192xf32> to vector<2x64xf32>
    %36 = arith.addf %34, %35 : vector<2x64xf32>
    %37 = arith.negf %36 : vector<2x64xf32>
    %38 = math.exp %37 : vector<2x64xf32>
    %cst_28 = arith.constant 1.000000e+00 : f32
    %39 = vector.broadcast %cst_28 : f32 to vector<2x64xf32>
    %40 = arith.addf %39, %38 : vector<2x64xf32>
    %41 = arith.divf %39, %40 : vector<2x64xf32>
    %42 = vector.extract_strided_slice %22 {offsets = [0, 128], sizes = [2, 64], strides = [1, 1]} : vector<2x192xf32> to vector<2x64xf32>
    %43 = vector.extract_strided_slice %25 {offsets = [0, 128], sizes = [2, 64], strides = [1, 1]} : vector<2x192xf32> to vector<2x64xf32>
    %44 = arith.mulf %33, %43 : vector<2x64xf32>
    %45 = arith.addf %42, %44 : vector<2x64xf32>
    %46 = math.tanh %45 : vector<2x64xf32>
    %cst_29 = arith.constant 1.000000e+00 : f32
    %47 = vector.broadcast %cst_29 : f32 to vector<2x64xf32>
    %48 = arith.subf %47, %41 : vector<2x64xf32>
    %49 = arith.mulf %48, %46 : vector<2x64xf32>
    %50 = arith.mulf %41, %20 : vector<2x64xf32>
    %51 = arith.addf %49, %50 : vector<2x64xf32>
    %52 = vector.extract_strided_slice %51 {offsets = [0, 0], sizes = [2, 32], strides = [1, 1]} : vector<2x64xf32> to vector<2x32xf32>
    %c0_30 = arith.constant 0 : index
    %c0_31 = arith.constant 0 : index
    %53 = vector.load %arg39[%c0_30, %c0_31] : memref<16x32xf32, #tpu.memory_space<vmem>>, vector<2x32xf32>
    tpu.vector_store %arg39[%c0_30, %c0_31], %52 {strides = array<i32>} : memref<16x32xf32, #tpu.memory_space<vmem>>, vector<2x32xf32>,
    %c2 = arith.constant 2 : index
    %c0_32 = arith.constant 0 : index
    %54 = vector.load %arg36[%c2, %c0_32] : memref<16x192xf32, #tpu.memory_space<vmem>>, vector<2x192xf32>
    %55 = arith.addf %54, %17 : vector<2x192xf32>
    %cst_33 = arith.constant dense<0.000000e+00> : vector<2x192xf32>
    %56 = tpu.matmul %51, %18, %cst_33 {dimension_numbers = #tpu.dot_dimension_numbers<[1], [0], [0], [1], [0, 0, 1, 1], [], []>} : vector<2x64xf32>, vector<64x192xf32>, vector<2x192xf32> -> vector<2x192xf32>
    %57 = vector.broadcast %19 : vector<1x192xf32> to vector<2x192xf32>
    %58 = arith.addf %56, %57 : vector<2x192xf32>
    %59 = vector.extract_strided_slice %55 {offsets = [0, 0], sizes = [2, 64], strides = [1, 1]} : vector<2x192xf32> to vector<2x64xf32>
    %60 = vector.extract_strided_slice %58 {offsets = [0, 0], sizes = [2, 64], strides = [1, 1]} : vector<2x192xf32> to vector<2x64xf32>
    %61 = arith.addf %59, %60 : vector<2x64xf32>
    %62 = arith.negf %61 : vector<2x64xf32>
    %63 = math.exp %62 : vector<2x64xf32>
    %cst_34 = arith.constant 1.000000e+00 : f32
    %64 = vector.broadcast %cst_34 : f32 to vector<2x64xf32>
    %65 = arith.addf %64, %63 : vector<2x64xf32>
    %66 = arith.divf %64, %65 : vector<2x64xf32>
    %67 = vector.extract_strided_slice %55 {offsets = [0, 64], sizes = [2, 64], strides = [1, 1]} : vector<2x192xf32> to vector<2x64xf32>
    %68 = vector.extract_strided_slice %58 {offsets = [0, 64], sizes = [2, 64], strides = [1, 1]} : vector<2x192xf32> to vector<2x64xf32>
    %69 = arith.addf %67, %68 : vector<2x64xf32>
    %70 = arith.negf %69 : vector<2x64xf32>
    %71 = math.exp %70 : vector<2x64xf32>
    %cst_35 = arith.constant 1.000000e+00 : f32
    %72 = vector.broadcast %cst_35 : f32 to vector<2x64xf32>
    %73 = arith.addf %72, %71 : vector<2x64xf32>
    %74 = arith.divf %72, %73 : vector<2x64xf32>
    %75 = vector.extract_strided_slice %55 {offsets = [0, 128], sizes = [2, 64], strides = [1, 1]} : vector<2x192xf32> to vector<2x64xf32>
    %76 = vector.extract_strided_slice %58 {offsets = [0, 128], sizes = [2, 64], strides = [1, 1]} : vector<2x192xf32> to vector<2x64xf32>
    %77 = arith.mulf %66, %76 : vector<2x64xf32>
    %78 = arith.addf %75, %77 : vector<2x64xf32>
    %79 = math.tanh %78 : vector<2x64xf32>
    %cst_36 = arith.constant 1.000000e+00 : f32
    %80 = vector.broadcast %cst_36 : f32 to vector<2x64xf32>
    %81 = arith.subf %80, %74 : vector<2x64xf32>
    %82 = arith.mulf %81, %79 : vector<2x64xf32>
    %83 = arith.mulf %74, %51 : vector<2x64xf32>
    %84 = arith.addf %82, %83 : vector<2x64xf32>
    %85 = vector.extract_strided_slice %84 {offsets = [0, 0], sizes = [2, 32], strides = [1, 1]} : vector<2x64xf32> to vector<2x32xf32>
    %c2_37 = arith.constant 2 : index
    %c0_38 = arith.constant 0 : index
    %86 = vector.load %arg39[%c2_37, %c0_38] : memref<16x32xf32, #tpu.memory_space<vmem>>, vector<2x32xf32>
    tpu.vector_store %arg39[%c2_37, %c0_38], %85 {strides = array<i32>} : memref<16x32xf32, #tpu.memory_space<vmem>>, vector<2x32xf32>,
    %c4 = arith.constant 4 : index
    %c0_39 = arith.constant 0 : index
    %87 = vector.load %arg36[%c4, %c0_39] : memref<16x192xf32, #tpu.memory_space<vmem>>, vector<2x192xf32>
    %88 = arith.addf %87, %17 : vector<2x192xf32>
    %cst_40 = arith.constant dense<0.000000e+00> : vector<2x192xf32>
    %89 = tpu.matmul %84, %18, %cst_40 {dimension_numbers = #tpu.dot_dimension_numbers<[1], [0], [0], [1], [0, 0, 1, 1], [], []>} : vector<2x64xf32>, vector<64x192xf32>, vector<2x192xf32> -> vector<2x192xf32>
    %90 = vector.broadcast %19 : vector<1x192xf32> to vector<2x192xf32>
    %91 = arith.addf %89, %90 : vector<2x192xf32>
    %92 = vector.extract_strided_slice %88 {offsets = [0, 0], sizes = [2, 64], strides = [1, 1]} : vector<2x192xf32> to vector<2x64xf32>
    %93 = vector.extract_strided_slice %91 {offsets = [0, 0], sizes = [2, 64], strides = [1, 1]} : vector<2x192xf32> to vector<2x64xf32>
    %94 = arith.addf %92, %93 : vector<2x64xf32>
    %95 = arith.negf %94 : vector<2x64xf32>
    %96 = math.exp %95 : vector<2x64xf32>
    %cst_41 = arith.constant 1.000000e+00 : f32
    %97 = vector.broadcast %cst_41 : f32 to vector<2x64xf32>
    %98 = arith.addf %97, %96 : vector<2x64xf32>
    %99 = arith.divf %97, %98 : vector<2x64xf32>
    %100 = vector.extract_strided_slice %88 {offsets = [0, 64], sizes = [2, 64], strides = [1, 1]} : vector<2x192xf32> to vector<2x64xf32>
    %101 = vector.extract_strided_slice %91 {offsets = [0, 64], sizes = [2, 64], strides = [1, 1]} : vector<2x192xf32> to vector<2x64xf32>
    %102 = arith.addf %100, %101 : vector<2x64xf32>
    %103 = arith.negf %102 : vector<2x64xf32>
    %104 = math.exp %103 : vector<2x64xf32>
    %cst_42 = arith.constant 1.000000e+00 : f32
    %105 = vector.broadcast %cst_42 : f32 to vector<2x64xf32>
    %106 = arith.addf %105, %104 : vector<2x64xf32>
    %107 = arith.divf %105, %106 : vector<2x64xf32>
    %108 = vector.extract_strided_slice %88 {offsets = [0, 128], sizes = [2, 64], strides = [1, 1]} : vector<2x192xf32> to vector<2x64xf32>
    %109 = vector.extract_strided_slice %91 {offsets = [0, 128], sizes = [2, 64], strides = [1, 1]} : vector<2x192xf32> to vector<2x64xf32>
    %110 = arith.mulf %99, %109 : vector<2x64xf32>
    %111 = arith.addf %108, %110 : vector<2x64xf32>
    %112 = math.tanh %111 : vector<2x64xf32>
    %cst_43 = arith.constant 1.000000e+00 : f32
    %113 = vector.broadcast %cst_43 : f32 to vector<2x64xf32>
    %114 = arith.subf %113, %107 : vector<2x64xf32>
    %115 = arith.mulf %114, %112 : vector<2x64xf32>
    %116 = arith.mulf %107, %84 : vector<2x64xf32>
    %117 = arith.addf %115, %116 : vector<2x64xf32>
    %118 = vector.extract_strided_slice %117 {offsets = [0, 0], sizes = [2, 32], strides = [1, 1]} : vector<2x64xf32> to vector<2x32xf32>
    %c4_44 = arith.constant 4 : index
    %c0_45 = arith.constant 0 : index
    %119 = vector.load %arg39[%c4_44, %c0_45] : memref<16x32xf32, #tpu.memory_space<vmem>>, vector<2x32xf32>
    tpu.vector_store %arg39[%c4_44, %c0_45], %118 {strides = array<i32>} : memref<16x32xf32, #tpu.memory_space<vmem>>, vector<2x32xf32>,
    %c6 = arith.constant 6 : index
    %c0_46 = arith.constant 0 : index
    %120 = vector.load %arg36[%c6, %c0_46] : memref<16x192xf32, #tpu.memory_space<vmem>>, vector<2x192xf32>
    %121 = arith.addf %120, %17 : vector<2x192xf32>
    %cst_47 = arith.constant dense<0.000000e+00> : vector<2x192xf32>
    %122 = tpu.matmul %117, %18, %cst_47 {dimension_numbers = #tpu.dot_dimension_numbers<[1], [0], [0], [1], [0, 0, 1, 1], [], []>} : vector<2x64xf32>, vector<64x192xf32>, vector<2x192xf32> -> vector<2x192xf32>
    %123 = vector.broadcast %19 : vector<1x192xf32> to vector<2x192xf32>
    %124 = arith.addf %122, %123 : vector<2x192xf32>
    %125 = vector.extract_strided_slice %121 {offsets = [0, 0], sizes = [2, 64], strides = [1, 1]} : vector<2x192xf32> to vector<2x64xf32>
    %126 = vector.extract_strided_slice %124 {offsets = [0, 0], sizes = [2, 64], strides = [1, 1]} : vector<2x192xf32> to vector<2x64xf32>
    %127 = arith.addf %125, %126 : vector<2x64xf32>
    %128 = arith.negf %127 : vector<2x64xf32>
    %129 = math.exp %128 : vector<2x64xf32>
    %cst_48 = arith.constant 1.000000e+00 : f32
    %130 = vector.broadcast %cst_48 : f32 to vector<2x64xf32>
    %131 = arith.addf %130, %129 : vector<2x64xf32>
    %132 = arith.divf %130, %131 : vector<2x64xf32>
    %133 = vector.extract_strided_slice %121 {offsets = [0, 64], sizes = [2, 64], strides = [1, 1]} : vector<2x192xf32> to vector<2x64xf32>
    %134 = vector.extract_strided_slice %124 {offsets = [0, 64], sizes = [2, 64], strides = [1, 1]} : vector<2x192xf32> to vector<2x64xf32>
    %135 = arith.addf %133, %134 : vector<2x64xf32>
    %136 = arith.negf %135 : vector<2x64xf32>
    %137 = math.exp %136 : vector<2x64xf32>
    %cst_49 = arith.constant 1.000000e+00 : f32
    %138 = vector.broadcast %cst_49 : f32 to vector<2x64xf32>
    %139 = arith.addf %138, %137 : vector<2x64xf32>
    %140 = arith.divf %138, %139 : vector<2x64xf32>
    %141 = vector.extract_strided_slice %121 {offsets = [0, 128], sizes = [2, 64], strides = [1, 1]} : vector<2x192xf32> to vector<2x64xf32>
    %142 = vector.extract_strided_slice %124 {offsets = [0, 128], sizes = [2, 64], strides = [1, 1]} : vector<2x192xf32> to vector<2x64xf32>
    %143 = arith.mulf %132, %142 : vector<2x64xf32>
    %144 = arith.addf %141, %143 : vector<2x64xf32>
    %145 = math.tanh %144 : vector<2x64xf32>
    %cst_50 = arith.constant 1.000000e+00 : f32
    %146 = vector.broadcast %cst_50 : f32 to vector<2x64xf32>
    %147 = arith.subf %146, %140 : vector<2x64xf32>
    %148 = arith.mulf %147, %145 : vector<2x64xf32>
    %149 = arith.mulf %140, %117 : vector<2x64xf32>
    %150 = arith.addf %148, %149 : vector<2x64xf32>
    %151 = vector.extract_strided_slice %150 {offsets = [0, 0], sizes = [2, 32], strides = [1, 1]} : vector<2x64xf32> to vector<2x32xf32>
    %c6_51 = arith.constant 6 : index
    %c0_52 = arith.constant 0 : index
    %152 = vector.load %arg39[%c6_51, %c0_52] : memref<16x32xf32, #tpu.memory_space<vmem>>, vector<2x32xf32>
    tpu.vector_store %arg39[%c6_51, %c0_52], %151 {strides = array<i32>} : memref<16x32xf32, #tpu.memory_space<vmem>>, vector<2x32xf32>,
    %c8 = arith.constant 8 : index
    %c0_53 = arith.constant 0 : index
    %153 = vector.load %arg36[%c8, %c0_53] : memref<16x192xf32, #tpu.memory_space<vmem>>, vector<2x192xf32>
    %154 = arith.addf %153, %17 : vector<2x192xf32>
    %cst_54 = arith.constant dense<0.000000e+00> : vector<2x192xf32>
    %155 = tpu.matmul %150, %18, %cst_54 {dimension_numbers = #tpu.dot_dimension_numbers<[1], [0], [0], [1], [0, 0, 1, 1], [], []>} : vector<2x64xf32>, vector<64x192xf32>, vector<2x192xf32> -> vector<2x192xf32>
    %156 = vector.broadcast %19 : vector<1x192xf32> to vector<2x192xf32>
    %157 = arith.addf %155, %156 : vector<2x192xf32>
    %158 = vector.extract_strided_slice %154 {offsets = [0, 0], sizes = [2, 64], strides = [1, 1]} : vector<2x192xf32> to vector<2x64xf32>
    %159 = vector.extract_strided_slice %157 {offsets = [0, 0], sizes = [2, 64], strides = [1, 1]} : vector<2x192xf32> to vector<2x64xf32>
    %160 = arith.addf %158, %159 : vector<2x64xf32>
    %161 = arith.negf %160 : vector<2x64xf32>
    %162 = math.exp %161 : vector<2x64xf32>
    %cst_55 = arith.constant 1.000000e+00 : f32
    %163 = vector.broadcast %cst_55 : f32 to vector<2x64xf32>
    %164 = arith.addf %163, %162 : vector<2x64xf32>
    %165 = arith.divf %163, %164 : vector<2x64xf32>
    %166 = vector.extract_strided_slice %154 {offsets = [0, 64], sizes = [2, 64], strides = [1, 1]} : vector<2x192xf32> to vector<2x64xf32>
    %167 = vector.extract_strided_slice %157 {offsets = [0, 64], sizes = [2, 64], strides = [1, 1]} : vector<2x192xf32> to vector<2x64xf32>
    %168 = arith.addf %166, %167 : vector<2x64xf32>
    %169 = arith.negf %168 : vector<2x64xf32>
    %170 = math.exp %169 : vector<2x64xf32>
    %cst_56 = arith.constant 1.000000e+00 : f32
    %171 = vector.broadcast %cst_56 : f32 to vector<2x64xf32>
    %172 = arith.addf %171, %170 : vector<2x64xf32>
    %173 = arith.divf %171, %172 : vector<2x64xf32>
    %174 = vector.extract_strided_slice %154 {offsets = [0, 128], sizes = [2, 64], strides = [1, 1]} : vector<2x192xf32> to vector<2x64xf32>
    %175 = vector.extract_strided_slice %157 {offsets = [0, 128], sizes = [2, 64], strides = [1, 1]} : vector<2x192xf32> to vector<2x64xf32>
    %176 = arith.mulf %165, %175 : vector<2x64xf32>
    %177 = arith.addf %174, %176 : vector<2x64xf32>
    %178 = math.tanh %177 : vector<2x64xf32>
    %cst_57 = arith.constant 1.000000e+00 : f32
    %179 = vector.broadcast %cst_57 : f32 to vector<2x64xf32>
    %180 = arith.subf %179, %173 : vector<2x64xf32>
    %181 = arith.mulf %180, %178 : vector<2x64xf32>
    %182 = arith.mulf %173, %150 : vector<2x64xf32>
    %183 = arith.addf %181, %182 : vector<2x64xf32>
    %184 = vector.extract_strided_slice %183 {offsets = [0, 0], sizes = [2, 32], strides = [1, 1]} : vector<2x64xf32> to vector<2x32xf32>
    %c8_58 = arith.constant 8 : index
    %c0_59 = arith.constant 0 : index
    %185 = vector.load %arg39[%c8_58, %c0_59] : memref<16x32xf32, #tpu.memory_space<vmem>>, vector<2x32xf32>
    tpu.vector_store %arg39[%c8_58, %c0_59], %184 {strides = array<i32>} : memref<16x32xf32, #tpu.memory_space<vmem>>, vector<2x32xf32>,
    %c10 = arith.constant 10 : index
    %c0_60 = arith.constant 0 : index
    %186 = vector.load %arg36[%c10, %c0_60] : memref<16x192xf32, #tpu.memory_space<vmem>>, vector<2x192xf32>
    %187 = arith.addf %186, %17 : vector<2x192xf32>
    %cst_61 = arith.constant dense<0.000000e+00> : vector<2x192xf32>
    %188 = tpu.matmul %183, %18, %cst_61 {dimension_numbers = #tpu.dot_dimension_numbers<[1], [0], [0], [1], [0, 0, 1, 1], [], []>} : vector<2x64xf32>, vector<64x192xf32>, vector<2x192xf32> -> vector<2x192xf32>
    %189 = vector.broadcast %19 : vector<1x192xf32> to vector<2x192xf32>
    %190 = arith.addf %188, %189 : vector<2x192xf32>
    %191 = vector.extract_strided_slice %187 {offsets = [0, 0], sizes = [2, 64], strides = [1, 1]} : vector<2x192xf32> to vector<2x64xf32>
    %192 = vector.extract_strided_slice %190 {offsets = [0, 0], sizes = [2, 64], strides = [1, 1]} : vector<2x192xf32> to vector<2x64xf32>
    %193 = arith.addf %191, %192 : vector<2x64xf32>
    %194 = arith.negf %193 : vector<2x64xf32>
    %195 = math.exp %194 : vector<2x64xf32>
    %cst_62 = arith.constant 1.000000e+00 : f32
    %196 = vector.broadcast %cst_62 : f32 to vector<2x64xf32>
    %197 = arith.addf %196, %195 : vector<2x64xf32>
    %198 = arith.divf %196, %197 : vector<2x64xf32>
    %199 = vector.extract_strided_slice %187 {offsets = [0, 64], sizes = [2, 64], strides = [1, 1]} : vector<2x192xf32> to vector<2x64xf32>
    %200 = vector.extract_strided_slice %190 {offsets = [0, 64], sizes = [2, 64], strides = [1, 1]} : vector<2x192xf32> to vector<2x64xf32>
    %201 = arith.addf %199, %200 : vector<2x64xf32>
    %202 = arith.negf %201 : vector<2x64xf32>
    %203 = math.exp %202 : vector<2x64xf32>
    %cst_63 = arith.constant 1.000000e+00 : f32
    %204 = vector.broadcast %cst_63 : f32 to vector<2x64xf32>
    %205 = arith.addf %204, %203 : vector<2x64xf32>
    %206 = arith.divf %204, %205 : vector<2x64xf32>
    %207 = vector.extract_strided_slice %187 {offsets = [0, 128], sizes = [2, 64], strides = [1, 1]} : vector<2x192xf32> to vector<2x64xf32>
    %208 = vector.extract_strided_slice %190 {offsets = [0, 128], sizes = [2, 64], strides = [1, 1]} : vector<2x192xf32> to vector<2x64xf32>
    %209 = arith.mulf %198, %208 : vector<2x64xf32>
    %210 = arith.addf %207, %209 : vector<2x64xf32>
    %211 = math.tanh %210 : vector<2x64xf32>
    %cst_64 = arith.constant 1.000000e+00 : f32
    %212 = vector.broadcast %cst_64 : f32 to vector<2x64xf32>
    %213 = arith.subf %212, %206 : vector<2x64xf32>
    %214 = arith.mulf %213, %211 : vector<2x64xf32>
    %215 = arith.mulf %206, %183 : vector<2x64xf32>
    %216 = arith.addf %214, %215 : vector<2x64xf32>
    %217 = vector.extract_strided_slice %216 {offsets = [0, 0], sizes = [2, 32], strides = [1, 1]} : vector<2x64xf32> to vector<2x32xf32>
    %c10_65 = arith.constant 10 : index
    %c0_66 = arith.constant 0 : index
    %218 = vector.load %arg39[%c10_65, %c0_66] : memref<16x32xf32, #tpu.memory_space<vmem>>, vector<2x32xf32>
    tpu.vector_store %arg39[%c10_65, %c0_66], %217 {strides = array<i32>} : memref<16x32xf32, #tpu.memory_space<vmem>>, vector<2x32xf32>,
    %c12 = arith.constant 12 : index
    %c0_67 = arith.constant 0 : index
    %219 = vector.load %arg36[%c12, %c0_67] : memref<16x192xf32, #tpu.memory_space<vmem>>, vector<2x192xf32>
    %220 = arith.addf %219, %17 : vector<2x192xf32>
    %cst_68 = arith.constant dense<0.000000e+00> : vector<2x192xf32>
    %221 = tpu.matmul %216, %18, %cst_68 {dimension_numbers = #tpu.dot_dimension_numbers<[1], [0], [0], [1], [0, 0, 1, 1], [], []>} : vector<2x64xf32>, vector<64x192xf32>, vector<2x192xf32> -> vector<2x192xf32>
    %222 = vector.broadcast %19 : vector<1x192xf32> to vector<2x192xf32>
    %223 = arith.addf %221, %222 : vector<2x192xf32>
    %224 = vector.extract_strided_slice %220 {offsets = [0, 0], sizes = [2, 64], strides = [1, 1]} : vector<2x192xf32> to vector<2x64xf32>
    %225 = vector.extract_strided_slice %223 {offsets = [0, 0], sizes = [2, 64], strides = [1, 1]} : vector<2x192xf32> to vector<2x64xf32>
    %226 = arith.addf %224, %225 : vector<2x64xf32>
    %227 = arith.negf %226 : vector<2x64xf32>
    %228 = math.exp %227 : vector<2x64xf32>
    %cst_69 = arith.constant 1.000000e+00 : f32
    %229 = vector.broadcast %cst_69 : f32 to vector<2x64xf32>
    %230 = arith.addf %229, %228 : vector<2x64xf32>
    %231 = arith.divf %229, %230 : vector<2x64xf32>
    %232 = vector.extract_strided_slice %220 {offsets = [0, 64], sizes = [2, 64], strides = [1, 1]} : vector<2x192xf32> to vector<2x64xf32>
    %233 = vector.extract_strided_slice %223 {offsets = [0, 64], sizes = [2, 64], strides = [1, 1]} : vector<2x192xf32> to vector<2x64xf32>
    %234 = arith.addf %232, %233 : vector<2x64xf32>
    %235 = arith.negf %234 : vector<2x64xf32>
    %236 = math.exp %235 : vector<2x64xf32>
    %cst_70 = arith.constant 1.000000e+00 : f32
    %237 = vector.broadcast %cst_70 : f32 to vector<2x64xf32>
    %238 = arith.addf %237, %236 : vector<2x64xf32>
    %239 = arith.divf %237, %238 : vector<2x64xf32>
    %240 = vector.extract_strided_slice %220 {offsets = [0, 128], sizes = [2, 64], strides = [1, 1]} : vector<2x192xf32> to vector<2x64xf32>
    %241 = vector.extract_strided_slice %223 {offsets = [0, 128], sizes = [2, 64], strides = [1, 1]} : vector<2x192xf32> to vector<2x64xf32>
    %242 = arith.mulf %231, %241 : vector<2x64xf32>
    %243 = arith.addf %240, %242 : vector<2x64xf32>
    %244 = math.tanh %243 : vector<2x64xf32>
    %cst_71 = arith.constant 1.000000e+00 : f32
    %245 = vector.broadcast %cst_71 : f32 to vector<2x64xf32>
    %246 = arith.subf %245, %239 : vector<2x64xf32>
    %247 = arith.mulf %246, %244 : vector<2x64xf32>
    %248 = arith.mulf %239, %216 : vector<2x64xf32>
    %249 = arith.addf %247, %248 : vector<2x64xf32>
    %250 = vector.extract_strided_slice %249 {offsets = [0, 0], sizes = [2, 32], strides = [1, 1]} : vector<2x64xf32> to vector<2x32xf32>
    %c12_72 = arith.constant 12 : index
    %c0_73 = arith.constant 0 : index
    %251 = vector.load %arg39[%c12_72, %c0_73] : memref<16x32xf32, #tpu.memory_space<vmem>>, vector<2x32xf32>
    tpu.vector_store %arg39[%c12_72, %c0_73], %250 {strides = array<i32>} : memref<16x32xf32, #tpu.memory_space<vmem>>, vector<2x32xf32>,
    %c14 = arith.constant 14 : index
    %c0_74 = arith.constant 0 : index
    %252 = vector.load %arg36[%c14, %c0_74] : memref<16x192xf32, #tpu.memory_space<vmem>>, vector<2x192xf32>
    %253 = arith.addf %252, %17 : vector<2x192xf32>
    %cst_75 = arith.constant dense<0.000000e+00> : vector<2x192xf32>
    %254 = tpu.matmul %249, %18, %cst_75 {dimension_numbers = #tpu.dot_dimension_numbers<[1], [0], [0], [1], [0, 0, 1, 1], [], []>} : vector<2x64xf32>, vector<64x192xf32>, vector<2x192xf32> -> vector<2x192xf32>
    %255 = vector.broadcast %19 : vector<1x192xf32> to vector<2x192xf32>
    %256 = arith.addf %254, %255 : vector<2x192xf32>
    %257 = vector.extract_strided_slice %253 {offsets = [0, 0], sizes = [2, 64], strides = [1, 1]} : vector<2x192xf32> to vector<2x64xf32>
    %258 = vector.extract_strided_slice %256 {offsets = [0, 0], sizes = [2, 64], strides = [1, 1]} : vector<2x192xf32> to vector<2x64xf32>
    %259 = arith.addf %257, %258 : vector<2x64xf32>
    %260 = arith.negf %259 : vector<2x64xf32>
    %261 = math.exp %260 : vector<2x64xf32>
    %cst_76 = arith.constant 1.000000e+00 : f32
    %262 = vector.broadcast %cst_76 : f32 to vector<2x64xf32>
    %263 = arith.addf %262, %261 : vector<2x64xf32>
    %264 = arith.divf %262, %263 : vector<2x64xf32>
    %265 = vector.extract_strided_slice %253 {offsets = [0, 64], sizes = [2, 64], strides = [1, 1]} : vector<2x192xf32> to vector<2x64xf32>
    %266 = vector.extract_strided_slice %256 {offsets = [0, 64], sizes = [2, 64], strides = [1, 1]} : vector<2x192xf32> to vector<2x64xf32>
    %267 = arith.addf %265, %266 : vector<2x64xf32>
    %268 = arith.negf %267 : vector<2x64xf32>
    %269 = math.exp %268 : vector<2x64xf32>
    %cst_77 = arith.constant 1.000000e+00 : f32
    %270 = vector.broadcast %cst_77 : f32 to vector<2x64xf32>
    %271 = arith.addf %270, %269 : vector<2x64xf32>
    %272 = arith.divf %270, %271 : vector<2x64xf32>
    %273 = vector.extract_strided_slice %253 {offsets = [0, 128], sizes = [2, 64], strides = [1, 1]} : vector<2x192xf32> to vector<2x64xf32>
    %274 = vector.extract_strided_slice %256 {offsets = [0, 128], sizes = [2, 64], strides = [1, 1]} : vector<2x192xf32> to vector<2x64xf32>
    %275 = arith.mulf %264, %274 : vector<2x64xf32>
    %276 = arith.addf %273, %275 : vector<2x64xf32>
    %277 = math.tanh %276 : vector<2x64xf32>
    %cst_78 = arith.constant 1.000000e+00 : f32
    %278 = vector.broadcast %cst_78 : f32 to vector<2x64xf32>
    %279 = arith.subf %278, %272 : vector<2x64xf32>
    %280 = arith.mulf %279, %277 : vector<2x64xf32>
    %281 = arith.mulf %272, %249 : vector<2x64xf32>
    %282 = arith.addf %280, %281 : vector<2x64xf32>
    %283 = vector.extract_strided_slice %282 {offsets = [0, 0], sizes = [2, 32], strides = [1, 1]} : vector<2x64xf32> to vector<2x32xf32>
    %c14_79 = arith.constant 14 : index
    %c0_80 = arith.constant 0 : index
    %284 = vector.load %arg39[%c14_79, %c0_80] : memref<16x32xf32, #tpu.memory_space<vmem>>, vector<2x32xf32>
    tpu.vector_store %arg39[%c14_79, %c0_80], %283 {strides = array<i32>} : memref<16x32xf32, #tpu.memory_space<vmem>>, vector<2x32xf32>,
    %c0_81 = arith.constant 0 : index
    %c0_82 = arith.constant 0 : index
    %285 = vector.load %arg39[%c0_81, %c0_82] : memref<16x32xf32, #tpu.memory_space<vmem>>, vector<16x32xf32>
    %c0_83 = arith.constant 0 : index
    %c0_84 = arith.constant 0 : index
    %286 = vector.load %arg10[%c0_83, %c0_84] : memref<32x32xf32, #tpu.memory_space<vmem>>, vector<32x32xf32>
    %cst_85 = arith.constant dense<0.000000e+00> : vector<16x32xf32>
    %287 = tpu.matmul %285, %286, %cst_85 {dimension_numbers = #tpu.dot_dimension_numbers<[1], [0], [0], [1], [0, 0, 1, 1], [], []>} : vector<16x32xf32>, vector<32x32xf32>, vector<16x32xf32> -> vector<16x32xf32>
    %c0_86 = arith.constant 0 : index
    %c0_87 = arith.constant 0 : index
    %288 = vector.load %arg11[%c0_86, %c0_87] : memref<1x32xf32, #tpu.memory_space<vmem>>, vector<1x32xf32>
    %289 = vector.broadcast %288 : vector<1x32xf32> to vector<16x32xf32>
    %290 = arith.addf %287, %289 : vector<16x32xf32>
    %c0_88 = arith.constant 0 : index
    %c0_89 = arith.constant 0 : index
    %291 = vector.load %arg12[%c0_88, %c0_89] : memref<32x64xf32, #tpu.memory_space<vmem>>, vector<32x64xf32>
    %cst_90 = arith.constant dense<0.000000e+00> : vector<16x64xf32>
    %292 = tpu.matmul %290, %291, %cst_90 {dimension_numbers = #tpu.dot_dimension_numbers<[1], [0], [0], [1], [0, 0, 1, 1], [], []>} : vector<16x32xf32>, vector<32x64xf32>, vector<16x64xf32> -> vector<16x64xf32>
    %c0_91 = arith.constant 0 : index
    %c0_92 = arith.constant 0 : index
    %293 = vector.load %arg34[%c0_91, %c0_92] : memref<16x64xf32, #tpu.memory_space<vmem>>, vector<16x64xf32>
    tpu.vector_store %arg34[%c0_91, %c0_92], %292 {strides = array<i32>} : memref<16x64xf32, #tpu.memory_space<vmem>>, vector<16x64xf32>,
    %c0_93 = arith.constant 0 : index
    %c0_94 = arith.constant 0 : index
    %294 = vector.load %arg13[%c0_93, %c0_94] : memref<32x96xf32, #tpu.memory_space<vmem>>, vector<32x96xf32>
    %cst_95 = arith.constant dense<0.000000e+00> : vector<16x96xf32>
    %295 = tpu.matmul %285, %294, %cst_95 {dimension_numbers = #tpu.dot_dimension_numbers<[1], [0], [0], [1], [0, 0, 1, 1], [], []>} : vector<16x32xf32>, vector<32x96xf32>, vector<16x96xf32> -> vector<16x96xf32>
    %c0_96 = arith.constant 0 : index
    %c0_97 = arith.constant 0 : index
    %296 = vector.load %arg14[%c0_96, %c0_97] : memref<32x96xf32, #tpu.memory_space<vmem>>, vector<32x96xf32>
    %cst_98 = arith.constant dense<0.000000e+00> : vector<16x96xf32>
    %297 = tpu.matmul %9, %296, %cst_98 {dimension_numbers = #tpu.dot_dimension_numbers<[1], [0], [0], [1], [0, 0, 1, 1], [], []>} : vector<16x32xf32>, vector<32x96xf32>, vector<16x96xf32> -> vector<16x96xf32>
    %298 = arith.addf %295, %297 : vector<16x96xf32>
    %c0_99 = arith.constant 0 : index
    %c0_100 = arith.constant 0 : index
    %299 = vector.load %arg16[%c0_99, %c0_100] : memref<1x96xf32, #tpu.memory_space<vmem>>, vector<1x96xf32>
    %300 = vector.broadcast %299 : vector<1x96xf32> to vector<16x96xf32>
    %301 = arith.addf %298, %300 : vector<16x96xf32>
    %c0_101 = arith.constant 0 : index
    %c0_102 = arith.constant 0 : index
    %302 = vector.load %arg37[%c0_101, %c0_102] : memref<16x96xf32, #tpu.memory_space<vmem>>, vector<16x96xf32>
    tpu.vector_store %arg37[%c0_101, %c0_102], %301 {strides = array<i32>} : memref<16x96xf32, #tpu.memory_space<vmem>>, vector<16x96xf32>,
    %c0_103 = arith.constant 0 : index
    %c0_104 = arith.constant 0 : index
    %303 = vector.load %arg18[%c0_103, %c0_104] : memref<32x96xf32, #tpu.memory_space<vmem>>, vector<32x96xf32>
    %cst_105 = arith.constant dense<0.000000e+00> : vector<16x96xf32>
    %304 = tpu.matmul %285, %303, %cst_105 {dimension_numbers = #tpu.dot_dimension_numbers<[1], [0], [0], [1], [0, 0, 1, 1], [], []>} : vector<16x32xf32>, vector<32x96xf32>, vector<16x96xf32> -> vector<16x96xf32>
    %c0_106 = arith.constant 0 : index
    %c0_107 = arith.constant 0 : index
    %305 = vector.load %arg19[%c0_106, %c0_107] : memref<32x96xf32, #tpu.memory_space<vmem>>, vector<32x96xf32>
    %cst_108 = arith.constant dense<0.000000e+00> : vector<16x96xf32>
    %306 = tpu.matmul %9, %305, %cst_108 {dimension_numbers = #tpu.dot_dimension_numbers<[1], [0], [0], [1], [0, 0, 1, 1], [], []>} : vector<16x32xf32>, vector<32x96xf32>, vector<16x96xf32> -> vector<16x96xf32>
    %307 = arith.addf %304, %306 : vector<16x96xf32>
    %c0_109 = arith.constant 0 : index
    %c0_110 = arith.constant 0 : index
    %308 = vector.load %arg21[%c0_109, %c0_110] : memref<1x96xf32, #tpu.memory_space<vmem>>, vector<1x96xf32>
    %309 = vector.broadcast %308 : vector<1x96xf32> to vector<16x96xf32>
    %310 = arith.addf %307, %309 : vector<16x96xf32>
    %c0_111 = arith.constant 0 : index
    %c0_112 = arith.constant 0 : index
    %311 = vector.load %arg38[%c0_111, %c0_112] : memref<16x96xf32, #tpu.memory_space<vmem>>, vector<16x96xf32>
    tpu.vector_store %arg38[%c0_111, %c0_112], %310 {strides = array<i32>} : memref<16x96xf32, #tpu.memory_space<vmem>>, vector<16x96xf32>,
    %c0_113 = arith.constant 0 : index
    %c0_114 = arith.constant 0 : index
    %312 = vector.load %arg15[%c0_113, %c0_114] : memref<32x96xf32, #tpu.memory_space<vmem>>, vector<32x96xf32>
    %c0_115 = arith.constant 0 : index
    %c0_116 = arith.constant 0 : index
    %313 = vector.load %arg17[%c0_115, %c0_116] : memref<1x96xf32, #tpu.memory_space<vmem>>, vector<1x96xf32>
    %c0_117 = arith.constant 0 : index
    %c0_118 = arith.constant 0 : index
    %314 = vector.load %arg20[%c0_117, %c0_118] : memref<32x96xf32, #tpu.memory_space<vmem>>, vector<32x96xf32>
    %c0_119 = arith.constant 0 : index
    %c0_120 = arith.constant 0 : index
    %315 = vector.load %arg22[%c0_119, %c0_120] : memref<1x96xf32, #tpu.memory_space<vmem>>, vector<1x96xf32>
    %cst_121 = arith.constant 0.000000e+00 : f32
    %316 = vector.broadcast %cst_121 : f32 to vector<2x32xf32>
    %cst_122 = arith.constant 0.000000e+00 : f32
    %317 = vector.broadcast %cst_122 : f32 to vector<2x32xf32>
    %c0_123 = arith.constant 0 : index
    %c0_124 = arith.constant 0 : index
    %318 = vector.load %arg37[%c0_123, %c0_124] : memref<16x96xf32, #tpu.memory_space<vmem>>, vector<2x96xf32>
    %cst_125 = arith.constant dense<0.000000e+00> : vector<2x96xf32>
    %319 = tpu.matmul %316, %312, %cst_125 {dimension_numbers = #tpu.dot_dimension_numbers<[1], [0], [0], [1], [0, 0, 1, 1], [], []>} : vector<2x32xf32>, vector<32x96xf32>, vector<2x96xf32> -> vector<2x96xf32>
    %320 = vector.broadcast %313 : vector<1x96xf32> to vector<2x96xf32>
    %321 = arith.addf %319, %320 : vector<2x96xf32>
    %322 = vector.extract_strided_slice %318 {offsets = [0, 0], sizes = [2, 32], strides = [1, 1]} : vector<2x96xf32> to vector<2x32xf32>
    %323 = vector.extract_strided_slice %321 {offsets = [0, 0], sizes = [2, 32], strides = [1, 1]} : vector<2x96xf32> to vector<2x32xf32>
    %324 = arith.addf %322, %323 : vector<2x32xf32>
    %325 = arith.negf %324 : vector<2x32xf32>
    %326 = math.exp %325 : vector<2x32xf32>
    %cst_126 = arith.constant 1.000000e+00 : f32
    %327 = vector.broadcast %cst_126 : f32 to vector<2x32xf32>
    %328 = arith.addf %327, %326 : vector<2x32xf32>
    %329 = arith.divf %327, %328 : vector<2x32xf32>
    %330 = vector.extract_strided_slice %318 {offsets = [0, 32], sizes = [2, 32], strides = [1, 1]} : vector<2x96xf32> to vector<2x32xf32>
    %331 = vector.extract_strided_slice %321 {offsets = [0, 32], sizes = [2, 32], strides = [1, 1]} : vector<2x96xf32> to vector<2x32xf32>
    %332 = arith.addf %330, %331 : vector<2x32xf32>
    %333 = arith.negf %332 : vector<2x32xf32>
    %334 = math.exp %333 : vector<2x32xf32>
    %cst_127 = arith.constant 1.000000e+00 : f32
    %335 = vector.broadcast %cst_127 : f32 to vector<2x32xf32>
    %336 = arith.addf %335, %334 : vector<2x32xf32>
    %337 = arith.divf %335, %336 : vector<2x32xf32>
    %338 = vector.extract_strided_slice %318 {offsets = [0, 64], sizes = [2, 32], strides = [1, 1]} : vector<2x96xf32> to vector<2x32xf32>
    %339 = vector.extract_strided_slice %321 {offsets = [0, 64], sizes = [2, 32], strides = [1, 1]} : vector<2x96xf32> to vector<2x32xf32>
    %340 = arith.mulf %329, %339 : vector<2x32xf32>
    %341 = arith.addf %338, %340 : vector<2x32xf32>
    %342 = math.tanh %341 : vector<2x32xf32>
    %cst_128 = arith.constant 1.000000e+00 : f32
    %343 = vector.broadcast %cst_128 : f32 to vector<2x32xf32>
    %344 = arith.subf %343, %337 : vector<2x32xf32>
    %345 = arith.mulf %344, %342 : vector<2x32xf32>
    %346 = arith.mulf %337, %316 : vector<2x32xf32>
    %347 = arith.addf %345, %346 : vector<2x32xf32>
    %c0_129 = arith.constant 0 : index
    %c0_130 = arith.constant 0 : index
    %348 = vector.load %arg40[%c0_129, %c0_130] : memref<16x32xf32, #tpu.memory_space<vmem>>, vector<2x32xf32>
    tpu.vector_store %arg40[%c0_129, %c0_130], %347 {strides = array<i32>} : memref<16x32xf32, #tpu.memory_space<vmem>>, vector<2x32xf32>,
    %c14_131 = arith.constant 14 : index
    %c0_132 = arith.constant 0 : index
    %349 = vector.load %arg38[%c14_131, %c0_132] : memref<16x96xf32, #tpu.memory_space<vmem>>, vector<2x96xf32>
    %cst_133 = arith.constant dense<0.000000e+00> : vector<2x96xf32>
    %350 = tpu.matmul %317, %314, %cst_133 {dimension_numbers = #tpu.dot_dimension_numbers<[1], [0], [0], [1], [0, 0, 1, 1], [], []>} : vector<2x32xf32>, vector<32x96xf32>, vector<2x96xf32> -> vector<2x96xf32>
    %351 = vector.broadcast %315 : vector<1x96xf32> to vector<2x96xf32>
    %352 = arith.addf %350, %351 : vector<2x96xf32>
    %353 = vector.extract_strided_slice %349 {offsets = [0, 0], sizes = [2, 32], strides = [1, 1]} : vector<2x96xf32> to vector<2x32xf32>
    %354 = vector.extract_strided_slice %352 {offsets = [0, 0], sizes = [2, 32], strides = [1, 1]} : vector<2x96xf32> to vector<2x32xf32>
    %355 = arith.addf %353, %354 : vector<2x32xf32>
    %356 = arith.negf %355 : vector<2x32xf32>
    %357 = math.exp %356 : vector<2x32xf32>
    %cst_134 = arith.constant 1.000000e+00 : f32
    %358 = vector.broadcast %cst_134 : f32 to vector<2x32xf32>
    %359 = arith.addf %358, %357 : vector<2x32xf32>
    %360 = arith.divf %358, %359 : vector<2x32xf32>
    %361 = vector.extract_strided_slice %349 {offsets = [0, 32], sizes = [2, 32], strides = [1, 1]} : vector<2x96xf32> to vector<2x32xf32>
    %362 = vector.extract_strided_slice %352 {offsets = [0, 32], sizes = [2, 32], strides = [1, 1]} : vector<2x96xf32> to vector<2x32xf32>
    %363 = arith.addf %361, %362 : vector<2x32xf32>
    %364 = arith.negf %363 : vector<2x32xf32>
    %365 = math.exp %364 : vector<2x32xf32>
    %cst_135 = arith.constant 1.000000e+00 : f32
    %366 = vector.broadcast %cst_135 : f32 to vector<2x32xf32>
    %367 = arith.addf %366, %365 : vector<2x32xf32>
    %368 = arith.divf %366, %367 : vector<2x32xf32>
    %369 = vector.extract_strided_slice %349 {offsets = [0, 64], sizes = [2, 32], strides = [1, 1]} : vector<2x96xf32> to vector<2x32xf32>
    %370 = vector.extract_strided_slice %352 {offsets = [0, 64], sizes = [2, 32], strides = [1, 1]} : vector<2x96xf32> to vector<2x32xf32>
    %371 = arith.mulf %360, %370 : vector<2x32xf32>
    %372 = arith.addf %369, %371 : vector<2x32xf32>
    %373 = math.tanh %372 : vector<2x32xf32>
    %cst_136 = arith.constant 1.000000e+00 : f32
    %374 = vector.broadcast %cst_136 : f32 to vector<2x32xf32>
    %375 = arith.subf %374, %368 : vector<2x32xf32>
    %376 = arith.mulf %375, %373 : vector<2x32xf32>
    %377 = arith.mulf %368, %317 : vector<2x32xf32>
    %378 = arith.addf %376, %377 : vector<2x32xf32>
    %c14_137 = arith.constant 14 : index
    %c0_138 = arith.constant 0 : index
    %379 = vector.load %arg41[%c14_137, %c0_138] : memref<16x32xf32, #tpu.memory_space<vmem>>, vector<2x32xf32>
    tpu.vector_store %arg41[%c14_137, %c0_138], %378 {strides = array<i32>} : memref<16x32xf32, #tpu.memory_space<vmem>>, vector<2x32xf32>,
    %c2_139 = arith.constant 2 : index
    %c0_140 = arith.constant 0 : index
    %380 = vector.load %arg37[%c2_139, %c0_140] : memref<16x96xf32, #tpu.memory_space<vmem>>, vector<2x96xf32>
    %cst_141 = arith.constant dense<0.000000e+00> : vector<2x96xf32>
    %381 = tpu.matmul %347, %312, %cst_141 {dimension_numbers = #tpu.dot_dimension_numbers<[1], [0], [0], [1], [0, 0, 1, 1], [], []>} : vector<2x32xf32>, vector<32x96xf32>, vector<2x96xf32> -> vector<2x96xf32>
    %382 = vector.broadcast %313 : vector<1x96xf32> to vector<2x96xf32>
    %383 = arith.addf %381, %382 : vector<2x96xf32>
    %384 = vector.extract_strided_slice %380 {offsets = [0, 0], sizes = [2, 32], strides = [1, 1]} : vector<2x96xf32> to vector<2x32xf32>
    %385 = vector.extract_strided_slice %383 {offsets = [0, 0], sizes = [2, 32], strides = [1, 1]} : vector<2x96xf32> to vector<2x32xf32>
    %386 = arith.addf %384, %385 : vector<2x32xf32>
    %387 = arith.negf %386 : vector<2x32xf32>
    %388 = math.exp %387 : vector<2x32xf32>
    %cst_142 = arith.constant 1.000000e+00 : f32
    %389 = vector.broadcast %cst_142 : f32 to vector<2x32xf32>
    %390 = arith.addf %389, %388 : vector<2x32xf32>
    %391 = arith.divf %389, %390 : vector<2x32xf32>
    %392 = vector.extract_strided_slice %380 {offsets = [0, 32], sizes = [2, 32], strides = [1, 1]} : vector<2x96xf32> to vector<2x32xf32>
    %393 = vector.extract_strided_slice %383 {offsets = [0, 32], sizes = [2, 32], strides = [1, 1]} : vector<2x96xf32> to vector<2x32xf32>
    %394 = arith.addf %392, %393 : vector<2x32xf32>
    %395 = arith.negf %394 : vector<2x32xf32>
    %396 = math.exp %395 : vector<2x32xf32>
    %cst_143 = arith.constant 1.000000e+00 : f32
    %397 = vector.broadcast %cst_143 : f32 to vector<2x32xf32>
    %398 = arith.addf %397, %396 : vector<2x32xf32>
    %399 = arith.divf %397, %398 : vector<2x32xf32>
    %400 = vector.extract_strided_slice %380 {offsets = [0, 64], sizes = [2, 32], strides = [1, 1]} : vector<2x96xf32> to vector<2x32xf32>
    %401 = vector.extract_strided_slice %383 {offsets = [0, 64], sizes = [2, 32], strides = [1, 1]} : vector<2x96xf32> to vector<2x32xf32>
    %402 = arith.mulf %391, %401 : vector<2x32xf32>
    %403 = arith.addf %400, %402 : vector<2x32xf32>
    %404 = math.tanh %403 : vector<2x32xf32>
    %cst_144 = arith.constant 1.000000e+00 : f32
    %405 = vector.broadcast %cst_144 : f32 to vector<2x32xf32>
    %406 = arith.subf %405, %399 : vector<2x32xf32>
    %407 = arith.mulf %406, %404 : vector<2x32xf32>
    %408 = arith.mulf %399, %347 : vector<2x32xf32>
    %409 = arith.addf %407, %408 : vector<2x32xf32>
    %c2_145 = arith.constant 2 : index
    %c0_146 = arith.constant 0 : index
    %410 = vector.load %arg40[%c2_145, %c0_146] : memref<16x32xf32, #tpu.memory_space<vmem>>, vector<2x32xf32>
    tpu.vector_store %arg40[%c2_145, %c0_146], %409 {strides = array<i32>} : memref<16x32xf32, #tpu.memory_space<vmem>>, vector<2x32xf32>,
    %c12_147 = arith.constant 12 : index
    %c0_148 = arith.constant 0 : index
    %411 = vector.load %arg38[%c12_147, %c0_148] : memref<16x96xf32, #tpu.memory_space<vmem>>, vector<2x96xf32>
    %cst_149 = arith.constant dense<0.000000e+00> : vector<2x96xf32>
    %412 = tpu.matmul %378, %314, %cst_149 {dimension_numbers = #tpu.dot_dimension_numbers<[1], [0], [0], [1], [0, 0, 1, 1], [], []>} : vector<2x32xf32>, vector<32x96xf32>, vector<2x96xf32> -> vector<2x96xf32>
    %413 = vector.broadcast %315 : vector<1x96xf32> to vector<2x96xf32>
    %414 = arith.addf %412, %413 : vector<2x96xf32>
    %415 = vector.extract_strided_slice %411 {offsets = [0, 0], sizes = [2, 32], strides = [1, 1]} : vector<2x96xf32> to vector<2x32xf32>
    %416 = vector.extract_strided_slice %414 {offsets = [0, 0], sizes = [2, 32], strides = [1, 1]} : vector<2x96xf32> to vector<2x32xf32>
    %417 = arith.addf %415, %416 : vector<2x32xf32>
    %418 = arith.negf %417 : vector<2x32xf32>
    %419 = math.exp %418 : vector<2x32xf32>
    %cst_150 = arith.constant 1.000000e+00 : f32
    %420 = vector.broadcast %cst_150 : f32 to vector<2x32xf32>
    %421 = arith.addf %420, %419 : vector<2x32xf32>
    %422 = arith.divf %420, %421 : vector<2x32xf32>
    %423 = vector.extract_strided_slice %411 {offsets = [0, 32], sizes = [2, 32], strides = [1, 1]} : vector<2x96xf32> to vector<2x32xf32>
    %424 = vector.extract_strided_slice %414 {offsets = [0, 32], sizes = [2, 32], strides = [1, 1]} : vector<2x96xf32> to vector<2x32xf32>
    %425 = arith.addf %423, %424 : vector<2x32xf32>
    %426 = arith.negf %425 : vector<2x32xf32>
    %427 = math.exp %426 : vector<2x32xf32>
    %cst_151 = arith.constant 1.000000e+00 : f32
    %428 = vector.broadcast %cst_151 : f32 to vector<2x32xf32>
    %429 = arith.addf %428, %427 : vector<2x32xf32>
    %430 = arith.divf %428, %429 : vector<2x32xf32>
    %431 = vector.extract_strided_slice %411 {offsets = [0, 64], sizes = [2, 32], strides = [1, 1]} : vector<2x96xf32> to vector<2x32xf32>
    %432 = vector.extract_strided_slice %414 {offsets = [0, 64], sizes = [2, 32], strides = [1, 1]} : vector<2x96xf32> to vector<2x32xf32>
    %433 = arith.mulf %422, %432 : vector<2x32xf32>
    %434 = arith.addf %431, %433 : vector<2x32xf32>
    %435 = math.tanh %434 : vector<2x32xf32>
    %cst_152 = arith.constant 1.000000e+00 : f32
    %436 = vector.broadcast %cst_152 : f32 to vector<2x32xf32>
    %437 = arith.subf %436, %430 : vector<2x32xf32>
    %438 = arith.mulf %437, %435 : vector<2x32xf32>
    %439 = arith.mulf %430, %378 : vector<2x32xf32>
    %440 = arith.addf %438, %439 : vector<2x32xf32>
    %c12_153 = arith.constant 12 : index
    %c0_154 = arith.constant 0 : index
    %441 = vector.load %arg41[%c12_153, %c0_154] : memref<16x32xf32, #tpu.memory_space<vmem>>, vector<2x32xf32>
    tpu.vector_store %arg41[%c12_153, %c0_154], %440 {strides = array<i32>} : memref<16x32xf32, #tpu.memory_space<vmem>>, vector<2x32xf32>,
    %c4_155 = arith.constant 4 : index
    %c0_156 = arith.constant 0 : index
    %442 = vector.load %arg37[%c4_155, %c0_156] : memref<16x96xf32, #tpu.memory_space<vmem>>, vector<2x96xf32>
    %cst_157 = arith.constant dense<0.000000e+00> : vector<2x96xf32>
    %443 = tpu.matmul %409, %312, %cst_157 {dimension_numbers = #tpu.dot_dimension_numbers<[1], [0], [0], [1], [0, 0, 1, 1], [], []>} : vector<2x32xf32>, vector<32x96xf32>, vector<2x96xf32> -> vector<2x96xf32>
    %444 = vector.broadcast %313 : vector<1x96xf32> to vector<2x96xf32>
    %445 = arith.addf %443, %444 : vector<2x96xf32>
    %446 = vector.extract_strided_slice %442 {offsets = [0, 0], sizes = [2, 32], strides = [1, 1]} : vector<2x96xf32> to vector<2x32xf32>
    %447 = vector.extract_strided_slice %445 {offsets = [0, 0], sizes = [2, 32], strides = [1, 1]} : vector<2x96xf32> to vector<2x32xf32>
    %448 = arith.addf %446, %447 : vector<2x32xf32>
    %449 = arith.negf %448 : vector<2x32xf32>
    %450 = math.exp %449 : vector<2x32xf32>
    %cst_158 = arith.constant 1.000000e+00 : f32
    %451 = vector.broadcast %cst_158 : f32 to vector<2x32xf32>
    %452 = arith.addf %451, %450 : vector<2x32xf32>
    %453 = arith.divf %451, %452 : vector<2x32xf32>
    %454 = vector.extract_strided_slice %442 {offsets = [0, 32], sizes = [2, 32], strides = [1, 1]} : vector<2x96xf32> to vector<2x32xf32>
    %455 = vector.extract_strided_slice %445 {offsets = [0, 32], sizes = [2, 32], strides = [1, 1]} : vector<2x96xf32> to vector<2x32xf32>
    %456 = arith.addf %454, %455 : vector<2x32xf32>
    %457 = arith.negf %456 : vector<2x32xf32>
    %458 = math.exp %457 : vector<2x32xf32>
    %cst_159 = arith.constant 1.000000e+00 : f32
    %459 = vector.broadcast %cst_159 : f32 to vector<2x32xf32>
    %460 = arith.addf %459, %458 : vector<2x32xf32>
    %461 = arith.divf %459, %460 : vector<2x32xf32>
    %462 = vector.extract_strided_slice %442 {offsets = [0, 64], sizes = [2, 32], strides = [1, 1]} : vector<2x96xf32> to vector<2x32xf32>
    %463 = vector.extract_strided_slice %445 {offsets = [0, 64], sizes = [2, 32], strides = [1, 1]} : vector<2x96xf32> to vector<2x32xf32>
    %464 = arith.mulf %453, %463 : vector<2x32xf32>
    %465 = arith.addf %462, %464 : vector<2x32xf32>
    %466 = math.tanh %465 : vector<2x32xf32>
    %cst_160 = arith.constant 1.000000e+00 : f32
    %467 = vector.broadcast %cst_160 : f32 to vector<2x32xf32>
    %468 = arith.subf %467, %461 : vector<2x32xf32>
    %469 = arith.mulf %468, %466 : vector<2x32xf32>
    %470 = arith.mulf %461, %409 : vector<2x32xf32>
    %471 = arith.addf %469, %470 : vector<2x32xf32>
    %c4_161 = arith.constant 4 : index
    %c0_162 = arith.constant 0 : index
    %472 = vector.load %arg40[%c4_161, %c0_162] : memref<16x32xf32, #tpu.memory_space<vmem>>, vector<2x32xf32>
    tpu.vector_store %arg40[%c4_161, %c0_162], %471 {strides = array<i32>} : memref<16x32xf32, #tpu.memory_space<vmem>>, vector<2x32xf32>,
    %c10_163 = arith.constant 10 : index
    %c0_164 = arith.constant 0 : index
    %473 = vector.load %arg38[%c10_163, %c0_164] : memref<16x96xf32, #tpu.memory_space<vmem>>, vector<2x96xf32>
    %cst_165 = arith.constant dense<0.000000e+00> : vector<2x96xf32>
    %474 = tpu.matmul %440, %314, %cst_165 {dimension_numbers = #tpu.dot_dimension_numbers<[1], [0], [0], [1], [0, 0, 1, 1], [], []>} : vector<2x32xf32>, vector<32x96xf32>, vector<2x96xf32> -> vector<2x96xf32>
    %475 = vector.broadcast %315 : vector<1x96xf32> to vector<2x96xf32>
    %476 = arith.addf %474, %475 : vector<2x96xf32>
    %477 = vector.extract_strided_slice %473 {offsets = [0, 0], sizes = [2, 32], strides = [1, 1]} : vector<2x96xf32> to vector<2x32xf32>
    %478 = vector.extract_strided_slice %476 {offsets = [0, 0], sizes = [2, 32], strides = [1, 1]} : vector<2x96xf32> to vector<2x32xf32>
    %479 = arith.addf %477, %478 : vector<2x32xf32>
    %480 = arith.negf %479 : vector<2x32xf32>
    %481 = math.exp %480 : vector<2x32xf32>
    %cst_166 = arith.constant 1.000000e+00 : f32
    %482 = vector.broadcast %cst_166 : f32 to vector<2x32xf32>
    %483 = arith.addf %482, %481 : vector<2x32xf32>
    %484 = arith.divf %482, %483 : vector<2x32xf32>
    %485 = vector.extract_strided_slice %473 {offsets = [0, 32], sizes = [2, 32], strides = [1, 1]} : vector<2x96xf32> to vector<2x32xf32>
    %486 = vector.extract_strided_slice %476 {offsets = [0, 32], sizes = [2, 32], strides = [1, 1]} : vector<2x96xf32> to vector<2x32xf32>
    %487 = arith.addf %485, %486 : vector<2x32xf32>
    %488 = arith.negf %487 : vector<2x32xf32>
    %489 = math.exp %488 : vector<2x32xf32>
    %cst_167 = arith.constant 1.000000e+00 : f32
    %490 = vector.broadcast %cst_167 : f32 to vector<2x32xf32>
    %491 = arith.addf %490, %489 : vector<2x32xf32>
    %492 = arith.divf %490, %491 : vector<2x32xf32>
    %493 = vector.extract_strided_slice %473 {offsets = [0, 64], sizes = [2, 32], strides = [1, 1]} : vector<2x96xf32> to vector<2x32xf32>
    %494 = vector.extract_strided_slice %476 {offsets = [0, 64], sizes = [2, 32], strides = [1, 1]} : vector<2x96xf32> to vector<2x32xf32>
    %495 = arith.mulf %484, %494 : vector<2x32xf32>
    %496 = arith.addf %493, %495 : vector<2x32xf32>
    %497 = math.tanh %496 : vector<2x32xf32>
    %cst_168 = arith.constant 1.000000e+00 : f32
    %498 = vector.broadcast %cst_168 : f32 to vector<2x32xf32>
    %499 = arith.subf %498, %492 : vector<2x32xf32>
    %500 = arith.mulf %499, %497 : vector<2x32xf32>
    %501 = arith.mulf %492, %440 : vector<2x32xf32>
    %502 = arith.addf %500, %501 : vector<2x32xf32>
    %c10_169 = arith.constant 10 : index
    %c0_170 = arith.constant 0 : index
    %503 = vector.load %arg41[%c10_169, %c0_170] : memref<16x32xf32, #tpu.memory_space<vmem>>, vector<2x32xf32>
    tpu.vector_store %arg41[%c10_169, %c0_170], %502 {strides = array<i32>} : memref<16x32xf32, #tpu.memory_space<vmem>>, vector<2x32xf32>,
    %c6_171 = arith.constant 6 : index
    %c0_172 = arith.constant 0 : index
    %504 = vector.load %arg37[%c6_171, %c0_172] : memref<16x96xf32, #tpu.memory_space<vmem>>, vector<2x96xf32>
    %cst_173 = arith.constant dense<0.000000e+00> : vector<2x96xf32>
    %505 = tpu.matmul %471, %312, %cst_173 {dimension_numbers = #tpu.dot_dimension_numbers<[1], [0], [0], [1], [0, 0, 1, 1], [], []>} : vector<2x32xf32>, vector<32x96xf32>, vector<2x96xf32> -> vector<2x96xf32>
    %506 = vector.broadcast %313 : vector<1x96xf32> to vector<2x96xf32>
    %507 = arith.addf %505, %506 : vector<2x96xf32>
    %508 = vector.extract_strided_slice %504 {offsets = [0, 0], sizes = [2, 32], strides = [1, 1]} : vector<2x96xf32> to vector<2x32xf32>
    %509 = vector.extract_strided_slice %507 {offsets = [0, 0], sizes = [2, 32], strides = [1, 1]} : vector<2x96xf32> to vector<2x32xf32>
    %510 = arith.addf %508, %509 : vector<2x32xf32>
    %511 = arith.negf %510 : vector<2x32xf32>
    %512 = math.exp %511 : vector<2x32xf32>
    %cst_174 = arith.constant 1.000000e+00 : f32
    %513 = vector.broadcast %cst_174 : f32 to vector<2x32xf32>
    %514 = arith.addf %513, %512 : vector<2x32xf32>
    %515 = arith.divf %513, %514 : vector<2x32xf32>
    %516 = vector.extract_strided_slice %504 {offsets = [0, 32], sizes = [2, 32], strides = [1, 1]} : vector<2x96xf32> to vector<2x32xf32>
    %517 = vector.extract_strided_slice %507 {offsets = [0, 32], sizes = [2, 32], strides = [1, 1]} : vector<2x96xf32> to vector<2x32xf32>
    %518 = arith.addf %516, %517 : vector<2x32xf32>
    %519 = arith.negf %518 : vector<2x32xf32>
    %520 = math.exp %519 : vector<2x32xf32>
    %cst_175 = arith.constant 1.000000e+00 : f32
    %521 = vector.broadcast %cst_175 : f32 to vector<2x32xf32>
    %522 = arith.addf %521, %520 : vector<2x32xf32>
    %523 = arith.divf %521, %522 : vector<2x32xf32>
    %524 = vector.extract_strided_slice %504 {offsets = [0, 64], sizes = [2, 32], strides = [1, 1]} : vector<2x96xf32> to vector<2x32xf32>
    %525 = vector.extract_strided_slice %507 {offsets = [0, 64], sizes = [2, 32], strides = [1, 1]} : vector<2x96xf32> to vector<2x32xf32>
    %526 = arith.mulf %515, %525 : vector<2x32xf32>
    %527 = arith.addf %524, %526 : vector<2x32xf32>
    %528 = math.tanh %527 : vector<2x32xf32>
    %cst_176 = arith.constant 1.000000e+00 : f32
    %529 = vector.broadcast %cst_176 : f32 to vector<2x32xf32>
    %530 = arith.subf %529, %523 : vector<2x32xf32>
    %531 = arith.mulf %530, %528 : vector<2x32xf32>
    %532 = arith.mulf %523, %471 : vector<2x32xf32>
    %533 = arith.addf %531, %532 : vector<2x32xf32>
    %c6_177 = arith.constant 6 : index
    %c0_178 = arith.constant 0 : index
    %534 = vector.load %arg40[%c6_177, %c0_178] : memref<16x32xf32, #tpu.memory_space<vmem>>, vector<2x32xf32>
    tpu.vector_store %arg40[%c6_177, %c0_178], %533 {strides = array<i32>} : memref<16x32xf32, #tpu.memory_space<vmem>>, vector<2x32xf32>,
    %c8_179 = arith.constant 8 : index
    %c0_180 = arith.constant 0 : index
    %535 = vector.load %arg38[%c8_179, %c0_180] : memref<16x96xf32, #tpu.memory_space<vmem>>, vector<2x96xf32>
    %cst_181 = arith.constant dense<0.000000e+00> : vector<2x96xf32>
    %536 = tpu.matmul %502, %314, %cst_181 {dimension_numbers = #tpu.dot_dimension_numbers<[1], [0], [0], [1], [0, 0, 1, 1], [], []>} : vector<2x32xf32>, vector<32x96xf32>, vector<2x96xf32> -> vector<2x96xf32>
    %537 = vector.broadcast %315 : vector<1x96xf32> to vector<2x96xf32>
    %538 = arith.addf %536, %537 : vector<2x96xf32>
    %539 = vector.extract_strided_slice %535 {offsets = [0, 0], sizes = [2, 32], strides = [1, 1]} : vector<2x96xf32> to vector<2x32xf32>
    %540 = vector.extract_strided_slice %538 {offsets = [0, 0], sizes = [2, 32], strides = [1, 1]} : vector<2x96xf32> to vector<2x32xf32>
    %541 = arith.addf %539, %540 : vector<2x32xf32>
    %542 = arith.negf %541 : vector<2x32xf32>
    %543 = math.exp %542 : vector<2x32xf32>
    %cst_182 = arith.constant 1.000000e+00 : f32
    %544 = vector.broadcast %cst_182 : f32 to vector<2x32xf32>
    %545 = arith.addf %544, %543 : vector<2x32xf32>
    %546 = arith.divf %544, %545 : vector<2x32xf32>
    %547 = vector.extract_strided_slice %535 {offsets = [0, 32], sizes = [2, 32], strides = [1, 1]} : vector<2x96xf32> to vector<2x32xf32>
    %548 = vector.extract_strided_slice %538 {offsets = [0, 32], sizes = [2, 32], strides = [1, 1]} : vector<2x96xf32> to vector<2x32xf32>
    %549 = arith.addf %547, %548 : vector<2x32xf32>
    %550 = arith.negf %549 : vector<2x32xf32>
    %551 = math.exp %550 : vector<2x32xf32>
    %cst_183 = arith.constant 1.000000e+00 : f32
    %552 = vector.broadcast %cst_183 : f32 to vector<2x32xf32>
    %553 = arith.addf %552, %551 : vector<2x32xf32>
    %554 = arith.divf %552, %553 : vector<2x32xf32>
    %555 = vector.extract_strided_slice %535 {offsets = [0, 64], sizes = [2, 32], strides = [1, 1]} : vector<2x96xf32> to vector<2x32xf32>
    %556 = vector.extract_strided_slice %538 {offsets = [0, 64], sizes = [2, 32], strides = [1, 1]} : vector<2x96xf32> to vector<2x32xf32>
    %557 = arith.mulf %546, %556 : vector<2x32xf32>
    %558 = arith.addf %555, %557 : vector<2x32xf32>
    %559 = math.tanh %558 : vector<2x32xf32>
    %cst_184 = arith.constant 1.000000e+00 : f32
    %560 = vector.broadcast %cst_184 : f32 to vector<2x32xf32>
    %561 = arith.subf %560, %554 : vector<2x32xf32>
    %562 = arith.mulf %561, %559 : vector<2x32xf32>
    %563 = arith.mulf %554, %502 : vector<2x32xf32>
    %564 = arith.addf %562, %563 : vector<2x32xf32>
    %c8_185 = arith.constant 8 : index
    %c0_186 = arith.constant 0 : index
    %565 = vector.load %arg41[%c8_185, %c0_186] : memref<16x32xf32, #tpu.memory_space<vmem>>, vector<2x32xf32>
    tpu.vector_store %arg41[%c8_185, %c0_186], %564 {strides = array<i32>} : memref<16x32xf32, #tpu.memory_space<vmem>>, vector<2x32xf32>,
    %c8_187 = arith.constant 8 : index
    %c0_188 = arith.constant 0 : index
    %566 = vector.load %arg37[%c8_187, %c0_188] : memref<16x96xf32, #tpu.memory_space<vmem>>, vector<2x96xf32>
    %cst_189 = arith.constant dense<0.000000e+00> : vector<2x96xf32>
    %567 = tpu.matmul %533, %312, %cst_189 {dimension_numbers = #tpu.dot_dimension_numbers<[1], [0], [0], [1], [0, 0, 1, 1], [], []>} : vector<2x32xf32>, vector<32x96xf32>, vector<2x96xf32> -> vector<2x96xf32>
    %568 = vector.broadcast %313 : vector<1x96xf32> to vector<2x96xf32>
    %569 = arith.addf %567, %568 : vector<2x96xf32>
    %570 = vector.extract_strided_slice %566 {offsets = [0, 0], sizes = [2, 32], strides = [1, 1]} : vector<2x96xf32> to vector<2x32xf32>
    %571 = vector.extract_strided_slice %569 {offsets = [0, 0], sizes = [2, 32], strides = [1, 1]} : vector<2x96xf32> to vector<2x32xf32>
    %572 = arith.addf %570, %571 : vector<2x32xf32>
    %573 = arith.negf %572 : vector<2x32xf32>
    %574 = math.exp %573 : vector<2x32xf32>
    %cst_190 = arith.constant 1.000000e+00 : f32
    %575 = vector.broadcast %cst_190 : f32 to vector<2x32xf32>
    %576 = arith.addf %575, %574 : vector<2x32xf32>
    %577 = arith.divf %575, %576 : vector<2x32xf32>
    %578 = vector.extract_strided_slice %566 {offsets = [0, 32], sizes = [2, 32], strides = [1, 1]} : vector<2x96xf32> to vector<2x32xf32>
    %579 = vector.extract_strided_slice %569 {offsets = [0, 32], sizes = [2, 32], strides = [1, 1]} : vector<2x96xf32> to vector<2x32xf32>
    %580 = arith.addf %578, %579 : vector<2x32xf32>
    %581 = arith.negf %580 : vector<2x32xf32>
    %582 = math.exp %581 : vector<2x32xf32>
    %cst_191 = arith.constant 1.000000e+00 : f32
    %583 = vector.broadcast %cst_191 : f32 to vector<2x32xf32>
    %584 = arith.addf %583, %582 : vector<2x32xf32>
    %585 = arith.divf %583, %584 : vector<2x32xf32>
    %586 = vector.extract_strided_slice %566 {offsets = [0, 64], sizes = [2, 32], strides = [1, 1]} : vector<2x96xf32> to vector<2x32xf32>
    %587 = vector.extract_strided_slice %569 {offsets = [0, 64], sizes = [2, 32], strides = [1, 1]} : vector<2x96xf32> to vector<2x32xf32>
    %588 = arith.mulf %577, %587 : vector<2x32xf32>
    %589 = arith.addf %586, %588 : vector<2x32xf32>
    %590 = math.tanh %589 : vector<2x32xf32>
    %cst_192 = arith.constant 1.000000e+00 : f32
    %591 = vector.broadcast %cst_192 : f32 to vector<2x32xf32>
    %592 = arith.subf %591, %585 : vector<2x32xf32>
    %593 = arith.mulf %592, %590 : vector<2x32xf32>
    %594 = arith.mulf %585, %533 : vector<2x32xf32>
    %595 = arith.addf %593, %594 : vector<2x32xf32>
    %c8_193 = arith.constant 8 : index
    %c0_194 = arith.constant 0 : index
    %596 = vector.load %arg40[%c8_193, %c0_194] : memref<16x32xf32, #tpu.memory_space<vmem>>, vector<2x32xf32>
    tpu.vector_store %arg40[%c8_193, %c0_194], %595 {strides = array<i32>} : memref<16x32xf32, #tpu.memory_space<vmem>>, vector<2x32xf32>,
    %c6_195 = arith.constant 6 : index
    %c0_196 = arith.constant 0 : index
    %597 = vector.load %arg38[%c6_195, %c0_196] : memref<16x96xf32, #tpu.memory_space<vmem>>, vector<2x96xf32>
    %cst_197 = arith.constant dense<0.000000e+00> : vector<2x96xf32>
    %598 = tpu.matmul %564, %314, %cst_197 {dimension_numbers = #tpu.dot_dimension_numbers<[1], [0], [0], [1], [0, 0, 1, 1], [], []>} : vector<2x32xf32>, vector<32x96xf32>, vector<2x96xf32> -> vector<2x96xf32>
    %599 = vector.broadcast %315 : vector<1x96xf32> to vector<2x96xf32>
    %600 = arith.addf %598, %599 : vector<2x96xf32>
    %601 = vector.extract_strided_slice %597 {offsets = [0, 0], sizes = [2, 32], strides = [1, 1]} : vector<2x96xf32> to vector<2x32xf32>
    %602 = vector.extract_strided_slice %600 {offsets = [0, 0], sizes = [2, 32], strides = [1, 1]} : vector<2x96xf32> to vector<2x32xf32>
    %603 = arith.addf %601, %602 : vector<2x32xf32>
    %604 = arith.negf %603 : vector<2x32xf32>
    %605 = math.exp %604 : vector<2x32xf32>
    %cst_198 = arith.constant 1.000000e+00 : f32
    %606 = vector.broadcast %cst_198 : f32 to vector<2x32xf32>
    %607 = arith.addf %606, %605 : vector<2x32xf32>
    %608 = arith.divf %606, %607 : vector<2x32xf32>
    %609 = vector.extract_strided_slice %597 {offsets = [0, 32], sizes = [2, 32], strides = [1, 1]} : vector<2x96xf32> to vector<2x32xf32>
    %610 = vector.extract_strided_slice %600 {offsets = [0, 32], sizes = [2, 32], strides = [1, 1]} : vector<2x96xf32> to vector<2x32xf32>
    %611 = arith.addf %609, %610 : vector<2x32xf32>
    %612 = arith.negf %611 : vector<2x32xf32>
    %613 = math.exp %612 : vector<2x32xf32>
    %cst_199 = arith.constant 1.000000e+00 : f32
    %614 = vector.broadcast %cst_199 : f32 to vector<2x32xf32>
    %615 = arith.addf %614, %613 : vector<2x32xf32>
    %616 = arith.divf %614, %615 : vector<2x32xf32>
    %617 = vector.extract_strided_slice %597 {offsets = [0, 64], sizes = [2, 32], strides = [1, 1]} : vector<2x96xf32> to vector<2x32xf32>
    %618 = vector.extract_strided_slice %600 {offsets = [0, 64], sizes = [2, 32], strides = [1, 1]} : vector<2x96xf32> to vector<2x32xf32>
    %619 = arith.mulf %608, %618 : vector<2x32xf32>
    %620 = arith.addf %617, %619 : vector<2x32xf32>
    %621 = math.tanh %620 : vector<2x32xf32>
    %cst_200 = arith.constant 1.000000e+00 : f32
    %622 = vector.broadcast %cst_200 : f32 to vector<2x32xf32>
    %623 = arith.subf %622, %616 : vector<2x32xf32>
    %624 = arith.mulf %623, %621 : vector<2x32xf32>
    %625 = arith.mulf %616, %564 : vector<2x32xf32>
    %626 = arith.addf %624, %625 : vector<2x32xf32>
    %c6_201 = arith.constant 6 : index
    %c0_202 = arith.constant 0 : index
    %627 = vector.load %arg41[%c6_201, %c0_202] : memref<16x32xf32, #tpu.memory_space<vmem>>, vector<2x32xf32>
    tpu.vector_store %arg41[%c6_201, %c0_202], %626 {strides = array<i32>} : memref<16x32xf32, #tpu.memory_space<vmem>>, vector<2x32xf32>,
    %c10_203 = arith.constant 10 : index
    %c0_204 = arith.constant 0 : index
    %628 = vector.load %arg37[%c10_203, %c0_204] : memref<16x96xf32, #tpu.memory_space<vmem>>, vector<2x96xf32>
    %cst_205 = arith.constant dense<0.000000e+00> : vector<2x96xf32>
    %629 = tpu.matmul %595, %312, %cst_205 {dimension_numbers = #tpu.dot_dimension_numbers<[1], [0], [0], [1], [0, 0, 1, 1], [], []>} : vector<2x32xf32>, vector<32x96xf32>, vector<2x96xf32> -> vector<2x96xf32>
    %630 = vector.broadcast %313 : vector<1x96xf32> to vector<2x96xf32>
    %631 = arith.addf %629, %630 : vector<2x96xf32>
    %632 = vector.extract_strided_slice %628 {offsets = [0, 0], sizes = [2, 32], strides = [1, 1]} : vector<2x96xf32> to vector<2x32xf32>
    %633 = vector.extract_strided_slice %631 {offsets = [0, 0], sizes = [2, 32], strides = [1, 1]} : vector<2x96xf32> to vector<2x32xf32>
    %634 = arith.addf %632, %633 : vector<2x32xf32>
    %635 = arith.negf %634 : vector<2x32xf32>
    %636 = math.exp %635 : vector<2x32xf32>
    %cst_206 = arith.constant 1.000000e+00 : f32
    %637 = vector.broadcast %cst_206 : f32 to vector<2x32xf32>
    %638 = arith.addf %637, %636 : vector<2x32xf32>
    %639 = arith.divf %637, %638 : vector<2x32xf32>
    %640 = vector.extract_strided_slice %628 {offsets = [0, 32], sizes = [2, 32], strides = [1, 1]} : vector<2x96xf32> to vector<2x32xf32>
    %641 = vector.extract_strided_slice %631 {offsets = [0, 32], sizes = [2, 32], strides = [1, 1]} : vector<2x96xf32> to vector<2x32xf32>
    %642 = arith.addf %640, %641 : vector<2x32xf32>
    %643 = arith.negf %642 : vector<2x32xf32>
    %644 = math.exp %643 : vector<2x32xf32>
    %cst_207 = arith.constant 1.000000e+00 : f32
    %645 = vector.broadcast %cst_207 : f32 to vector<2x32xf32>
    %646 = arith.addf %645, %644 : vector<2x32xf32>
    %647 = arith.divf %645, %646 : vector<2x32xf32>
    %648 = vector.extract_strided_slice %628 {offsets = [0, 64], sizes = [2, 32], strides = [1, 1]} : vector<2x96xf32> to vector<2x32xf32>
    %649 = vector.extract_strided_slice %631 {offsets = [0, 64], sizes = [2, 32], strides = [1, 1]} : vector<2x96xf32> to vector<2x32xf32>
    %650 = arith.mulf %639, %649 : vector<2x32xf32>
    %651 = arith.addf %648, %650 : vector<2x32xf32>
    %652 = math.tanh %651 : vector<2x32xf32>
    %cst_208 = arith.constant 1.000000e+00 : f32
    %653 = vector.broadcast %cst_208 : f32 to vector<2x32xf32>
    %654 = arith.subf %653, %647 : vector<2x32xf32>
    %655 = arith.mulf %654, %652 : vector<2x32xf32>
    %656 = arith.mulf %647, %595 : vector<2x32xf32>
    %657 = arith.addf %655, %656 : vector<2x32xf32>
    %c10_209 = arith.constant 10 : index
    %c0_210 = arith.constant 0 : index
    %658 = vector.load %arg40[%c10_209, %c0_210] : memref<16x32xf32, #tpu.memory_space<vmem>>, vector<2x32xf32>
    tpu.vector_store %arg40[%c10_209, %c0_210], %657 {strides = array<i32>} : memref<16x32xf32, #tpu.memory_space<vmem>>, vector<2x32xf32>,
    %c4_211 = arith.constant 4 : index
    %c0_212 = arith.constant 0 : index
    %659 = vector.load %arg38[%c4_211, %c0_212] : memref<16x96xf32, #tpu.memory_space<vmem>>, vector<2x96xf32>
    %cst_213 = arith.constant dense<0.000000e+00> : vector<2x96xf32>
    %660 = tpu.matmul %626, %314, %cst_213 {dimension_numbers = #tpu.dot_dimension_numbers<[1], [0], [0], [1], [0, 0, 1, 1], [], []>} : vector<2x32xf32>, vector<32x96xf32>, vector<2x96xf32> -> vector<2x96xf32>
    %661 = vector.broadcast %315 : vector<1x96xf32> to vector<2x96xf32>
    %662 = arith.addf %660, %661 : vector<2x96xf32>
    %663 = vector.extract_strided_slice %659 {offsets = [0, 0], sizes = [2, 32], strides = [1, 1]} : vector<2x96xf32> to vector<2x32xf32>
    %664 = vector.extract_strided_slice %662 {offsets = [0, 0], sizes = [2, 32], strides = [1, 1]} : vector<2x96xf32> to vector<2x32xf32>
    %665 = arith.addf %663, %664 : vector<2x32xf32>
    %666 = arith.negf %665 : vector<2x32xf32>
    %667 = math.exp %666 : vector<2x32xf32>
    %cst_214 = arith.constant 1.000000e+00 : f32
    %668 = vector.broadcast %cst_214 : f32 to vector<2x32xf32>
    %669 = arith.addf %668, %667 : vector<2x32xf32>
    %670 = arith.divf %668, %669 : vector<2x32xf32>
    %671 = vector.extract_strided_slice %659 {offsets = [0, 32], sizes = [2, 32], strides = [1, 1]} : vector<2x96xf32> to vector<2x32xf32>
    %672 = vector.extract_strided_slice %662 {offsets = [0, 32], sizes = [2, 32], strides = [1, 1]} : vector<2x96xf32> to vector<2x32xf32>
    %673 = arith.addf %671, %672 : vector<2x32xf32>
    %674 = arith.negf %673 : vector<2x32xf32>
    %675 = math.exp %674 : vector<2x32xf32>
    %cst_215 = arith.constant 1.000000e+00 : f32
    %676 = vector.broadcast %cst_215 : f32 to vector<2x32xf32>
    %677 = arith.addf %676, %675 : vector<2x32xf32>
    %678 = arith.divf %676, %677 : vector<2x32xf32>
    %679 = vector.extract_strided_slice %659 {offsets = [0, 64], sizes = [2, 32], strides = [1, 1]} : vector<2x96xf32> to vector<2x32xf32>
    %680 = vector.extract_strided_slice %662 {offsets = [0, 64], sizes = [2, 32], strides = [1, 1]} : vector<2x96xf32> to vector<2x32xf32>
    %681 = arith.mulf %670, %680 : vector<2x32xf32>
    %682 = arith.addf %679, %681 : vector<2x32xf32>
    %683 = math.tanh %682 : vector<2x32xf32>
    %cst_216 = arith.constant 1.000000e+00 : f32
    %684 = vector.broadcast %cst_216 : f32 to vector<2x32xf32>
    %685 = arith.subf %684, %678 : vector<2x32xf32>
    %686 = arith.mulf %685, %683 : vector<2x32xf32>
    %687 = arith.mulf %678, %626 : vector<2x32xf32>
    %688 = arith.addf %686, %687 : vector<2x32xf32>
    %c4_217 = arith.constant 4 : index
    %c0_218 = arith.constant 0 : index
    %689 = vector.load %arg41[%c4_217, %c0_218] : memref<16x32xf32, #tpu.memory_space<vmem>>, vector<2x32xf32>
    tpu.vector_store %arg41[%c4_217, %c0_218], %688 {strides = array<i32>} : memref<16x32xf32, #tpu.memory_space<vmem>>, vector<2x32xf32>,
    %c12_219 = arith.constant 12 : index
    %c0_220 = arith.constant 0 : index
    %690 = vector.load %arg37[%c12_219, %c0_220] : memref<16x96xf32, #tpu.memory_space<vmem>>, vector<2x96xf32>
    %cst_221 = arith.constant dense<0.000000e+00> : vector<2x96xf32>
    %691 = tpu.matmul %657, %312, %cst_221 {dimension_numbers = #tpu.dot_dimension_numbers<[1], [0], [0], [1], [0, 0, 1, 1], [], []>} : vector<2x32xf32>, vector<32x96xf32>, vector<2x96xf32> -> vector<2x96xf32>
    %692 = vector.broadcast %313 : vector<1x96xf32> to vector<2x96xf32>
    %693 = arith.addf %691, %692 : vector<2x96xf32>
    %694 = vector.extract_strided_slice %690 {offsets = [0, 0], sizes = [2, 32], strides = [1, 1]} : vector<2x96xf32> to vector<2x32xf32>
    %695 = vector.extract_strided_slice %693 {offsets = [0, 0], sizes = [2, 32], strides = [1, 1]} : vector<2x96xf32> to vector<2x32xf32>
    %696 = arith.addf %694, %695 : vector<2x32xf32>
    %697 = arith.negf %696 : vector<2x32xf32>
    %698 = math.exp %697 : vector<2x32xf32>
    %cst_222 = arith.constant 1.000000e+00 : f32
    %699 = vector.broadcast %cst_222 : f32 to vector<2x32xf32>
    %700 = arith.addf %699, %698 : vector<2x32xf32>
    %701 = arith.divf %699, %700 : vector<2x32xf32>
    %702 = vector.extract_strided_slice %690 {offsets = [0, 32], sizes = [2, 32], strides = [1, 1]} : vector<2x96xf32> to vector<2x32xf32>
    %703 = vector.extract_strided_slice %693 {offsets = [0, 32], sizes = [2, 32], strides = [1, 1]} : vector<2x96xf32> to vector<2x32xf32>
    %704 = arith.addf %702, %703 : vector<2x32xf32>
    %705 = arith.negf %704 : vector<2x32xf32>
    %706 = math.exp %705 : vector<2x32xf32>
    %cst_223 = arith.constant 1.000000e+00 : f32
    %707 = vector.broadcast %cst_223 : f32 to vector<2x32xf32>
    %708 = arith.addf %707, %706 : vector<2x32xf32>
    %709 = arith.divf %707, %708 : vector<2x32xf32>
    %710 = vector.extract_strided_slice %690 {offsets = [0, 64], sizes = [2, 32], strides = [1, 1]} : vector<2x96xf32> to vector<2x32xf32>
    %711 = vector.extract_strided_slice %693 {offsets = [0, 64], sizes = [2, 32], strides = [1, 1]} : vector<2x96xf32> to vector<2x32xf32>
    %712 = arith.mulf %701, %711 : vector<2x32xf32>
    %713 = arith.addf %710, %712 : vector<2x32xf32>
    %714 = math.tanh %713 : vector<2x32xf32>
    %cst_224 = arith.constant 1.000000e+00 : f32
    %715 = vector.broadcast %cst_224 : f32 to vector<2x32xf32>
    %716 = arith.subf %715, %709 : vector<2x32xf32>
    %717 = arith.mulf %716, %714 : vector<2x32xf32>
    %718 = arith.mulf %709, %657 : vector<2x32xf32>
    %719 = arith.addf %717, %718 : vector<2x32xf32>
    %c12_225 = arith.constant 12 : index
    %c0_226 = arith.constant 0 : index
    %720 = vector.load %arg40[%c12_225, %c0_226] : memref<16x32xf32, #tpu.memory_space<vmem>>, vector<2x32xf32>
    tpu.vector_store %arg40[%c12_225, %c0_226], %719 {strides = array<i32>} : memref<16x32xf32, #tpu.memory_space<vmem>>, vector<2x32xf32>,
    %c2_227 = arith.constant 2 : index
    %c0_228 = arith.constant 0 : index
    %721 = vector.load %arg38[%c2_227, %c0_228] : memref<16x96xf32, #tpu.memory_space<vmem>>, vector<2x96xf32>
    %cst_229 = arith.constant dense<0.000000e+00> : vector<2x96xf32>
    %722 = tpu.matmul %688, %314, %cst_229 {dimension_numbers = #tpu.dot_dimension_numbers<[1], [0], [0], [1], [0, 0, 1, 1], [], []>} : vector<2x32xf32>, vector<32x96xf32>, vector<2x96xf32> -> vector<2x96xf32>
    %723 = vector.broadcast %315 : vector<1x96xf32> to vector<2x96xf32>
    %724 = arith.addf %722, %723 : vector<2x96xf32>
    %725 = vector.extract_strided_slice %721 {offsets = [0, 0], sizes = [2, 32], strides = [1, 1]} : vector<2x96xf32> to vector<2x32xf32>
    %726 = vector.extract_strided_slice %724 {offsets = [0, 0], sizes = [2, 32], strides = [1, 1]} : vector<2x96xf32> to vector<2x32xf32>
    %727 = arith.addf %725, %726 : vector<2x32xf32>
    %728 = arith.negf %727 : vector<2x32xf32>
    %729 = math.exp %728 : vector<2x32xf32>
    %cst_230 = arith.constant 1.000000e+00 : f32
    %730 = vector.broadcast %cst_230 : f32 to vector<2x32xf32>
    %731 = arith.addf %730, %729 : vector<2x32xf32>
    %732 = arith.divf %730, %731 : vector<2x32xf32>
    %733 = vector.extract_strided_slice %721 {offsets = [0, 32], sizes = [2, 32], strides = [1, 1]} : vector<2x96xf32> to vector<2x32xf32>
    %734 = vector.extract_strided_slice %724 {offsets = [0, 32], sizes = [2, 32], strides = [1, 1]} : vector<2x96xf32> to vector<2x32xf32>
    %735 = arith.addf %733, %734 : vector<2x32xf32>
    %736 = arith.negf %735 : vector<2x32xf32>
    %737 = math.exp %736 : vector<2x32xf32>
    %cst_231 = arith.constant 1.000000e+00 : f32
    %738 = vector.broadcast %cst_231 : f32 to vector<2x32xf32>
    %739 = arith.addf %738, %737 : vector<2x32xf32>
    %740 = arith.divf %738, %739 : vector<2x32xf32>
    %741 = vector.extract_strided_slice %721 {offsets = [0, 64], sizes = [2, 32], strides = [1, 1]} : vector<2x96xf32> to vector<2x32xf32>
    %742 = vector.extract_strided_slice %724 {offsets = [0, 64], sizes = [2, 32], strides = [1, 1]} : vector<2x96xf32> to vector<2x32xf32>
    %743 = arith.mulf %732, %742 : vector<2x32xf32>
    %744 = arith.addf %741, %743 : vector<2x32xf32>
    %745 = math.tanh %744 : vector<2x32xf32>
    %cst_232 = arith.constant 1.000000e+00 : f32
    %746 = vector.broadcast %cst_232 : f32 to vector<2x32xf32>
    %747 = arith.subf %746, %740 : vector<2x32xf32>
    %748 = arith.mulf %747, %745 : vector<2x32xf32>
    %749 = arith.mulf %740, %688 : vector<2x32xf32>
    %750 = arith.addf %748, %749 : vector<2x32xf32>
    %c2_233 = arith.constant 2 : index
    %c0_234 = arith.constant 0 : index
    %751 = vector.load %arg41[%c2_233, %c0_234] : memref<16x32xf32, #tpu.memory_space<vmem>>, vector<2x32xf32>
    tpu.vector_store %arg41[%c2_233, %c0_234], %750 {strides = array<i32>} : memref<16x32xf32, #tpu.memory_space<vmem>>, vector<2x32xf32>,
    %c14_235 = arith.constant 14 : index
    %c0_236 = arith.constant 0 : index
    %752 = vector.load %arg37[%c14_235, %c0_236] : memref<16x96xf32, #tpu.memory_space<vmem>>, vector<2x96xf32>
    %cst_237 = arith.constant dense<0.000000e+00> : vector<2x96xf32>
    %753 = tpu.matmul %719, %312, %cst_237 {dimension_numbers = #tpu.dot_dimension_numbers<[1], [0], [0], [1], [0, 0, 1, 1], [], []>} : vector<2x32xf32>, vector<32x96xf32>, vector<2x96xf32> -> vector<2x96xf32>
    %754 = vector.broadcast %313 : vector<1x96xf32> to vector<2x96xf32>
    %755 = arith.addf %753, %754 : vector<2x96xf32>
    %756 = vector.extract_strided_slice %752 {offsets = [0, 0], sizes = [2, 32], strides = [1, 1]} : vector<2x96xf32> to vector<2x32xf32>
    %757 = vector.extract_strided_slice %755 {offsets = [0, 0], sizes = [2, 32], strides = [1, 1]} : vector<2x96xf32> to vector<2x32xf32>
    %758 = arith.addf %756, %757 : vector<2x32xf32>
    %759 = arith.negf %758 : vector<2x32xf32>
    %760 = math.exp %759 : vector<2x32xf32>
    %cst_238 = arith.constant 1.000000e+00 : f32
    %761 = vector.broadcast %cst_238 : f32 to vector<2x32xf32>
    %762 = arith.addf %761, %760 : vector<2x32xf32>
    %763 = arith.divf %761, %762 : vector<2x32xf32>
    %764 = vector.extract_strided_slice %752 {offsets = [0, 32], sizes = [2, 32], strides = [1, 1]} : vector<2x96xf32> to vector<2x32xf32>
    %765 = vector.extract_strided_slice %755 {offsets = [0, 32], sizes = [2, 32], strides = [1, 1]} : vector<2x96xf32> to vector<2x32xf32>
    %766 = arith.addf %764, %765 : vector<2x32xf32>
    %767 = arith.negf %766 : vector<2x32xf32>
    %768 = math.exp %767 : vector<2x32xf32>
    %cst_239 = arith.constant 1.000000e+00 : f32
    %769 = vector.broadcast %cst_239 : f32 to vector<2x32xf32>
    %770 = arith.addf %769, %768 : vector<2x32xf32>
    %771 = arith.divf %769, %770 : vector<2x32xf32>
    %772 = vector.extract_strided_slice %752 {offsets = [0, 64], sizes = [2, 32], strides = [1, 1]} : vector<2x96xf32> to vector<2x32xf32>
    %773 = vector.extract_strided_slice %755 {offsets = [0, 64], sizes = [2, 32], strides = [1, 1]} : vector<2x96xf32> to vector<2x32xf32>
    %774 = arith.mulf %763, %773 : vector<2x32xf32>
    %775 = arith.addf %772, %774 : vector<2x32xf32>
    %776 = math.tanh %775 : vector<2x32xf32>
    %cst_240 = arith.constant 1.000000e+00 : f32
    %777 = vector.broadcast %cst_240 : f32 to vector<2x32xf32>
    %778 = arith.subf %777, %771 : vector<2x32xf32>
    %779 = arith.mulf %778, %776 : vector<2x32xf32>
    %780 = arith.mulf %771, %719 : vector<2x32xf32>
    %781 = arith.addf %779, %780 : vector<2x32xf32>
    %c14_241 = arith.constant 14 : index
    %c0_242 = arith.constant 0 : index
    %782 = vector.load %arg40[%c14_241, %c0_242] : memref<16x32xf32, #tpu.memory_space<vmem>>, vector<2x32xf32>
    tpu.vector_store %arg40[%c14_241, %c0_242], %781 {strides = array<i32>} : memref<16x32xf32, #tpu.memory_space<vmem>>, vector<2x32xf32>,
    %c0_243 = arith.constant 0 : index
    %c0_244 = arith.constant 0 : index
    %783 = vector.load %arg38[%c0_243, %c0_244] : memref<16x96xf32, #tpu.memory_space<vmem>>, vector<2x96xf32>
    %cst_245 = arith.constant dense<0.000000e+00> : vector<2x96xf32>
    %784 = tpu.matmul %750, %314, %cst_245 {dimension_numbers = #tpu.dot_dimension_numbers<[1], [0], [0], [1], [0, 0, 1, 1], [], []>} : vector<2x32xf32>, vector<32x96xf32>, vector<2x96xf32> -> vector<2x96xf32>
    %785 = vector.broadcast %315 : vector<1x96xf32> to vector<2x96xf32>
    %786 = arith.addf %784, %785 : vector<2x96xf32>
    %787 = vector.extract_strided_slice %783 {offsets = [0, 0], sizes = [2, 32], strides = [1, 1]} : vector<2x96xf32> to vector<2x32xf32>
    %788 = vector.extract_strided_slice %786 {offsets = [0, 0], sizes = [2, 32], strides = [1, 1]} : vector<2x96xf32> to vector<2x32xf32>
    %789 = arith.addf %787, %788 : vector<2x32xf32>
    %790 = arith.negf %789 : vector<2x32xf32>
    %791 = math.exp %790 : vector<2x32xf32>
    %cst_246 = arith.constant 1.000000e+00 : f32
    %792 = vector.broadcast %cst_246 : f32 to vector<2x32xf32>
    %793 = arith.addf %792, %791 : vector<2x32xf32>
    %794 = arith.divf %792, %793 : vector<2x32xf32>
    %795 = vector.extract_strided_slice %783 {offsets = [0, 32], sizes = [2, 32], strides = [1, 1]} : vector<2x96xf32> to vector<2x32xf32>
    %796 = vector.extract_strided_slice %786 {offsets = [0, 32], sizes = [2, 32], strides = [1, 1]} : vector<2x96xf32> to vector<2x32xf32>
    %797 = arith.addf %795, %796 : vector<2x32xf32>
    %798 = arith.negf %797 : vector<2x32xf32>
    %799 = math.exp %798 : vector<2x32xf32>
    %cst_247 = arith.constant 1.000000e+00 : f32
    %800 = vector.broadcast %cst_247 : f32 to vector<2x32xf32>
    %801 = arith.addf %800, %799 : vector<2x32xf32>
    %802 = arith.divf %800, %801 : vector<2x32xf32>
    %803 = vector.extract_strided_slice %783 {offsets = [0, 64], sizes = [2, 32], strides = [1, 1]} : vector<2x96xf32> to vector<2x32xf32>
    %804 = vector.extract_strided_slice %786 {offsets = [0, 64], sizes = [2, 32], strides = [1, 1]} : vector<2x96xf32> to vector<2x32xf32>
    %805 = arith.mulf %794, %804 : vector<2x32xf32>
    %806 = arith.addf %803, %805 : vector<2x32xf32>
    %807 = math.tanh %806 : vector<2x32xf32>
    %cst_248 = arith.constant 1.000000e+00 : f32
    %808 = vector.broadcast %cst_248 : f32 to vector<2x32xf32>
    %809 = arith.subf %808, %802 : vector<2x32xf32>
    %810 = arith.mulf %809, %807 : vector<2x32xf32>
    %811 = arith.mulf %802, %750 : vector<2x32xf32>
    %812 = arith.addf %810, %811 : vector<2x32xf32>
    %c0_249 = arith.constant 0 : index
    %c0_250 = arith.constant 0 : index
    %813 = vector.load %arg41[%c0_249, %c0_250] : memref<16x32xf32, #tpu.memory_space<vmem>>, vector<2x32xf32>
    tpu.vector_store %arg41[%c0_249, %c0_250], %812 {strides = array<i32>} : memref<16x32xf32, #tpu.memory_space<vmem>>, vector<2x32xf32>,
    %c0_251 = arith.constant 0 : index
    %c0_252 = arith.constant 0 : index
    %814 = vector.load %arg40[%c0_251, %c0_252] : memref<16x32xf32, #tpu.memory_space<vmem>>, vector<16x32xf32>
    %c0_253 = arith.constant 0 : index
    %c0_254 = arith.constant 0 : index
    %815 = vector.load %arg41[%c0_253, %c0_254] : memref<16x32xf32, #tpu.memory_space<vmem>>, vector<16x32xf32>
    %c0_255 = arith.constant 0 : index
    %c0_256 = arith.constant 0 : index
    %816 = vector.load %arg23[%c0_255, %c0_256] : memref<32x32xf32, #tpu.memory_space<vmem>>, vector<32x32xf32>
    %cst_257 = arith.constant dense<0.000000e+00> : vector<16x32xf32>
    %817 = tpu.matmul %814, %816, %cst_257 {dimension_numbers = #tpu.dot_dimension_numbers<[1], [0], [0], [1], [0, 0, 1, 1], [], []>} : vector<16x32xf32>, vector<32x32xf32>, vector<16x32xf32> -> vector<16x32xf32>
    %c0_258 = arith.constant 0 : index
    %c0_259 = arith.constant 0 : index
    %818 = vector.load %arg24[%c0_258, %c0_259] : memref<32x32xf32, #tpu.memory_space<vmem>>, vector<32x32xf32>
    %cst_260 = arith.constant dense<0.000000e+00> : vector<16x32xf32>
    %819 = tpu.matmul %815, %818, %cst_260 {dimension_numbers = #tpu.dot_dimension_numbers<[1], [0], [0], [1], [0, 0, 1, 1], [], []>} : vector<16x32xf32>, vector<32x32xf32>, vector<16x32xf32> -> vector<16x32xf32>
    %820 = arith.addf %817, %819 : vector<16x32xf32>
    %c0_261 = arith.constant 0 : index
    %c0_262 = arith.constant 0 : index
    %821 = vector.load %arg25[%c0_261, %c0_262] : memref<1x32xf32, #tpu.memory_space<vmem>>, vector<1x32xf32>
    %822 = vector.broadcast %821 : vector<1x32xf32> to vector<16x32xf32>
    %823 = arith.addf %820, %822 : vector<16x32xf32>
    %824 = math.tanh %823 : vector<16x32xf32>
    %c0_263 = arith.constant 0 : index
    %c0_264 = arith.constant 0 : index
    %825 = vector.load %arg26[%c0_263, %c0_264] : memref<1x32xf32, #tpu.memory_space<vmem>>, vector<1x32xf32>
    %826 = vector.broadcast %825 : vector<1x32xf32> to vector<16x32xf32>
    %827 = arith.mulf %824, %826 : vector<16x32xf32>
    %cst_265 = arith.constant dense<0.000000e+00> : vector<16xf32>
    %828 = vector.multi_reduction <add>, %827, %cst_265 [1] : vector<16x32xf32> to vector<16xf32>
    %829 = vector.shape_cast %828 : vector<16xf32> to vector<16x1xf32>
    %c0_266 = arith.constant 0 : index
    %c0_267 = arith.constant 0 : index
    %830 = vector.load %arg27[%c0_266, %c0_267] : memref<1x1xf32, #tpu.memory_space<vmem>>, vector<1x1xf32>
    %831 = vector.broadcast %830 : vector<1x1xf32> to vector<16x1xf32>
    %832 = arith.addf %829, %831 : vector<16x1xf32>
    %c0_268 = arith.constant 0 : index
    %c0_269 = arith.constant 0 : index
    %833 = vector.load %arg42[%c0_268, %c0_269] : memref<16x1xf32, #tpu.memory_space<vmem>>, vector<16x1xf32>
    tpu.vector_store %arg42[%c0_268, %c0_269], %832 {strides = array<i32>} : memref<16x1xf32, #tpu.memory_space<vmem>>, vector<16x1xf32>,
    %c0_270 = arith.constant 0 : index
    %c0_271 = arith.constant 0 : index
    %834 = vector.load %arg42[%c0_270, %c0_271] : memref<16x1xf32, #tpu.memory_space<vmem>>, vector<2x1xf32>
    %c0_272 = arith.constant 0 : index
    %c0_273 = arith.constant 0 : index
    %835 = vector.load %arg43[%c0_272, %c0_273] : memref<2x8xf32, #tpu.memory_space<vmem>>, vector<2x1xf32>
    tpu.vector_store %arg43[%c0_272, %c0_273], %834 {strides = array<i32>} : memref<2x8xf32, #tpu.memory_space<vmem>>, vector<2x1xf32>,
    %c2_274 = arith.constant 2 : index
    %c0_275 = arith.constant 0 : index
    %836 = vector.load %arg42[%c2_274, %c0_275] : memref<16x1xf32, #tpu.memory_space<vmem>>, vector<2x1xf32>
    %c0_276 = arith.constant 0 : index
    %c1 = arith.constant 1 : index
    %837 = vector.load %arg43[%c0_276, %c1] : memref<2x8xf32, #tpu.memory_space<vmem>>, vector<2x1xf32>
    tpu.vector_store %arg43[%c0_276, %c1], %836 {strides = array<i32>} : memref<2x8xf32, #tpu.memory_space<vmem>>, vector<2x1xf32>,
    %c4_277 = arith.constant 4 : index
    %c0_278 = arith.constant 0 : index
    %838 = vector.load %arg42[%c4_277, %c0_278] : memref<16x1xf32, #tpu.memory_space<vmem>>, vector<2x1xf32>
    %c0_279 = arith.constant 0 : index
    %c2_280 = arith.constant 2 : index
    %839 = vector.load %arg43[%c0_279, %c2_280] : memref<2x8xf32, #tpu.memory_space<vmem>>, vector<2x1xf32>
    tpu.vector_store %arg43[%c0_279, %c2_280], %838 {strides = array<i32>} : memref<2x8xf32, #tpu.memory_space<vmem>>, vector<2x1xf32>,
    %c6_281 = arith.constant 6 : index
    %c0_282 = arith.constant 0 : index
    %840 = vector.load %arg42[%c6_281, %c0_282] : memref<16x1xf32, #tpu.memory_space<vmem>>, vector<2x1xf32>
    %c0_283 = arith.constant 0 : index
    %c3 = arith.constant 3 : index
    %841 = vector.load %arg43[%c0_283, %c3] : memref<2x8xf32, #tpu.memory_space<vmem>>, vector<2x1xf32>
    tpu.vector_store %arg43[%c0_283, %c3], %840 {strides = array<i32>} : memref<2x8xf32, #tpu.memory_space<vmem>>, vector<2x1xf32>,
    %c8_284 = arith.constant 8 : index
    %c0_285 = arith.constant 0 : index
    %842 = vector.load %arg42[%c8_284, %c0_285] : memref<16x1xf32, #tpu.memory_space<vmem>>, vector<2x1xf32>
    %c0_286 = arith.constant 0 : index
    %c4_287 = arith.constant 4 : index
    %843 = vector.load %arg43[%c0_286, %c4_287] : memref<2x8xf32, #tpu.memory_space<vmem>>, vector<2x1xf32>
    tpu.vector_store %arg43[%c0_286, %c4_287], %842 {strides = array<i32>} : memref<2x8xf32, #tpu.memory_space<vmem>>, vector<2x1xf32>,
    %c10_288 = arith.constant 10 : index
    %c0_289 = arith.constant 0 : index
    %844 = vector.load %arg42[%c10_288, %c0_289] : memref<16x1xf32, #tpu.memory_space<vmem>>, vector<2x1xf32>
    %c0_290 = arith.constant 0 : index
    %c5 = arith.constant 5 : index
    %845 = vector.load %arg43[%c0_290, %c5] : memref<2x8xf32, #tpu.memory_space<vmem>>, vector<2x1xf32>
    tpu.vector_store %arg43[%c0_290, %c5], %844 {strides = array<i32>} : memref<2x8xf32, #tpu.memory_space<vmem>>, vector<2x1xf32>,
    %c12_291 = arith.constant 12 : index
    %c0_292 = arith.constant 0 : index
    %846 = vector.load %arg42[%c12_291, %c0_292] : memref<16x1xf32, #tpu.memory_space<vmem>>, vector<2x1xf32>
    %c0_293 = arith.constant 0 : index
    %c6_294 = arith.constant 6 : index
    %847 = vector.load %arg43[%c0_293, %c6_294] : memref<2x8xf32, #tpu.memory_space<vmem>>, vector<2x1xf32>
    tpu.vector_store %arg43[%c0_293, %c6_294], %846 {strides = array<i32>} : memref<2x8xf32, #tpu.memory_space<vmem>>, vector<2x1xf32>,
    %c14_295 = arith.constant 14 : index
    %c0_296 = arith.constant 0 : index
    %848 = vector.load %arg42[%c14_295, %c0_296] : memref<16x1xf32, #tpu.memory_space<vmem>>, vector<2x1xf32>
    %c0_297 = arith.constant 0 : index
    %c7 = arith.constant 7 : index
    %849 = vector.load %arg43[%c0_297, %c7] : memref<2x8xf32, #tpu.memory_space<vmem>>, vector<2x1xf32>
    tpu.vector_store %arg43[%c0_297, %c7], %848 {strides = array<i32>} : memref<2x8xf32, #tpu.memory_space<vmem>>, vector<2x1xf32>,
    %c0_298 = arith.constant 0 : index
    %c0_299 = arith.constant 0 : index
    %850 = vector.load %arg43[%c0_298, %c0_299] : memref<2x8xf32, #tpu.memory_space<vmem>>, vector<2x8xf32>
    %cst_300 = arith.constant dense<0xFF800000> : vector<2xf32>
    %851 = vector.multi_reduction <maximumf>, %850, %cst_300 [1] : vector<2x8xf32> to vector<2xf32>
    %852 = vector.shape_cast %851 : vector<2xf32> to vector<2x1xf32>
    %853 = vector.broadcast %852 : vector<2x1xf32> to vector<2x8xf32>
    %854 = arith.subf %850, %853 : vector<2x8xf32>
    %855 = math.exp %854 : vector<2x8xf32>
    %cst_301 = arith.constant dense<0.000000e+00> : vector<2xf32>
    %856 = vector.multi_reduction <add>, %855, %cst_301 [1] : vector<2x8xf32> to vector<2xf32>
    %857 = vector.shape_cast %856 : vector<2xf32> to vector<2x1xf32>
    %858 = vector.broadcast %857 : vector<2x1xf32> to vector<2x8xf32>
    %859 = arith.divf %855, %858 : vector<2x8xf32>
    %cst_302 = arith.constant 0.000000e+00 : f32
    %860 = vector.broadcast %cst_302 : f32 to vector<2x32xf32>
    %cst_303 = arith.constant 0.000000e+00 : f32
    %861 = vector.broadcast %cst_303 : f32 to vector<2x32xf32>
    %862 = vector.extract_strided_slice %859 {offsets = [0, 0], sizes = [2, 1], strides = [1, 1]} : vector<2x8xf32> to vector<2x1xf32>
    %c0_304 = arith.constant 0 : index
    %c0_305 = arith.constant 0 : index
    %863 = vector.load %arg40[%c0_304, %c0_305] : memref<16x32xf32, #tpu.memory_space<vmem>>, vector<2x32xf32>
    %864 = vector.broadcast %862 : vector<2x1xf32> to vector<2x32xf32>
    %865 = arith.mulf %863, %864 : vector<2x32xf32>
    %866 = arith.addf %860, %865 : vector<2x32xf32>
    %c0_306 = arith.constant 0 : index
    %c0_307 = arith.constant 0 : index
    %867 = vector.load %arg41[%c0_306, %c0_307] : memref<16x32xf32, #tpu.memory_space<vmem>>, vector<2x32xf32>
    %868 = vector.broadcast %862 : vector<2x1xf32> to vector<2x32xf32>
    %869 = arith.mulf %867, %868 : vector<2x32xf32>
    %870 = arith.addf %861, %869 : vector<2x32xf32>
    %871 = vector.extract_strided_slice %859 {offsets = [0, 1], sizes = [2, 1], strides = [1, 1]} : vector<2x8xf32> to vector<2x1xf32>
    %c2_308 = arith.constant 2 : index
    %c0_309 = arith.constant 0 : index
    %872 = vector.load %arg40[%c2_308, %c0_309] : memref<16x32xf32, #tpu.memory_space<vmem>>, vector<2x32xf32>
    %873 = vector.broadcast %871 : vector<2x1xf32> to vector<2x32xf32>
    %874 = arith.mulf %872, %873 : vector<2x32xf32>
    %875 = arith.addf %866, %874 : vector<2x32xf32>
    %c2_310 = arith.constant 2 : index
    %c0_311 = arith.constant 0 : index
    %876 = vector.load %arg41[%c2_310, %c0_311] : memref<16x32xf32, #tpu.memory_space<vmem>>, vector<2x32xf32>
    %877 = vector.broadcast %871 : vector<2x1xf32> to vector<2x32xf32>
    %878 = arith.mulf %876, %877 : vector<2x32xf32>
    %879 = arith.addf %870, %878 : vector<2x32xf32>
    %880 = vector.extract_strided_slice %859 {offsets = [0, 2], sizes = [2, 1], strides = [1, 1]} : vector<2x8xf32> to vector<2x1xf32>
    %c4_312 = arith.constant 4 : index
    %c0_313 = arith.constant 0 : index
    %881 = vector.load %arg40[%c4_312, %c0_313] : memref<16x32xf32, #tpu.memory_space<vmem>>, vector<2x32xf32>
    %882 = vector.broadcast %880 : vector<2x1xf32> to vector<2x32xf32>
    %883 = arith.mulf %881, %882 : vector<2x32xf32>
    %884 = arith.addf %875, %883 : vector<2x32xf32>
    %c4_314 = arith.constant 4 : index
    %c0_315 = arith.constant 0 : index
    %885 = vector.load %arg41[%c4_314, %c0_315] : memref<16x32xf32, #tpu.memory_space<vmem>>, vector<2x32xf32>
    %886 = vector.broadcast %880 : vector<2x1xf32> to vector<2x32xf32>
    %887 = arith.mulf %885, %886 : vector<2x32xf32>
    %888 = arith.addf %879, %887 : vector<2x32xf32>
    %889 = vector.extract_strided_slice %859 {offsets = [0, 3], sizes = [2, 1], strides = [1, 1]} : vector<2x8xf32> to vector<2x1xf32>
    %c6_316 = arith.constant 6 : index
    %c0_317 = arith.constant 0 : index
    %890 = vector.load %arg40[%c6_316, %c0_317] : memref<16x32xf32, #tpu.memory_space<vmem>>, vector<2x32xf32>
    %891 = vector.broadcast %889 : vector<2x1xf32> to vector<2x32xf32>
    %892 = arith.mulf %890, %891 : vector<2x32xf32>
    %893 = arith.addf %884, %892 : vector<2x32xf32>
    %c6_318 = arith.constant 6 : index
    %c0_319 = arith.constant 0 : index
    %894 = vector.load %arg41[%c6_318, %c0_319] : memref<16x32xf32, #tpu.memory_space<vmem>>, vector<2x32xf32>
    %895 = vector.broadcast %889 : vector<2x1xf32> to vector<2x32xf32>
    %896 = arith.mulf %894, %895 : vector<2x32xf32>
    %897 = arith.addf %888, %896 : vector<2x32xf32>
    %898 = vector.extract_strided_slice %859 {offsets = [0, 4], sizes = [2, 1], strides = [1, 1]} : vector<2x8xf32> to vector<2x1xf32>
    %c8_320 = arith.constant 8 : index
    %c0_321 = arith.constant 0 : index
    %899 = vector.load %arg40[%c8_320, %c0_321] : memref<16x32xf32, #tpu.memory_space<vmem>>, vector<2x32xf32>
    %900 = vector.broadcast %898 : vector<2x1xf32> to vector<2x32xf32>
    %901 = arith.mulf %899, %900 : vector<2x32xf32>
    %902 = arith.addf %893, %901 : vector<2x32xf32>
    %c8_322 = arith.constant 8 : index
    %c0_323 = arith.constant 0 : index
    %903 = vector.load %arg41[%c8_322, %c0_323] : memref<16x32xf32, #tpu.memory_space<vmem>>, vector<2x32xf32>
    %904 = vector.broadcast %898 : vector<2x1xf32> to vector<2x32xf32>
    %905 = arith.mulf %903, %904 : vector<2x32xf32>
    %906 = arith.addf %897, %905 : vector<2x32xf32>
    %907 = vector.extract_strided_slice %859 {offsets = [0, 5], sizes = [2, 1], strides = [1, 1]} : vector<2x8xf32> to vector<2x1xf32>
    %c10_324 = arith.constant 10 : index
    %c0_325 = arith.constant 0 : index
    %908 = vector.load %arg40[%c10_324, %c0_325] : memref<16x32xf32, #tpu.memory_space<vmem>>, vector<2x32xf32>
    %909 = vector.broadcast %907 : vector<2x1xf32> to vector<2x32xf32>
    %910 = arith.mulf %908, %909 : vector<2x32xf32>
    %911 = arith.addf %902, %910 : vector<2x32xf32>
    %c10_326 = arith.constant 10 : index
    %c0_327 = arith.constant 0 : index
    %912 = vector.load %arg41[%c10_326, %c0_327] : memref<16x32xf32, #tpu.memory_space<vmem>>, vector<2x32xf32>
    %913 = vector.broadcast %907 : vector<2x1xf32> to vector<2x32xf32>
    %914 = arith.mulf %912, %913 : vector<2x32xf32>
    %915 = arith.addf %906, %914 : vector<2x32xf32>
    %916 = vector.extract_strided_slice %859 {offsets = [0, 6], sizes = [2, 1], strides = [1, 1]} : vector<2x8xf32> to vector<2x1xf32>
    %c12_328 = arith.constant 12 : index
    %c0_329 = arith.constant 0 : index
    %917 = vector.load %arg40[%c12_328, %c0_329] : memref<16x32xf32, #tpu.memory_space<vmem>>, vector<2x32xf32>
    %918 = vector.broadcast %916 : vector<2x1xf32> to vector<2x32xf32>
    %919 = arith.mulf %917, %918 : vector<2x32xf32>
    %920 = arith.addf %911, %919 : vector<2x32xf32>
    %c12_330 = arith.constant 12 : index
    %c0_331 = arith.constant 0 : index
    %921 = vector.load %arg41[%c12_330, %c0_331] : memref<16x32xf32, #tpu.memory_space<vmem>>, vector<2x32xf32>
    %922 = vector.broadcast %916 : vector<2x1xf32> to vector<2x32xf32>
    %923 = arith.mulf %921, %922 : vector<2x32xf32>
    %924 = arith.addf %915, %923 : vector<2x32xf32>
    %925 = vector.extract_strided_slice %859 {offsets = [0, 7], sizes = [2, 1], strides = [1, 1]} : vector<2x8xf32> to vector<2x1xf32>
    %c14_332 = arith.constant 14 : index
    %c0_333 = arith.constant 0 : index
    %926 = vector.load %arg40[%c14_332, %c0_333] : memref<16x32xf32, #tpu.memory_space<vmem>>, vector<2x32xf32>
    %927 = vector.broadcast %925 : vector<2x1xf32> to vector<2x32xf32>
    %928 = arith.mulf %926, %927 : vector<2x32xf32>
    %929 = arith.addf %920, %928 : vector<2x32xf32>
    %c14_334 = arith.constant 14 : index
    %c0_335 = arith.constant 0 : index
    %930 = vector.load %arg41[%c14_334, %c0_335] : memref<16x32xf32, #tpu.memory_space<vmem>>, vector<2x32xf32>
    %931 = vector.broadcast %925 : vector<2x1xf32> to vector<2x32xf32>
    %932 = arith.mulf %930, %931 : vector<2x32xf32>
    %933 = arith.addf %924, %932 : vector<2x32xf32>
    %c0_336 = arith.constant 0 : index
    %c0_337 = arith.constant 0 : index
    %934 = vector.load %arg28[%c0_336, %c0_337] : memref<32x32xf32, #tpu.memory_space<vmem>>, vector<32x32xf32>
    %cst_338 = arith.constant dense<0.000000e+00> : vector<2x32xf32>
    %935 = tpu.matmul %929, %934, %cst_338 {dimension_numbers = #tpu.dot_dimension_numbers<[1], [0], [0], [1], [0, 0, 1, 1], [], []>} : vector<2x32xf32>, vector<32x32xf32>, vector<2x32xf32> -> vector<2x32xf32>
    %c0_339 = arith.constant 0 : index
    %c0_340 = arith.constant 0 : index
    %936 = vector.load %arg29[%c0_339, %c0_340] : memref<32x32xf32, #tpu.memory_space<vmem>>, vector<32x32xf32>
    %cst_341 = arith.constant dense<0.000000e+00> : vector<2x32xf32>
    %937 = tpu.matmul %933, %936, %cst_341 {dimension_numbers = #tpu.dot_dimension_numbers<[1], [0], [0], [1], [0, 0, 1, 1], [], []>} : vector<2x32xf32>, vector<32x32xf32>, vector<2x32xf32> -> vector<2x32xf32>
    %938 = arith.addf %935, %937 : vector<2x32xf32>
    %c0_342 = arith.constant 0 : index
    %c0_343 = arith.constant 0 : index
    %939 = vector.load %arg30[%c0_342, %c0_343] : memref<32x32xf32, #tpu.memory_space<vmem>>, vector<32x32xf32>
    %cst_344 = arith.constant dense<0.000000e+00> : vector<2x32xf32>
    %940 = tpu.matmul %8, %939, %cst_344 {dimension_numbers = #tpu.dot_dimension_numbers<[1], [0], [0], [1], [0, 0, 1, 1], [], []>} : vector<2x32xf32>, vector<32x32xf32>, vector<2x32xf32> -> vector<2x32xf32>
    %941 = arith.addf %938, %940 : vector<2x32xf32>
    %c0_345 = arith.constant 0 : index
    %c0_346 = arith.constant 0 : index
    %942 = vector.load %arg31[%c0_345, %c0_346] : memref<1x32xf32, #tpu.memory_space<vmem>>, vector<1x32xf32>
    %943 = vector.broadcast %942 : vector<1x32xf32> to vector<2x32xf32>
    %944 = arith.addf %941, %943 : vector<2x32xf32>
    %945 = math.tanh %944 : vector<2x32xf32>
    %c0_347 = arith.constant 0 : index
    %c0_348 = arith.constant 0 : index
    %946 = vector.load %arg32[%c0_347, %c0_348] : memref<32x48xf32, #tpu.memory_space<vmem>>, vector<32x48xf32>
    %cst_349 = arith.constant dense<0.000000e+00> : vector<2x48xf32>
    %947 = tpu.matmul %945, %946, %cst_349 {dimension_numbers = #tpu.dot_dimension_numbers<[1], [0], [0], [1], [0, 0, 1, 1], [], []>} : vector<2x32xf32>, vector<32x48xf32>, vector<2x48xf32> -> vector<2x48xf32>
    %c0_350 = arith.constant 0 : index
    %c0_351 = arith.constant 0 : index
    %948 = vector.load %arg33[%c0_350, %c0_351] : memref<1x48xf32, #tpu.memory_space<vmem>>, vector<1x48xf32>
    %949 = vector.broadcast %948 : vector<1x48xf32> to vector<2x48xf32>
    %950 = arith.addf %947, %949 : vector<2x48xf32>
    %951 = vector.extract_strided_slice %950 {offsets = [0, 0], sizes = [2, 8], strides = [1, 1]} : vector<2x48xf32> to vector<2x8xf32>
    %c0_352 = arith.constant 0 : index
    %c0_353 = arith.constant 0 : index
    %952 = vector.load %arg35[%c0_352, %c0_353] : memref<12x8xf32, #tpu.memory_space<vmem>>, vector<2x8xf32>
    tpu.vector_store %arg35[%c0_352, %c0_353], %951 {strides = array<i32>} : memref<12x8xf32, #tpu.memory_space<vmem>>, vector<2x8xf32>,
    %953 = vector.extract_strided_slice %950 {offsets = [0, 8], sizes = [2, 8], strides = [1, 1]} : vector<2x48xf32> to vector<2x8xf32>
    %c2_354 = arith.constant 2 : index
    %c0_355 = arith.constant 0 : index
    %954 = vector.load %arg35[%c2_354, %c0_355] : memref<12x8xf32, #tpu.memory_space<vmem>>, vector<2x8xf32>
    tpu.vector_store %arg35[%c2_354, %c0_355], %953 {strides = array<i32>} : memref<12x8xf32, #tpu.memory_space<vmem>>, vector<2x8xf32>,
    %955 = vector.extract_strided_slice %950 {offsets = [0, 16], sizes = [2, 8], strides = [1, 1]} : vector<2x48xf32> to vector<2x8xf32>
    %c4_356 = arith.constant 4 : index
    %c0_357 = arith.constant 0 : index
    %956 = vector.load %arg35[%c4_356, %c0_357] : memref<12x8xf32, #tpu.memory_space<vmem>>, vector<2x8xf32>
    tpu.vector_store %arg35[%c4_356, %c0_357], %955 {strides = array<i32>} : memref<12x8xf32, #tpu.memory_space<vmem>>, vector<2x8xf32>,
    %957 = vector.extract_strided_slice %950 {offsets = [0, 24], sizes = [2, 8], strides = [1, 1]} : vector<2x48xf32> to vector<2x8xf32>
    %c6_358 = arith.constant 6 : index
    %c0_359 = arith.constant 0 : index
    %958 = vector.load %arg35[%c6_358, %c0_359] : memref<12x8xf32, #tpu.memory_space<vmem>>, vector<2x8xf32>
    tpu.vector_store %arg35[%c6_358, %c0_359], %957 {strides = array<i32>} : memref<12x8xf32, #tpu.memory_space<vmem>>, vector<2x8xf32>,
    %959 = vector.extract_strided_slice %950 {offsets = [0, 32], sizes = [2, 8], strides = [1, 1]} : vector<2x48xf32> to vector<2x8xf32>
    %c8_360 = arith.constant 8 : index
    %c0_361 = arith.constant 0 : index
    %960 = vector.load %arg35[%c8_360, %c0_361] : memref<12x8xf32, #tpu.memory_space<vmem>>, vector<2x8xf32>
    tpu.vector_store %arg35[%c8_360, %c0_361], %959 {strides = array<i32>} : memref<12x8xf32, #tpu.memory_space<vmem>>, vector<2x8xf32>,
    %961 = vector.extract_strided_slice %950 {offsets = [0, 40], sizes = [2, 8], strides = [1, 1]} : vector<2x48xf32> to vector<2x8xf32>
    %c10_362 = arith.constant 10 : index
    %c0_363 = arith.constant 0 : index
    %962 = vector.load %arg35[%c10_362, %c0_363] : memref<12x8xf32, #tpu.memory_space<vmem>>, vector<2x8xf32>
    tpu.vector_store %arg35[%c10_362, %c0_363], %961 {strides = array<i32>} : memref<12x8xf32, #tpu.memory_space<vmem>>, vector<2x8xf32>,
    return
  }
}

</mosaic_0001>

<llo_original>
// kernel: forward.1
$region0: #{forward.1}
  #allocation0 [shape = 'u32[]', space=smem, size = 0x4, offset = 0x4, fixed_abs, tag = 'smem constant byte address 0x4 - core index']
  #allocation1 [shape = 'u32[144,128]{1,0:T(1,128)}', space=vmem, size = 0x12000, scoped, tag = 'internal scratch']
  #allocation2 [shape = 'f32[16,192]{1,0:T(8,128)}', space=vmem, size = 0x4000, scoped, tag = 'scratch operand']
  #allocation3 [shape = 'f32[16,96]{1,0:T(8,128)}', space=vmem, size = 0x2000, scoped, tag = 'scratch operand']
  #allocation4 [shape = 'f32[16,96]{1,0:T(8,128)}', space=vmem, size = 0x2000, scoped, tag = 'scratch operand']
  #allocation5 [shape = 'f32[16,32]{1,0:T(8,128)}', space=vmem, size = 0x2000, scoped, tag = 'scratch operand']
  #allocation6 [shape = 'f32[16,32]{1,0:T(8,128)}', space=vmem, size = 0x2000, scoped, tag = 'scratch operand']
  #allocation7 [shape = 'f32[16,32]{1,0:T(8,128)}', space=vmem, size = 0x2000, scoped, tag = 'scratch operand']
  #allocation8 [shape = 'f32[16,1]{1,0:T(8,128)}', space=vmem, size = 0x2000, scoped, tag = 'scratch operand']
  #allocation9 [shape = 'f32[2,8]{1,0:T(2,128)}', space=vmem, size = 0x400, scoped, tag = 'scratch operand']
  #allocation10 [shape = 'f32[1,1]{1,0:T(1,128)S(1)}', space=vmem, size = 0x200, scoped, tag = 'scoped memory for forward.1']
  %s0 = inlined_call_operand.smem [shape: u32[36], index: -1, kind: input, shape index: {}]
  %s1 = sld [smem:[%s0]]
  %s2 = scalar_lea.smem %s0, 1
  %s3 = sld [smem:[%s2]]
  %s4 = scalar_lea.smem %s0, 2
  %s5 = sld [smem:[%s4]]
  %s6 = scalar_lea.smem %s0, 3
  %s7 = sld [smem:[%s6]]
  %s8 = scalar_lea.smem %s0, 4
  %s9 = sld [smem:[%s8]]
  %s10 = scalar_lea.smem %s0, 5
  %s11 = sld [smem:[%s10]]
  %s12 = scalar_lea.smem %s0, 6
  %s13 = sld [smem:[%s12]]
  %s14 = scalar_lea.smem %s0, 7
  %s15 = sld [smem:[%s14]]
  %s16 = scalar_lea.smem %s0, 8
  %s17 = sld [smem:[%s16]]
  %s18 = scalar_lea.smem %s0, 9
  %s19 = sld [smem:[%s18]]
  %s20 = scalar_lea.smem %s0, 10
  %s21 = sld [smem:[%s20]]
  %s22 = scalar_lea.smem %s0, 11
  %s23 = sld [smem:[%s22]]
  %s24 = scalar_lea.smem %s0, 12
  %s25 = sld [smem:[%s24]]
  %s26 = scalar_lea.smem %s0, 13
  %s27 = sld [smem:[%s26]]
  %s28 = scalar_lea.smem %s0, 14
  %s29 = sld [smem:[%s28]]
  %s30 = scalar_lea.smem %s0, 15
  %s31 = sld [smem:[%s30]]
  %s32 = scalar_lea.smem %s0, 16
  %s33 = sld [smem:[%s32]]
  %s34 = scalar_lea.smem %s0, 17
  %s35 = sld [smem:[%s34]]
  %s36 = scalar_lea.smem %s0, 18
  %s37 = sld [smem:[%s36]]
  %s38 = scalar_lea.smem %s0, 19
  %s39 = sld [smem:[%s38]]
  %s40 = scalar_lea.smem %s0, 20
  %s41 = sld [smem:[%s40]]
  %s42 = scalar_lea.smem %s0, 21
  %s43 = sld [smem:[%s42]]
  %s44 = scalar_lea.smem %s0, 22
  %s45 = sld [smem:[%s44]]
  %s46 = scalar_lea.smem %s0, 23
  %s47 = sld [smem:[%s46]]
  %s48 = scalar_lea.smem %s0, 24
  %s49 = sld [smem:[%s48]]
  %s50 = scalar_lea.smem %s0, 25
  %s51 = sld [smem:[%s50]]
  %s52 = scalar_lea.smem %s0, 26
  %s53 = sld [smem:[%s52]]
  %s54 = scalar_lea.smem %s0, 27
  %s55 = sld [smem:[%s54]]
  %s56 = scalar_lea.smem %s0, 28
  %s57 = sld [smem:[%s56]]
  %s58 = scalar_lea.smem %s0, 29
  %s59 = sld [smem:[%s58]]
  %s60 = scalar_lea.smem %s0, 30
  %s61 = sld [smem:[%s60]]
  %s62 = scalar_lea.smem %s0, 31
  %s63 = sld [smem:[%s62]]
  %s64 = scalar_lea.smem %s0, 32
  %s65 = sld [smem:[%s64]]
  %s66 = scalar_lea.smem %s0, 33
  %s67 = sld [smem:[%s66]]
  %s68 = scalar_lea.smem %s0, 34
  %s69 = sld [smem:[%s68]]
  %s70 = scalar_lea.smem %s0, 35
  %s71 = sld [smem:[%s70]]
  %72 = xla_tuple %s69, %s71
  %s73 = sld [smem:[#allocation0]]
  $region178: #{forward.1} parent=0
    _
  %s75 = ssub.s32 1, %s73
  %s76 = scalar_select 0, %s75, %s73
  %v77 = vstv %s55
  %78 = vst [vmem:[#allocation10] sm:$0x1] %v77
  $region1: #{forward.1} parent=0
    #allocation11 [shape = 'u8[512]{0}', space=vmem, size = 0x400, scoped, tag = 'input window, operand 25, single buffered']
    #allocation12 [shape = 's32[1]{0}', space=sflag, size = 0x4, scoped, tag = 'scoped memory for forward.1']
    #allocation13 [shape = 's32[1]{0}', space=sflag, size = 0x4, scoped, tag = 'scoped memory for forward.1']
    #allocation14 [shape = 'u8[512]{0}', space=vmem, size = 0x400, scoped, tag = 'input window, operand 26, single buffered']
    #allocation15 [shape = 's32[1]{0}', space=sflag, size = 0x4, scoped, tag = 'scoped memory for forward.1']
    #allocation16 [shape = 'u8[16384]{0}', space=vmem, size = 0x4000, scoped, tag = 'input window, operand 30, single buffered']
    #allocation17 [shape = 'u8[512]{0}', space=vmem, size = 0x400, scoped, tag = 'input window, operand 31, single buffered']
    #allocation18 [shape = 's32[1]{0}', space=sflag, size = 0x4, scoped, tag = 'scoped memory for forward.1']
    #allocation19 [shape = 'u8[16384]{0}', space=vmem, size = 0x4000, scoped, tag = 'input window, operand 32, single buffered']
    #allocation20 [shape = 'u8[512]{0}', space=vmem, size = 0x400, scoped, tag = 'input window, operand 33, single buffered']
    #allocation21 [shape = 's32[1]{0}', space=sflag, size = 0x4, scoped, tag = 'scoped memory for forward.1']
    #allocation22 [shape = 'u8[8192]{0}', space=vmem, size = 0x2000, scoped, tag = 'output window, operand 0, single buffered']
    %79 = vsyncpa [#allocation12], 0
    %80 = vsyncpa [#allocation15], 0
    %81 = vsyncpa [#allocation18], 0
    %82 = vsyncpa [#allocation21], 0
    %83 = vsyncpa [#allocation13], 0
    // Predicated region
    $region2: #{forward.1} parent=1 // pred_check
      _
    $region3: #{forward.1} parent=1 // pred_check_branch
      %85 = sbr.rel (0) target = $region5
    $region4: #{forward.1} parent=1 // pred_region
      _
    $region5: #{forward.1} parent=1 // pred_fallthru
      _
    // Predicated region
    $region6: #{forward.1} parent=1 // pred_check
      _
    $region7: #{forward.1} parent=1 // pred_check_branch
      %87 = sbr.rel (0) target = $region9
    $region8: #{forward.1} parent=1 // pred_region
      _
    $region9: #{forward.1} parent=1 // pred_fallthru
      _
    // Predicated region
    $region10: #{forward.1} parent=1 // pred_check
      _
    $region11: #{forward.1} parent=1 // pred_check_branch
      %89 = sbr.rel (0) target = $region13
    $region12: #{forward.1} parent=1 // pred_region
      _
    $region13: #{forward.1} parent=1 // pred_fallthru
      _
    // Predicated region
    $region14: #{forward.1} parent=1 // pred_check
      _
    $region15: #{forward.1} parent=1 // pred_check_branch
      %91 = sbr.rel (0) target = $region17
    $region16: #{forward.1} parent=1 // pred_region
      _
    $region17: #{forward.1} parent=1 // pred_fallthru
      _
    // Predicated region
    $region18: #{forward.1} parent=1 // pred_check
      _
    $region19: #{forward.1} parent=1 // pred_check_branch
      %93 = sbr.rel (0) target = $region21
    $region20: #{forward.1} parent=1 // pred_region
      _
    $region21: #{forward.1} parent=1 // pred_fallthru
      _
    // Predicated region
    $region22: #{forward.1} parent=1 // pred_check
      _
    $region23: #{forward.1} parent=1 // pred_check_branch
      %95 = sbr.rel (0) target = $region25
    $region24: #{forward.1} parent=1 // pred_region
      _
    $region25: #{forward.1} parent=1 // pred_fallthru
      _
    // Predicated region
    $region26: #{forward.1} parent=1 // pred_check
      _
    $region27: #{forward.1} parent=1 // pred_check_branch
      %97 = sbr.rel (0) target = $region29
    $region28: #{forward.1} parent=1 // pred_region
      _
    $region29: #{forward.1} parent=1 // pred_fallthru
      _
    // Predicated region
    $region30: #{forward.1} parent=1 // pred_check
      _
    $region31: #{forward.1} parent=1 // pred_check_branch
      %99 = sbr.rel (0) target = $region33
    $region32: #{forward.1} parent=1 // pred_region
      _
    $region33: #{forward.1} parent=1 // pred_fallthru
      _
    // Predicated region
    $region34: #{forward.1} parent=1 // pred_check
      _
    $region35: #{forward.1} parent=1 // pred_check_branch
      %101 = sbr.rel (0) target = $region37
    $region36: #{forward.1} parent=1 // pred_region
      _
    $region37: #{forward.1} parent=1 // pred_fallthru
      _
    // Predicated region
    $region38: #{forward.1} parent=1 // pred_check
      _
    $region39: #{forward.1} parent=1 // pred_check_branch
      %103 = sbr.rel (0) target = $region41
    $region40: #{forward.1} parent=1 // pred_region
      _
    $region41: #{forward.1} parent=1 // pred_fallthru
      _
    // Predicated region
    $region42: #{forward.1} parent=1 // pred_check
      _
    $region43: #{forward.1} parent=1 // pred_check_branch
      %105 = sbr.rel (0) target = $region45
    $region44: #{forward.1} parent=1 // pred_region
      _
    $region45: #{forward.1} parent=1 // pred_fallthru
      _
    // Predicated region
    $region46: #{forward.1} parent=1 // pred_check
      _
    $region47: #{forward.1} parent=1 // pred_check_branch
      %107 = sbr.rel (0) target = $region49
    $region48: #{forward.1} parent=1 // pred_region
      _
    $region49: #{forward.1} parent=1 // pred_fallthru
      _
    // Predicated region
    $region50: #{forward.1} parent=1 // pred_check
      _
    $region51: #{forward.1} parent=1 // pred_check_branch
      %109 = sbr.rel (0) target = $region53
    $region52: #{forward.1} parent=1 // pred_region
      _
    $region53: #{forward.1} parent=1 // pred_fallthru
      _
    // Predicated region
    $region54: #{forward.1} parent=1 // pred_check
      _
    $region55: #{forward.1} parent=1 // pred_check_branch
      %111 = sbr.rel (0) target = $region57
    $region56: #{forward.1} parent=1 // pred_region
      _
    $region57: #{forward.1} parent=1 // pred_fallthru
      _
    // Predicated region
    $region58: #{forward.1} parent=1 // pred_check
      _
    $region59: #{forward.1} parent=1 // pred_check_branch
      %113 = sbr.rel (0) target = $region61
    $region60: #{forward.1} parent=1 // pred_region
      _
    $region61: #{forward.1} parent=1 // pred_fallthru
      _
    // Predicated region
    $region62: #{forward.1} parent=1 // pred_check
      _
    $region63: #{forward.1} parent=1 // pred_check_branch
      %115 = sbr.rel (0) target = $region65
    $region64: #{forward.1} parent=1 // pred_region
      _
    $region65: #{forward.1} parent=1 // pred_fallthru
      _
    // Predicated region
    $region66: #{forward.1} parent=1 // pred_check
      _
    $region67: #{forward.1} parent=1 // pred_check_branch
      %117 = sbr.rel (0) target = $region69
    $region68: #{forward.1} parent=1 // pred_region
      _
    $region69: #{forward.1} parent=1 // pred_fallthru
      _
    // Predicated region
    $region70: #{forward.1} parent=1 // pred_check
      _
    $region71: #{forward.1} parent=1 // pred_check_branch
      %119 = sbr.rel (0) target = $region73
    $region72: #{forward.1} parent=1 // pred_region
      _
    $region73: #{forward.1} parent=1 // pred_fallthru
      _
    // Predicated region
    $region74: #{forward.1} parent=1 // pred_check
      _
    $region75: #{forward.1} parent=1 // pred_check_branch
      %121 = sbr.rel (0) target = $region77
    $region76: #{forward.1} parent=1 // pred_region
      _
    $region77: #{forward.1} parent=1 // pred_fallthru
      _
    // Predicated region
    $region78: #{forward.1} parent=1 // pred_check
      _
    $region79: #{forward.1} parent=1 // pred_check_branch
      %123 = sbr.rel (0) target = $region81
    $region80: #{forward.1} parent=1 // pred_region
      _
    $region81: #{forward.1} parent=1 // pred_fallthru
      _
    // Predicated region
    $region82: #{forward.1} parent=1 // pred_check
      _
    $region83: #{forward.1} parent=1 // pred_check_branch
      %125 = sbr.rel (0) target = $region85
    $region84: #{forward.1} parent=1 // pred_region
      _
    $region85: #{forward.1} parent=1 // pred_fallthru
      _
    // Predicated region
    $region86: #{forward.1} parent=1 // pred_check
      _
    $region87: #{forward.1} parent=1 // pred_check_branch
      %127 = sbr.rel (0) target = $region89
    $region88: #{forward.1} parent=1 // pred_region
      _
    $region89: #{forward.1} parent=1 // pred_fallthru
      _
    // Predicated region
    $region90: #{forward.1} parent=1 // pred_check
      _
    $region91: #{forward.1} parent=1 // pred_check_branch
      %129 = sbr.rel (0) target = $region93
    $region92: #{forward.1} parent=1 // pred_region
      _
    $region93: #{forward.1} parent=1 // pred_fallthru
      _
    // Predicated region
    $region94: #{forward.1} parent=1 // pred_check
      _
    $region95: #{forward.1} parent=1 // pred_check_branch
      %131 = sbr.rel (0) target = $region97
    $region96: #{forward.1} parent=1 // pred_region
      _
    $region97: #{forward.1} parent=1 // pred_fallthru
      _
    // Predicated region
    $region98: #{forward.1} parent=1 // pred_check
      _
    $region99: #{forward.1} parent=1 // pred_check_branch
      %133 = sbr.rel (0) target = $region101
    $region100: #{forward.1} parent=1 // pred_region
      _
    $region101: #{forward.1} parent=1 // pred_fallthru
      _
    // Predicated region
    $region102: #{forward.1} parent=1 // pred_check
      _
    $region103: #{forward.1} parent=1 // pred_check_branch
      %135 = sbr.rel (0) target = $region105
    $region104: #{forward.1} parent=1 // pred_region
      %s137 = ssub.s32 16, 16
      %138 = vsyncadd [#allocation12], %s137
      %s140 = sshll.u32 [#allocation11], 4
      %s141 = int_to_ptr.vmem [resolvable:$true] %s140
      %143 = dma.hbm_to_vmem [thread:$0]  %s51, 16, %s141, [#allocation12]
    $region105: #{forward.1} parent=1 // pred_fallthru
      _
    // Predicated region
    $region106: #{forward.1} parent=1 // pred_check
      _
    $region107: #{forward.1} parent=1 // pred_check_branch
      %145 = sbr.rel (0) target = $region109
    $region108: #{forward.1} parent=1 // pred_region
      %s147 = ssub.s32 16, 16
      %148 = vsyncadd [#allocation15], %s147
      %s150 = sshll.u32 [#allocation14], 4
      %s151 = int_to_ptr.vmem [resolvable:$true] %s150
      %153 = dma.hbm_to_vmem [thread:$0]  %s53, 16, %s151, [#allocation15]
    $region109: #{forward.1} parent=1 // pred_fallthru
      _
    // Predicated region
    $region110: #{forward.1} parent=1 // pred_check
      _
    $region111: #{forward.1} parent=1 // pred_check_branch
      %155 = sbr.rel (0) target = $region113
    $region112: #{forward.1} parent=1 // pred_region
      _
    $region113: #{forward.1} parent=1 // pred_fallthru
      _
    // Predicated region
    $region114: #{forward.1} parent=1 // pred_check
      _
    $region115: #{forward.1} parent=1 // pred_check_branch
      %157 = sbr.rel (0) target = $region117
    $region116: #{forward.1} parent=1 // pred_region
      _
    $region117: #{forward.1} parent=1 // pred_fallthru
      _
    // Predicated region
    $region118: #{forward.1} parent=1 // pred_check
      _
    $region119: #{forward.1} parent=1 // pred_check_branch
      %159 = sbr.rel (0) target = $region121
    $region120: #{forward.1} parent=1 // pred_region
      _
    $region121: #{forward.1} parent=1 // pred_fallthru
      _
    // Predicated region
    $region122: #{forward.1} parent=1 // pred_check
      _
    $region123: #{forward.1} parent=1 // pred_check_branch
      %161 = sbr.rel (0) target = $region125
    $region124: #{forward.1} parent=1 // pred_region
      %s163 = ssub.s32 512, 512
      %164 = vsyncadd [#allocation15], %s163
      %s165 = sshll.u32 [#allocation16], 4
      %s166 = int_to_ptr.vmem [resolvable:$true] %s165
      %171 = dma.hbm_to_vmem [thread:$0]  %s61, 512, %s166, [#allocation15], 128, 128, 8
    $region125: #{forward.1} parent=1 // pred_fallthru
      _
    // Predicated region
    $region126: #{forward.1} parent=1 // pred_check
      _
    $region127: #{forward.1} parent=1 // pred_check_branch
      %173 = sbr.rel (0) target = $region129
    $region128: #{forward.1} parent=1 // pred_region
      %s175 = ssub.s32 16, 16
      %176 = vsyncadd [#allocation18], %s175
      %s178 = sshll.u32 [#allocation17], 4
      %s179 = int_to_ptr.vmem [resolvable:$true] %s178
      %181 = dma.hbm_to_vmem [thread:$0]  %s63, 16, %s179, [#allocation18]
    $region129: #{forward.1} parent=1 // pred_fallthru
      _
    // Predicated region
    $region130: #{forward.1} parent=1 // pred_check
      _
    $region131: #{forward.1} parent=1 // pred_check_branch
      %183 = sbr.rel (0) target = $region133
    $region132: #{forward.1} parent=1 // pred_region
      %s185 = ssub.s32 512, 512
      %186 = vsyncadd [#allocation18], %s185
      %s187 = sshll.u32 [#allocation19], 4
      %s188 = int_to_ptr.vmem [resolvable:$true] %s187
      %193 = dma.hbm_to_vmem [thread:$0]  %s65, 512, %s188, [#allocation18], 128, 128, 8
    $region133: #{forward.1} parent=1 // pred_fallthru
      _
    // Predicated region
    $region134: #{forward.1} parent=1 // pred_check
      _
    $region135: #{forward.1} parent=1 // pred_check_branch
      %195 = sbr.rel (0) target = $region137
    $region136: #{forward.1} parent=1 // pred_region
      %s197 = ssub.s32 16, 16
      %198 = vsyncadd [#allocation21], %s197
      %s200 = sshll.u32 [#allocation20], 4
      %s201 = int_to_ptr.vmem [resolvable:$true] %s200
      %203 = dma.hbm_to_vmem [thread:$0]  %s67, 16, %s201, [#allocation21]
    $region137: #{forward.1} parent=1 // pred_fallthru
      _
    // Predicated region
    $region138: #{forward.1} parent=1 // pred_check
      _
    $region139: #{forward.1} parent=1 // pred_check_branch
      %205 = sbr.rel (0) target = $region141
    $region140: #{forward.1} parent=1 // pred_region
      %206 = dma.done [#allocation12], 16
    $region141: #{forward.1} parent=1 // pred_fallthru
      _
    // Predicated region
    $region142: #{forward.1} parent=1 // pred_check
      _
    $region143: #{forward.1} parent=1 // pred_check_branch
      %208 = sbr.rel (0) target = $region145
    $region144: #{forward.1} parent=1 // pred_region
      %209 = dma.done [#allocation15], 16
    $region145: #{forward.1} parent=1 // pred_fallthru
      _
    // Predicated region
    $region146: #{forward.1} parent=1 // pred_check
      _
    $region147: #{forward.1} parent=1 // pred_check_branch
      %211 = sbr.rel (0) target = $region149
    $region148: #{forward.1} parent=1 // pred_region
      %212 = dma.done [#allocation15], 512
    $region149: #{forward.1} parent=1 // pred_fallthru
      _
    // Predicated region
    $region150: #{forward.1} parent=1 // pred_check
      _
    $region151: #{forward.1} parent=1 // pred_check_branch
      %214 = sbr.rel (0) target = $region153
    $region152: #{forward.1} parent=1 // pred_region
      %215 = dma.done [#allocation18], 16
    $region153: #{forward.1} parent=1 // pred_fallthru
      _
    // Predicated region
    $region154: #{forward.1} parent=1 // pred_check
      _
    $region155: #{forward.1} parent=1 // pred_check_branch
      %217 = sbr.rel (0) target = $region157
    $region156: #{forward.1} parent=1 // pred_region
      %218 = dma.done [#allocation18], 512
    $region157: #{forward.1} parent=1 // pred_fallthru
      _
    // Predicated region
    $region158: #{forward.1} parent=1 // pred_check
      _
    $region159: #{forward.1} parent=1 // pred_check_branch
      %220 = sbr.rel (0) target = $region161
    $region160: #{forward.1} parent=1 // pred_region
      %221 = dma.done [#allocation21], 16
    $region161: #{forward.1} parent=1 // pred_fallthru
      _
    %v222 = vld [vmem:[%s1] sm:$0x3]
    %v223 = vld [vmem:[%s3] sm:$0x3]
    %v224 = vmul.f32 %v222, %v223
    %v225 = vtanh.pop %v224
    %v226 = vld [vmem:[%s7] sm:$0xff]
    %v227 = vld [vmem:[%s7 + $0x8] sm:$0xff]
    %v228 = vld [vmem:[%s7 + $0x10] sm:$0xff]
    %v229 = vld [vmem:[%s7 + $0x18] sm:$0xff]
    %v230 = vld [vmem:[%s7 + $0x20] sm:$0xff]
    %v231 = vld [vmem:[%s7 + $0x28] sm:$0xff]
    %v232 = vld [vmem:[%s9] sm:$0x1]
    %v234 = vlaneseq
    %v235 = vshrl.u32 %v234, 7
    %v236 = vsub.s32 0, %v235
    %v237 = vrot.slane %v232, %v236
    %vm239 = vcmask 392192
    %v241 = vsel %vm239, %v225, 0
    %243 = vmatprep.subr.mxu0 0.0
    %244 = vmatpush1.msra.mxu0 0.0
    %245 = vmatprep.subr.mxu0 0.0
    %246 = vmatpush1.msra.mxu0 0.0
    %247 = vmatprep.subr.mxu0 0.0
    %248 = vmatpush1.msra.mxu0 0.0
    %249 = vmatprep.subr.mxu0 0.0
    %250 = vmatpush1.msra.mxu0 0.0
    %251 = vmatprep.subr.mxu0 0.0
    %252 = vmatpush1.msra.mxu0 0.0
    %253 = vmatprep.subr.mxu0 0.0
    %254 = vmatpush1.msra.mxu0 0.0
    %255 = vmatprep.subr.mxu0 0.0
    %256 = vmatpush1.msra.mxu0 0.0
    %257 = vmatprep.subr.mxu0 0.0
    %258 = vmatpush1.msra.mxu0 0.0
    %259 = vmatprep.subr.mxu0 0.0
    %260 = vmatpush1.msra.mxu0 0.0
    %261 = vmatprep.subr.mxu0 0.0
    %262 = vmatpush1.msra.mxu0 0.0
    %263 = vmatprep.subr.mxu0 0.0
    %264 = vmatpush1.msra.mxu0 %v231
    %265 = vmatprep.subr.mxu0 0.0
    %266 = vmatpush1.msra.mxu0 %v230
    %267 = vmatprep.subr.mxu0 0.0
    %268 = vmatpush1.msra.mxu0 %v229
    %269 = vmatprep.subr.mxu0 0.0
    %270 = vmatpush1.msra.mxu0 %v228
    %271 = vmatprep.subr.mxu0 0.0
    %272 = vmatpush1.msra.mxu0 %v227
    %273 = vmatprep.subr.mxu0 0.0
    %274 = vmatpush1.msra.mxu0 %v226
    %275 = vmatprep.subr.mxu0 0.0
    %276 = vmatpush2.msra.mxu0 0.0
    %277 = vmatprep.subr.mxu0 0.0
    %278 = vmatpush2.msra.mxu0 0.0
    %279 = vmatprep.subr.mxu0 0.0
    %280 = vmatpush2.msra.mxu0 0.0
    %281 = vmatprep.subr.mxu0 0.0
    %282 = vmatpush2.msra.mxu0 0.0
    %283 = vmatprep.subr.mxu0 0.0
    %284 = vmatpush2.msra.mxu0 0.0
    %285 = vmatprep.subr.mxu0 0.0
    %286 = vmatpush2.msra.mxu0 0.0
    %287 = vmatprep.subr.mxu0 0.0
    %288 = vmatpush2.msra.mxu0 0.0
    %289 = vmatprep.subr.mxu0 0.0
    %290 = vmatpush2.msra.mxu0 0.0
    %291 = vmatprep.subr.mxu0 0.0
    %292 = vmatpush2.msra.mxu0 0.0
    %293 = vmatprep.subr.mxu0 0.0
    %294 = vmatpush2.msra.mxu0 0.0
    %295 = vmatprep.subr.mxu0 0.0
    %296 = vmatpush2.msra.mxu0 0.0
    %297 = vmatprep.subr.mxu0 0.0
    %298 = vmatpush2.msra.mxu0 0.0
    %299 = vmatprep.subr.mxu0 0.0
    %300 = vmatpush2.msra.mxu0 0.0
    %301 = vmatprep.subr.mxu0 0.0
    %302 = vmatpush2.msra.mxu0 0.0
    %303 = vmatprep.subr.mxu0 0.0
    %304 = vmatpush2.msra.mxu0 0.0
    %305 = vmatprep.subr.mxu0 0.0
    %306 = vmatpush2.msra.mxu0 0.0
    %307 = vmatprep.mubr.f32.mxu0 0.0
    %308 = vmatmul.mubr.f32.gmra.mxu0 %v241
    %v309 = vpop.f32.mrf.mxu0
    %v310 = vadd.f32 %v237, %v309
    %v311 = vpop.f32.mrf.mxu0
    %312 = vdwg.mxu0
    %v313 = vld [vmem:[%s5] sm:$0xff]
    %v314 = vld [vmem:[%s5 + $0x8] sm:$0xff]
    %v315 = vld [vmem:[%s11] sm:$0xff]
    %v316 = vld [vmem:[%s11 + $0x8] sm:$0xff]
    %v317 = vld [vmem:[%s11 + $0x10] sm:$0xff]
    %v318 = vld [vmem:[%s11 + $0x18] sm:$0xff]
    %v319 = vld [vmem:[%s11 + $0x20] sm:$0xff]
    %v320 = vld [vmem:[%s11 + $0x28] sm:$0xff]
    %v321 = vld [vmem:[%s11 + $0x30] sm:$0xff]
    %v322 = vld [vmem:[%s11 + $0x38] sm:$0xff]
    %vm323 = vcmask 261120
    %v325 = vsel %vm323, %v313, 0
    %v328 = vsel %vm323, %v314, 0
    %330 = vmatprep.subr.mxu0 0.0
    %331 = vmatpush1.msra.mxu0 0.0
    %332 = vmatprep.subr.mxu0 0.0
    %333 = vmatpush1.msra.mxu0 0.0
    %334 = vmatprep.subr.mxu0 0.0
    %335 = vmatpush1.msra.mxu0 0.0
    %336 = vmatprep.subr.mxu0 0.0
    %337 = vmatpush1.msra.mxu0 0.0
    %338 = vmatprep.subr.mxu0 0.0
    %339 = vmatpush1.msra.mxu0 0.0
    %340 = vmatprep.subr.mxu0 0.0
    %341 = vmatpush1.msra.mxu0 0.0
    %342 = vmatprep.subr.mxu0 0.0
    %343 = vmatpush1.msra.mxu0 0.0
    %344 = vmatprep.subr.mxu0 0.0
    %345 = vmatpush1.msra.mxu0 0.0
    %346 = vmatprep.subr.mxu0 0.0
    %347 = vmatpush1.msra.mxu0 0.0
    %348 = vmatprep.subr.mxu0 0.0
    %349 = vmatpush1.msra.mxu0 0.0
    %350 = vmatprep.subr.mxu0 0.0
    %351 = vmatpush1.msra.mxu0 0.0
    %352 = vmatprep.subr.mxu0 0.0
    %353 = vmatpush1.msra.mxu0 0.0
    %354 = vmatprep.subr.mxu0 %v322
    %355 = vmatpush1.msra.mxu0 %v321
    %356 = vmatprep.subr.mxu0 %v320
    %357 = vmatpush1.msra.mxu0 %v319
    %358 = vmatprep.subr.mxu0 %v318
    %359 = vmatpush1.msra.mxu0 %v317
    %360 = vmatprep.subr.mxu0 %v316
    %361 = vmatpush1.msra.mxu0 %v315
    %362 = vmatprep.subr.mxu0 0.0
    %363 = vmatpush2.msra.mxu0 0.0
    %364 = vmatprep.subr.mxu0 0.0
    %365 = vmatpush2.msra.mxu0 0.0
    %366 = vmatprep.subr.mxu0 0.0
    %367 = vmatpush2.msra.mxu0 0.0
    %368 = vmatprep.subr.mxu0 0.0
    %369 = vmatpush2.msra.mxu0 0.0
    %370 = vmatprep.subr.mxu0 0.0
    %371 = vmatpush2.msra.mxu0 0.0
    %372 = vmatprep.subr.mxu0 0.0
    %373 = vmatpush2.msra.mxu0 0.0
    %374 = vmatprep.subr.mxu0 0.0
    %375 = vmatpush2.msra.mxu0 0.0
    %376 = vmatprep.subr.mxu0 0.0
    %377 = vmatpush2.msra.mxu0 0.0
    %378 = vmatprep.subr.mxu0 0.0
    %379 = vmatpush2.msra.mxu0 0.0
    %380 = vmatprep.subr.mxu0 0.0
    %381 = vmatpush2.msra.mxu0 0.0
    %382 = vmatprep.subr.mxu0 0.0
    %383 = vmatpush2.msra.mxu0 0.0
    %384 = vmatprep.subr.mxu0 0.0
    %385 = vmatpush2.msra.mxu0 0.0
    %386 = vmatprep.subr.mxu0 0.0
    %387 = vmatpush2.msra.mxu0 0.0
    %388 = vmatprep.subr.mxu0 0.0
    %389 = vmatpush2.msra.mxu0 0.0
    %390 = vmatprep.subr.mxu0 0.0
    %391 = vmatpush2.msra.mxu0 0.0
    %392 = vmatprep.subr.mxu0 0.0
    %393 = vmatpush2.msra.mxu0 0.0
    %394 = vmatprep.mubr.f32.mxu0 0.0
    %395 = vmatmul.mubr.f32.gmra.mxu0 %v325
    %v396 = vpop.f32.mrf.mxu0
    %v397 = vadd.f32 0.0, %v396
    %v398 = vpop.f32.mrf.mxu0
    %v399 = vadd.f32 0.0, %v398
    %400 = vmatprep.mubr.f32.mxu0 0.0
    %401 = vmatmul.mubr.f32.gmra.mxu0 %v328
    %v402 = vpop.f32.mrf.mxu0
    %v403 = vadd.f32 0.0, %v402
    %v404 = vpop.f32.mrf.mxu0
    %v405 = vadd.f32 0.0, %v404
    %406 = vdwg.mxu0
    %407 = vst [vmem:[#allocation2] sm:$0xff] %v397
    %vm408 = vcmask 523264
    %409 = vst.msk [vmem:[#allocation2 + $0x8] sm:$0xff] %vm408, %v399
    %410 = vst [vmem:[#allocation2 + $0x10] sm:$0xff] %v403
    %411 = vst.msk [vmem:[#allocation2 + $0x18] sm:$0xff] %vm408, %v405
    %v412 = vld [vmem:[%s13] sm:$0xff]
    %v413 = vld [vmem:[%s13 + $0x8] sm:$0xff]
    %v414 = vld [vmem:[%s13 + $0x10] sm:$0xff]
    %v415 = vld [vmem:[%s13 + $0x18] sm:$0xff]
    %v416 = vld [vmem:[%s13 + $0x20] sm:$0xff]
    %v417 = vld [vmem:[%s13 + $0x28] sm:$0xff]
    %v418 = vld [vmem:[%s13 + $0x30] sm:$0xff]
    %v419 = vld [vmem:[%s13 + $0x38] sm:$0xff]
    %v420 = vld [vmem:[%s17] sm:$0x3]
    %v422 = vlaneseq
    %v423 = vshrl.u32 %v422, 7
    %v424 = vsub.s32 0, %v423
    %v425 = vrot.slane %v420, %v424
    %v426 = vlaneseq
    %v427 = vshrl.u32 %v426, 7
    %v428 = vsub.s32 1, %v427
    %v429 = vrot.slane %v420, %v428
    %v433 = vsel %vm323, %v310, 0
    %435 = vmatprep.subr.mxu0 0.0
    %436 = vmatpush1.msra.mxu0 0.0
    %437 = vmatprep.subr.mxu0 0.0
    %438 = vmatpush1.msra.mxu0 0.0
    %439 = vmatprep.subr.mxu0 0.0
    %440 = vmatpush1.msra.mxu0 0.0
    %441 = vmatprep.subr.mxu0 0.0
    %442 = vmatpush1.msra.mxu0 0.0
    %443 = vmatprep.subr.mxu0 0.0
    %444 = vmatpush1.msra.mxu0 0.0
    %445 = vmatprep.subr.mxu0 0.0
    %446 = vmatpush1.msra.mxu0 0.0
    %447 = vmatprep.subr.mxu0 0.0
    %448 = vmatpush1.msra.mxu0 0.0
    %449 = vmatprep.subr.mxu0 0.0
    %450 = vmatpush1.msra.mxu0 0.0
    %451 = vmatprep.subr.mxu0 0.0
    %452 = vmatpush1.msra.mxu0 0.0
    %453 = vmatprep.subr.mxu0 0.0
    %454 = vmatpush1.msra.mxu0 0.0
    %455 = vmatprep.subr.mxu0 0.0
    %456 = vmatpush1.msra.mxu0 0.0
    %457 = vmatprep.subr.mxu0 0.0
    %458 = vmatpush1.msra.mxu0 0.0
    %459 = vmatprep.subr.mxu0 %v419
    %460 = vmatpush1.msra.mxu0 %v418
    %461 = vmatprep.subr.mxu0 %v417
    %462 = vmatpush1.msra.mxu0 %v416
    %463 = vmatprep.subr.mxu0 %v415
    %464 = vmatpush1.msra.mxu0 %v414
    %465 = vmatprep.subr.mxu0 %v413
    %466 = vmatpush1.msra.mxu0 %v412
    %467 = vmatprep.subr.mxu0 0.0
    %468 = vmatpush2.msra.mxu0 0.0
    %469 = vmatprep.subr.mxu0 0.0
    %470 = vmatpush2.msra.mxu0 0.0
    %471 = vmatprep.subr.mxu0 0.0
    %472 = vmatpush2.msra.mxu0 0.0
    %473 = vmatprep.subr.mxu0 0.0
    %474 = vmatpush2.msra.mxu0 0.0
    %475 = vmatprep.subr.mxu0 0.0
    %476 = vmatpush2.msra.mxu0 0.0
    %477 = vmatprep.subr.mxu0 0.0
    %478 = vmatpush2.msra.mxu0 0.0
    %479 = vmatprep.subr.mxu0 0.0
    %480 = vmatpush2.msra.mxu0 0.0
    %481 = vmatprep.subr.mxu0 0.0
    %482 = vmatpush2.msra.mxu0 0.0
    %483 = vmatprep.subr.mxu0 0.0
    %484 = vmatpush2.msra.mxu0 0.0
    %485 = vmatprep.subr.mxu0 0.0
    %486 = vmatpush2.msra.mxu0 0.0
    %487 = vmatprep.subr.mxu0 0.0
    %488 = vmatpush2.msra.mxu0 0.0
    %489 = vmatprep.subr.mxu0 0.0
    %490 = vmatpush2.msra.mxu0 0.0
    %491 = vmatprep.subr.mxu0 0.0
    %492 = vmatpush2.msra.mxu0 0.0
    %493 = vmatprep.subr.mxu0 0.0
    %494 = vmatpush2.msra.mxu0 0.0
    %495 = vmatprep.subr.mxu0 0.0
    %496 = vmatpush2.msra.mxu0 0.0
    %497 = vmatprep.subr.mxu0 0.0
    %498 = vmatpush2.msra.mxu0 0.0
    %499 = vmatprep.mubr.f32.mxu0 0.0
    %500 = vmatmul.mubr.f32.gmra.mxu0 %v433
    %v501 = vpop.f32.mrf.mxu0
    %v502 = vadd.f32 %v425, %v501
    %v503 = vpop.f32.mrf.mxu0
    %v504 = vadd.f32 %v429, %v503
    %505 = vdwg.mxu0
    %v506 = vld [vmem:[%s15] sm:$0xff]
    %v507 = vld [vmem:[%s15 + $0x8] sm:$0xff]
    %v508 = vld [vmem:[%s15 + $0x10] sm:$0xff]
    %v509 = vld [vmem:[%s15 + $0x18] sm:$0xff]
    %v510 = vld [vmem:[%s15 + $0x20] sm:$0xff]
    %v511 = vld [vmem:[%s15 + $0x28] sm:$0xff]
    %v512 = vld [vmem:[%s15 + $0x30] sm:$0xff]
    %v513 = vld [vmem:[%s15 + $0x38] sm:$0xff]
    %v514 = vld [vmem:[%s15 + $0x40] sm:$0xff]
    %v515 = vld [vmem:[%s15 + $0x48] sm:$0xff]
    %v516 = vld [vmem:[%s15 + $0x50] sm:$0xff]
    %v517 = vld [vmem:[%s15 + $0x58] sm:$0xff]
    %v518 = vld [vmem:[%s15 + $0x60] sm:$0xff]
    %v519 = vld [vmem:[%s15 + $0x68] sm:$0xff]
    %v520 = vld [vmem:[%s15 + $0x70] sm:$0xff]
    %v521 = vld [vmem:[%s15 + $0x78] sm:$0xff]
    %v522 = vld [vmem:[%s19] sm:$0x3]
    %v523 = vld [vmem:[#allocation2] sm:$0x3]
    %v524 = vld [vmem:[#allocation2 + $0x8] sm:$0x3]
    %v525 = vadd.f32 %v523, %v502
    %v526 = vadd.f32 %v524, %v504
    %v528 = vlaneseq
    %v529 = vshrl.u32 %v528, 7
    %v530 = vsub.s32 0, %v529
    %v531 = vrot.slane %v522, %v530
    %v532 = vlaneseq
    %v533 = vshrl.u32 %v532, 7
    %v534 = vsub.s32 1, %v533
    %v535 = vrot.slane %v522, %v534
    %v539 = vsel %vm408, 0.0, 0
    %541 = vmatprep.subr.mxu0 0.0
    %542 = vmatpush1.msra.mxu0 0.0
    %543 = vmatprep.subr.mxu0 0.0
    %544 = vmatpush1.msra.mxu0 0.0
    %545 = vmatprep.subr.mxu0 0.0
    %546 = vmatpush1.msra.mxu0 0.0
    %547 = vmatprep.subr.mxu0 0.0
    %548 = vmatpush1.msra.mxu0 0.0
    %549 = vmatprep.subr.mxu0 0.0
    %550 = vmatpush1.msra.mxu0 0.0
    %551 = vmatprep.subr.mxu0 0.0
    %552 = vmatpush1.msra.mxu0 0.0
    %553 = vmatprep.subr.mxu0 0.0
    %554 = vmatpush1.msra.mxu0 0.0
    %555 = vmatprep.subr.mxu0 0.0
    %556 = vmatpush1.msra.mxu0 0.0
    %557 = vmatprep.subr.mxu0 %v521
    %558 = vmatpush1.msra.mxu0 %v520
    %559 = vmatprep.subr.mxu0 %v519
    %560 = vmatpush1.msra.mxu0 %v518
    %561 = vmatprep.subr.mxu0 %v517
    %562 = vmatpush1.msra.mxu0 %v516
    %563 = vmatprep.subr.mxu0 %v515
    %564 = vmatpush1.msra.mxu0 %v514
    %565 = vmatprep.subr.mxu0 %v513
    %566 = vmatpush1.msra.mxu0 %v512
    %567 = vmatprep.subr.mxu0 %v511
    %568 = vmatpush1.msra.mxu0 %v510
    %569 = vmatprep.subr.mxu0 %v509
    %570 = vmatpush1.msra.mxu0 %v508
    %571 = vmatprep.subr.mxu0 %v507
    %572 = vmatpush1.msra.mxu0 %v506
    %573 = vmatprep.subr.mxu0 0.0
    %574 = vmatpush2.msra.mxu0 0.0
    %575 = vmatprep.subr.mxu0 0.0
    %576 = vmatpush2.msra.mxu0 0.0
    %577 = vmatprep.subr.mxu0 0.0
    %578 = vmatpush2.msra.mxu0 0.0
    %579 = vmatprep.subr.mxu0 0.0
    %580 = vmatpush2.msra.mxu0 0.0
    %581 = vmatprep.subr.mxu0 0.0
    %582 = vmatpush2.msra.mxu0 0.0
    %583 = vmatprep.subr.mxu0 0.0
    %584 = vmatpush2.msra.mxu0 0.0
    %585 = vmatprep.subr.mxu0 0.0
    %586 = vmatpush2.msra.mxu0 0.0
    %587 = vmatprep.subr.mxu0 0.0
    %588 = vmatpush2.msra.mxu0 0.0
    %589 = vmatprep.subr.mxu0 0.0
    %590 = vmatpush2.msra.mxu0 0.0
    %591 = vmatprep.subr.mxu0 0.0
    %592 = vmatpush2.msra.mxu0 0.0
    %593 = vmatprep.subr.mxu0 0.0
    %594 = vmatpush2.msra.mxu0 0.0
    %595 = vmatprep.subr.mxu0 0.0
    %596 = vmatpush2.msra.mxu0 0.0
    %597 = vmatprep.subr.mxu0 0.0
    %598 = vmatpush2.msra.mxu0 0.0
    %599 = vmatprep.subr.mxu0 0.0
    %600 = vmatpush2.msra.mxu0 0.0
    %601 = vmatprep.subr.mxu0 0.0
    %602 = vmatpush2.msra.mxu0 0.0
    %603 = vmatprep.subr.mxu0 0.0
    %604 = vmatpush2.msra.mxu0 0.0
    %605 = vmatprep.mubr.f32.mxu0 0.0
    %606 = vmatmul.mubr.f32.gmra.mxu0 %v539
    %v607 = vpop.f32.mrf.mxu0
    %v608 = vadd.f32 %v531, %v607
    %v609 = vpop.f32.mrf.mxu0
    %v610 = vadd.f32 %v535, %v609
    %611 = vdwg.mxu0
    %v612 = vadd.f32 %v525, %v608
    %v613 = vxor.u32 %v612, 2147483648
    %v614 = vmul.f32 %v613, 1.442695
    %v615 = vpow.pop %v614
    %v616 = vadd.f32 %v615, 1.0
    %v617 = vrcp.pop %v616
    %v618 = vmul.f32 1.0, %v617
    %v619 = vmul.f32 %v618, %v610
    %v620 = vadd.f32 %v526, %v619
    %v621 = vtanh.pop %v620
    %v622 = vsub.f32 1.0, %v618
    %624 = vrot.lane.b32.xlu0 %v621, 64
    %v625 = vpop.permute.xlu0 %624
    %v627 = vmul.f32 %v622, %v625
    %v628 = vmul.f32 %v618, 0.0
    %v629 = vadd.f32 %v627, %v628
    %631 = vrot.lane.b32.xlu0 %v629, 64
    %v632 = vpop.permute.xlu0 %631
    %vm634 = vcmask 254976
    %635 = vst.msk [vmem:[#allocation5] sm:$0x3] %vm634, %v632
    %v636 = vld [vmem:[#allocation2] sm:$0xc]
    %v637 = vld [vmem:[#allocation2 + $0x8] sm:$0xc]
    %v640 = vrot.slane %v502, 6
    %v641 = vrot.slane %v504, 6
    %v644 = vadd.f32 %v636, %v640
    %v645 = vadd.f32 %v637, %v641
    %v646 = vsel %vm408, %v632, 0
    %648 = vmatprep.subr.mxu0 0.0
    %649 = vmatpush1.msra.mxu0 0.0
    %650 = vmatprep.subr.mxu0 0.0
    %651 = vmatpush1.msra.mxu0 0.0
    %652 = vmatprep.subr.mxu0 0.0
    %653 = vmatpush1.msra.mxu0 0.0
    %654 = vmatprep.subr.mxu0 0.0
    %655 = vmatpush1.msra.mxu0 0.0
    %656 = vmatprep.subr.mxu0 0.0
    %657 = vmatpush1.msra.mxu0 0.0
    %658 = vmatprep.subr.mxu0 0.0
    %659 = vmatpush1.msra.mxu0 0.0
    %660 = vmatprep.subr.mxu0 0.0
    %661 = vmatpush1.msra.mxu0 0.0
    %662 = vmatprep.subr.mxu0 0.0
    %663 = vmatpush1.msra.mxu0 0.0
    %664 = vmatprep.subr.mxu0 %v521
    %665 = vmatpush1.msra.mxu0 %v520
    %666 = vmatprep.subr.mxu0 %v519
    %667 = vmatpush1.msra.mxu0 %v518
    %668 = vmatprep.subr.mxu0 %v517
    %669 = vmatpush1.msra.mxu0 %v516
    %670 = vmatprep.subr.mxu0 %v515
    %671 = vmatpush1.msra.mxu0 %v514
    %672 = vmatprep.subr.mxu0 %v513
    %673 = vmatpush1.msra.mxu0 %v512
    %674 = vmatprep.subr.mxu0 %v511
    %675 = vmatpush1.msra.mxu0 %v510
    %676 = vmatprep.subr.mxu0 %v509
    %677 = vmatpush1.msra.mxu0 %v508
    %678 = vmatprep.subr.mxu0 %v507
    %679 = vmatpush1.msra.mxu0 %v506
    %680 = vmatprep.subr.mxu0 0.0
    %681 = vmatpush2.msra.mxu0 0.0
    %682 = vmatprep.subr.mxu0 0.0
    %683 = vmatpush2.msra.mxu0 0.0
    %684 = vmatprep.subr.mxu0 0.0
    %685 = vmatpush2.msra.mxu0 0.0
    %686 = vmatprep.subr.mxu0 0.0
    %687 = vmatpush2.msra.mxu0 0.0
    %688 = vmatprep.subr.mxu0 0.0
    %689 = vmatpush2.msra.mxu0 0.0
    %690 = vmatprep.subr.mxu0 0.0
    %691 = vmatpush2.msra.mxu0 0.0
    %692 = vmatprep.subr.mxu0 0.0
    %693 = vmatpush2.msra.mxu0 0.0
    %694 = vmatprep.subr.mxu0 0.0
    %695 = vmatpush2.msra.mxu0 0.0
    %696 = vmatprep.subr.mxu0 0.0
    %697 = vmatpush2.msra.mxu0 0.0
    %698 = vmatprep.subr.mxu0 0.0
    %699 = vmatpush2.msra.mxu0 0.0
    %700 = vmatprep.subr.mxu0 0.0
    %701 = vmatpush2.msra.mxu0 0.0
    %702 = vmatprep.subr.mxu0 0.0
    %703 = vmatpush2.msra.mxu0 0.0
    %704 = vmatprep.subr.mxu0 0.0
    %705 = vmatpush2.msra.mxu0 0.0
    %706 = vmatprep.subr.mxu0 0.0
    %707 = vmatpush2.msra.mxu0 0.0
    %708 = vmatprep.subr.mxu0 0.0
    %709 = vmatpush2.msra.mxu0 0.0
    %710 = vmatprep.subr.mxu0 0.0
    %711 = vmatpush2.msra.mxu0 0.0
    %712 = vmatprep.mubr.f32.mxu0 0.0
    %713 = vmatmul.mubr.f32.gmra.mxu0 %v646
    %v714 = vpop.f32.mrf.mxu0
    %v715 = vadd.f32 %v531, %v714
    %v716 = vpop.f32.mrf.mxu0
    %v717 = vadd.f32 %v535, %v716
    %718 = vdwg.mxu0
    %v720 = vrot.slane %v715, 6
    %v722 = vadd.f32 %v644, %v720
    %v723 = vxor.u32 %v722, 2147483648
    %v724 = vmul.f32 %v723, 1.442695
    %v725 = vpow.pop %v724
    %v726 = vadd.f32 %v725, 1.0
    %v727 = vrcp.pop %v726
    %v728 = vmul.f32 1.0, %v727
    %v730 = vrot.slane %v717, 6
    %v732 = vmul.f32 %v728, %v730
    %v733 = vadd.f32 %v645, %v732
    %v734 = vtanh.pop %v733
    %v735 = vsub.f32 1.0, %v728
    %737 = vrot.lane.b32.xlu0 %v734, 64
    %v738 = vpop.permute.xlu0 %737
    %v740 = vmul.f32 %v735, %v738
    %v741 = vrot.slane %v629, 6
    %v743 = vmul.f32 %v728, %v741
    %v744 = vadd.f32 %v740, %v743
    %746 = vrot.lane.b32.xlu0 %v744, 64
    %v747 = vpop.permute.xlu0 %746
    %vm749 = vcmask 257026
    %750 = vst.msk [vmem:[#allocation5] sm:$0xc] %vm749, %v747
    %v751 = vld [vmem:[#allocation2] sm:$0x30]
    %v752 = vld [vmem:[#allocation2 + $0x8] sm:$0x30]
    %v753 = vrot.slane %v502, 4
    %v754 = vrot.slane %v504, 4
    %v757 = vadd.f32 %v751, %v753
    %v758 = vadd.f32 %v752, %v754
    %v759 = vrot.slane %v744, 2
    %760 = vrot.lane.b32.xlu0 %v759, 64
    %v761 = vpop.permute.xlu0 %760
    %v762 = vsel %vm408, %v761, 0
    %764 = vmatprep.subr.mxu0 0.0
    %765 = vmatpush1.msra.mxu0 0.0
    %766 = vmatprep.subr.mxu0 0.0
    %767 = vmatpush1.msra.mxu0 0.0
    %768 = vmatprep.subr.mxu0 0.0
    %769 = vmatpush1.msra.mxu0 0.0
    %770 = vmatprep.subr.mxu0 0.0
    %771 = vmatpush1.msra.mxu0 0.0
    %772 = vmatprep.subr.mxu0 0.0
    %773 = vmatpush1.msra.mxu0 0.0
    %774 = vmatprep.subr.mxu0 0.0
    %775 = vmatpush1.msra.mxu0 0.0
    %776 = vmatprep.subr.mxu0 0.0
    %777 = vmatpush1.msra.mxu0 0.0
    %778 = vmatprep.subr.mxu0 0.0
    %779 = vmatpush1.msra.mxu0 0.0
    %780 = vmatprep.subr.mxu0 %v521
    %781 = vmatpush1.msra.mxu0 %v520
    %782 = vmatprep.subr.mxu0 %v519
    %783 = vmatpush1.msra.mxu0 %v518
    %784 = vmatprep.subr.mxu0 %v517
    %785 = vmatpush1.msra.mxu0 %v516
    %786 = vmatprep.subr.mxu0 %v515
    %787 = vmatpush1.msra.mxu0 %v514
    %788 = vmatprep.subr.mxu0 %v513
    %789 = vmatpush1.msra.mxu0 %v512
    %790 = vmatprep.subr.mxu0 %v511
    %791 = vmatpush1.msra.mxu0 %v510
    %792 = vmatprep.subr.mxu0 %v509
    %793 = vmatpush1.msra.mxu0 %v508
    %794 = vmatprep.subr.mxu0 %v507
    %795 = vmatpush1.msra.mxu0 %v506
    %796 = vmatprep.subr.mxu0 0.0
    %797 = vmatpush2.msra.mxu0 0.0
    %798 = vmatprep.subr.mxu0 0.0
    %799 = vmatpush2.msra.mxu0 0.0
    %800 = vmatprep.subr.mxu0 0.0
    %801 = vmatpush2.msra.mxu0 0.0
    %802 = vmatprep.subr.mxu0 0.0
    %803 = vmatpush2.msra.mxu0 0.0
    %804 = vmatprep.subr.mxu0 0.0
    %805 = vmatpush2.msra.mxu0 0.0
    %806 = vmatprep.subr.mxu0 0.0
    %807 = vmatpush2.msra.mxu0 0.0
    %808 = vmatprep.subr.mxu0 0.0
    %809 = vmatpush2.msra.mxu0 0.0
    %810 = vmatprep.subr.mxu0 0.0
    %811 = vmatpush2.msra.mxu0 0.0
    %812 = vmatprep.subr.mxu0 0.0
    %813 = vmatpush2.msra.mxu0 0.0
    %814 = vmatprep.subr.mxu0 0.0
    %815 = vmatpush2.msra.mxu0 0.0
    %816 = vmatprep.subr.mxu0 0.0
    %817 = vmatpush2.msra.mxu0 0.0
    %818 = vmatprep.subr.mxu0 0.0
    %819 = vmatpush2.msra.mxu0 0.0
    %820 = vmatprep.subr.mxu0 0.0
    %821 = vmatpush2.msra.mxu0 0.0
    %822 = vmatprep.subr.mxu0 0.0
    %823 = vmatpush2.msra.mxu0 0.0
    %824 = vmatprep.subr.mxu0 0.0
    %825 = vmatpush2.msra.mxu0 0.0
    %826 = vmatprep.subr.mxu0 0.0
    %827 = vmatpush2.msra.mxu0 0.0
    %828 = vmatprep.mubr.f32.mxu0 0.0
    %829 = vmatmul.mubr.f32.gmra.mxu0 %v762
    %v830 = vpop.f32.mrf.mxu0
    %v831 = vadd.f32 %v531, %v830
    %v832 = vpop.f32.mrf.mxu0
    %v833 = vadd.f32 %v535, %v832
    %834 = vdwg.mxu0
    %v836 = vrot.slane %v831, 4
    %v838 = vadd.f32 %v757, %v836
    %v839 = vxor.u32 %v838, 2147483648
    %v840 = vmul.f32 %v839, 1.442695
    %v841 = vpow.pop %v840
    %v842 = vadd.f32 %v841, 1.0
    %v843 = vrcp.pop %v842
    %v844 = vmul.f32 1.0, %v843
    %v846 = vrot.slane %v833, 4
    %v848 = vmul.f32 %v844, %v846
    %v849 = vadd.f32 %v758, %v848
    %v850 = vtanh.pop %v849
    %v851 = vsub.f32 1.0, %v844
    %853 = vrot.lane.b32.xlu0 %v850, 64
    %v854 = vpop.permute.xlu0 %853
    %v856 = vmul.f32 %v851, %v854
    %v857 = vrot.slane %v744, 6
    %v859 = vmul.f32 %v844, %v857
    %v860 = vadd.f32 %v856, %v859
    %862 = vrot.lane.b32.xlu0 %v860, 64
    %v863 = vpop.permute.xlu0 %862
    %vm865 = vcmask 259076
    %866 = vst.msk [vmem:[#allocation5] sm:$0x30] %vm865, %v863
    %v867 = vld [vmem:[#allocation2] sm:$0xc0]
    %v868 = vld [vmem:[#allocation2 + $0x8] sm:$0xc0]
    %v869 = vrot.slane %v502, 2
    %v870 = vrot.slane %v504, 2
    %v873 = vadd.f32 %v867, %v869
    %v874 = vadd.f32 %v868, %v870
    %v875 = vrot.slane %v860, 4
    %876 = vrot.lane.b32.xlu0 %v875, 64
    %v877 = vpop.permute.xlu0 %876
    %v878 = vsel %vm408, %v877, 0
    %880 = vmatprep.subr.mxu0 0.0
    %881 = vmatpush1.msra.mxu0 0.0
    %882 = vmatprep.subr.mxu0 0.0
    %883 = vmatpush1.msra.mxu0 0.0
    %884 = vmatprep.subr.mxu0 0.0
    %885 = vmatpush1.msra.mxu0 0.0
    %886 = vmatprep.subr.mxu0 0.0
    %887 = vmatpush1.msra.mxu0 0.0
    %888 = vmatprep.subr.mxu0 0.0
    %889 = vmatpush1.msra.mxu0 0.0
    %890 = vmatprep.subr.mxu0 0.0
    %891 = vmatpush1.msra.mxu0 0.0
    %892 = vmatprep.subr.mxu0 0.0
    %893 = vmatpush1.msra.mxu0 0.0
    %894 = vmatprep.subr.mxu0 0.0
    %895 = vmatpush1.msra.mxu0 0.0
    %896 = vmatprep.subr.mxu0 %v521
    %897 = vmatpush1.msra.mxu0 %v520
    %898 = vmatprep.subr.mxu0 %v519
    %899 = vmatpush1.msra.mxu0 %v518
    %900 = vmatprep.subr.mxu0 %v517
    %901 = vmatpush1.msra.mxu0 %v516
    %902 = vmatprep.subr.mxu0 %v515
    %903 = vmatpush1.msra.mxu0 %v514
    %904 = vmatprep.subr.mxu0 %v513
    %905 = vmatpush1.msra.mxu0 %v512
    %906 = vmatprep.subr.mxu0 %v511
    %907 = vmatpush1.msra.mxu0 %v510
    %908 = vmatprep.subr.mxu0 %v509
    %909 = vmatpush1.msra.mxu0 %v508
    %910 = vmatprep.subr.mxu0 %v507
    %911 = vmatpush1.msra.mxu0 %v506
    %912 = vmatprep.subr.mxu0 0.0
    %913 = vmatpush2.msra.mxu0 0.0
    %914 = vmatprep.subr.mxu0 0.0
    %915 = vmatpush2.msra.mxu0 0.0
    %916 = vmatprep.subr.mxu0 0.0
    %917 = vmatpush2.msra.mxu0 0.0
    %918 = vmatprep.subr.mxu0 0.0
    %919 = vmatpush2.msra.mxu0 0.0
    %920 = vmatprep.subr.mxu0 0.0
    %921 = vmatpush2.msra.mxu0 0.0
    %922 = vmatprep.subr.mxu0 0.0
    %923 = vmatpush2.msra.mxu0 0.0
    %924 = vmatprep.subr.mxu0 0.0
    %925 = vmatpush2.msra.mxu0 0.0
    %926 = vmatprep.subr.mxu0 0.0
    %927 = vmatpush2.msra.mxu0 0.0
    %928 = vmatprep.subr.mxu0 0.0
    %929 = vmatpush2.msra.mxu0 0.0
    %930 = vmatprep.subr.mxu0 0.0
    %931 = vmatpush2.msra.mxu0 0.0
    %932 = vmatprep.subr.mxu0 0.0
    %933 = vmatpush2.msra.mxu0 0.0
    %934 = vmatprep.subr.mxu0 0.0
    %935 = vmatpush2.msra.mxu0 0.0
    %936 = vmatprep.subr.mxu0 0.0
    %937 = vmatpush2.msra.mxu0 0.0
    %938 = vmatprep.subr.mxu0 0.0
    %939 = vmatpush2.msra.mxu0 0.0
    %940 = vmatprep.subr.mxu0 0.0
    %941 = vmatpush2.msra.mxu0 0.0
    %942 = vmatprep.subr.mxu0 0.0
    %943 = vmatpush2.msra.mxu0 0.0
    %944 = vmatprep.mubr.f32.mxu0 0.0
    %945 = vmatmul.mubr.f32.gmra.mxu0 %v878
    %v946 = vpop.f32.mrf.mxu0
    %v947 = vadd.f32 %v531, %v946
    %v948 = vpop.f32.mrf.mxu0
    %v949 = vadd.f32 %v535, %v948
    %950 = vdwg.mxu0
    %v952 = vrot.slane %v947, 2
    %v954 = vadd.f32 %v873, %v952
    %v955 = vxor.u32 %v954, 2147483648
    %v956 = vmul.f32 %v955, 1.442695
    %v957 = vpow.pop %v956
    %v958 = vadd.f32 %v957, 1.0
    %v959 = vrcp.pop %v958
    %v960 = vmul.f32 1.0, %v959
    %v962 = vrot.slane %v949, 2
    %v964 = vmul.f32 %v960, %v962
    %v965 = vadd.f32 %v874, %v964
    %v966 = vtanh.pop %v965
    %v967 = vsub.f32 1.0, %v960
    %969 = vrot.lane.b32.xlu0 %v966, 64
    %v970 = vpop.permute.xlu0 %969
    %v972 = vmul.f32 %v967, %v970
    %v973 = vrot.slane %v860, 6
    %v975 = vmul.f32 %v960, %v973
    %v976 = vadd.f32 %v972, %v975
    %978 = vrot.lane.b32.xlu0 %v976, 64
    %v979 = vpop.permute.xlu0 %978
    %vm981 = vcmask 261126
    %982 = vst.msk [vmem:[#allocation5] sm:$0xc0] %vm981, %v979
    %v983 = vld [vmem:[#allocation2 + $0x10] sm:$0x3]
    %v984 = vld [vmem:[#allocation2 + $0x18] sm:$0x3]
    %v985 = vadd.f32 %v983, %v502
    %v986 = vadd.f32 %v984, %v504
    %v987 = vrot.slane %v976, 6
    %988 = vrot.lane.b32.xlu0 %v987, 64
    %v989 = vpop.permute.xlu0 %988
    %v990 = vsel %vm408, %v989, 0
    %992 = vmatprep.subr.mxu0 0.0
    %993 = vmatpush1.msra.mxu0 0.0
    %994 = vmatprep.subr.mxu0 0.0
    %995 = vmatpush1.msra.mxu0 0.0
    %996 = vmatprep.subr.mxu0 0.0
    %997 = vmatpush1.msra.mxu0 0.0
    %998 = vmatprep.subr.mxu0 0.0
    %999 = vmatpush1.msra.mxu0 0.0
    %1000 = vmatprep.subr.mxu0 0.0
    %1001 = vmatpush1.msra.mxu0 0.0
    %1002 = vmatprep.subr.mxu0 0.0
    %1003 = vmatpush1.msra.mxu0 0.0
    %1004 = vmatprep.subr.mxu0 0.0
    %1005 = vmatpush1.msra.mxu0 0.0
    %1006 = vmatprep.subr.mxu0 0.0
    %1007 = vmatpush1.msra.mxu0 0.0
    %1008 = vmatprep.subr.mxu0 %v521
    %1009 = vmatpush1.msra.mxu0 %v520
    %1010 = vmatprep.subr.mxu0 %v519
    %1011 = vmatpush1.msra.mxu0 %v518
    %1012 = vmatprep.subr.mxu0 %v517
    %1013 = vmatpush1.msra.mxu0 %v516
    %1014 = vmatprep.subr.mxu0 %v515
    %1015 = vmatpush1.msra.mxu0 %v514
    %1016 = vmatprep.subr.mxu0 %v513
    %1017 = vmatpush1.msra.mxu0 %v512
    %1018 = vmatprep.subr.mxu0 %v511
    %1019 = vmatpush1.msra.mxu0 %v510
    %1020 = vmatprep.subr.mxu0 %v509
    %1021 = vmatpush1.msra.mxu0 %v508
    %1022 = vmatprep.subr.mxu0 %v507
    %1023 = vmatpush1.msra.mxu0 %v506
    %1024 = vmatprep.subr.mxu0 0.0
    %1025 = vmatpush2.msra.mxu0 0.0
    %1026 = vmatprep.subr.mxu0 0.0
    %1027 = vmatpush2.msra.mxu0 0.0
    %1028 = vmatprep.subr.mxu0 0.0
    %1029 = vmatpush2.msra.mxu0 0.0
    %1030 = vmatprep.subr.mxu0 0.0
    %1031 = vmatpush2.msra.mxu0 0.0
    %1032 = vmatprep.subr.mxu0 0.0
    %1033 = vmatpush2.msra.mxu0 0.0
    %1034 = vmatprep.subr.mxu0 0.0
    %1035 = vmatpush2.msra.mxu0 0.0
    %1036 = vmatprep.subr.mxu0 0.0
    %1037 = vmatpush2.msra.mxu0 0.0
    %1038 = vmatprep.subr.mxu0 0.0
    %1039 = vmatpush2.msra.mxu0 0.0
    %1040 = vmatprep.subr.mxu0 0.0
    %1041 = vmatpush2.msra.mxu0 0.0
    %1042 = vmatprep.subr.mxu0 0.0
    %1043 = vmatpush2.msra.mxu0 0.0
    %1044 = vmatprep.subr.mxu0 0.0
    %1045 = vmatpush2.msra.mxu0 0.0
    %1046 = vmatprep.subr.mxu0 0.0
    %1047 = vmatpush2.msra.mxu0 0.0
    %1048 = vmatprep.subr.mxu0 0.0
    %1049 = vmatpush2.msra.mxu0 0.0
    %1050 = vmatprep.subr.mxu0 0.0
    %1051 = vmatpush2.msra.mxu0 0.0
    %1052 = vmatprep.subr.mxu0 0.0
    %1053 = vmatpush2.msra.mxu0 0.0
    %1054 = vmatprep.subr.mxu0 0.0
    %1055 = vmatpush2.msra.mxu0 0.0
    %1056 = vmatprep.mubr.f32.mxu0 0.0
    %1057 = vmatmul.mubr.f32.gmra.mxu0 %v990
    %v1058 = vpop.f32.mrf.mxu0
    %v1059 = vadd.f32 %v531, %v1058
    %v1060 = vpop.f32.mrf.mxu0
    %v1061 = vadd.f32 %v535, %v1060
    %1062 = vdwg.mxu0
    %v1063 = vadd.f32 %v985, %v1059
    %v1064 = vxor.u32 %v1063, 2147483648
    %v1065 = vmul.f32 %v1064, 1.442695
    %v1066 = vpow.pop %v1065
    %v1067 = vadd.f32 %v1066, 1.0
    %v1068 = vrcp.pop %v1067
    %v1069 = vmul.f32 1.0, %v1068
    %v1070 = vmul.f32 %v1069, %v1061
    %v1071 = vadd.f32 %v986, %v1070
    %v1072 = vtanh.pop %v1071
    %v1073 = vsub.f32 1.0, %v1069
    %1075 = vrot.lane.b32.xlu0 %v1072, 64
    %v1076 = vpop.permute.xlu0 %1075
    %v1078 = vmul.f32 %v1073, %v1076
    %v1080 = vmul.f32 %v1069, %v987
    %v1081 = vadd.f32 %v1078, %v1080
    %1083 = vrot.lane.b32.xlu0 %v1081, 64
    %v1084 = vpop.permute.xlu0 %1083
    %1086 = vst.msk [vmem:[#allocation5 + $0x8] sm:$0x3] %vm634, %v1084
    %v1087 = vld [vmem:[#allocation2 + $0x10] sm:$0xc]
    %v1088 = vld [vmem:[#allocation2 + $0x18] sm:$0xc]
    %v1089 = vadd.f32 %v1087, %v640
    %v1090 = vadd.f32 %v1088, %v641
    %v1091 = vsel %vm408, %v1084, 0
    %1093 = vmatprep.subr.mxu0 0.0
    %1094 = vmatpush1.msra.mxu0 0.0
    %1095 = vmatprep.subr.mxu0 0.0
    %1096 = vmatpush1.msra.mxu0 0.0
    %1097 = vmatprep.subr.mxu0 0.0
    %1098 = vmatpush1.msra.mxu0 0.0
    %1099 = vmatprep.subr.mxu0 0.0
    %1100 = vmatpush1.msra.mxu0 0.0
    %1101 = vmatprep.subr.mxu0 0.0
    %1102 = vmatpush1.msra.mxu0 0.0
    %1103 = vmatprep.subr.mxu0 0.0
    %1104 = vmatpush1.msra.mxu0 0.0
    %1105 = vmatprep.subr.mxu0 0.0
    %1106 = vmatpush1.msra.mxu0 0.0
    %1107 = vmatprep.subr.mxu0 0.0
    %1108 = vmatpush1.msra.mxu0 0.0
    %1109 = vmatprep.subr.mxu0 %v521
    %1110 = vmatpush1.msra.mxu0 %v520
    %1111 = vmatprep.subr.mxu0 %v519
    %1112 = vmatpush1.msra.mxu0 %v518
    %1113 = vmatprep.subr.mxu0 %v517
    %1114 = vmatpush1.msra.mxu0 %v516
    %1115 = vmatprep.subr.mxu0 %v515
    %1116 = vmatpush1.msra.mxu0 %v514
    %1117 = vmatprep.subr.mxu0 %v513
    %1118 = vmatpush1.msra.mxu0 %v512
    %1119 = vmatprep.subr.mxu0 %v511
    %1120 = vmatpush1.msra.mxu0 %v510
    %1121 = vmatprep.subr.mxu0 %v509
    %1122 = vmatpush1.msra.mxu0 %v508
    %1123 = vmatprep.subr.mxu0 %v507
    %1124 = vmatpush1.msra.mxu0 %v506
    %1125 = vmatprep.subr.mxu0 0.0
    %1126 = vmatpush2.msra.mxu0 0.0
    %1127 = vmatprep.subr.mxu0 0.0
    %1128 = vmatpush2.msra.mxu0 0.0
    %1129 = vmatprep.subr.mxu0 0.0
    %1130 = vmatpush2.msra.mxu0 0.0
    %1131 = vmatprep.subr.mxu0 0.0
    %1132 = vmatpush2.msra.mxu0 0.0
    %1133 = vmatprep.subr.mxu0 0.0
    %1134 = vmatpush2.msra.mxu0 0.0
    %1135 = vmatprep.subr.mxu0 0.0
    %1136 = vmatpush2.msra.mxu0 0.0
    %1137 = vmatprep.subr.mxu0 0.0
    %1138 = vmatpush2.msra.mxu0 0.0
    %1139 = vmatprep.subr.mxu0 0.0
    %1140 = vmatpush2.msra.mxu0 0.0
    %1141 = vmatprep.subr.mxu0 0.0
    %1142 = vmatpush2.msra.mxu0 0.0
    %1143 = vmatprep.subr.mxu0 0.0
    %1144 = vmatpush2.msra.mxu0 0.0
    %1145 = vmatprep.subr.mxu0 0.0
    %1146 = vmatpush2.msra.mxu0 0.0
    %1147 = vmatprep.subr.mxu0 0.0
    %1148 = vmatpush2.msra.mxu0 0.0
    %1149 = vmatprep.subr.mxu0 0.0
    %1150 = vmatpush2.msra.mxu0 0.0
    %1151 = vmatprep.subr.mxu0 0.0
    %1152 = vmatpush2.msra.mxu0 0.0
    %1153 = vmatprep.subr.mxu0 0.0
    %1154 = vmatpush2.msra.mxu0 0.0
    %1155 = vmatprep.subr.mxu0 0.0
    %1156 = vmatpush2.msra.mxu0 0.0
    %1157 = vmatprep.mubr.f32.mxu0 0.0
    %1158 = vmatmul.mubr.f32.gmra.mxu0 %v1091
    %v1159 = vpop.f32.mrf.mxu0
    %v1160 = vadd.f32 %v531, %v1159
    %v1161 = vpop.f32.mrf.mxu0
    %v1162 = vadd.f32 %v535, %v1161
    %1163 = vdwg.mxu0
    %v1165 = vrot.slane %v1160, 6
    %v1167 = vadd.f32 %v1089, %v1165
    %v1168 = vxor.u32 %v1167, 2147483648
    %v1169 = vmul.f32 %v1168, 1.442695
    %v1170 = vpow.pop %v1169
    %v1171 = vadd.f32 %v1170, 1.0
    %v1172 = vrcp.pop %v1171
    %v1173 = vmul.f32 1.0, %v1172
    %v1175 = vrot.slane %v1162, 6
    %v1177 = vmul.f32 %v1173, %v1175
    %v1178 = vadd.f32 %v1090, %v1177
    %v1179 = vtanh.pop %v1178
    %v1180 = vsub.f32 1.0, %v1173
    %1182 = vrot.lane.b32.xlu0 %v1179, 64
    %v1183 = vpop.permute.xlu0 %1182
    %v1185 = vmul.f32 %v1180, %v1183
    %v1186 = vrot.slane %v1081, 6
    %v1188 = vmul.f32 %v1173, %v1186
    %v1189 = vadd.f32 %v1185, %v1188
    %1191 = vrot.lane.b32.xlu0 %v1189, 64
    %v1192 = vpop.permute.xlu0 %1191
    %1194 = vst.msk [vmem:[#allocation5 + $0x8] sm:$0xc] %vm749, %v1192
    %v1195 = vld [vmem:[#allocation2 + $0x10] sm:$0x30]
    %v1196 = vld [vmem:[#allocation2 + $0x18] sm:$0x30]
    %v1197 = vadd.f32 %v1195, %v753
    %v1198 = vadd.f32 %v1196, %v754
    %v1199 = vrot.slane %v1189, 2
    %1200 = vrot.lane.b32.xlu0 %v1199, 64
    %v1201 = vpop.permute.xlu0 %1200
    %v1202 = vsel %vm408, %v1201, 0
    %1204 = vmatprep.subr.mxu0 0.0
    %1205 = vmatpush1.msra.mxu0 0.0
    %1206 = vmatprep.subr.mxu0 0.0
    %1207 = vmatpush1.msra.mxu0 0.0
    %1208 = vmatprep.subr.mxu0 0.0
    %1209 = vmatpush1.msra.mxu0 0.0
    %1210 = vmatprep.subr.mxu0 0.0
    %1211 = vmatpush1.msra.mxu0 0.0
    %1212 = vmatprep.subr.mxu0 0.0
    %1213 = vmatpush1.msra.mxu0 0.0
    %1214 = vmatprep.subr.mxu0 0.0
    %1215 = vmatpush1.msra.mxu0 0.0
    %1216 = vmatprep.subr.mxu0 0.0
    %1217 = vmatpush1.msra.mxu0 0.0
    %1218 = vmatprep.subr.mxu0 0.0
    %1219 = vmatpush1.msra.mxu0 0.0
    %1220 = vmatprep.subr.mxu0 %v521
    %1221 = vmatpush1.msra.mxu0 %v520
    %1222 = vmatprep.subr.mxu0 %v519
    %1223 = vmatpush1.msra.mxu0 %v518
    %1224 = vmatprep.subr.mxu0 %v517
    %1225 = vmatpush1.msra.mxu0 %v516
    %1226 = vmatprep.subr.mxu0 %v515
    %1227 = vmatpush1.msra.mxu0 %v514
    %1228 = vmatprep.subr.mxu0 %v513
    %1229 = vmatpush1.msra.mxu0 %v512
    %1230 = vmatprep.subr.mxu0 %v511
    %1231 = vmatpush1.msra.mxu0 %v510
    %1232 = vmatprep.subr.mxu0 %v509
    %1233 = vmatpush1.msra.mxu0 %v508
    %1234 = vmatprep.subr.mxu0 %v507
    %1235 = vmatpush1.msra.mxu0 %v506
    %1236 = vmatprep.subr.mxu0 0.0
    %1237 = vmatpush2.msra.mxu0 0.0
    %1238 = vmatprep.subr.mxu0 0.0
    %1239 = vmatpush2.msra.mxu0 0.0
    %1240 = vmatprep.subr.mxu0 0.0
    %1241 = vmatpush2.msra.mxu0 0.0
    %1242 = vmatprep.subr.mxu0 0.0
    %1243 = vmatpush2.msra.mxu0 0.0
    %1244 = vmatprep.subr.mxu0 0.0
    %1245 = vmatpush2.msra.mxu0 0.0
    %1246 = vmatprep.subr.mxu0 0.0
    %1247 = vmatpush2.msra.mxu0 0.0
    %1248 = vmatprep.subr.mxu0 0.0
    %1249 = vmatpush2.msra.mxu0 0.0
    %1250 = vmatprep.subr.mxu0 0.0
    %1251 = vmatpush2.msra.mxu0 0.0
    %1252 = vmatprep.subr.mxu0 0.0
    %1253 = vmatpush2.msra.mxu0 0.0
    %1254 = vmatprep.subr.mxu0 0.0
    %1255 = vmatpush2.msra.mxu0 0.0
    %1256 = vmatprep.subr.mxu0 0.0
    %1257 = vmatpush2.msra.mxu0 0.0
    %1258 = vmatprep.subr.mxu0 0.0
    %1259 = vmatpush2.msra.mxu0 0.0
    %1260 = vmatprep.subr.mxu0 0.0
    %1261 = vmatpush2.msra.mxu0 0.0
    %1262 = vmatprep.subr.mxu0 0.0
    %1263 = vmatpush2.msra.mxu0 0.0
    %1264 = vmatprep.subr.mxu0 0.0
    %1265 = vmatpush2.msra.mxu0 0.0
    %1266 = vmatprep.subr.mxu0 0.0
    %1267 = vmatpush2.msra.mxu0 0.0
    %1268 = vmatprep.mubr.f32.mxu0 0.0
    %1269 = vmatmul.mubr.f32.gmra.mxu0 %v1202
    %v1270 = vpop.f32.mrf.mxu0
    %v1271 = vadd.f32 %v531, %v1270
    %v1272 = vpop.f32.mrf.mxu0
    %v1273 = vadd.f32 %v535, %v1272
    %1274 = vdwg.mxu0
    %v1276 = vrot.slane %v1271, 4
    %v1278 = vadd.f32 %v1197, %v1276
    %v1279 = vxor.u32 %v1278, 2147483648
    %v1280 = vmul.f32 %v1279, 1.442695
    %v1281 = vpow.pop %v1280
    %v1282 = vadd.f32 %v1281, 1.0
    %v1283 = vrcp.pop %v1282
    %v1284 = vmul.f32 1.0, %v1283
    %v1286 = vrot.slane %v1273, 4
    %v1288 = vmul.f32 %v1284, %v1286
    %v1289 = vadd.f32 %v1198, %v1288
    %v1290 = vtanh.pop %v1289
    %v1291 = vsub.f32 1.0, %v1284
    %1293 = vrot.lane.b32.xlu0 %v1290, 64
    %v1294 = vpop.permute.xlu0 %1293
    %v1296 = vmul.f32 %v1291, %v1294
    %v1297 = vrot.slane %v1189, 6
    %v1299 = vmul.f32 %v1284, %v1297
    %v1300 = vadd.f32 %v1296, %v1299
    %1302 = vrot.lane.b32.xlu0 %v1300, 64
    %v1303 = vpop.permute.xlu0 %1302
    %1305 = vst.msk [vmem:[#allocation5 + $0x8] sm:$0x30] %vm865, %v1303
    %v1306 = vld [vmem:[#allocation2 + $0x10] sm:$0xc0]
    %v1307 = vld [vmem:[#allocation2 + $0x18] sm:$0xc0]
    %v1308 = vadd.f32 %v1306, %v869
    %v1309 = vadd.f32 %v1307, %v870
    %v1310 = vrot.slane %v1300, 4
    %1311 = vrot.lane.b32.xlu0 %v1310, 64
    %v1312 = vpop.permute.xlu0 %1311
    %v1313 = vsel %vm408, %v1312, 0
    %1315 = vmatprep.subr.mxu0 0.0
    %1316 = vmatpush1.msra.mxu0 0.0
    %1317 = vmatprep.subr.mxu0 0.0
    %1318 = vmatpush1.msra.mxu0 0.0
    %1319 = vmatprep.subr.mxu0 0.0
    %1320 = vmatpush1.msra.mxu0 0.0
    %1321 = vmatprep.subr.mxu0 0.0
    %1322 = vmatpush1.msra.mxu0 0.0
    %1323 = vmatprep.subr.mxu0 0.0
    %1324 = vmatpush1.msra.mxu0 0.0
    %1325 = vmatprep.subr.mxu0 0.0
    %1326 = vmatpush1.msra.mxu0 0.0
    %1327 = vmatprep.subr.mxu0 0.0
    %1328 = vmatpush1.msra.mxu0 0.0
    %1329 = vmatprep.subr.mxu0 0.0
    %1330 = vmatpush1.msra.mxu0 0.0
    %1331 = vmatprep.subr.mxu0 %v521
    %1332 = vmatpush1.msra.mxu0 %v520
    %1333 = vmatprep.subr.mxu0 %v519
    %1334 = vmatpush1.msra.mxu0 %v518
    %1335 = vmatprep.subr.mxu0 %v517
    %1336 = vmatpush1.msra.mxu0 %v516
    %1337 = vmatprep.subr.mxu0 %v515
    %1338 = vmatpush1.msra.mxu0 %v514
    %1339 = vmatprep.subr.mxu0 %v513
    %1340 = vmatpush1.msra.mxu0 %v512
    %1341 = vmatprep.subr.mxu0 %v511
    %1342 = vmatpush1.msra.mxu0 %v510
    %1343 = vmatprep.subr.mxu0 %v509
    %1344 = vmatpush1.msra.mxu0 %v508
    %1345 = vmatprep.subr.mxu0 %v507
    %1346 = vmatpush1.msra.mxu0 %v506
    %1347 = vmatprep.subr.mxu0 0.0
    %1348 = vmatpush2.msra.mxu0 0.0
    %1349 = vmatprep.subr.mxu0 0.0
    %1350 = vmatpush2.msra.mxu0 0.0
    %1351 = vmatprep.subr.mxu0 0.0
    %1352 = vmatpush2.msra.mxu0 0.0
    %1353 = vmatprep.subr.mxu0 0.0
    %1354 = vmatpush2.msra.mxu0 0.0
    %1355 = vmatprep.subr.mxu0 0.0
    %1356 = vmatpush2.msra.mxu0 0.0
    %1357 = vmatprep.subr.mxu0 0.0
    %1358 = vmatpush2.msra.mxu0 0.0
    %1359 = vmatprep.subr.mxu0 0.0
    %1360 = vmatpush2.msra.mxu0 0.0
    %1361 = vmatprep.subr.mxu0 0.0
    %1362 = vmatpush2.msra.mxu0 0.0
    %1363 = vmatprep.subr.mxu0 0.0
    %1364 = vmatpush2.msra.mxu0 0.0
    %1365 = vmatprep.subr.mxu0 0.0
    %1366 = vmatpush2.msra.mxu0 0.0
    %1367 = vmatprep.subr.mxu0 0.0
    %1368 = vmatpush2.msra.mxu0 0.0
    %1369 = vmatprep.subr.mxu0 0.0
    %1370 = vmatpush2.msra.mxu0 0.0
    %1371 = vmatprep.subr.mxu0 0.0
    %1372 = vmatpush2.msra.mxu0 0.0
    %1373 = vmatprep.subr.mxu0 0.0
    %1374 = vmatpush2.msra.mxu0 0.0
    %1375 = vmatprep.subr.mxu0 0.0
    %1376 = vmatpush2.msra.mxu0 0.0
    %1377 = vmatprep.subr.mxu0 0.0
    %1378 = vmatpush2.msra.mxu0 0.0
    %1379 = vmatprep.mubr.f32.mxu0 0.0
    %1380 = vmatmul.mubr.f32.gmra.mxu0 %v1313
    %v1381 = vpop.f32.mrf.mxu0
    %v1382 = vadd.f32 %v531, %v1381
    %v1383 = vpop.f32.mrf.mxu0
    %v1384 = vadd.f32 %v535, %v1383
    %1385 = vdwg.mxu0
    %v1387 = vrot.slane %v1382, 2
    %v1389 = vadd.f32 %v1308, %v1387
    %v1390 = vxor.u32 %v1389, 2147483648
    %v1391 = vmul.f32 %v1390, 1.442695
    %v1392 = vpow.pop %v1391
    %v1393 = vadd.f32 %v1392, 1.0
    %v1394 = vrcp.pop %v1393
    %v1395 = vmul.f32 1.0, %v1394
    %v1397 = vrot.slane %v1384, 2
    %v1399 = vmul.f32 %v1395, %v1397
    %v1400 = vadd.f32 %v1309, %v1399
    %v1401 = vtanh.pop %v1400
    %v1402 = vsub.f32 1.0, %v1395
    %1404 = vrot.lane.b32.xlu0 %v1401, 64
    %v1405 = vpop.permute.xlu0 %1404
    %v1407 = vmul.f32 %v1402, %v1405
    %v1408 = vrot.slane %v1300, 6
    %v1410 = vmul.f32 %v1395, %v1408
    %v1411 = vadd.f32 %v1407, %v1410
    %1413 = vrot.lane.b32.xlu0 %v1411, 64
    %v1414 = vpop.permute.xlu0 %1413
    %1416 = vst.msk [vmem:[#allocation5 + $0x8] sm:$0xc0] %vm981, %v1414
    %v1417 = vld [vmem:[#allocation5] sm:$0xff]
    %v1418 = vld [vmem:[#allocation5 + $0x8] sm:$0xff]
    %v1419 = vld [vmem:[%s21] sm:$0xff]
    %v1420 = vld [vmem:[%s21 + $0x8] sm:$0xff]
    %v1421 = vld [vmem:[%s21 + $0x10] sm:$0xff]
    %v1422 = vld [vmem:[%s21 + $0x18] sm:$0xff]
    %v1423 = vld [vmem:[%s23] sm:$0x1]
    %v1425 = vlaneseq
    %v1426 = vshrl.u32 %v1425, 7
    %v1427 = vsub.s32 0, %v1426
    %v1428 = vrot.slane %v1423, %v1427
    %v1431 = vsel %vm323, %v1417, 0
    %v1434 = vsel %vm323, %v1418, 0
    %1436 = vmatprep.subr.mxu0 0.0
    %1437 = vmatpush1.msra.mxu0 0.0
    %1438 = vmatprep.subr.mxu0 0.0
    %1439 = vmatpush1.msra.mxu0 0.0
    %1440 = vmatprep.subr.mxu0 0.0
    %1441 = vmatpush1.msra.mxu0 0.0
    %1442 = vmatprep.subr.mxu0 0.0
    %1443 = vmatpush1.msra.mxu0 0.0
    %1444 = vmatprep.subr.mxu0 0.0
    %1445 = vmatpush1.msra.mxu0 0.0
    %1446 = vmatprep.subr.mxu0 0.0
    %1447 = vmatpush1.msra.mxu0 0.0
    %1448 = vmatprep.subr.mxu0 0.0
    %1449 = vmatpush1.msra.mxu0 0.0
    %1450 = vmatprep.subr.mxu0 0.0
    %1451 = vmatpush1.msra.mxu0 0.0
    %1452 = vmatprep.subr.mxu0 0.0
    %1453 = vmatpush1.msra.mxu0 0.0
    %1454 = vmatprep.subr.mxu0 0.0
    %1455 = vmatpush1.msra.mxu0 0.0
    %1456 = vmatprep.subr.mxu0 0.0
    %1457 = vmatpush1.msra.mxu0 0.0
    %1458 = vmatprep.subr.mxu0 0.0
    %1459 = vmatpush1.msra.mxu0 0.0
    %1460 = vmatprep.subr.mxu0 0.0
    %1461 = vmatpush1.msra.mxu0 %v1422
    %1462 = vmatprep.subr.mxu0 0.0
    %1463 = vmatpush1.msra.mxu0 %v1421
    %1464 = vmatprep.subr.mxu0 0.0
    %1465 = vmatpush1.msra.mxu0 %v1420
    %1466 = vmatprep.subr.mxu0 0.0
    %1467 = vmatpush1.msra.mxu0 %v1419
    %1468 = vmatprep.subr.mxu0 0.0
    %1469 = vmatpush2.msra.mxu0 0.0
    %1470 = vmatprep.subr.mxu0 0.0
    %1471 = vmatpush2.msra.mxu0 0.0
    %1472 = vmatprep.subr.mxu0 0.0
    %1473 = vmatpush2.msra.mxu0 0.0
    %1474 = vmatprep.subr.mxu0 0.0
    %1475 = vmatpush2.msra.mxu0 0.0
    %1476 = vmatprep.subr.mxu0 0.0
    %1477 = vmatpush2.msra.mxu0 0.0
    %1478 = vmatprep.subr.mxu0 0.0
    %1479 = vmatpush2.msra.mxu0 0.0
    %1480 = vmatprep.subr.mxu0 0.0
    %1481 = vmatpush2.msra.mxu0 0.0
    %1482 = vmatprep.subr.mxu0 0.0
    %1483 = vmatpush2.msra.mxu0 0.0
    %1484 = vmatprep.subr.mxu0 0.0
    %1485 = vmatpush2.msra.mxu0 0.0
    %1486 = vmatprep.subr.mxu0 0.0
    %1487 = vmatpush2.msra.mxu0 0.0
    %1488 = vmatprep.subr.mxu0 0.0
    %1489 = vmatpush2.msra.mxu0 0.0
    %1490 = vmatprep.subr.mxu0 0.0
    %1491 = vmatpush2.msra.mxu0 0.0
    %1492 = vmatprep.subr.mxu0 0.0
    %1493 = vmatpush2.msra.mxu0 0.0
    %1494 = vmatprep.subr.mxu0 0.0
    %1495 = vmatpush2.msra.mxu0 0.0
    %1496 = vmatprep.subr.mxu0 0.0
    %1497 = vmatpush2.msra.mxu0 0.0
    %1498 = vmatprep.subr.mxu0 0.0
    %1499 = vmatpush2.msra.mxu0 0.0
    %1500 = vmatprep.mubr.f32.mxu0 0.0
    %1501 = vmatmul.mubr.f32.gmra.mxu0 %v1431
    %v1502 = vpop.f32.mrf.mxu0
    %v1503 = vadd.f32 %v1428, %v1502
    %v1504 = vpop.f32.mrf.mxu0
    %1505 = vmatprep.mubr.f32.mxu0 0.0
    %1506 = vmatmul.mubr.f32.gmra.mxu0 %v1434
    %v1507 = vpop.f32.mrf.mxu0
    %v1508 = vadd.f32 %v1428, %v1507
    %v1509 = vpop.f32.mrf.mxu0
    %1510 = vdwg.mxu0
    %v1511 = vld [vmem:[%s25] sm:$0xff]
    %v1512 = vld [vmem:[%s25 + $0x8] sm:$0xff]
    %v1513 = vld [vmem:[%s25 + $0x10] sm:$0xff]
    %v1514 = vld [vmem:[%s25 + $0x18] sm:$0xff]
    %v1516 = vsel %vm323, %v1503, 0
    %v1519 = vsel %vm323, %v1508, 0
    %1521 = vmatprep.subr.mxu0 0.0
    %1522 = vmatpush1.msra.mxu0 0.0
    %1523 = vmatprep.subr.mxu0 0.0
    %1524 = vmatpush1.msra.mxu0 0.0
    %1525 = vmatprep.subr.mxu0 0.0
    %1526 = vmatpush1.msra.mxu0 0.0
    %1527 = vmatprep.subr.mxu0 0.0
    %1528 = vmatpush1.msra.mxu0 0.0
    %1529 = vmatprep.subr.mxu0 0.0
    %1530 = vmatpush1.msra.mxu0 0.0
    %1531 = vmatprep.subr.mxu0 0.0
    %1532 = vmatpush1.msra.mxu0 0.0
    %1533 = vmatprep.subr.mxu0 0.0
    %1534 = vmatpush1.msra.mxu0 0.0
    %1535 = vmatprep.subr.mxu0 0.0
    %1536 = vmatpush1.msra.mxu0 0.0
    %1537 = vmatprep.subr.mxu0 0.0
    %1538 = vmatpush1.msra.mxu0 0.0
    %1539 = vmatprep.subr.mxu0 0.0
    %1540 = vmatpush1.msra.mxu0 0.0
    %1541 = vmatprep.subr.mxu0 0.0
    %1542 = vmatpush1.msra.mxu0 0.0
    %1543 = vmatprep.subr.mxu0 0.0
    %1544 = vmatpush1.msra.mxu0 0.0
    %1545 = vmatprep.subr.mxu0 0.0
    %1546 = vmatpush1.msra.mxu0 %v1514
    %1547 = vmatprep.subr.mxu0 0.0
    %1548 = vmatpush1.msra.mxu0 %v1513
    %1549 = vmatprep.subr.mxu0 0.0
    %1550 = vmatpush1.msra.mxu0 %v1512
    %1551 = vmatprep.subr.mxu0 0.0
    %1552 = vmatpush1.msra.mxu0 %v1511
    %1553 = vmatprep.subr.mxu0 0.0
    %1554 = vmatpush2.msra.mxu0 0.0
    %1555 = vmatprep.subr.mxu0 0.0
    %1556 = vmatpush2.msra.mxu0 0.0
    %1557 = vmatprep.subr.mxu0 0.0
    %1558 = vmatpush2.msra.mxu0 0.0
    %1559 = vmatprep.subr.mxu0 0.0
    %1560 = vmatpush2.msra.mxu0 0.0
    %1561 = vmatprep.subr.mxu0 0.0
    %1562 = vmatpush2.msra.mxu0 0.0
    %1563 = vmatprep.subr.mxu0 0.0
    %1564 = vmatpush2.msra.mxu0 0.0
    %1565 = vmatprep.subr.mxu0 0.0
    %1566 = vmatpush2.msra.mxu0 0.0
    %1567 = vmatprep.subr.mxu0 0.0
    %1568 = vmatpush2.msra.mxu0 0.0
    %1569 = vmatprep.subr.mxu0 0.0
    %1570 = vmatpush2.msra.mxu0 0.0
    %1571 = vmatprep.subr.mxu0 0.0
    %1572 = vmatpush2.msra.mxu0 0.0
    %1573 = vmatprep.subr.mxu0 0.0
    %1574 = vmatpush2.msra.mxu0 0.0
    %1575 = vmatprep.subr.mxu0 0.0
    %1576 = vmatpush2.msra.mxu0 0.0
    %1577 = vmatprep.subr.mxu0 0.0
    %1578 = vmatpush2.msra.mxu0 0.0
    %1579 = vmatprep.subr.mxu0 0.0
    %1580 = vmatpush2.msra.mxu0 0.0
    %1581 = vmatprep.subr.mxu0 0.0
    %1582 = vmatpush2.msra.mxu0 0.0
    %1583 = vmatprep.subr.mxu0 0.0
    %1584 = vmatpush2.msra.mxu0 0.0
    %1585 = vmatprep.mubr.f32.mxu0 0.0
    %1586 = vmatmul.mubr.f32.gmra.mxu0 %v1516
    %v1587 = vpop.f32.mrf.mxu0
    %v1588 = vadd.f32 0.0, %v1587
    %v1589 = vpop.f32.mrf.mxu0
    %1590 = vmatprep.mubr.f32.mxu0 0.0
    %1591 = vmatmul.mubr.f32.gmra.mxu0 %v1519
    %v1592 = vpop.f32.mrf.mxu0
    %v1593 = vadd.f32 0.0, %v1592
    %v1594 = vpop.f32.mrf.mxu0
    %1595 = vdwg.mxu0
    %1596 = vst.msk [vmem:[#allocation22] sm:$0xff] %vm408, %v1588
    %1597 = vst.msk [vmem:[#allocation22 + $0x8] sm:$0xff] %vm408, %v1593
    %v1598 = vld [vmem:[%s27] sm:$0xff]
    %v1599 = vld [vmem:[%s27 + $0x8] sm:$0xff]
    %v1600 = vld [vmem:[%s27 + $0x10] sm:$0xff]
    %v1601 = vld [vmem:[%s27 + $0x18] sm:$0xff]
    %v1602 = vld [vmem:[%s29] sm:$0xff]
    %v1603 = vld [vmem:[%s29 + $0x8] sm:$0xff]
    %v1604 = vld [vmem:[%s29 + $0x10] sm:$0xff]
    %v1605 = vld [vmem:[%s29 + $0x18] sm:$0xff]
    %1606 = vmatprep.subr.mxu0 0.0
    %1607 = vmatpush1.msra.mxu0 0.0
    %1608 = vmatprep.subr.mxu0 0.0
    %1609 = vmatpush1.msra.mxu0 0.0
    %1610 = vmatprep.subr.mxu0 0.0
    %1611 = vmatpush1.msra.mxu0 0.0
    %1612 = vmatprep.subr.mxu0 0.0
    %1613 = vmatpush1.msra.mxu0 0.0
    %1614 = vmatprep.subr.mxu0 0.0
    %1615 = vmatpush1.msra.mxu0 0.0
    %1616 = vmatprep.subr.mxu0 0.0
    %1617 = vmatpush1.msra.mxu0 0.0
    %1618 = vmatprep.subr.mxu0 0.0
    %1619 = vmatpush1.msra.mxu0 0.0
    %1620 = vmatprep.subr.mxu0 0.0
    %1621 = vmatpush1.msra.mxu0 0.0
    %1622 = vmatprep.subr.mxu0 0.0
    %1623 = vmatpush1.msra.mxu0 0.0
    %1624 = vmatprep.subr.mxu0 0.0
    %1625 = vmatpush1.msra.mxu0 0.0
    %1626 = vmatprep.subr.mxu0 0.0
    %1627 = vmatpush1.msra.mxu0 0.0
    %1628 = vmatprep.subr.mxu0 0.0
    %1629 = vmatpush1.msra.mxu0 0.0
    %1630 = vmatprep.subr.mxu0 0.0
    %1631 = vmatpush1.msra.mxu0 %v1605
    %1632 = vmatprep.subr.mxu0 0.0
    %1633 = vmatpush1.msra.mxu0 %v1604
    %1634 = vmatprep.subr.mxu0 0.0
    %1635 = vmatpush1.msra.mxu0 %v1603
    %1636 = vmatprep.subr.mxu0 0.0
    %1637 = vmatpush1.msra.mxu0 %v1602
    %1638 = vmatprep.subr.mxu0 0.0
    %1639 = vmatpush2.msra.mxu0 0.0
    %1640 = vmatprep.subr.mxu0 0.0
    %1641 = vmatpush2.msra.mxu0 0.0
    %1642 = vmatprep.subr.mxu0 0.0
    %1643 = vmatpush2.msra.mxu0 0.0
    %1644 = vmatprep.subr.mxu0 0.0
    %1645 = vmatpush2.msra.mxu0 0.0
    %1646 = vmatprep.subr.mxu0 0.0
    %1647 = vmatpush2.msra.mxu0 0.0
    %1648 = vmatprep.subr.mxu0 0.0
    %1649 = vmatpush2.msra.mxu0 0.0
    %1650 = vmatprep.subr.mxu0 0.0
    %1651 = vmatpush2.msra.mxu0 0.0
    %1652 = vmatprep.subr.mxu0 0.0
    %1653 = vmatpush2.msra.mxu0 0.0
    %1654 = vmatprep.subr.mxu0 0.0
    %1655 = vmatpush2.msra.mxu0 0.0
    %1656 = vmatprep.subr.mxu0 0.0
    %1657 = vmatpush2.msra.mxu0 0.0
    %1658 = vmatprep.subr.mxu0 0.0
    %1659 = vmatpush2.msra.mxu0 0.0
    %1660 = vmatprep.subr.mxu0 0.0
    %1661 = vmatpush2.msra.mxu0 0.0
    %1662 = vmatprep.subr.mxu0 0.0
    %1663 = vmatpush2.msra.mxu0 0.0
    %1664 = vmatprep.subr.mxu0 0.0
    %1665 = vmatpush2.msra.mxu0 0.0
    %1666 = vmatprep.subr.mxu0 0.0
    %1667 = vmatpush2.msra.mxu0 0.0
    %1668 = vmatprep.subr.mxu0 0.0
    %1669 = vmatpush2.msra.mxu0 0.0
    %1670 = vmatprep.mubr.f32.mxu0 0.0
    %1671 = vmatmul.mubr.f32.gmra.mxu0 %v325
    %v1672 = vpop.f32.mrf.mxu0
    %v1673 = vadd.f32 0.0, %v1672
    %v1674 = vpop.f32.mrf.mxu0
    %1675 = vmatprep.mubr.f32.mxu0 0.0
    %1676 = vmatmul.mubr.f32.gmra.mxu0 %v328
    %v1677 = vpop.f32.mrf.mxu0
    %v1678 = vadd.f32 0.0, %v1677
    %v1679 = vpop.f32.mrf.mxu0
    %1680 = vdwg.mxu0
    %1681 = vmatprep.subr.mxu0 0.0
    %1682 = vmatpush1.msra.mxu0 0.0
    %1683 = vmatprep.subr.mxu0 0.0
    %1684 = vmatpush1.msra.mxu0 0.0
    %1685 = vmatprep.subr.mxu0 0.0
    %1686 = vmatpush1.msra.mxu0 0.0
    %1687 = vmatprep.subr.mxu0 0.0
    %1688 = vmatpush1.msra.mxu0 0.0
    %1689 = vmatprep.subr.mxu0 0.0
    %1690 = vmatpush1.msra.mxu0 0.0
    %1691 = vmatprep.subr.mxu0 0.0
    %1692 = vmatpush1.msra.mxu0 0.0
    %1693 = vmatprep.subr.mxu0 0.0
    %1694 = vmatpush1.msra.mxu0 0.0
    %1695 = vmatprep.subr.mxu0 0.0
    %1696 = vmatpush1.msra.mxu0 0.0
    %1697 = vmatprep.subr.mxu0 0.0
    %1698 = vmatpush1.msra.mxu0 0.0
    %1699 = vmatprep.subr.mxu0 0.0
    %1700 = vmatpush1.msra.mxu0 0.0
    %1701 = vmatprep.subr.mxu0 0.0
    %1702 = vmatpush1.msra.mxu0 0.0
    %1703 = vmatprep.subr.mxu0 0.0
    %1704 = vmatpush1.msra.mxu0 0.0
    %1705 = vmatprep.subr.mxu0 0.0
    %1706 = vmatpush1.msra.mxu0 %v1601
    %1707 = vmatprep.subr.mxu0 0.0
    %1708 = vmatpush1.msra.mxu0 %v1600
    %1709 = vmatprep.subr.mxu0 0.0
    %1710 = vmatpush1.msra.mxu0 %v1599
    %1711 = vmatprep.subr.mxu0 0.0
    %1712 = vmatpush1.msra.mxu0 %v1598
    %1713 = vmatprep.subr.mxu0 0.0
    %1714 = vmatpush2.msra.mxu0 0.0
    %1715 = vmatprep.subr.mxu0 0.0
    %1716 = vmatpush2.msra.mxu0 0.0
    %1717 = vmatprep.subr.mxu0 0.0
    %1718 = vmatpush2.msra.mxu0 0.0
    %1719 = vmatprep.subr.mxu0 0.0
    %1720 = vmatpush2.msra.mxu0 0.0
    %1721 = vmatprep.subr.mxu0 0.0
    %1722 = vmatpush2.msra.mxu0 0.0
    %1723 = vmatprep.subr.mxu0 0.0
    %1724 = vmatpush2.msra.mxu0 0.0
    %1725 = vmatprep.subr.mxu0 0.0
    %1726 = vmatpush2.msra.mxu0 0.0
    %1727 = vmatprep.subr.mxu0 0.0
    %1728 = vmatpush2.msra.mxu0 0.0
    %1729 = vmatprep.subr.mxu0 0.0
    %1730 = vmatpush2.msra.mxu0 0.0
    %1731 = vmatprep.subr.mxu0 0.0
    %1732 = vmatpush2.msra.mxu0 0.0
    %1733 = vmatprep.subr.mxu0 0.0
    %1734 = vmatpush2.msra.mxu0 0.0
    %1735 = vmatprep.subr.mxu0 0.0
    %1736 = vmatpush2.msra.mxu0 0.0
    %1737 = vmatprep.subr.mxu0 0.0
    %1738 = vmatpush2.msra.mxu0 0.0
    %1739 = vmatprep.subr.mxu0 0.0
    %1740 = vmatpush2.msra.mxu0 0.0
    %1741 = vmatprep.subr.mxu0 0.0
    %1742 = vmatpush2.msra.mxu0 0.0
    %1743 = vmatprep.subr.mxu0 0.0
    %1744 = vmatpush2.msra.mxu0 0.0
    %1745 = vmatprep.mubr.f32.mxu0 0.0
    %1746 = vmatmul.mubr.f32.gmra.mxu0 %v1431
    %v1747 = vpop.f32.mrf.mxu0
    %v1748 = vadd.f32 %v1673, %v1747
    %v1749 = vpop.f32.mrf.mxu0
    %1750 = vmatprep.mubr.f32.mxu0 0.0
    %1751 = vmatmul.mubr.f32.gmra.mxu0 %v1434
    %v1752 = vpop.f32.mrf.mxu0
    %v1753 = vadd.f32 %v1678, %v1752
    %v1754 = vpop.f32.mrf.mxu0
    %1755 = vdwg.mxu0
    %v1756 = vld [vmem:[%s33] sm:$0x1]
    %v1758 = vlaneseq
    %v1759 = vshrl.u32 %v1758, 7
    %v1760 = vsub.s32 0, %v1759
    %v1761 = vrot.slane %v1756, %v1760
    %v1763 = vadd.f32 %v1748, %v1761
    %v1764 = vadd.f32 %v1753, %v1761
    %vm1765 = vcmask 785408
    %1766 = vst.msk [vmem:[#allocation3] sm:$0xff] %vm1765, %v1763
    %1767 = vst.msk [vmem:[#allocation3 + $0x8] sm:$0xff] %vm1765, %v1764
    %v1768 = vld [vmem:[%s37] sm:$0xff]
    %v1769 = vld [vmem:[%s37 + $0x8] sm:$0xff]
    %v1770 = vld [vmem:[%s37 + $0x10] sm:$0xff]
    %v1771 = vld [vmem:[%s37 + $0x18] sm:$0xff]
    %v1772 = vld [vmem:[%s39] sm:$0xff]
    %v1773 = vld [vmem:[%s39 + $0x8] sm:$0xff]
    %v1774 = vld [vmem:[%s39 + $0x10] sm:$0xff]
    %v1775 = vld [vmem:[%s39 + $0x18] sm:$0xff]
    %1776 = vmatprep.subr.mxu0 0.0
    %1777 = vmatpush1.msra.mxu0 0.0
    %1778 = vmatprep.subr.mxu0 0.0
    %1779 = vmatpush1.msra.mxu0 0.0
    %1780 = vmatprep.subr.mxu0 0.0
    %1781 = vmatpush1.msra.mxu0 0.0
    %1782 = vmatprep.subr.mxu0 0.0
    %1783 = vmatpush1.msra.mxu0 0.0
    %1784 = vmatprep.subr.mxu0 0.0
    %1785 = vmatpush1.msra.mxu0 0.0
    %1786 = vmatprep.subr.mxu0 0.0
    %1787 = vmatpush1.msra.mxu0 0.0
    %1788 = vmatprep.subr.mxu0 0.0
    %1789 = vmatpush1.msra.mxu0 0.0
    %1790 = vmatprep.subr.mxu0 0.0
    %1791 = vmatpush1.msra.mxu0 0.0
    %1792 = vmatprep.subr.mxu0 0.0
    %1793 = vmatpush1.msra.mxu0 0.0
    %1794 = vmatprep.subr.mxu0 0.0
    %1795 = vmatpush1.msra.mxu0 0.0
    %1796 = vmatprep.subr.mxu0 0.0
    %1797 = vmatpush1.msra.mxu0 0.0
    %1798 = vmatprep.subr.mxu0 0.0
    %1799 = vmatpush1.msra.mxu0 0.0
    %1800 = vmatprep.subr.mxu0 0.0
    %1801 = vmatpush1.msra.mxu0 %v1775
    %1802 = vmatprep.subr.mxu0 0.0
    %1803 = vmatpush1.msra.mxu0 %v1774
    %1804 = vmatprep.subr.mxu0 0.0
    %1805 = vmatpush1.msra.mxu0 %v1773
    %1806 = vmatprep.subr.mxu0 0.0
    %1807 = vmatpush1.msra.mxu0 %v1772
    %1808 = vmatprep.subr.mxu0 0.0
    %1809 = vmatpush2.msra.mxu0 0.0
    %1810 = vmatprep.subr.mxu0 0.0
    %1811 = vmatpush2.msra.mxu0 0.0
    %1812 = vmatprep.subr.mxu0 0.0
    %1813 = vmatpush2.msra.mxu0 0.0
    %1814 = vmatprep.subr.mxu0 0.0
    %1815 = vmatpush2.msra.mxu0 0.0
    %1816 = vmatprep.subr.mxu0 0.0
    %1817 = vmatpush2.msra.mxu0 0.0
    %1818 = vmatprep.subr.mxu0 0.0
    %1819 = vmatpush2.msra.mxu0 0.0
    %1820 = vmatprep.subr.mxu0 0.0
    %1821 = vmatpush2.msra.mxu0 0.0
    %1822 = vmatprep.subr.mxu0 0.0
    %1823 = vmatpush2.msra.mxu0 0.0
    %1824 = vmatprep.subr.mxu0 0.0
    %1825 = vmatpush2.msra.mxu0 0.0
    %1826 = vmatprep.subr.mxu0 0.0
    %1827 = vmatpush2.msra.mxu0 0.0
    %1828 = vmatprep.subr.mxu0 0.0
    %1829 = vmatpush2.msra.mxu0 0.0
    %1830 = vmatprep.subr.mxu0 0.0
    %1831 = vmatpush2.msra.mxu0 0.0
    %1832 = vmatprep.subr.mxu0 0.0
    %1833 = vmatpush2.msra.mxu0 0.0
    %1834 = vmatprep.subr.mxu0 0.0
    %1835 = vmatpush2.msra.mxu0 0.0
    %1836 = vmatprep.subr.mxu0 0.0
    %1837 = vmatpush2.msra.mxu0 0.0
    %1838 = vmatprep.subr.mxu0 0.0
    %1839 = vmatpush2.msra.mxu0 0.0
    %1840 = vmatprep.mubr.f32.mxu0 0.0
    %1841 = vmatmul.mubr.f32.gmra.mxu0 %v325
    %v1842 = vpop.f32.mrf.mxu0
    %v1843 = vadd.f32 0.0, %v1842
    %v1844 = vpop.f32.mrf.mxu0
    %1845 = vmatprep.mubr.f32.mxu0 0.0
    %1846 = vmatmul.mubr.f32.gmra.mxu0 %v328
    %v1847 = vpop.f32.mrf.mxu0
    %v1848 = vadd.f32 0.0, %v1847
    %v1849 = vpop.f32.mrf.mxu0
    %1850 = vdwg.mxu0
    %1851 = vmatprep.subr.mxu0 0.0
    %1852 = vmatpush1.msra.mxu0 0.0
    %1853 = vmatprep.subr.mxu0 0.0
    %1854 = vmatpush1.msra.mxu0 0.0
    %1855 = vmatprep.subr.mxu0 0.0
    %1856 = vmatpush1.msra.mxu0 0.0
    %1857 = vmatprep.subr.mxu0 0.0
    %1858 = vmatpush1.msra.mxu0 0.0
    %1859 = vmatprep.subr.mxu0 0.0
    %1860 = vmatpush1.msra.mxu0 0.0
    %1861 = vmatprep.subr.mxu0 0.0
    %1862 = vmatpush1.msra.mxu0 0.0
    %1863 = vmatprep.subr.mxu0 0.0
    %1864 = vmatpush1.msra.mxu0 0.0
    %1865 = vmatprep.subr.mxu0 0.0
    %1866 = vmatpush1.msra.mxu0 0.0
    %1867 = vmatprep.subr.mxu0 0.0
    %1868 = vmatpush1.msra.mxu0 0.0
    %1869 = vmatprep.subr.mxu0 0.0
    %1870 = vmatpush1.msra.mxu0 0.0
    %1871 = vmatprep.subr.mxu0 0.0
    %1872 = vmatpush1.msra.mxu0 0.0
    %1873 = vmatprep.subr.mxu0 0.0
    %1874 = vmatpush1.msra.mxu0 0.0
    %1875 = vmatprep.subr.mxu0 0.0
    %1876 = vmatpush1.msra.mxu0 %v1771
    %1877 = vmatprep.subr.mxu0 0.0
    %1878 = vmatpush1.msra.mxu0 %v1770
    %1879 = vmatprep.subr.mxu0 0.0
    %1880 = vmatpush1.msra.mxu0 %v1769
    %1881 = vmatprep.subr.mxu0 0.0
    %1882 = vmatpush1.msra.mxu0 %v1768
    %1883 = vmatprep.subr.mxu0 0.0
    %1884 = vmatpush2.msra.mxu0 0.0
    %1885 = vmatprep.subr.mxu0 0.0
    %1886 = vmatpush2.msra.mxu0 0.0
    %1887 = vmatprep.subr.mxu0 0.0
    %1888 = vmatpush2.msra.mxu0 0.0
    %1889 = vmatprep.subr.mxu0 0.0
    %1890 = vmatpush2.msra.mxu0 0.0
    %1891 = vmatprep.subr.mxu0 0.0
    %1892 = vmatpush2.msra.mxu0 0.0
    %1893 = vmatprep.subr.mxu0 0.0
    %1894 = vmatpush2.msra.mxu0 0.0
    %1895 = vmatprep.subr.mxu0 0.0
    %1896 = vmatpush2.msra.mxu0 0.0
    %1897 = vmatprep.subr.mxu0 0.0
    %1898 = vmatpush2.msra.mxu0 0.0
    %1899 = vmatprep.subr.mxu0 0.0
    %1900 = vmatpush2.msra.mxu0 0.0
    %1901 = vmatprep.subr.mxu0 0.0
    %1902 = vmatpush2.msra.mxu0 0.0
    %1903 = vmatprep.subr.mxu0 0.0
    %1904 = vmatpush2.msra.mxu0 0.0
    %1905 = vmatprep.subr.mxu0 0.0
    %1906 = vmatpush2.msra.mxu0 0.0
    %1907 = vmatprep.subr.mxu0 0.0
    %1908 = vmatpush2.msra.mxu0 0.0
    %1909 = vmatprep.subr.mxu0 0.0
    %1910 = vmatpush2.msra.mxu0 0.0
    %1911 = vmatprep.subr.mxu0 0.0
    %1912 = vmatpush2.msra.mxu0 0.0
    %1913 = vmatprep.subr.mxu0 0.0
    %1914 = vmatpush2.msra.mxu0 0.0
    %1915 = vmatprep.mubr.f32.mxu0 0.0
    %1916 = vmatmul.mubr.f32.gmra.mxu0 %v1431
    %v1917 = vpop.f32.mrf.mxu0
    %v1918 = vadd.f32 %v1843, %v1917
    %v1919 = vpop.f32.mrf.mxu0
    %1920 = vmatprep.mubr.f32.mxu0 0.0
    %1921 = vmatmul.mubr.f32.gmra.mxu0 %v1434
    %v1922 = vpop.f32.mrf.mxu0
    %v1923 = vadd.f32 %v1848, %v1922
    %v1924 = vpop.f32.mrf.mxu0
    %1925 = vdwg.mxu0
    %v1926 = vld [vmem:[%s43] sm:$0x1]
    %v1928 = vlaneseq
    %v1929 = vshrl.u32 %v1928, 7
    %v1930 = vsub.s32 0, %v1929
    %v1931 = vrot.slane %v1926, %v1930
    %v1933 = vadd.f32 %v1918, %v1931
    %v1934 = vadd.f32 %v1923, %v1931
    %1935 = vst.msk [vmem:[#allocation4] sm:$0xff] %vm1765, %v1933
    %1936 = vst.msk [vmem:[#allocation4 + $0x8] sm:$0xff] %vm1765, %v1934
    %v1937 = vld [vmem:[%s31] sm:$0xff]
    %v1938 = vld [vmem:[%s31 + $0x8] sm:$0xff]
    %v1939 = vld [vmem:[%s31 + $0x10] sm:$0xff]
    %v1940 = vld [vmem:[%s31 + $0x18] sm:$0xff]
    %v1941 = vld [vmem:[%s35] sm:$0x1]
    %v1942 = vld [vmem:[%s41] sm:$0xff]
    %v1943 = vld [vmem:[%s41 + $0x8] sm:$0xff]
    %v1944 = vld [vmem:[%s41 + $0x10] sm:$0xff]
    %v1945 = vld [vmem:[%s41 + $0x18] sm:$0xff]
    %v1946 = vld [vmem:[%s45] sm:$0x1]
    %v1947 = vld [vmem:[#allocation3] sm:$0x3]
    %v1949 = vlaneseq
    %v1950 = vshrl.u32 %v1949, 7
    %v1951 = vsub.s32 0, %v1950
    %v1952 = vrot.slane %v1941, %v1951
    %v1954 = vsel %vm323, 0.0, 0
    %1956 = vmatprep.subr.mxu0 0.0
    %1957 = vmatpush1.msra.mxu0 0.0
    %1958 = vmatprep.subr.mxu0 0.0
    %1959 = vmatpush1.msra.mxu0 0.0
    %1960 = vmatprep.subr.mxu0 0.0
    %1961 = vmatpush1.msra.mxu0 0.0
    %1962 = vmatprep.subr.mxu0 0.0
    %1963 = vmatpush1.msra.mxu0 0.0
    %1964 = vmatprep.subr.mxu0 0.0
    %1965 = vmatpush1.msra.mxu0 0.0
    %1966 = vmatprep.subr.mxu0 0.0
    %1967 = vmatpush1.msra.mxu0 0.0
    %1968 = vmatprep.subr.mxu0 0.0
    %1969 = vmatpush1.msra.mxu0 0.0
    %1970 = vmatprep.subr.mxu0 0.0
    %1971 = vmatpush1.msra.mxu0 0.0
    %1972 = vmatprep.subr.mxu0 0.0
    %1973 = vmatpush1.msra.mxu0 0.0
    %1974 = vmatprep.subr.mxu0 0.0
    %1975 = vmatpush1.msra.mxu0 0.0
    %1976 = vmatprep.subr.mxu0 0.0
    %1977 = vmatpush1.msra.mxu0 0.0
    %1978 = vmatprep.subr.mxu0 0.0
    %1979 = vmatpush1.msra.mxu0 0.0
    %1980 = vmatprep.subr.mxu0 0.0
    %1981 = vmatpush1.msra.mxu0 %v1940
    %1982 = vmatprep.subr.mxu0 0.0
    %1983 = vmatpush1.msra.mxu0 %v1939
    %1984 = vmatprep.subr.mxu0 0.0
    %1985 = vmatpush1.msra.mxu0 %v1938
    %1986 = vmatprep.subr.mxu0 0.0
    %1987 = vmatpush1.msra.mxu0 %v1937
    %1988 = vmatprep.subr.mxu0 0.0
    %1989 = vmatpush2.msra.mxu0 0.0
    %1990 = vmatprep.subr.mxu0 0.0
    %1991 = vmatpush2.msra.mxu0 0.0
    %1992 = vmatprep.subr.mxu0 0.0
    %1993 = vmatpush2.msra.mxu0 0.0
    %1994 = vmatprep.subr.mxu0 0.0
    %1995 = vmatpush2.msra.mxu0 0.0
    %1996 = vmatprep.subr.mxu0 0.0
    %1997 = vmatpush2.msra.mxu0 0.0
    %1998 = vmatprep.subr.mxu0 0.0
    %1999 = vmatpush2.msra.mxu0 0.0
    %2000 = vmatprep.subr.mxu0 0.0
    %2001 = vmatpush2.msra.mxu0 0.0
    %2002 = vmatprep.subr.mxu0 0.0
    %2003 = vmatpush2.msra.mxu0 0.0
    %2004 = vmatprep.subr.mxu0 0.0
    %2005 = vmatpush2.msra.mxu0 0.0
    %2006 = vmatprep.subr.mxu0 0.0
    %2007 = vmatpush2.msra.mxu0 0.0
    %2008 = vmatprep.subr.mxu0 0.0
    %2009 = vmatpush2.msra.mxu0 0.0
    %2010 = vmatprep.subr.mxu0 0.0
    %2011 = vmatpush2.msra.mxu0 0.0
    %2012 = vmatprep.subr.mxu0 0.0
    %2013 = vmatpush2.msra.mxu0 0.0
    %2014 = vmatprep.subr.mxu0 0.0
    %2015 = vmatpush2.msra.mxu0 0.0
    %2016 = vmatprep.subr.mxu0 0.0
    %2017 = vmatpush2.msra.mxu0 0.0
    %2018 = vmatprep.subr.mxu0 0.0
    %2019 = vmatpush2.msra.mxu0 0.0
    %2020 = vmatprep.mubr.f32.mxu0 0.0
    %2021 = vmatmul.mubr.f32.gmra.mxu0 %v1954
    %v2022 = vpop.f32.mrf.mxu0
    %v2023 = vadd.f32 %v1952, %v2022
    %v2024 = vpop.f32.mrf.mxu0
    %2025 = vdwg.mxu0
    %v2026 = vadd.f32 %v1947, %v2023
    %v2027 = vxor.u32 %v2026, 2147483648
    %v2028 = vmul.f32 %v2027, 1.442695
    %v2029 = vpow.pop %v2028
    %v2030 = vadd.f32 %v2029, 1.0
    %v2031 = vrcp.pop %v2030
    %v2032 = vmul.f32 1.0, %v2031
    %2034 = vrot.lane.b32.xlu0 %v2023, 64
    %v2035 = vpop.permute.xlu0 %2034
    %v2037 = vmul.f32 %v2032, %v2035
    %2039 = vrot.lane.b32.xlu0 %v2037, 64
    %v2040 = vpop.permute.xlu0 %2039
    %v2042 = vadd.f32 %v1947, %v2040
    %v2043 = vtanh.pop %v2042
    %v2044 = vsub.f32 1.0, %v2032
    %2046 = vrot.lane.b32.xlu0 %v2043, 96
    %v2047 = vpop.permute.xlu0 %2046
    %v2049 = vmul.f32 %v2044, %v2047
    %v2050 = vmul.f32 %v2032, 0.0
    %v2051 = vadd.f32 %v2049, %v2050
    %2053 = vrot.lane.b32.xlu0 %v2051, 96
    %v2054 = vpop.permute.xlu0 %2053
    %2056 = vst.msk [vmem:[#allocation6] sm:$0x3] %vm634, %v2054
    %v2057 = vld [vmem:[#allocation4 + $0xe] sm:$0x3]
    %v2059 = vlaneseq
    %v2060 = vshrl.u32 %v2059, 7
    %v2061 = vsub.s32 0, %v2060
    %v2062 = vrot.slane %v1946, %v2061
    %2064 = vmatprep.subr.mxu0 0.0
    %2065 = vmatpush1.msra.mxu0 0.0
    %2066 = vmatprep.subr.mxu0 0.0
    %2067 = vmatpush1.msra.mxu0 0.0
    %2068 = vmatprep.subr.mxu0 0.0
    %2069 = vmatpush1.msra.mxu0 0.0
    %2070 = vmatprep.subr.mxu0 0.0
    %2071 = vmatpush1.msra.mxu0 0.0
    %2072 = vmatprep.subr.mxu0 0.0
    %2073 = vmatpush1.msra.mxu0 0.0
    %2074 = vmatprep.subr.mxu0 0.0
    %2075 = vmatpush1.msra.mxu0 0.0
    %2076 = vmatprep.subr.mxu0 0.0
    %2077 = vmatpush1.msra.mxu0 0.0
    %2078 = vmatprep.subr.mxu0 0.0
    %2079 = vmatpush1.msra.mxu0 0.0
    %2080 = vmatprep.subr.mxu0 0.0
    %2081 = vmatpush1.msra.mxu0 0.0
    %2082 = vmatprep.subr.mxu0 0.0
    %2083 = vmatpush1.msra.mxu0 0.0
    %2084 = vmatprep.subr.mxu0 0.0
    %2085 = vmatpush1.msra.mxu0 0.0
    %2086 = vmatprep.subr.mxu0 0.0
    %2087 = vmatpush1.msra.mxu0 0.0
    %2088 = vmatprep.subr.mxu0 0.0
    %2089 = vmatpush1.msra.mxu0 %v1945
    %2090 = vmatprep.subr.mxu0 0.0
    %2091 = vmatpush1.msra.mxu0 %v1944
    %2092 = vmatprep.subr.mxu0 0.0
    %2093 = vmatpush1.msra.mxu0 %v1943
    %2094 = vmatprep.subr.mxu0 0.0
    %2095 = vmatpush1.msra.mxu0 %v1942
    %2096 = vmatprep.subr.mxu0 0.0
    %2097 = vmatpush2.msra.mxu0 0.0
    %2098 = vmatprep.subr.mxu0 0.0
    %2099 = vmatpush2.msra.mxu0 0.0
    %2100 = vmatprep.subr.mxu0 0.0
    %2101 = vmatpush2.msra.mxu0 0.0
    %2102 = vmatprep.subr.mxu0 0.0
    %2103 = vmatpush2.msra.mxu0 0.0
    %2104 = vmatprep.subr.mxu0 0.0
    %2105 = vmatpush2.msra.mxu0 0.0
    %2106 = vmatprep.subr.mxu0 0.0
    %2107 = vmatpush2.msra.mxu0 0.0
    %2108 = vmatprep.subr.mxu0 0.0
    %2109 = vmatpush2.msra.mxu0 0.0
    %2110 = vmatprep.subr.mxu0 0.0
    %2111 = vmatpush2.msra.mxu0 0.0
    %2112 = vmatprep.subr.mxu0 0.0
    %2113 = vmatpush2.msra.mxu0 0.0
    %2114 = vmatprep.subr.mxu0 0.0
    %2115 = vmatpush2.msra.mxu0 0.0
    %2116 = vmatprep.subr.mxu0 0.0
    %2117 = vmatpush2.msra.mxu0 0.0
    %2118 = vmatprep.subr.mxu0 0.0
    %2119 = vmatpush2.msra.mxu0 0.0
    %2120 = vmatprep.subr.mxu0 0.0
    %2121 = vmatpush2.msra.mxu0 0.0
    %2122 = vmatprep.subr.mxu0 0.0
    %2123 = vmatpush2.msra.mxu0 0.0
    %2124 = vmatprep.subr.mxu0 0.0
    %2125 = vmatpush2.msra.mxu0 0.0
    %2126 = vmatprep.subr.mxu0 0.0
    %2127 = vmatpush2.msra.mxu0 0.0
    %2128 = vmatprep.mubr.f32.mxu0 0.0
    %2129 = vmatmul.mubr.f32.gmra.mxu0 %v1954
    %v2130 = vpop.f32.mrf.mxu0
    %v2131 = vadd.f32 %v2062, %v2130
    %v2132 = vpop.f32.mrf.mxu0
    %2133 = vdwg.mxu0
    %v2134 = vadd.f32 %v2057, %v2131
    %v2135 = vxor.u32 %v2134, 2147483648
    %v2136 = vmul.f32 %v2135, 1.442695
    %v2137 = vpow.pop %v2136
    %v2138 = vadd.f32 %v2137, 1.0
    %v2139 = vrcp.pop %v2138
    %v2140 = vmul.f32 1.0, %v2139
    %2142 = vrot.lane.b32.xlu0 %v2131, 64
    %v2143 = vpop.permute.xlu0 %2142
    %v2145 = vmul.f32 %v2140, %v2143
    %2147 = vrot.lane.b32.xlu0 %v2145, 64
    %v2148 = vpop.permute.xlu0 %2147
    %v2150 = vadd.f32 %v2057, %v2148
    %v2151 = vtanh.pop %v2150
    %v2152 = vsub.f32 1.0, %v2140
    %2154 = vrot.lane.b32.xlu0 %v2151, 96
    %v2155 = vpop.permute.xlu0 %2154
    %v2157 = vmul.f32 %v2152, %v2155
    %v2158 = vmul.f32 %v2140, 0.0
    %v2159 = vadd.f32 %v2157, %v2158
    %2161 = vrot.lane.b32.xlu0 %v2159, 96
    %v2162 = vpop.permute.xlu0 %2161
    %2164 = vst.msk [vmem:[#allocation7 + $0xe] sm:$0x3] %vm634, %v2162
    %v2165 = vld [vmem:[#allocation3 + $0x2] sm:$0x3]
    %v2166 = vsel %vm323, %v2054, 0
    %2168 = vmatprep.subr.mxu0 0.0
    %2169 = vmatpush1.msra.mxu0 0.0
    %2170 = vmatprep.subr.mxu0 0.0
    %2171 = vmatpush1.msra.mxu0 0.0
    %2172 = vmatprep.subr.mxu0 0.0
    %2173 = vmatpush1.msra.mxu0 0.0
    %2174 = vmatprep.subr.mxu0 0.0
    %2175 = vmatpush1.msra.mxu0 0.0
    %2176 = vmatprep.subr.mxu0 0.0
    %2177 = vmatpush1.msra.mxu0 0.0
    %2178 = vmatprep.subr.mxu0 0.0
    %2179 = vmatpush1.msra.mxu0 0.0
    %2180 = vmatprep.subr.mxu0 0.0
    %2181 = vmatpush1.msra.mxu0 0.0
    %2182 = vmatprep.subr.mxu0 0.0
    %2183 = vmatpush1.msra.mxu0 0.0
    %2184 = vmatprep.subr.mxu0 0.0
    %2185 = vmatpush1.msra.mxu0 0.0
    %2186 = vmatprep.subr.mxu0 0.0
    %2187 = vmatpush1.msra.mxu0 0.0
    %2188 = vmatprep.subr.mxu0 0.0
    %2189 = vmatpush1.msra.mxu0 0.0
    %2190 = vmatprep.subr.mxu0 0.0
    %2191 = vmatpush1.msra.mxu0 0.0
    %2192 = vmatprep.subr.mxu0 0.0
    %2193 = vmatpush1.msra.mxu0 %v1940
    %2194 = vmatprep.subr.mxu0 0.0
    %2195 = vmatpush1.msra.mxu0 %v1939
    %2196 = vmatprep.subr.mxu0 0.0
    %2197 = vmatpush1.msra.mxu0 %v1938
    %2198 = vmatprep.subr.mxu0 0.0
    %2199 = vmatpush1.msra.mxu0 %v1937
    %2200 = vmatprep.subr.mxu0 0.0
    %2201 = vmatpush2.msra.mxu0 0.0
    %2202 = vmatprep.subr.mxu0 0.0
    %2203 = vmatpush2.msra.mxu0 0.0
    %2204 = vmatprep.subr.mxu0 0.0
    %2205 = vmatpush2.msra.mxu0 0.0
    %2206 = vmatprep.subr.mxu0 0.0
    %2207 = vmatpush2.msra.mxu0 0.0
    %2208 = vmatprep.subr.mxu0 0.0
    %2209 = vmatpush2.msra.mxu0 0.0
    %2210 = vmatprep.subr.mxu0 0.0
    %2211 = vmatpush2.msra.mxu0 0.0
    %2212 = vmatprep.subr.mxu0 0.0
    %2213 = vmatpush2.msra.mxu0 0.0
    %2214 = vmatprep.subr.mxu0 0.0
    %2215 = vmatpush2.msra.mxu0 0.0
    %2216 = vmatprep.subr.mxu0 0.0
    %2217 = vmatpush2.msra.mxu0 0.0
    %2218 = vmatprep.subr.mxu0 0.0
    %2219 = vmatpush2.msra.mxu0 0.0
    %2220 = vmatprep.subr.mxu0 0.0
    %2221 = vmatpush2.msra.mxu0 0.0
    %2222 = vmatprep.subr.mxu0 0.0
    %2223 = vmatpush2.msra.mxu0 0.0
    %2224 = vmatprep.subr.mxu0 0.0
    %2225 = vmatpush2.msra.mxu0 0.0
    %2226 = vmatprep.subr.mxu0 0.0
    %2227 = vmatpush2.msra.mxu0 0.0
    %2228 = vmatprep.subr.mxu0 0.0
    %2229 = vmatpush2.msra.mxu0 0.0
    %2230 = vmatprep.subr.mxu0 0.0
    %2231 = vmatpush2.msra.mxu0 0.0
    %2232 = vmatprep.mubr.f32.mxu0 0.0
    %2233 = vmatmul.mubr.f32.gmra.mxu0 %v2166
    %v2234 = vpop.f32.mrf.mxu0
    %v2235 = vadd.f32 %v1952, %v2234
    %v2236 = vpop.f32.mrf.mxu0
    %2237 = vdwg.mxu0
    %v2238 = vadd.f32 %v2165, %v2235
    %v2239 = vxor.u32 %v2238, 2147483648
    %v2240 = vmul.f32 %v2239, 1.442695
    %v2241 = vpow.pop %v2240
    %v2242 = vadd.f32 %v2241, 1.0
    %v2243 = vrcp.pop %v2242
    %v2244 = vmul.f32 1.0, %v2243
    %2246 = vrot.lane.b32.xlu0 %v2235, 64
    %v2247 = vpop.permute.xlu0 %2246
    %v2249 = vmul.f32 %v2244, %v2247
    %2251 = vrot.lane.b32.xlu0 %v2249, 64
    %v2252 = vpop.permute.xlu0 %2251
    %v2254 = vadd.f32 %v2165, %v2252
    %v2255 = vtanh.pop %v2254
    %v2256 = vsub.f32 1.0, %v2244
    %2258 = vrot.lane.b32.xlu0 %v2255, 96
    %v2259 = vpop.permute.xlu0 %2258
    %v2261 = vmul.f32 %v2256, %v2259
    %v2262 = vmul.f32 %v2244, %v2051
    %v2263 = vadd.f32 %v2261, %v2262
    %2265 = vrot.lane.b32.xlu0 %v2263, 96
    %v2266 = vpop.permute.xlu0 %2265
    %2268 = vst.msk [vmem:[#allocation6 + $0x2] sm:$0x3] %vm634, %v2266
    %v2269 = vld [vmem:[#allocation4 + $0xc] sm:$0x3]
    %v2270 = vsel %vm323, %v2162, 0
    %2272 = vmatprep.subr.mxu0 0.0
    %2273 = vmatpush1.msra.mxu0 0.0
    %2274 = vmatprep.subr.mxu0 0.0
    %2275 = vmatpush1.msra.mxu0 0.0
    %2276 = vmatprep.subr.mxu0 0.0
    %2277 = vmatpush1.msra.mxu0 0.0
    %2278 = vmatprep.subr.mxu0 0.0
    %2279 = vmatpush1.msra.mxu0 0.0
    %2280 = vmatprep.subr.mxu0 0.0
    %2281 = vmatpush1.msra.mxu0 0.0
    %2282 = vmatprep.subr.mxu0 0.0
    %2283 = vmatpush1.msra.mxu0 0.0
    %2284 = vmatprep.subr.mxu0 0.0
    %2285 = vmatpush1.msra.mxu0 0.0
    %2286 = vmatprep.subr.mxu0 0.0
    %2287 = vmatpush1.msra.mxu0 0.0
    %2288 = vmatprep.subr.mxu0 0.0
    %2289 = vmatpush1.msra.mxu0 0.0
    %2290 = vmatprep.subr.mxu0 0.0
    %2291 = vmatpush1.msra.mxu0 0.0
    %2292 = vmatprep.subr.mxu0 0.0
    %2293 = vmatpush1.msra.mxu0 0.0
    %2294 = vmatprep.subr.mxu0 0.0
    %2295 = vmatpush1.msra.mxu0 0.0
    %2296 = vmatprep.subr.mxu0 0.0
    %2297 = vmatpush1.msra.mxu0 %v1945
    %2298 = vmatprep.subr.mxu0 0.0
    %2299 = vmatpush1.msra.mxu0 %v1944
    %2300 = vmatprep.subr.mxu0 0.0
    %2301 = vmatpush1.msra.mxu0 %v1943
    %2302 = vmatprep.subr.mxu0 0.0
    %2303 = vmatpush1.msra.mxu0 %v1942
    %2304 = vmatprep.subr.mxu0 0.0
    %2305 = vmatpush2.msra.mxu0 0.0
    %2306 = vmatprep.subr.mxu0 0.0
    %2307 = vmatpush2.msra.mxu0 0.0
    %2308 = vmatprep.subr.mxu0 0.0
    %2309 = vmatpush2.msra.mxu0 0.0
    %2310 = vmatprep.subr.mxu0 0.0
    %2311 = vmatpush2.msra.mxu0 0.0
    %2312 = vmatprep.subr.mxu0 0.0
    %2313 = vmatpush2.msra.mxu0 0.0
    %2314 = vmatprep.subr.mxu0 0.0
    %2315 = vmatpush2.msra.mxu0 0.0
    %2316 = vmatprep.subr.mxu0 0.0
    %2317 = vmatpush2.msra.mxu0 0.0
    %2318 = vmatprep.subr.mxu0 0.0
    %2319 = vmatpush2.msra.mxu0 0.0
    %2320 = vmatprep.subr.mxu0 0.0
    %2321 = vmatpush2.msra.mxu0 0.0
    %2322 = vmatprep.subr.mxu0 0.0
    %2323 = vmatpush2.msra.mxu0 0.0
    %2324 = vmatprep.subr.mxu0 0.0
    %2325 = vmatpush2.msra.mxu0 0.0
    %2326 = vmatprep.subr.mxu0 0.0
    %2327 = vmatpush2.msra.mxu0 0.0
    %2328 = vmatprep.subr.mxu0 0.0
    %2329 = vmatpush2.msra.mxu0 0.0
    %2330 = vmatprep.subr.mxu0 0.0
    %2331 = vmatpush2.msra.mxu0 0.0
    %2332 = vmatprep.subr.mxu0 0.0
    %2333 = vmatpush2.msra.mxu0 0.0
    %2334 = vmatprep.subr.mxu0 0.0
    %2335 = vmatpush2.msra.mxu0 0.0
    %2336 = vmatprep.mubr.f32.mxu0 0.0
    %2337 = vmatmul.mubr.f32.gmra.mxu0 %v2270
    %v2338 = vpop.f32.mrf.mxu0
    %v2339 = vadd.f32 %v2062, %v2338
    %v2340 = vpop.f32.mrf.mxu0
    %2341 = vdwg.mxu0
    %v2342 = vadd.f32 %v2269, %v2339
    %v2343 = vxor.u32 %v2342, 2147483648
    %v2344 = vmul.f32 %v2343, 1.442695
    %v2345 = vpow.pop %v2344
    %v2346 = vadd.f32 %v2345, 1.0
    %v2347 = vrcp.pop %v2346
    %v2348 = vmul.f32 1.0, %v2347
    %2350 = vrot.lane.b32.xlu0 %v2339, 64
    %v2351 = vpop.permute.xlu0 %2350
    %v2353 = vmul.f32 %v2348, %v2351
    %2355 = vrot.lane.b32.xlu0 %v2353, 64
    %v2356 = vpop.permute.xlu0 %2355
    %v2358 = vadd.f32 %v2269, %v2356
    %v2359 = vtanh.pop %v2358
    %v2360 = vsub.f32 1.0, %v2348
    %2362 = vrot.lane.b32.xlu0 %v2359, 96
    %v2363 = vpop.permute.xlu0 %2362
    %v2365 = vmul.f32 %v2360, %v2363
    %v2366 = vmul.f32 %v2348, %v2159
    %v2367 = vadd.f32 %v2365, %v2366
    %2369 = vrot.lane.b32.xlu0 %v2367, 96
    %v2370 = vpop.permute.xlu0 %2369
    %2372 = vst.msk [vmem:[#allocation7 + $0xc] sm:$0x3] %vm634, %v2370
    %v2373 = vld [vmem:[#allocation3 + $0x4] sm:$0x3]
    %v2374 = vsel %vm323, %v2266, 0
    %2376 = vmatprep.subr.mxu0 0.0
    %2377 = vmatpush1.msra.mxu0 0.0
    %2378 = vmatprep.subr.mxu0 0.0
    %2379 = vmatpush1.msra.mxu0 0.0
    %2380 = vmatprep.subr.mxu0 0.0
    %2381 = vmatpush1.msra.mxu0 0.0
    %2382 = vmatprep.subr.mxu0 0.0
    %2383 = vmatpush1.msra.mxu0 0.0
    %2384 = vmatprep.subr.mxu0 0.0
    %2385 = vmatpush1.msra.mxu0 0.0
    %2386 = vmatprep.subr.mxu0 0.0
    %2387 = vmatpush1.msra.mxu0 0.0
    %2388 = vmatprep.subr.mxu0 0.0
    %2389 = vmatpush1.msra.mxu0 0.0
    %2390 = vmatprep.subr.mxu0 0.0
    %2391 = vmatpush1.msra.mxu0 0.0
    %2392 = vmatprep.subr.mxu0 0.0
    %2393 = vmatpush1.msra.mxu0 0.0
    %2394 = vmatprep.subr.mxu0 0.0
    %2395 = vmatpush1.msra.mxu0 0.0
    %2396 = vmatprep.subr.mxu0 0.0
    %2397 = vmatpush1.msra.mxu0 0.0
    %2398 = vmatprep.subr.mxu0 0.0
    %2399 = vmatpush1.msra.mxu0 0.0
    %2400 = vmatprep.subr.mxu0 0.0
    %2401 = vmatpush1.msra.mxu0 %v1940
    %2402 = vmatprep.subr.mxu0 0.0
    %2403 = vmatpush1.msra.mxu0 %v1939
    %2404 = vmatprep.subr.mxu0 0.0
    %2405 = vmatpush1.msra.mxu0 %v1938
    %2406 = vmatprep.subr.mxu0 0.0
    %2407 = vmatpush1.msra.mxu0 %v1937
    %2408 = vmatprep.subr.mxu0 0.0
    %2409 = vmatpush2.msra.mxu0 0.0
    %2410 = vmatprep.subr.mxu0 0.0
    %2411 = vmatpush2.msra.mxu0 0.0
    %2412 = vmatprep.subr.mxu0 0.0
    %2413 = vmatpush2.msra.mxu0 0.0
    %2414 = vmatprep.subr.mxu0 0.0
    %2415 = vmatpush2.msra.mxu0 0.0
    %2416 = vmatprep.subr.mxu0 0.0
    %2417 = vmatpush2.msra.mxu0 0.0
    %2418 = vmatprep.subr.mxu0 0.0
    %2419 = vmatpush2.msra.mxu0 0.0
    %2420 = vmatprep.subr.mxu0 0.0
    %2421 = vmatpush2.msra.mxu0 0.0
    %2422 = vmatprep.subr.mxu0 0.0
    %2423 = vmatpush2.msra.mxu0 0.0
    %2424 = vmatprep.subr.mxu0 0.0
    %2425 = vmatpush2.msra.mxu0 0.0
    %2426 = vmatprep.subr.mxu0 0.0
    %2427 = vmatpush2.msra.mxu0 0.0
    %2428 = vmatprep.subr.mxu0 0.0
    %2429 = vmatpush2.msra.mxu0 0.0
    %2430 = vmatprep.subr.mxu0 0.0
    %2431 = vmatpush2.msra.mxu0 0.0
    %2432 = vmatprep.subr.mxu0 0.0
    %2433 = vmatpush2.msra.mxu0 0.0
    %2434 = vmatprep.subr.mxu0 0.0
    %2435 = vmatpush2.msra.mxu0 0.0
    %2436 = vmatprep.subr.mxu0 0.0
    %2437 = vmatpush2.msra.mxu0 0.0
    %2438 = vmatprep.subr.mxu0 0.0
    %2439 = vmatpush2.msra.mxu0 0.0
    %2440 = vmatprep.mubr.f32.mxu0 0.0
    %2441 = vmatmul.mubr.f32.gmra.mxu0 %v2374
    %v2442 = vpop.f32.mrf.mxu0
    %v2443 = vadd.f32 %v1952, %v2442
    %v2444 = vpop.f32.mrf.mxu0
    %2445 = vdwg.mxu0
    %v2446 = vadd.f32 %v2373, %v2443
    %v2447 = vxor.u32 %v2446, 2147483648
    %v2448 = vmul.f32 %v2447, 1.442695
    %v2449 = vpow.pop %v2448
    %v2450 = vadd.f32 %v2449, 1.0
    %v2451 = vrcp.pop %v2450
    %v2452 = vmul.f32 1.0, %v2451
    %2454 = vrot.lane.b32.xlu0 %v2443, 64
    %v2455 = vpop.permute.xlu0 %2454
    %v2457 = vmul.f32 %v2452, %v2455
    %2459 = vrot.lane.b32.xlu0 %v2457, 64
    %v2460 = vpop.permute.xlu0 %2459
    %v2462 = vadd.f32 %v2373, %v2460
    %v2463 = vtanh.pop %v2462
    %v2464 = vsub.f32 1.0, %v2452
    %2466 = vrot.lane.b32.xlu0 %v2463, 96
    %v2467 = vpop.permute.xlu0 %2466
    %v2469 = vmul.f32 %v2464, %v2467
    %v2470 = vmul.f32 %v2452, %v2263
    %v2471 = vadd.f32 %v2469, %v2470
    %2473 = vrot.lane.b32.xlu0 %v2471, 96
    %v2474 = vpop.permute.xlu0 %2473
    %2476 = vst.msk [vmem:[#allocation6 + $0x4] sm:$0x3] %vm634, %v2474
    %v2477 = vld [vmem:[#allocation4 + $0xa] sm:$0x3]
    %v2478 = vsel %vm323, %v2370, 0
    %2480 = vmatprep.subr.mxu0 0.0
    %2481 = vmatpush1.msra.mxu0 0.0
    %2482 = vmatprep.subr.mxu0 0.0
    %2483 = vmatpush1.msra.mxu0 0.0
    %2484 = vmatprep.subr.mxu0 0.0
    %2485 = vmatpush1.msra.mxu0 0.0
    %2486 = vmatprep.subr.mxu0 0.0
    %2487 = vmatpush1.msra.mxu0 0.0
    %2488 = vmatprep.subr.mxu0 0.0
    %2489 = vmatpush1.msra.mxu0 0.0
    %2490 = vmatprep.subr.mxu0 0.0
    %2491 = vmatpush1.msra.mxu0 0.0
    %2492 = vmatprep.subr.mxu0 0.0
    %2493 = vmatpush1.msra.mxu0 0.0
    %2494 = vmatprep.subr.mxu0 0.0
    %2495 = vmatpush1.msra.mxu0 0.0
    %2496 = vmatprep.subr.mxu0 0.0
    %2497 = vmatpush1.msra.mxu0 0.0
    %2498 = vmatprep.subr.mxu0 0.0
    %2499 = vmatpush1.msra.mxu0 0.0
    %2500 = vmatprep.subr.mxu0 0.0
    %2501 = vmatpush1.msra.mxu0 0.0
    %2502 = vmatprep.subr.mxu0 0.0
    %2503 = vmatpush1.msra.mxu0 0.0
    %2504 = vmatprep.subr.mxu0 0.0
    %2505 = vmatpush1.msra.mxu0 %v1945
    %2506 = vmatprep.subr.mxu0 0.0
    %2507 = vmatpush1.msra.mxu0 %v1944
    %2508 = vmatprep.subr.mxu0 0.0
    %2509 = vmatpush1.msra.mxu0 %v1943
    %2510 = vmatprep.subr.mxu0 0.0
    %2511 = vmatpush1.msra.mxu0 %v1942
    %2512 = vmatprep.subr.mxu0 0.0
    %2513 = vmatpush2.msra.mxu0 0.0
    %2514 = vmatprep.subr.mxu0 0.0
    %2515 = vmatpush2.msra.mxu0 0.0
    %2516 = vmatprep.subr.mxu0 0.0
    %2517 = vmatpush2.msra.mxu0 0.0
    %2518 = vmatprep.subr.mxu0 0.0
    %2519 = vmatpush2.msra.mxu0 0.0
    %2520 = vmatprep.subr.mxu0 0.0
    %2521 = vmatpush2.msra.mxu0 0.0
    %2522 = vmatprep.subr.mxu0 0.0
    %2523 = vmatpush2.msra.mxu0 0.0
    %2524 = vmatprep.subr.mxu0 0.0
    %2525 = vmatpush2.msra.mxu0 0.0
    %2526 = vmatprep.subr.mxu0 0.0
    %2527 = vmatpush2.msra.mxu0 0.0
    %2528 = vmatprep.subr.mxu0 0.0
    %2529 = vmatpush2.msra.mxu0 0.0
    %2530 = vmatprep.subr.mxu0 0.0
    %2531 = vmatpush2.msra.mxu0 0.0
    %2532 = vmatprep.subr.mxu0 0.0
    %2533 = vmatpush2.msra.mxu0 0.0
    %2534 = vmatprep.subr.mxu0 0.0
    %2535 = vmatpush2.msra.mxu0 0.0
    %2536 = vmatprep.subr.mxu0 0.0
    %2537 = vmatpush2.msra.mxu0 0.0
    %2538 = vmatprep.subr.mxu0 0.0
    %2539 = vmatpush2.msra.mxu0 0.0
    %2540 = vmatprep.subr.mxu0 0.0
    %2541 = vmatpush2.msra.mxu0 0.0
    %2542 = vmatprep.subr.mxu0 0.0
    %2543 = vmatpush2.msra.mxu0 0.0
    %2544 = vmatprep.mubr.f32.mxu0 0.0
    %2545 = vmatmul.mubr.f32.gmra.mxu0 %v2478
    %v2546 = vpop.f32.mrf.mxu0
    %v2547 = vadd.f32 %v2062, %v2546
    %v2548 = vpop.f32.mrf.mxu0
    %2549 = vdwg.mxu0
    %v2550 = vadd.f32 %v2477, %v2547
    %v2551 = vxor.u32 %v2550, 2147483648
    %v2552 = vmul.f32 %v2551, 1.442695
    %v2553 = vpow.pop %v2552
    %v2554 = vadd.f32 %v2553, 1.0
    %v2555 = vrcp.pop %v2554
    %v2556 = vmul.f32 1.0, %v2555
    %2558 = vrot.lane.b32.xlu0 %v2547, 64
    %v2559 = vpop.permute.xlu0 %2558
    %v2561 = vmul.f32 %v2556, %v2559
    %2563 = vrot.lane.b32.xlu0 %v2561, 64
    %v2564 = vpop.permute.xlu0 %2563
    %v2566 = vadd.f32 %v2477, %v2564
    %v2567 = vtanh.pop %v2566
    %v2568 = vsub.f32 1.0, %v2556
    %2570 = vrot.lane.b32.xlu0 %v2567, 96
    %v2571 = vpop.permute.xlu0 %2570
    %v2573 = vmul.f32 %v2568, %v2571
    %v2574 = vmul.f32 %v2556, %v2367
    %v2575 = vadd.f32 %v2573, %v2574
    %2577 = vrot.lane.b32.xlu0 %v2575, 96
    %v2578 = vpop.permute.xlu0 %2577
    %2580 = vst.msk [vmem:[#allocation7 + $0xa] sm:$0x3] %vm634, %v2578
    %v2581 = vld [vmem:[#allocation3 + $0x6] sm:$0x3]
    %v2582 = vsel %vm323, %v2474, 0
    %2584 = vmatprep.subr.mxu0 0.0
    %2585 = vmatpush1.msra.mxu0 0.0
    %2586 = vmatprep.subr.mxu0 0.0
    %2587 = vmatpush1.msra.mxu0 0.0
    %2588 = vmatprep.subr.mxu0 0.0
    %2589 = vmatpush1.msra.mxu0 0.0
    %2590 = vmatprep.subr.mxu0 0.0
    %2591 = vmatpush1.msra.mxu0 0.0
    %2592 = vmatprep.subr.mxu0 0.0
    %2593 = vmatpush1.msra.mxu0 0.0
    %2594 = vmatprep.subr.mxu0 0.0
    %2595 = vmatpush1.msra.mxu0 0.0
    %2596 = vmatprep.subr.mxu0 0.0
    %2597 = vmatpush1.msra.mxu0 0.0
    %2598 = vmatprep.subr.mxu0 0.0
    %2599 = vmatpush1.msra.mxu0 0.0
    %2600 = vmatprep.subr.mxu0 0.0
    %2601 = vmatpush1.msra.mxu0 0.0
    %2602 = vmatprep.subr.mxu0 0.0
    %2603 = vmatpush1.msra.mxu0 0.0
    %2604 = vmatprep.subr.mxu0 0.0
    %2605 = vmatpush1.msra.mxu0 0.0
    %2606 = vmatprep.subr.mxu0 0.0
    %2607 = vmatpush1.msra.mxu0 0.0
    %2608 = vmatprep.subr.mxu0 0.0
    %2609 = vmatpush1.msra.mxu0 %v1940
    %2610 = vmatprep.subr.mxu0 0.0
    %2611 = vmatpush1.msra.mxu0 %v1939
    %2612 = vmatprep.subr.mxu0 0.0
    %2613 = vmatpush1.msra.mxu0 %v1938
    %2614 = vmatprep.subr.mxu0 0.0
    %2615 = vmatpush1.msra.mxu0 %v1937
    %2616 = vmatprep.subr.mxu0 0.0
    %2617 = vmatpush2.msra.mxu0 0.0
    %2618 = vmatprep.subr.mxu0 0.0
    %2619 = vmatpush2.msra.mxu0 0.0
    %2620 = vmatprep.subr.mxu0 0.0
    %2621 = vmatpush2.msra.mxu0 0.0
    %2622 = vmatprep.subr.mxu0 0.0
    %2623 = vmatpush2.msra.mxu0 0.0
    %2624 = vmatprep.subr.mxu0 0.0
    %2625 = vmatpush2.msra.mxu0 0.0
    %2626 = vmatprep.subr.mxu0 0.0
    %2627 = vmatpush2.msra.mxu0 0.0
    %2628 = vmatprep.subr.mxu0 0.0
    %2629 = vmatpush2.msra.mxu0 0.0
    %2630 = vmatprep.subr.mxu0 0.0
    %2631 = vmatpush2.msra.mxu0 0.0
    %2632 = vmatprep.subr.mxu0 0.0
    %2633 = vmatpush2.msra.mxu0 0.0
    %2634 = vmatprep.subr.mxu0 0.0
    %2635 = vmatpush2.msra.mxu0 0.0
    %2636 = vmatprep.subr.mxu0 0.0
    %2637 = vmatpush2.msra.mxu0 0.0
    %2638 = vmatprep.subr.mxu0 0.0
    %2639 = vmatpush2.msra.mxu0 0.0
    %2640 = vmatprep.subr.mxu0 0.0
    %2641 = vmatpush2.msra.mxu0 0.0
    %2642 = vmatprep.subr.mxu0 0.0
    %2643 = vmatpush2.msra.mxu0 0.0
    %2644 = vmatprep.subr.mxu0 0.0
    %2645 = vmatpush2.msra.mxu0 0.0
    %2646 = vmatprep.subr.mxu0 0.0
    %2647 = vmatpush2.msra.mxu0 0.0
    %2648 = vmatprep.mubr.f32.mxu0 0.0
    %2649 = vmatmul.mubr.f32.gmra.mxu0 %v2582
    %v2650 = vpop.f32.mrf.mxu0
    %v2651 = vadd.f32 %v1952, %v2650
    %v2652 = vpop.f32.mrf.mxu0
    %2653 = vdwg.mxu0
    %v2654 = vadd.f32 %v2581, %v2651
    %v2655 = vxor.u32 %v2654, 2147483648
    %v2656 = vmul.f32 %v2655, 1.442695
    %v2657 = vpow.pop %v2656
    %v2658 = vadd.f32 %v2657, 1.0
    %v2659 = vrcp.pop %v2658
    %v2660 = vmul.f32 1.0, %v2659
    %2662 = vrot.lane.b32.xlu0 %v2651, 64
    %v2663 = vpop.permute.xlu0 %2662
    %v2665 = vmul.f32 %v2660, %v2663
    %2667 = vrot.lane.b32.xlu0 %v2665, 64
    %v2668 = vpop.permute.xlu0 %2667
    %v2670 = vadd.f32 %v2581, %v2668
    %v2671 = vtanh.pop %v2670
    %v2672 = vsub.f32 1.0, %v2660
    %2674 = vrot.lane.b32.xlu0 %v2671, 96
    %v2675 = vpop.permute.xlu0 %2674
    %v2677 = vmul.f32 %v2672, %v2675
    %v2678 = vmul.f32 %v2660, %v2471
    %v2679 = vadd.f32 %v2677, %v2678
    %2681 = vrot.lane.b32.xlu0 %v2679, 96
    %v2682 = vpop.permute.xlu0 %2681
    %2684 = vst.msk [vmem:[#allocation6 + $0x6] sm:$0x3] %vm634, %v2682
    %v2685 = vld [vmem:[#allocation4 + $0x8] sm:$0x3]
    %v2686 = vsel %vm323, %v2578, 0
    %2688 = vmatprep.subr.mxu0 0.0
    %2689 = vmatpush1.msra.mxu0 0.0
    %2690 = vmatprep.subr.mxu0 0.0
    %2691 = vmatpush1.msra.mxu0 0.0
    %2692 = vmatprep.subr.mxu0 0.0
    %2693 = vmatpush1.msra.mxu0 0.0
    %2694 = vmatprep.subr.mxu0 0.0
    %2695 = vmatpush1.msra.mxu0 0.0
    %2696 = vmatprep.subr.mxu0 0.0
    %2697 = vmatpush1.msra.mxu0 0.0
    %2698 = vmatprep.subr.mxu0 0.0
    %2699 = vmatpush1.msra.mxu0 0.0
    %2700 = vmatprep.subr.mxu0 0.0
    %2701 = vmatpush1.msra.mxu0 0.0
    %2702 = vmatprep.subr.mxu0 0.0
    %2703 = vmatpush1.msra.mxu0 0.0
    %2704 = vmatprep.subr.mxu0 0.0
    %2705 = vmatpush1.msra.mxu0 0.0
    %2706 = vmatprep.subr.mxu0 0.0
    %2707 = vmatpush1.msra.mxu0 0.0
    %2708 = vmatprep.subr.mxu0 0.0
    %2709 = vmatpush1.msra.mxu0 0.0
    %2710 = vmatprep.subr.mxu0 0.0
    %2711 = vmatpush1.msra.mxu0 0.0
    %2712 = vmatprep.subr.mxu0 0.0
    %2713 = vmatpush1.msra.mxu0 %v1945
    %2714 = vmatprep.subr.mxu0 0.0
    %2715 = vmatpush1.msra.mxu0 %v1944
    %2716 = vmatprep.subr.mxu0 0.0
    %2717 = vmatpush1.msra.mxu0 %v1943
    %2718 = vmatprep.subr.mxu0 0.0
    %2719 = vmatpush1.msra.mxu0 %v1942
    %2720 = vmatprep.subr.mxu0 0.0
    %2721 = vmatpush2.msra.mxu0 0.0
    %2722 = vmatprep.subr.mxu0 0.0
    %2723 = vmatpush2.msra.mxu0 0.0
    %2724 = vmatprep.subr.mxu0 0.0
    %2725 = vmatpush2.msra.mxu0 0.0
    %2726 = vmatprep.subr.mxu0 0.0
    %2727 = vmatpush2.msra.mxu0 0.0
    %2728 = vmatprep.subr.mxu0 0.0
    %2729 = vmatpush2.msra.mxu0 0.0
    %2730 = vmatprep.subr.mxu0 0.0
    %2731 = vmatpush2.msra.mxu0 0.0
    %2732 = vmatprep.subr.mxu0 0.0
    %2733 = vmatpush2.msra.mxu0 0.0
    %2734 = vmatprep.subr.mxu0 0.0
    %2735 = vmatpush2.msra.mxu0 0.0
    %2736 = vmatprep.subr.mxu0 0.0
    %2737 = vmatpush2.msra.mxu0 0.0
    %2738 = vmatprep.subr.mxu0 0.0
    %2739 = vmatpush2.msra.mxu0 0.0
    %2740 = vmatprep.subr.mxu0 0.0
    %2741 = vmatpush2.msra.mxu0 0.0
    %2742 = vmatprep.subr.mxu0 0.0
    %2743 = vmatpush2.msra.mxu0 0.0
    %2744 = vmatprep.subr.mxu0 0.0
    %2745 = vmatpush2.msra.mxu0 0.0
    %2746 = vmatprep.subr.mxu0 0.0
    %2747 = vmatpush2.msra.mxu0 0.0
    %2748 = vmatprep.subr.mxu0 0.0
    %2749 = vmatpush2.msra.mxu0 0.0
    %2750 = vmatprep.subr.mxu0 0.0
    %2751 = vmatpush2.msra.mxu0 0.0
    %2752 = vmatprep.mubr.f32.mxu0 0.0
    %2753 = vmatmul.mubr.f32.gmra.mxu0 %v2686
    %v2754 = vpop.f32.mrf.mxu0
    %v2755 = vadd.f32 %v2062, %v2754
    %v2756 = vpop.f32.mrf.mxu0
    %2757 = vdwg.mxu0
    %v2758 = vadd.f32 %v2685, %v2755
    %v2759 = vxor.u32 %v2758, 2147483648
    %v2760 = vmul.f32 %v2759, 1.442695
    %v2761 = vpow.pop %v2760
    %v2762 = vadd.f32 %v2761, 1.0
    %v2763 = vrcp.pop %v2762
    %v2764 = vmul.f32 1.0, %v2763
    %2766 = vrot.lane.b32.xlu0 %v2755, 64
    %v2767 = vpop.permute.xlu0 %2766
    %v2769 = vmul.f32 %v2764, %v2767
    %2771 = vrot.lane.b32.xlu0 %v2769, 64
    %v2772 = vpop.permute.xlu0 %2771
    %v2774 = vadd.f32 %v2685, %v2772
    %v2775 = vtanh.pop %v2774
    %v2776 = vsub.f32 1.0, %v2764
    %2778 = vrot.lane.b32.xlu0 %v2775, 96
    %v2779 = vpop.permute.xlu0 %2778
    %v2781 = vmul.f32 %v2776, %v2779
    %v2782 = vmul.f32 %v2764, %v2575
    %v2783 = vadd.f32 %v2781, %v2782
    %2785 = vrot.lane.b32.xlu0 %v2783, 96
    %v2786 = vpop.permute.xlu0 %2785
    %2788 = vst.msk [vmem:[#allocation7 + $0x8] sm:$0x3] %vm634, %v2786
    %v2789 = vld [vmem:[#allocation3 + $0x8] sm:$0x3]
    %v2790 = vsel %vm323, %v2682, 0
    %2792 = vmatprep.subr.mxu0 0.0
    %2793 = vmatpush1.msra.mxu0 0.0
    %2794 = vmatprep.subr.mxu0 0.0
    %2795 = vmatpush1.msra.mxu0 0.0
    %2796 = vmatprep.subr.mxu0 0.0
    %2797 = vmatpush1.msra.mxu0 0.0
    %2798 = vmatprep.subr.mxu0 0.0
    %2799 = vmatpush1.msra.mxu0 0.0
    %2800 = vmatprep.subr.mxu0 0.0
    %2801 = vmatpush1.msra.mxu0 0.0
    %2802 = vmatprep.subr.mxu0 0.0
    %2803 = vmatpush1.msra.mxu0 0.0
    %2804 = vmatprep.subr.mxu0 0.0
    %2805 = vmatpush1.msra.mxu0 0.0
    %2806 = vmatprep.subr.mxu0 0.0
    %2807 = vmatpush1.msra.mxu0 0.0
    %2808 = vmatprep.subr.mxu0 0.0
    %2809 = vmatpush1.msra.mxu0 0.0
    %2810 = vmatprep.subr.mxu0 0.0
    %2811 = vmatpush1.msra.mxu0 0.0
    %2812 = vmatprep.subr.mxu0 0.0
    %2813 = vmatpush1.msra.mxu0 0.0
    %2814 = vmatprep.subr.mxu0 0.0
    %2815 = vmatpush1.msra.mxu0 0.0
    %2816 = vmatprep.subr.mxu0 0.0
    %2817 = vmatpush1.msra.mxu0 %v1940
    %2818 = vmatprep.subr.mxu0 0.0
    %2819 = vmatpush1.msra.mxu0 %v1939
    %2820 = vmatprep.subr.mxu0 0.0
    %2821 = vmatpush1.msra.mxu0 %v1938
    %2822 = vmatprep.subr.mxu0 0.0
    %2823 = vmatpush1.msra.mxu0 %v1937
    %2824 = vmatprep.subr.mxu0 0.0
    %2825 = vmatpush2.msra.mxu0 0.0
    %2826 = vmatprep.subr.mxu0 0.0
    %2827 = vmatpush2.msra.mxu0 0.0
    %2828 = vmatprep.subr.mxu0 0.0
    %2829 = vmatpush2.msra.mxu0 0.0
    %2830 = vmatprep.subr.mxu0 0.0
    %2831 = vmatpush2.msra.mxu0 0.0
    %2832 = vmatprep.subr.mxu0 0.0
    %2833 = vmatpush2.msra.mxu0 0.0
    %2834 = vmatprep.subr.mxu0 0.0
    %2835 = vmatpush2.msra.mxu0 0.0
    %2836 = vmatprep.subr.mxu0 0.0
    %2837 = vmatpush2.msra.mxu0 0.0
    %2838 = vmatprep.subr.mxu0 0.0
    %2839 = vmatpush2.msra.mxu0 0.0
    %2840 = vmatprep.subr.mxu0 0.0
    %2841 = vmatpush2.msra.mxu0 0.0
    %2842 = vmatprep.subr.mxu0 0.0
    %2843 = vmatpush2.msra.mxu0 0.0
    %2844 = vmatprep.subr.mxu0 0.0
    %2845 = vmatpush2.msra.mxu0 0.0
    %2846 = vmatprep.subr.mxu0 0.0
    %2847 = vmatpush2.msra.mxu0 0.0
    %2848 = vmatprep.subr.mxu0 0.0
    %2849 = vmatpush2.msra.mxu0 0.0
    %2850 = vmatprep.subr.mxu0 0.0
    %2851 = vmatpush2.msra.mxu0 0.0
    %2852 = vmatprep.subr.mxu0 0.0
    %2853 = vmatpush2.msra.mxu0 0.0
    %2854 = vmatprep.subr.mxu0 0.0
    %2855 = vmatpush2.msra.mxu0 0.0
    %2856 = vmatprep.mubr.f32.mxu0 0.0
    %2857 = vmatmul.mubr.f32.gmra.mxu0 %v2790
    %v2858 = vpop.f32.mrf.mxu0
    %v2859 = vadd.f32 %v1952, %v2858
    %v2860 = vpop.f32.mrf.mxu0
    %2861 = vdwg.mxu0
    %v2862 = vadd.f32 %v2789, %v2859
    %v2863 = vxor.u32 %v2862, 2147483648
    %v2864 = vmul.f32 %v2863, 1.442695
    %v2865 = vpow.pop %v2864
    %v2866 = vadd.f32 %v2865, 1.0
    %v2867 = vrcp.pop %v2866
    %v2868 = vmul.f32 1.0, %v2867
    %2870 = vrot.lane.b32.xlu0 %v2859, 64
    %v2871 = vpop.permute.xlu0 %2870
    %v2873 = vmul.f32 %v2868, %v2871
    %2875 = vrot.lane.b32.xlu0 %v2873, 64
    %v2876 = vpop.permute.xlu0 %2875
    %v2878 = vadd.f32 %v2789, %v2876
    %v2879 = vtanh.pop %v2878
    %v2880 = vsub.f32 1.0, %v2868
    %2882 = vrot.lane.b32.xlu0 %v2879, 96
    %v2883 = vpop.permute.xlu0 %2882
    %v2885 = vmul.f32 %v2880, %v2883
    %v2886 = vmul.f32 %v2868, %v2679
    %v2887 = vadd.f32 %v2885, %v2886
    %2889 = vrot.lane.b32.xlu0 %v2887, 96
    %v2890 = vpop.permute.xlu0 %2889
    %2892 = vst.msk [vmem:[#allocation6 + $0x8] sm:$0x3] %vm634, %v2890
    %v2893 = vld [vmem:[#allocation4 + $0x6] sm:$0x3]
    %v2894 = vsel %vm323, %v2786, 0
    %2896 = vmatprep.subr.mxu0 0.0
    %2897 = vmatpush1.msra.mxu0 0.0
    %2898 = vmatprep.subr.mxu0 0.0
    %2899 = vmatpush1.msra.mxu0 0.0
    %2900 = vmatprep.subr.mxu0 0.0
    %2901 = vmatpush1.msra.mxu0 0.0
    %2902 = vmatprep.subr.mxu0 0.0
    %2903 = vmatpush1.msra.mxu0 0.0
    %2904 = vmatprep.subr.mxu0 0.0
    %2905 = vmatpush1.msra.mxu0 0.0
    %2906 = vmatprep.subr.mxu0 0.0
    %2907 = vmatpush1.msra.mxu0 0.0
    %2908 = vmatprep.subr.mxu0 0.0
    %2909 = vmatpush1.msra.mxu0 0.0
    %2910 = vmatprep.subr.mxu0 0.0
    %2911 = vmatpush1.msra.mxu0 0.0
    %2912 = vmatprep.subr.mxu0 0.0
    %2913 = vmatpush1.msra.mxu0 0.0
    %2914 = vmatprep.subr.mxu0 0.0
    %2915 = vmatpush1.msra.mxu0 0.0
    %2916 = vmatprep.subr.mxu0 0.0
    %2917 = vmatpush1.msra.mxu0 0.0
    %2918 = vmatprep.subr.mxu0 0.0
    %2919 = vmatpush1.msra.mxu0 0.0
    %2920 = vmatprep.subr.mxu0 0.0
    %2921 = vmatpush1.msra.mxu0 %v1945
    %2922 = vmatprep.subr.mxu0 0.0
    %2923 = vmatpush1.msra.mxu0 %v1944
    %2924 = vmatprep.subr.mxu0 0.0
    %2925 = vmatpush1.msra.mxu0 %v1943
    %2926 = vmatprep.subr.mxu0 0.0
    %2927 = vmatpush1.msra.mxu0 %v1942
    %2928 = vmatprep.subr.mxu0 0.0
    %2929 = vmatpush2.msra.mxu0 0.0
    %2930 = vmatprep.subr.mxu0 0.0
    %2931 = vmatpush2.msra.mxu0 0.0
    %2932 = vmatprep.subr.mxu0 0.0
    %2933 = vmatpush2.msra.mxu0 0.0
    %2934 = vmatprep.subr.mxu0 0.0
    %2935 = vmatpush2.msra.mxu0 0.0
    %2936 = vmatprep.subr.mxu0 0.0
    %2937 = vmatpush2.msra.mxu0 0.0
    %2938 = vmatprep.subr.mxu0 0.0
    %2939 = vmatpush2.msra.mxu0 0.0
    %2940 = vmatprep.subr.mxu0 0.0
    %2941 = vmatpush2.msra.mxu0 0.0
    %2942 = vmatprep.subr.mxu0 0.0
    %2943 = vmatpush2.msra.mxu0 0.0
    %2944 = vmatprep.subr.mxu0 0.0
    %2945 = vmatpush2.msra.mxu0 0.0
    %2946 = vmatprep.subr.mxu0 0.0
    %2947 = vmatpush2.msra.mxu0 0.0
    %2948 = vmatprep.subr.mxu0 0.0
    %2949 = vmatpush2.msra.mxu0 0.0
    %2950 = vmatprep.subr.mxu0 0.0
    %2951 = vmatpush2.msra.mxu0 0.0
    %2952 = vmatprep.subr.mxu0 0.0
    %2953 = vmatpush2.msra.mxu0 0.0
    %2954 = vmatprep.subr.mxu0 0.0
    %2955 = vmatpush2.msra.mxu0 0.0
    %2956 = vmatprep.subr.mxu0 0.0
    %2957 = vmatpush2.msra.mxu0 0.0
    %2958 = vmatprep.subr.mxu0 0.0
    %2959 = vmatpush2.msra.mxu0 0.0
    %2960 = vmatprep.mubr.f32.mxu0 0.0
    %2961 = vmatmul.mubr.f32.gmra.mxu0 %v2894
    %v2962 = vpop.f32.mrf.mxu0
    %v2963 = vadd.f32 %v2062, %v2962
    %v2964 = vpop.f32.mrf.mxu0
    %2965 = vdwg.mxu0
    %v2966 = vadd.f32 %v2893, %v2963
    %v2967 = vxor.u32 %v2966, 2147483648
    %v2968 = vmul.f32 %v2967, 1.442695
    %v2969 = vpow.pop %v2968
    %v2970 = vadd.f32 %v2969, 1.0
    %v2971 = vrcp.pop %v2970
    %v2972 = vmul.f32 1.0, %v2971
    %2974 = vrot.lane.b32.xlu0 %v2963, 64
    %v2975 = vpop.permute.xlu0 %2974
    %v2977 = vmul.f32 %v2972, %v2975
    %2979 = vrot.lane.b32.xlu0 %v2977, 64
    %v2980 = vpop.permute.xlu0 %2979
    %v2982 = vadd.f32 %v2893, %v2980
    %v2983 = vtanh.pop %v2982
    %v2984 = vsub.f32 1.0, %v2972
    %2986 = vrot.lane.b32.xlu0 %v2983, 96
    %v2987 = vpop.permute.xlu0 %2986
    %v2989 = vmul.f32 %v2984, %v2987
    %v2990 = vmul.f32 %v2972, %v2783
    %v2991 = vadd.f32 %v2989, %v2990
    %2993 = vrot.lane.b32.xlu0 %v2991, 96
    %v2994 = vpop.permute.xlu0 %2993
    %2996 = vst.msk [vmem:[#allocation7 + $0x6] sm:$0x3] %vm634, %v2994
    %v2997 = vld [vmem:[#allocation3 + $0xa] sm:$0x3]
    %v2998 = vsel %vm323, %v2890, 0
    %3000 = vmatprep.subr.mxu0 0.0
    %3001 = vmatpush1.msra.mxu0 0.0
    %3002 = vmatprep.subr.mxu0 0.0
    %3003 = vmatpush1.msra.mxu0 0.0
    %3004 = vmatprep.subr.mxu0 0.0
    %3005 = vmatpush1.msra.mxu0 0.0
    %3006 = vmatprep.subr.mxu0 0.0
    %3007 = vmatpush1.msra.mxu0 0.0
    %3008 = vmatprep.subr.mxu0 0.0
    %3009 = vmatpush1.msra.mxu0 0.0
    %3010 = vmatprep.subr.mxu0 0.0
    %3011 = vmatpush1.msra.mxu0 0.0
    %3012 = vmatprep.subr.mxu0 0.0
    %3013 = vmatpush1.msra.mxu0 0.0
    %3014 = vmatprep.subr.mxu0 0.0
    %3015 = vmatpush1.msra.mxu0 0.0
    %3016 = vmatprep.subr.mxu0 0.0
    %3017 = vmatpush1.msra.mxu0 0.0
    %3018 = vmatprep.subr.mxu0 0.0
    %3019 = vmatpush1.msra.mxu0 0.0
    %3020 = vmatprep.subr.mxu0 0.0
    %3021 = vmatpush1.msra.mxu0 0.0
    %3022 = vmatprep.subr.mxu0 0.0
    %3023 = vmatpush1.msra.mxu0 0.0
    %3024 = vmatprep.subr.mxu0 0.0
    %3025 = vmatpush1.msra.mxu0 %v1940
    %3026 = vmatprep.subr.mxu0 0.0
    %3027 = vmatpush1.msra.mxu0 %v1939
    %3028 = vmatprep.subr.mxu0 0.0
    %3029 = vmatpush1.msra.mxu0 %v1938
    %3030 = vmatprep.subr.mxu0 0.0
    %3031 = vmatpush1.msra.mxu0 %v1937
    %3032 = vmatprep.subr.mxu0 0.0
    %3033 = vmatpush2.msra.mxu0 0.0
    %3034 = vmatprep.subr.mxu0 0.0
    %3035 = vmatpush2.msra.mxu0 0.0
    %3036 = vmatprep.subr.mxu0 0.0
    %3037 = vmatpush2.msra.mxu0 0.0
    %3038 = vmatprep.subr.mxu0 0.0
    %3039 = vmatpush2.msra.mxu0 0.0
    %3040 = vmatprep.subr.mxu0 0.0
    %3041 = vmatpush2.msra.mxu0 0.0
    %3042 = vmatprep.subr.mxu0 0.0
    %3043 = vmatpush2.msra.mxu0 0.0
    %3044 = vmatprep.subr.mxu0 0.0
    %3045 = vmatpush2.msra.mxu0 0.0
    %3046 = vmatprep.subr.mxu0 0.0
    %3047 = vmatpush2.msra.mxu0 0.0
    %3048 = vmatprep.subr.mxu0 0.0
    %3049 = vmatpush2.msra.mxu0 0.0
    %3050 = vmatprep.subr.mxu0 0.0
    %3051 = vmatpush2.msra.mxu0 0.0
    %3052 = vmatprep.subr.mxu0 0.0
    %3053 = vmatpush2.msra.mxu0 0.0
    %3054 = vmatprep.subr.mxu0 0.0
    %3055 = vmatpush2.msra.mxu0 0.0
    %3056 = vmatprep.subr.mxu0 0.0
    %3057 = vmatpush2.msra.mxu0 0.0
    %3058 = vmatprep.subr.mxu0 0.0
    %3059 = vmatpush2.msra.mxu0 0.0
    %3060 = vmatprep.subr.mxu0 0.0
    %3061 = vmatpush2.msra.mxu0 0.0
    %3062 = vmatprep.subr.mxu0 0.0
    %3063 = vmatpush2.msra.mxu0 0.0
    %3064 = vmatprep.mubr.f32.mxu0 0.0
    %3065 = vmatmul.mubr.f32.gmra.mxu0 %v2998
    %v3066 = vpop.f32.mrf.mxu0
    %v3067 = vadd.f32 %v1952, %v3066
    %v3068 = vpop.f32.mrf.mxu0
    %3069 = vdwg.mxu0
    %v3070 = vadd.f32 %v2997, %v3067
    %v3071 = vxor.u32 %v3070, 2147483648
    %v3072 = vmul.f32 %v3071, 1.442695
    %v3073 = vpow.pop %v3072
    %v3074 = vadd.f32 %v3073, 1.0
    %v3075 = vrcp.pop %v3074
    %v3076 = vmul.f32 1.0, %v3075
    %3078 = vrot.lane.b32.xlu0 %v3067, 64
    %v3079 = vpop.permute.xlu0 %3078
    %v3081 = vmul.f32 %v3076, %v3079
    %3083 = vrot.lane.b32.xlu0 %v3081, 64
    %v3084 = vpop.permute.xlu0 %3083
    %v3086 = vadd.f32 %v2997, %v3084
    %v3087 = vtanh.pop %v3086
    %v3088 = vsub.f32 1.0, %v3076
    %3090 = vrot.lane.b32.xlu0 %v3087, 96
    %v3091 = vpop.permute.xlu0 %3090
    %v3093 = vmul.f32 %v3088, %v3091
    %v3094 = vmul.f32 %v3076, %v2887
    %v3095 = vadd.f32 %v3093, %v3094
    %3097 = vrot.lane.b32.xlu0 %v3095, 96
    %v3098 = vpop.permute.xlu0 %3097
    %3100 = vst.msk [vmem:[#allocation6 + $0xa] sm:$0x3] %vm634, %v3098
    %v3101 = vld [vmem:[#allocation4 + $0x4] sm:$0x3]
    %v3102 = vsel %vm323, %v2994, 0
    %3104 = vmatprep.subr.mxu0 0.0
    %3105 = vmatpush1.msra.mxu0 0.0
    %3106 = vmatprep.subr.mxu0 0.0
    %3107 = vmatpush1.msra.mxu0 0.0
    %3108 = vmatprep.subr.mxu0 0.0
    %3109 = vmatpush1.msra.mxu0 0.0
    %3110 = vmatprep.subr.mxu0 0.0
    %3111 = vmatpush1.msra.mxu0 0.0
    %3112 = vmatprep.subr.mxu0 0.0
    %3113 = vmatpush1.msra.mxu0 0.0
    %3114 = vmatprep.subr.mxu0 0.0
    %3115 = vmatpush1.msra.mxu0 0.0
    %3116 = vmatprep.subr.mxu0 0.0
    %3117 = vmatpush1.msra.mxu0 0.0
    %3118 = vmatprep.subr.mxu0 0.0
    %3119 = vmatpush1.msra.mxu0 0.0
    %3120 = vmatprep.subr.mxu0 0.0
    %3121 = vmatpush1.msra.mxu0 0.0
    %3122 = vmatprep.subr.mxu0 0.0
    %3123 = vmatpush1.msra.mxu0 0.0
    %3124 = vmatprep.subr.mxu0 0.0
    %3125 = vmatpush1.msra.mxu0 0.0
    %3126 = vmatprep.subr.mxu0 0.0
    %3127 = vmatpush1.msra.mxu0 0.0
    %3128 = vmatprep.subr.mxu0 0.0
    %3129 = vmatpush1.msra.mxu0 %v1945
    %3130 = vmatprep.subr.mxu0 0.0
    %3131 = vmatpush1.msra.mxu0 %v1944
    %3132 = vmatprep.subr.mxu0 0.0
    %3133 = vmatpush1.msra.mxu0 %v1943
    %3134 = vmatprep.subr.mxu0 0.0
    %3135 = vmatpush1.msra.mxu0 %v1942
    %3136 = vmatprep.subr.mxu0 0.0
    %3137 = vmatpush2.msra.mxu0 0.0
    %3138 = vmatprep.subr.mxu0 0.0
    %3139 = vmatpush2.msra.mxu0 0.0
    %3140 = vmatprep.subr.mxu0 0.0
    %3141 = vmatpush2.msra.mxu0 0.0
    %3142 = vmatprep.subr.mxu0 0.0
    %3143 = vmatpush2.msra.mxu0 0.0
    %3144 = vmatprep.subr.mxu0 0.0
    %3145 = vmatpush2.msra.mxu0 0.0
    %3146 = vmatprep.subr.mxu0 0.0
    %3147 = vmatpush2.msra.mxu0 0.0
    %3148 = vmatprep.subr.mxu0 0.0
    %3149 = vmatpush2.msra.mxu0 0.0
    %3150 = vmatprep.subr.mxu0 0.0
    %3151 = vmatpush2.msra.mxu0 0.0
    %3152 = vmatprep.subr.mxu0 0.0
    %3153 = vmatpush2.msra.mxu0 0.0
    %3154 = vmatprep.subr.mxu0 0.0
    %3155 = vmatpush2.msra.mxu0 0.0
    %3156 = vmatprep.subr.mxu0 0.0
    %3157 = vmatpush2.msra.mxu0 0.0
    %3158 = vmatprep.subr.mxu0 0.0
    %3159 = vmatpush2.msra.mxu0 0.0
    %3160 = vmatprep.subr.mxu0 0.0
    %3161 = vmatpush2.msra.mxu0 0.0
    %3162 = vmatprep.subr.mxu0 0.0
    %3163 = vmatpush2.msra.mxu0 0.0
    %3164 = vmatprep.subr.mxu0 0.0
    %3165 = vmatpush2.msra.mxu0 0.0
    %3166 = vmatprep.subr.mxu0 0.0
    %3167 = vmatpush2.msra.mxu0 0.0
    %3168 = vmatprep.mubr.f32.mxu0 0.0
    %3169 = vmatmul.mubr.f32.gmra.mxu0 %v3102
    %v3170 = vpop.f32.mrf.mxu0
    %v3171 = vadd.f32 %v2062, %v3170
    %v3172 = vpop.f32.mrf.mxu0
    %3173 = vdwg.mxu0
    %v3174 = vadd.f32 %v3101, %v3171
    %v3175 = vxor.u32 %v3174, 2147483648
    %v3176 = vmul.f32 %v3175, 1.442695
    %v3177 = vpow.pop %v3176
    %v3178 = vadd.f32 %v3177, 1.0
    %v3179 = vrcp.pop %v3178
    %v3180 = vmul.f32 1.0, %v3179
    %3182 = vrot.lane.b32.xlu0 %v3171, 64
    %v3183 = vpop.permute.xlu0 %3182
    %v3185 = vmul.f32 %v3180, %v3183
    %3187 = vrot.lane.b32.xlu0 %v3185, 64
    %v3188 = vpop.permute.xlu0 %3187
    %v3190 = vadd.f32 %v3101, %v3188
    %v3191 = vtanh.pop %v3190
    %v3192 = vsub.f32 1.0, %v3180
    %3194 = vrot.lane.b32.xlu0 %v3191, 96
    %v3195 = vpop.permute.xlu0 %3194
    %v3197 = vmul.f32 %v3192, %v3195
    %v3198 = vmul.f32 %v3180, %v2991
    %v3199 = vadd.f32 %v3197, %v3198
    %3201 = vrot.lane.b32.xlu0 %v3199, 96
    %v3202 = vpop.permute.xlu0 %3201
    %3204 = vst.msk [vmem:[#allocation7 + $0x4] sm:$0x3] %vm634, %v3202
    %v3205 = vld [vmem:[#allocation3 + $0xc] sm:$0x3]
    %v3206 = vsel %vm323, %v3098, 0
    %3208 = vmatprep.subr.mxu0 0.0
    %3209 = vmatpush1.msra.mxu0 0.0
    %3210 = vmatprep.subr.mxu0 0.0
    %3211 = vmatpush1.msra.mxu0 0.0
    %3212 = vmatprep.subr.mxu0 0.0
    %3213 = vmatpush1.msra.mxu0 0.0
    %3214 = vmatprep.subr.mxu0 0.0
    %3215 = vmatpush1.msra.mxu0 0.0
    %3216 = vmatprep.subr.mxu0 0.0
    %3217 = vmatpush1.msra.mxu0 0.0
    %3218 = vmatprep.subr.mxu0 0.0
    %3219 = vmatpush1.msra.mxu0 0.0
    %3220 = vmatprep.subr.mxu0 0.0
    %3221 = vmatpush1.msra.mxu0 0.0
    %3222 = vmatprep.subr.mxu0 0.0
    %3223 = vmatpush1.msra.mxu0 0.0
    %3224 = vmatprep.subr.mxu0 0.0
    %3225 = vmatpush1.msra.mxu0 0.0
    %3226 = vmatprep.subr.mxu0 0.0
    %3227 = vmatpush1.msra.mxu0 0.0
    %3228 = vmatprep.subr.mxu0 0.0
    %3229 = vmatpush1.msra.mxu0 0.0
    %3230 = vmatprep.subr.mxu0 0.0
    %3231 = vmatpush1.msra.mxu0 0.0
    %3232 = vmatprep.subr.mxu0 0.0
    %3233 = vmatpush1.msra.mxu0 %v1940
    %3234 = vmatprep.subr.mxu0 0.0
    %3235 = vmatpush1.msra.mxu0 %v1939
    %3236 = vmatprep.subr.mxu0 0.0
    %3237 = vmatpush1.msra.mxu0 %v1938
    %3238 = vmatprep.subr.mxu0 0.0
    %3239 = vmatpush1.msra.mxu0 %v1937
    %3240 = vmatprep.subr.mxu0 0.0
    %3241 = vmatpush2.msra.mxu0 0.0
    %3242 = vmatprep.subr.mxu0 0.0
    %3243 = vmatpush2.msra.mxu0 0.0
    %3244 = vmatprep.subr.mxu0 0.0
    %3245 = vmatpush2.msra.mxu0 0.0
    %3246 = vmatprep.subr.mxu0 0.0
    %3247 = vmatpush2.msra.mxu0 0.0
    %3248 = vmatprep.subr.mxu0 0.0
    %3249 = vmatpush2.msra.mxu0 0.0
    %3250 = vmatprep.subr.mxu0 0.0
    %3251 = vmatpush2.msra.mxu0 0.0
    %3252 = vmatprep.subr.mxu0 0.0
    %3253 = vmatpush2.msra.mxu0 0.0
    %3254 = vmatprep.subr.mxu0 0.0
    %3255 = vmatpush2.msra.mxu0 0.0
    %3256 = vmatprep.subr.mxu0 0.0
    %3257 = vmatpush2.msra.mxu0 0.0
    %3258 = vmatprep.subr.mxu0 0.0
    %3259 = vmatpush2.msra.mxu0 0.0
    %3260 = vmatprep.subr.mxu0 0.0
    %3261 = vmatpush2.msra.mxu0 0.0
    %3262 = vmatprep.subr.mxu0 0.0
    %3263 = vmatpush2.msra.mxu0 0.0
    %3264 = vmatprep.subr.mxu0 0.0
    %3265 = vmatpush2.msra.mxu0 0.0
    %3266 = vmatprep.subr.mxu0 0.0
    %3267 = vmatpush2.msra.mxu0 0.0
    %3268 = vmatprep.subr.mxu0 0.0
    %3269 = vmatpush2.msra.mxu0 0.0
    %3270 = vmatprep.subr.mxu0 0.0
    %3271 = vmatpush2.msra.mxu0 0.0
    %3272 = vmatprep.mubr.f32.mxu0 0.0
    %3273 = vmatmul.mubr.f32.gmra.mxu0 %v3206
    %v3274 = vpop.f32.mrf.mxu0
    %v3275 = vadd.f32 %v1952, %v3274
    %v3276 = vpop.f32.mrf.mxu0
    %3277 = vdwg.mxu0
    %v3278 = vadd.f32 %v3205, %v3275
    %v3279 = vxor.u32 %v3278, 2147483648
    %v3280 = vmul.f32 %v3279, 1.442695
    %v3281 = vpow.pop %v3280
    %v3282 = vadd.f32 %v3281, 1.0
    %v3283 = vrcp.pop %v3282
    %v3284 = vmul.f32 1.0, %v3283
    %3286 = vrot.lane.b32.xlu0 %v3275, 64
    %v3287 = vpop.permute.xlu0 %3286
    %v3289 = vmul.f32 %v3284, %v3287
    %3291 = vrot.lane.b32.xlu0 %v3289, 64
    %v3292 = vpop.permute.xlu0 %3291
    %v3294 = vadd.f32 %v3205, %v3292
    %v3295 = vtanh.pop %v3294
    %v3296 = vsub.f32 1.0, %v3284
    %3298 = vrot.lane.b32.xlu0 %v3295, 96
    %v3299 = vpop.permute.xlu0 %3298
    %v3301 = vmul.f32 %v3296, %v3299
    %v3302 = vmul.f32 %v3284, %v3095
    %v3303 = vadd.f32 %v3301, %v3302
    %3305 = vrot.lane.b32.xlu0 %v3303, 96
    %v3306 = vpop.permute.xlu0 %3305
    %3308 = vst.msk [vmem:[#allocation6 + $0xc] sm:$0x3] %vm634, %v3306
    %v3309 = vld [vmem:[#allocation4 + $0x2] sm:$0x3]
    %v3310 = vsel %vm323, %v3202, 0
    %3312 = vmatprep.subr.mxu0 0.0
    %3313 = vmatpush1.msra.mxu0 0.0
    %3314 = vmatprep.subr.mxu0 0.0
    %3315 = vmatpush1.msra.mxu0 0.0
    %3316 = vmatprep.subr.mxu0 0.0
    %3317 = vmatpush1.msra.mxu0 0.0
    %3318 = vmatprep.subr.mxu0 0.0
    %3319 = vmatpush1.msra.mxu0 0.0
    %3320 = vmatprep.subr.mxu0 0.0
    %3321 = vmatpush1.msra.mxu0 0.0
    %3322 = vmatprep.subr.mxu0 0.0
    %3323 = vmatpush1.msra.mxu0 0.0
    %3324 = vmatprep.subr.mxu0 0.0
    %3325 = vmatpush1.msra.mxu0 0.0
    %3326 = vmatprep.subr.mxu0 0.0
    %3327 = vmatpush1.msra.mxu0 0.0
    %3328 = vmatprep.subr.mxu0 0.0
    %3329 = vmatpush1.msra.mxu0 0.0
    %3330 = vmatprep.subr.mxu0 0.0
    %3331 = vmatpush1.msra.mxu0 0.0
    %3332 = vmatprep.subr.mxu0 0.0
    %3333 = vmatpush1.msra.mxu0 0.0
    %3334 = vmatprep.subr.mxu0 0.0
    %3335 = vmatpush1.msra.mxu0 0.0
    %3336 = vmatprep.subr.mxu0 0.0
    %3337 = vmatpush1.msra.mxu0 %v1945
    %3338 = vmatprep.subr.mxu0 0.0
    %3339 = vmatpush1.msra.mxu0 %v1944
    %3340 = vmatprep.subr.mxu0 0.0
    %3341 = vmatpush1.msra.mxu0 %v1943
    %3342 = vmatprep.subr.mxu0 0.0
    %3343 = vmatpush1.msra.mxu0 %v1942
    %3344 = vmatprep.subr.mxu0 0.0
    %3345 = vmatpush2.msra.mxu0 0.0
    %3346 = vmatprep.subr.mxu0 0.0
    %3347 = vmatpush2.msra.mxu0 0.0
    %3348 = vmatprep.subr.mxu0 0.0
    %3349 = vmatpush2.msra.mxu0 0.0
    %3350 = vmatprep.subr.mxu0 0.0
    %3351 = vmatpush2.msra.mxu0 0.0
    %3352 = vmatprep.subr.mxu0 0.0
    %3353 = vmatpush2.msra.mxu0 0.0
    %3354 = vmatprep.subr.mxu0 0.0
    %3355 = vmatpush2.msra.mxu0 0.0
    %3356 = vmatprep.subr.mxu0 0.0
    %3357 = vmatpush2.msra.mxu0 0.0
    %3358 = vmatprep.subr.mxu0 0.0
    %3359 = vmatpush2.msra.mxu0 0.0
    %3360 = vmatprep.subr.mxu0 0.0
    %3361 = vmatpush2.msra.mxu0 0.0
    %3362 = vmatprep.subr.mxu0 0.0
    %3363 = vmatpush2.msra.mxu0 0.0
    %3364 = vmatprep.subr.mxu0 0.0
    %3365 = vmatpush2.msra.mxu0 0.0
    %3366 = vmatprep.subr.mxu0 0.0
    %3367 = vmatpush2.msra.mxu0 0.0
    %3368 = vmatprep.subr.mxu0 0.0
    %3369 = vmatpush2.msra.mxu0 0.0
    %3370 = vmatprep.subr.mxu0 0.0
    %3371 = vmatpush2.msra.mxu0 0.0
    %3372 = vmatprep.subr.mxu0 0.0
    %3373 = vmatpush2.msra.mxu0 0.0
    %3374 = vmatprep.subr.mxu0 0.0
    %3375 = vmatpush2.msra.mxu0 0.0
    %3376 = vmatprep.mubr.f32.mxu0 0.0
    %3377 = vmatmul.mubr.f32.gmra.mxu0 %v3310
    %v3378 = vpop.f32.mrf.mxu0
    %v3379 = vadd.f32 %v2062, %v3378
    %v3380 = vpop.f32.mrf.mxu0
    %3381 = vdwg.mxu0
    %v3382 = vadd.f32 %v3309, %v3379
    %v3383 = vxor.u32 %v3382, 2147483648
    %v3384 = vmul.f32 %v3383, 1.442695
    %v3385 = vpow.pop %v3384
    %v3386 = vadd.f32 %v3385, 1.0
    %v3387 = vrcp.pop %v3386
    %v3388 = vmul.f32 1.0, %v3387
    %3390 = vrot.lane.b32.xlu0 %v3379, 64
    %v3391 = vpop.permute.xlu0 %3390
    %v3393 = vmul.f32 %v3388, %v3391
    %3395 = vrot.lane.b32.xlu0 %v3393, 64
    %v3396 = vpop.permute.xlu0 %3395
    %v3398 = vadd.f32 %v3309, %v3396
    %v3399 = vtanh.pop %v3398
    %v3400 = vsub.f32 1.0, %v3388
    %3402 = vrot.lane.b32.xlu0 %v3399, 96
    %v3403 = vpop.permute.xlu0 %3402
    %v3405 = vmul.f32 %v3400, %v3403
    %v3406 = vmul.f32 %v3388, %v3199
    %v3407 = vadd.f32 %v3405, %v3406
    %3409 = vrot.lane.b32.xlu0 %v3407, 96
    %v3410 = vpop.permute.xlu0 %3409
    %3412 = vst.msk [vmem:[#allocation7 + $0x2] sm:$0x3] %vm634, %v3410
    %v3413 = vld [vmem:[#allocation3 + $0xe] sm:$0x3]
    %v3414 = vsel %vm323, %v3306, 0
    %3416 = vmatprep.subr.mxu0 0.0
    %3417 = vmatpush1.msra.mxu0 0.0
    %3418 = vmatprep.subr.mxu0 0.0
    %3419 = vmatpush1.msra.mxu0 0.0
    %3420 = vmatprep.subr.mxu0 0.0
    %3421 = vmatpush1.msra.mxu0 0.0
    %3422 = vmatprep.subr.mxu0 0.0
    %3423 = vmatpush1.msra.mxu0 0.0
    %3424 = vmatprep.subr.mxu0 0.0
    %3425 = vmatpush1.msra.mxu0 0.0
    %3426 = vmatprep.subr.mxu0 0.0
    %3427 = vmatpush1.msra.mxu0 0.0
    %3428 = vmatprep.subr.mxu0 0.0
    %3429 = vmatpush1.msra.mxu0 0.0
    %3430 = vmatprep.subr.mxu0 0.0
    %3431 = vmatpush1.msra.mxu0 0.0
    %3432 = vmatprep.subr.mxu0 0.0
    %3433 = vmatpush1.msra.mxu0 0.0
    %3434 = vmatprep.subr.mxu0 0.0
    %3435 = vmatpush1.msra.mxu0 0.0
    %3436 = vmatprep.subr.mxu0 0.0
    %3437 = vmatpush1.msra.mxu0 0.0
    %3438 = vmatprep.subr.mxu0 0.0
    %3439 = vmatpush1.msra.mxu0 0.0
    %3440 = vmatprep.subr.mxu0 0.0
    %3441 = vmatpush1.msra.mxu0 %v1940
    %3442 = vmatprep.subr.mxu0 0.0
    %3443 = vmatpush1.msra.mxu0 %v1939
    %3444 = vmatprep.subr.mxu0 0.0
    %3445 = vmatpush1.msra.mxu0 %v1938
    %3446 = vmatprep.subr.mxu0 0.0
    %3447 = vmatpush1.msra.mxu0 %v1937
    %3448 = vmatprep.subr.mxu0 0.0
    %3449 = vmatpush2.msra.mxu0 0.0
    %3450 = vmatprep.subr.mxu0 0.0
    %3451 = vmatpush2.msra.mxu0 0.0
    %3452 = vmatprep.subr.mxu0 0.0
    %3453 = vmatpush2.msra.mxu0 0.0
    %3454 = vmatprep.subr.mxu0 0.0
    %3455 = vmatpush2.msra.mxu0 0.0
    %3456 = vmatprep.subr.mxu0 0.0
    %3457 = vmatpush2.msra.mxu0 0.0
    %3458 = vmatprep.subr.mxu0 0.0
    %3459 = vmatpush2.msra.mxu0 0.0
    %3460 = vmatprep.subr.mxu0 0.0
    %3461 = vmatpush2.msra.mxu0 0.0
    %3462 = vmatprep.subr.mxu0 0.0
    %3463 = vmatpush2.msra.mxu0 0.0
    %3464 = vmatprep.subr.mxu0 0.0
    %3465 = vmatpush2.msra.mxu0 0.0
    %3466 = vmatprep.subr.mxu0 0.0
    %3467 = vmatpush2.msra.mxu0 0.0
    %3468 = vmatprep.subr.mxu0 0.0
    %3469 = vmatpush2.msra.mxu0 0.0
    %3470 = vmatprep.subr.mxu0 0.0
    %3471 = vmatpush2.msra.mxu0 0.0
    %3472 = vmatprep.subr.mxu0 0.0
    %3473 = vmatpush2.msra.mxu0 0.0
    %3474 = vmatprep.subr.mxu0 0.0
    %3475 = vmatpush2.msra.mxu0 0.0
    %3476 = vmatprep.subr.mxu0 0.0
    %3477 = vmatpush2.msra.mxu0 0.0
    %3478 = vmatprep.subr.mxu0 0.0
    %3479 = vmatpush2.msra.mxu0 0.0
    %3480 = vmatprep.mubr.f32.mxu0 0.0
    %3481 = vmatmul.mubr.f32.gmra.mxu0 %v3414
    %v3482 = vpop.f32.mrf.mxu0
    %v3483 = vadd.f32 %v1952, %v3482
    %v3484 = vpop.f32.mrf.mxu0
    %3485 = vdwg.mxu0
    %v3486 = vadd.f32 %v3413, %v3483
    %v3487 = vxor.u32 %v3486, 2147483648
    %v3488 = vmul.f32 %v3487, 1.442695
    %v3489 = vpow.pop %v3488
    %v3490 = vadd.f32 %v3489, 1.0
    %v3491 = vrcp.pop %v3490
    %v3492 = vmul.f32 1.0, %v3491
    %3494 = vrot.lane.b32.xlu0 %v3483, 64
    %v3495 = vpop.permute.xlu0 %3494
    %v3497 = vmul.f32 %v3492, %v3495
    %3499 = vrot.lane.b32.xlu0 %v3497, 64
    %v3500 = vpop.permute.xlu0 %3499
    %v3502 = vadd.f32 %v3413, %v3500
    %v3503 = vtanh.pop %v3502
    %v3504 = vsub.f32 1.0, %v3492
    %3506 = vrot.lane.b32.xlu0 %v3503, 96
    %v3507 = vpop.permute.xlu0 %3506
    %v3509 = vmul.f32 %v3504, %v3507
    %v3510 = vmul.f32 %v3492, %v3303
    %v3511 = vadd.f32 %v3509, %v3510
    %3513 = vrot.lane.b32.xlu0 %v3511, 96
    %v3514 = vpop.permute.xlu0 %3513
    %3516 = vst.msk [vmem:[#allocation6 + $0xe] sm:$0x3] %vm634, %v3514
    %v3517 = vld [vmem:[#allocation4] sm:$0x3]
    %v3518 = vsel %vm323, %v3410, 0
    %3520 = vmatprep.subr.mxu0 0.0
    %3521 = vmatpush1.msra.mxu0 0.0
    %3522 = vmatprep.subr.mxu0 0.0
    %3523 = vmatpush1.msra.mxu0 0.0
    %3524 = vmatprep.subr.mxu0 0.0
    %3525 = vmatpush1.msra.mxu0 0.0
    %3526 = vmatprep.subr.mxu0 0.0
    %3527 = vmatpush1.msra.mxu0 0.0
    %3528 = vmatprep.subr.mxu0 0.0
    %3529 = vmatpush1.msra.mxu0 0.0
    %3530 = vmatprep.subr.mxu0 0.0
    %3531 = vmatpush1.msra.mxu0 0.0
    %3532 = vmatprep.subr.mxu0 0.0
    %3533 = vmatpush1.msra.mxu0 0.0
    %3534 = vmatprep.subr.mxu0 0.0
    %3535 = vmatpush1.msra.mxu0 0.0
    %3536 = vmatprep.subr.mxu0 0.0
    %3537 = vmatpush1.msra.mxu0 0.0
    %3538 = vmatprep.subr.mxu0 0.0
    %3539 = vmatpush1.msra.mxu0 0.0
    %3540 = vmatprep.subr.mxu0 0.0
    %3541 = vmatpush1.msra.mxu0 0.0
    %3542 = vmatprep.subr.mxu0 0.0
    %3543 = vmatpush1.msra.mxu0 0.0
    %3544 = vmatprep.subr.mxu0 0.0
    %3545 = vmatpush1.msra.mxu0 %v1945
    %3546 = vmatprep.subr.mxu0 0.0
    %3547 = vmatpush1.msra.mxu0 %v1944
    %3548 = vmatprep.subr.mxu0 0.0
    %3549 = vmatpush1.msra.mxu0 %v1943
    %3550 = vmatprep.subr.mxu0 0.0
    %3551 = vmatpush1.msra.mxu0 %v1942
    %3552 = vmatprep.subr.mxu0 0.0
    %3553 = vmatpush2.msra.mxu0 0.0
    %3554 = vmatprep.subr.mxu0 0.0
    %3555 = vmatpush2.msra.mxu0 0.0
    %3556 = vmatprep.subr.mxu0 0.0
    %3557 = vmatpush2.msra.mxu0 0.0
    %3558 = vmatprep.subr.mxu0 0.0
    %3559 = vmatpush2.msra.mxu0 0.0
    %3560 = vmatprep.subr.mxu0 0.0
    %3561 = vmatpush2.msra.mxu0 0.0
    %3562 = vmatprep.subr.mxu0 0.0
    %3563 = vmatpush2.msra.mxu0 0.0
    %3564 = vmatprep.subr.mxu0 0.0
    %3565 = vmatpush2.msra.mxu0 0.0
    %3566 = vmatprep.subr.mxu0 0.0
    %3567 = vmatpush2.msra.mxu0 0.0
    %3568 = vmatprep.subr.mxu0 0.0
    %3569 = vmatpush2.msra.mxu0 0.0
    %3570 = vmatprep.subr.mxu0 0.0
    %3571 = vmatpush2.msra.mxu0 0.0
    %3572 = vmatprep.subr.mxu0 0.0
    %3573 = vmatpush2.msra.mxu0 0.0
    %3574 = vmatprep.subr.mxu0 0.0
    %3575 = vmatpush2.msra.mxu0 0.0
    %3576 = vmatprep.subr.mxu0 0.0
    %3577 = vmatpush2.msra.mxu0 0.0
    %3578 = vmatprep.subr.mxu0 0.0
    %3579 = vmatpush2.msra.mxu0 0.0
    %3580 = vmatprep.subr.mxu0 0.0
    %3581 = vmatpush2.msra.mxu0 0.0
    %3582 = vmatprep.subr.mxu0 0.0
    %3583 = vmatpush2.msra.mxu0 0.0
    %3584 = vmatprep.mubr.f32.mxu0 0.0
    %3585 = vmatmul.mubr.f32.gmra.mxu0 %v3518
    %v3586 = vpop.f32.mrf.mxu0
    %v3587 = vadd.f32 %v2062, %v3586
    %v3588 = vpop.f32.mrf.mxu0
    %3589 = vdwg.mxu0
    %v3590 = vadd.f32 %v3517, %v3587
    %v3591 = vxor.u32 %v3590, 2147483648
    %v3592 = vmul.f32 %v3591, 1.442695
    %v3593 = vpow.pop %v3592
    %v3594 = vadd.f32 %v3593, 1.0
    %v3595 = vrcp.pop %v3594
    %v3596 = vmul.f32 1.0, %v3595
    %3598 = vrot.lane.b32.xlu0 %v3587, 64
    %v3599 = vpop.permute.xlu0 %3598
    %v3601 = vmul.f32 %v3596, %v3599
    %3603 = vrot.lane.b32.xlu0 %v3601, 64
    %v3604 = vpop.permute.xlu0 %3603
    %v3606 = vadd.f32 %v3517, %v3604
    %v3607 = vtanh.pop %v3606
    %v3608 = vsub.f32 1.0, %v3596
    %3610 = vrot.lane.b32.xlu0 %v3607, 96
    %v3611 = vpop.permute.xlu0 %3610
    %v3613 = vmul.f32 %v3608, %v3611
    %v3614 = vmul.f32 %v3596, %v3407
    %v3615 = vadd.f32 %v3613, %v3614
    %3617 = vrot.lane.b32.xlu0 %v3615, 96
    %v3618 = vpop.permute.xlu0 %3617
    %3620 = vst.msk [vmem:[#allocation7] sm:$0x3] %vm634, %v3618
    %v3621 = vld [vmem:[#allocation6] sm:$0xff]
    %v3622 = vld [vmem:[#allocation6 + $0x8] sm:$0xff]
    %v3623 = vld [vmem:[#allocation7] sm:$0xff]
    %v3624 = vld [vmem:[#allocation7 + $0x8] sm:$0xff]
    %v3625 = vld [vmem:[%s47] sm:$0xff]
    %v3626 = vld [vmem:[%s47 + $0x8] sm:$0xff]
    %v3627 = vld [vmem:[%s47 + $0x10] sm:$0xff]
    %v3628 = vld [vmem:[%s47 + $0x18] sm:$0xff]
    %v3629 = vld [vmem:[%s49] sm:$0xff]
    %v3630 = vld [vmem:[%s49 + $0x8] sm:$0xff]
    %v3631 = vld [vmem:[%s49 + $0x10] sm:$0xff]
    %v3632 = vld [vmem:[%s49 + $0x18] sm:$0xff]
    %v3634 = vsel %vm323, %v3623, 0
    %v3637 = vsel %vm323, %v3624, 0
    %3639 = vmatprep.subr.mxu0 0.0
    %3640 = vmatpush1.msra.mxu0 0.0
    %3641 = vmatprep.subr.mxu0 0.0
    %3642 = vmatpush1.msra.mxu0 0.0
    %3643 = vmatprep.subr.mxu0 0.0
    %3644 = vmatpush1.msra.mxu0 0.0
    %3645 = vmatprep.subr.mxu0 0.0
    %3646 = vmatpush1.msra.mxu0 0.0
    %3647 = vmatprep.subr.mxu0 0.0
    %3648 = vmatpush1.msra.mxu0 0.0
    %3649 = vmatprep.subr.mxu0 0.0
    %3650 = vmatpush1.msra.mxu0 0.0
    %3651 = vmatprep.subr.mxu0 0.0
    %3652 = vmatpush1.msra.mxu0 0.0
    %3653 = vmatprep.subr.mxu0 0.0
    %3654 = vmatpush1.msra.mxu0 0.0
    %3655 = vmatprep.subr.mxu0 0.0
    %3656 = vmatpush1.msra.mxu0 0.0
    %3657 = vmatprep.subr.mxu0 0.0
    %3658 = vmatpush1.msra.mxu0 0.0
    %3659 = vmatprep.subr.mxu0 0.0
    %3660 = vmatpush1.msra.mxu0 0.0
    %3661 = vmatprep.subr.mxu0 0.0
    %3662 = vmatpush1.msra.mxu0 0.0
    %3663 = vmatprep.subr.mxu0 0.0
    %3664 = vmatpush1.msra.mxu0 %v3632
    %3665 = vmatprep.subr.mxu0 0.0
    %3666 = vmatpush1.msra.mxu0 %v3631
    %3667 = vmatprep.subr.mxu0 0.0
    %3668 = vmatpush1.msra.mxu0 %v3630
    %3669 = vmatprep.subr.mxu0 0.0
    %3670 = vmatpush1.msra.mxu0 %v3629
    %3671 = vmatprep.subr.mxu0 0.0
    %3672 = vmatpush2.msra.mxu0 0.0
    %3673 = vmatprep.subr.mxu0 0.0
    %3674 = vmatpush2.msra.mxu0 0.0
    %3675 = vmatprep.subr.mxu0 0.0
    %3676 = vmatpush2.msra.mxu0 0.0
    %3677 = vmatprep.subr.mxu0 0.0
    %3678 = vmatpush2.msra.mxu0 0.0
    %3679 = vmatprep.subr.mxu0 0.0
    %3680 = vmatpush2.msra.mxu0 0.0
    %3681 = vmatprep.subr.mxu0 0.0
    %3682 = vmatpush2.msra.mxu0 0.0
    %3683 = vmatprep.subr.mxu0 0.0
    %3684 = vmatpush2.msra.mxu0 0.0
    %3685 = vmatprep.subr.mxu0 0.0
    %3686 = vmatpush2.msra.mxu0 0.0
    %3687 = vmatprep.subr.mxu0 0.0
    %3688 = vmatpush2.msra.mxu0 0.0
    %3689 = vmatprep.subr.mxu0 0.0
    %3690 = vmatpush2.msra.mxu0 0.0
    %3691 = vmatprep.subr.mxu0 0.0
    %3692 = vmatpush2.msra.mxu0 0.0
    %3693 = vmatprep.subr.mxu0 0.0
    %3694 = vmatpush2.msra.mxu0 0.0
    %3695 = vmatprep.subr.mxu0 0.0
    %3696 = vmatpush2.msra.mxu0 0.0
    %3697 = vmatprep.subr.mxu0 0.0
    %3698 = vmatpush2.msra.mxu0 0.0
    %3699 = vmatprep.subr.mxu0 0.0
    %3700 = vmatpush2.msra.mxu0 0.0
    %3701 = vmatprep.subr.mxu0 0.0
    %3702 = vmatpush2.msra.mxu0 0.0
    %3703 = vmatprep.mubr.f32.mxu0 0.0
    %3704 = vmatmul.mubr.f32.gmra.mxu0 %v3634
    %v3705 = vpop.f32.mrf.mxu0
    %v3706 = vadd.f32 0.0, %v3705
    %v3707 = vpop.f32.mrf.mxu0
    %3708 = vmatprep.mubr.f32.mxu0 0.0
    %3709 = vmatmul.mubr.f32.gmra.mxu0 %v3637
    %v3710 = vpop.f32.mrf.mxu0
    %v3711 = vadd.f32 0.0, %v3710
    %v3712 = vpop.f32.mrf.mxu0
    %3713 = vdwg.mxu0
    %v3715 = vsel %vm323, %v3621, 0
    %v3718 = vsel %vm323, %v3622, 0
    %3720 = vmatprep.subr.mxu0 0.0
    %3721 = vmatpush1.msra.mxu0 0.0
    %3722 = vmatprep.subr.mxu0 0.0
    %3723 = vmatpush1.msra.mxu0 0.0
    %3724 = vmatprep.subr.mxu0 0.0
    %3725 = vmatpush1.msra.mxu0 0.0
    %3726 = vmatprep.subr.mxu0 0.0
    %3727 = vmatpush1.msra.mxu0 0.0
    %3728 = vmatprep.subr.mxu0 0.0
    %3729 = vmatpush1.msra.mxu0 0.0
    %3730 = vmatprep.subr.mxu0 0.0
    %3731 = vmatpush1.msra.mxu0 0.0
    %3732 = vmatprep.subr.mxu0 0.0
    %3733 = vmatpush1.msra.mxu0 0.0
    %3734 = vmatprep.subr.mxu0 0.0
    %3735 = vmatpush1.msra.mxu0 0.0
    %3736 = vmatprep.subr.mxu0 0.0
    %3737 = vmatpush1.msra.mxu0 0.0
    %3738 = vmatprep.subr.mxu0 0.0
    %3739 = vmatpush1.msra.mxu0 0.0
    %3740 = vmatprep.subr.mxu0 0.0
    %3741 = vmatpush1.msra.mxu0 0.0
    %3742 = vmatprep.subr.mxu0 0.0
    %3743 = vmatpush1.msra.mxu0 0.0
    %3744 = vmatprep.subr.mxu0 0.0
    %3745 = vmatpush1.msra.mxu0 %v3628
    %3746 = vmatprep.subr.mxu0 0.0
    %3747 = vmatpush1.msra.mxu0 %v3627
    %3748 = vmatprep.subr.mxu0 0.0
    %3749 = vmatpush1.msra.mxu0 %v3626
    %3750 = vmatprep.subr.mxu0 0.0
    %3751 = vmatpush1.msra.mxu0 %v3625
    %3752 = vmatprep.subr.mxu0 0.0
    %3753 = vmatpush2.msra.mxu0 0.0
    %3754 = vmatprep.subr.mxu0 0.0
    %3755 = vmatpush2.msra.mxu0 0.0
    %3756 = vmatprep.subr.mxu0 0.0
    %3757 = vmatpush2.msra.mxu0 0.0
    %3758 = vmatprep.subr.mxu0 0.0
    %3759 = vmatpush2.msra.mxu0 0.0
    %3760 = vmatprep.subr.mxu0 0.0
    %3761 = vmatpush2.msra.mxu0 0.0
    %3762 = vmatprep.subr.mxu0 0.0
    %3763 = vmatpush2.msra.mxu0 0.0
    %3764 = vmatprep.subr.mxu0 0.0
    %3765 = vmatpush2.msra.mxu0 0.0
    %3766 = vmatprep.subr.mxu0 0.0
    %3767 = vmatpush2.msra.mxu0 0.0
    %3768 = vmatprep.subr.mxu0 0.0
    %3769 = vmatpush2.msra.mxu0 0.0
    %3770 = vmatprep.subr.mxu0 0.0
    %3771 = vmatpush2.msra.mxu0 0.0
    %3772 = vmatprep.subr.mxu0 0.0
    %3773 = vmatpush2.msra.mxu0 0.0
    %3774 = vmatprep.subr.mxu0 0.0
    %3775 = vmatpush2.msra.mxu0 0.0
    %3776 = vmatprep.subr.mxu0 0.0
    %3777 = vmatpush2.msra.mxu0 0.0
    %3778 = vmatprep.subr.mxu0 0.0
    %3779 = vmatpush2.msra.mxu0 0.0
    %3780 = vmatprep.subr.mxu0 0.0
    %3781 = vmatpush2.msra.mxu0 0.0
    %3782 = vmatprep.subr.mxu0 0.0
    %3783 = vmatpush2.msra.mxu0 0.0
    %3784 = vmatprep.mubr.f32.mxu0 0.0
    %3785 = vmatmul.mubr.f32.gmra.mxu0 %v3715
    %v3786 = vpop.f32.mrf.mxu0
    %v3787 = vadd.f32 %v3706, %v3786
    %v3788 = vpop.f32.mrf.mxu0
    %3789 = vmatprep.mubr.f32.mxu0 0.0
    %3790 = vmatmul.mubr.f32.gmra.mxu0 %v3718
    %v3791 = vpop.f32.mrf.mxu0
    %v3792 = vadd.f32 %v3711, %v3791
    %v3793 = vpop.f32.mrf.mxu0
    %3794 = vdwg.mxu0
    %v3795 = vld [vmem:[#allocation11] sm:$0x1]
    %v3797 = vlaneseq
    %v3798 = vshrl.u32 %v3797, 7
    %v3799 = vsub.s32 0, %v3798
    %v3800 = vrot.slane %v3795, %v3799
    %v3802 = vadd.f32 %v3787, %v3800
    %v3803 = vadd.f32 %v3792, %v3800
    %v3804 = vtanh.pop %v3802
    %v3805 = vtanh.pop %v3803
    %v3806 = vld [vmem:[#allocation14] sm:$0x1]
    %v3808 = vlaneseq
    %v3809 = vshrl.u32 %v3808, 7
    %v3810 = vsub.s32 0, %v3809
    %v3811 = vrot.slane %v3806, %v3810
    %v3813 = vmul.f32 %v3804, %v3811
    %v3814 = vmul.f32 %v3805, %v3811
    %v3815 = vsel %vm323, %v3813, 0.0
    %3816 = vadd.xlane.f32.xlu0 %v3815
    %v3817 = vpop.xlane.xlu0 %3816
    %v3818 = vsel %vm323, %v3814, 0.0
    %3819 = vadd.xlane.f32.xlu0 %v3818
    %v3820 = vpop.xlane.xlu0 %3819
    %v3821 = vld [vmem:[#allocation10] sm:$0x1]
    %v3823 = vlaneseq
    %v3824 = vshrl.u32 %v3823, 7
    %v3825 = vsub.s32 0, %v3824
    %v3826 = vrot.slane %v3821, %v3825
    %v3828 = vadd.f32 %v3817, %v3826
    %v3829 = vadd.f32 %v3820, %v3826
    %vm3830 = vcmask 7168
    %3831 = vst.msk [vmem:[#allocation8] sm:$0xff] %vm3830, %v3828
    %3832 = vst.msk [vmem:[#allocation8 + $0x8] sm:$0xff] %vm3830, %v3829
    %v3833 = vld [vmem:[#allocation8] sm:$0x3]
    %vm3834 = vcmask 1024
    %3835 = vst.msk [vmem:[#allocation9] sm:$0x3] %vm3834, %v3833
    %v3836 = vld [vmem:[#allocation8 + $0x2] sm:$0x3]
    %3838 = vrot.lane.b32.xlu0 %v3836, 1
    %v3839 = vpop.permute.xlu0 %3838
    %vm3841 = vcmask 9224
    %3842 = vst.msk [vmem:[#allocation9] sm:$0x3] %vm3841, %v3839
    %v3843 = vld [vmem:[#allocation8 + $0x4] sm:$0x3]
    %3845 = vrot.lane.b32.xlu0 %v3843, 2
    %v3846 = vpop.permute.xlu0 %3845
    %vm3848 = vcmask 17424
    %3849 = vst.msk [vmem:[#allocation9] sm:$0x3] %vm3848, %v3846
    %v3850 = vld [vmem:[#allocation8 + $0x6] sm:$0x3]
    %3852 = vrot.lane.b32.xlu0 %v3850, 3
    %v3853 = vpop.permute.xlu0 %3852
    %vm3855 = vcmask 25624
    %3856 = vst.msk [vmem:[#allocation9] sm:$0x3] %vm3855, %v3853
    %v3857 = vld [vmem:[#allocation8 + $0x8] sm:$0x3]
    %3859 = vrot.lane.b32.xlu0 %v3857, 4
    %v3860 = vpop.permute.xlu0 %3859
    %vm3862 = vcmask 33824
    %3863 = vst.msk [vmem:[#allocation9] sm:$0x3] %vm3862, %v3860
    %v3864 = vld [vmem:[#allocation8 + $0xa] sm:$0x3]
    %3866 = vrot.lane.b32.xlu0 %v3864, 5
    %v3867 = vpop.permute.xlu0 %3866
    %vm3869 = vcmask 42024
    %3870 = vst.msk [vmem:[#allocation9] sm:$0x3] %vm3869, %v3867
    %v3871 = vld [vmem:[#allocation8 + $0xc] sm:$0x3]
    %3873 = vrot.lane.b32.xlu0 %v3871, 6
    %v3874 = vpop.permute.xlu0 %3873
    %vm3876 = vcmask 50224
    %3877 = vst.msk [vmem:[#allocation9] sm:$0x3] %vm3876, %v3874
    %v3878 = vld [vmem:[#allocation8 + $0xe] sm:$0x3]
    %3880 = vrot.lane.b32.xlu0 %v3878, 7
    %v3881 = vpop.permute.xlu0 %3880
    %vm3883 = vcmask 58424
    %3884 = vst.msk [vmem:[#allocation9] sm:$0x3] %vm3883, %v3881
    %v3885 = vld [vmem:[#allocation9] sm:$0x3]
    %vm3886 = vcmask 58368
    %v3887 = vsel %vm3886, %v3885, -inf
    %3888 = vmax.xlane.f32.xlu0 %v3887
    %v3889 = vpop.xlane.xlu0 %3888
    %v3890 = vsub.f32 %v3885, %v3889
    %v3891 = vmul.f32 %v3890, 1.442695
    %v3892 = vpow.pop %v3891
    %v3893 = vsel %vm3886, %v3892, 0.0
    %3894 = vadd.xlane.f32.xlu0 %v3893
    %v3895 = vpop.xlane.xlu0 %3894
    %v3896 = vrcp.pop %v3895
    %v3897 = vmul.f32 %v3892, %v3896
    %v3898 = vld [vmem:[#allocation6] sm:$0x3]
    %3900 = vset.pattern.permute.xlu0 0
    %3901 = vperm.xlu0 %3900, %v3897
    %v3902 = vpop.permute.xlu0 %3901
    %v3904 = vmul.f32 %v3898, %v3902
    %v3905 = vadd.f32 %v3904, 0.0
    %v3906 = vld [vmem:[#allocation7] sm:$0x3]
    %v3907 = vmul.f32 %v3906, %v3902
    %v3908 = vadd.f32 %v3907, 0.0
    %v3909 = vld [vmem:[#allocation6 + $0x2] sm:$0x3]
    %3910 = vset.pattern.permute.xlu0 1
    %3911 = vperm.xlu0 %3910, %v3897
    %v3912 = vpop.permute.xlu0 %3911
    %v3914 = vmul.f32 %v3909, %v3912
    %v3915 = vadd.f32 %v3905, %v3914
    %v3916 = vld [vmem:[#allocation7 + $0x2] sm:$0x3]
    %v3917 = vmul.f32 %v3916, %v3912
    %v3918 = vadd.f32 %v3908, %v3917
    %v3919 = vld [vmem:[#allocation6 + $0x4] sm:$0x3]
    %3920 = vset.pattern.permute.xlu0 2
    %3921 = vperm.xlu0 %3920, %v3897
    %v3922 = vpop.permute.xlu0 %3921
    %v3924 = vmul.f32 %v3919, %v3922
    %v3925 = vadd.f32 %v3915, %v3924
    %v3926 = vld [vmem:[#allocation7 + $0x4] sm:$0x3]
    %v3927 = vmul.f32 %v3926, %v3922
    %v3928 = vadd.f32 %v3918, %v3927
    %v3929 = vld [vmem:[#allocation6 + $0x6] sm:$0x3]
    %3930 = vset.pattern.permute.xlu0 3
    %3931 = vperm.xlu0 %3930, %v3897
    %v3932 = vpop.permute.xlu0 %3931
    %v3934 = vmul.f32 %v3929, %v3932
    %v3935 = vadd.f32 %v3925, %v3934
    %v3936 = vld [vmem:[#allocation7 + $0x6] sm:$0x3]
    %v3937 = vmul.f32 %v3936, %v3932
    %v3938 = vadd.f32 %v3928, %v3937
    %v3939 = vld [vmem:[#allocation6 + $0x8] sm:$0x3]
    %3940 = vset.pattern.permute.xlu0 4
    %3941 = vperm.xlu0 %3940, %v3897
    %v3942 = vpop.permute.xlu0 %3941
    %v3944 = vmul.f32 %v3939, %v3942
    %v3945 = vadd.f32 %v3935, %v3944
    %v3946 = vld [vmem:[#allocation7 + $0x8] sm:$0x3]
    %v3947 = vmul.f32 %v3946, %v3942
    %v3948 = vadd.f32 %v3938, %v3947
    %v3949 = vld [vmem:[#allocation6 + $0xa] sm:$0x3]
    %3950 = vset.pattern.permute.xlu0 5
    %3951 = vperm.xlu0 %3950, %v3897
    %v3952 = vpop.permute.xlu0 %3951
    %v3954 = vmul.f32 %v3949, %v3952
    %v3955 = vadd.f32 %v3945, %v3954
    %v3956 = vld [vmem:[#allocation7 + $0xa] sm:$0x3]
    %v3957 = vmul.f32 %v3956, %v3952
    %v3958 = vadd.f32 %v3948, %v3957
    %v3959 = vld [vmem:[#allocation6 + $0xc] sm:$0x3]
    %3960 = vset.pattern.permute.xlu0 6
    %3961 = vperm.xlu0 %3960, %v3897
    %v3962 = vpop.permute.xlu0 %3961
    %v3964 = vmul.f32 %v3959, %v3962
    %v3965 = vadd.f32 %v3955, %v3964
    %v3966 = vld [vmem:[#allocation7 + $0xc] sm:$0x3]
    %v3967 = vmul.f32 %v3966, %v3962
    %v3968 = vadd.f32 %v3958, %v3967
    %v3969 = vld [vmem:[#allocation6 + $0xe] sm:$0x3]
    %3970 = vset.pattern.permute.xlu0 7
    %3971 = vperm.xlu0 %3970, %v3897
    %v3972 = vpop.permute.xlu0 %3971
    %v3974 = vmul.f32 %v3969, %v3972
    %v3975 = vadd.f32 %v3965, %v3974
    %v3976 = vld [vmem:[#allocation7 + $0xe] sm:$0x3]
    %v3977 = vmul.f32 %v3976, %v3972
    %v3978 = vadd.f32 %v3968, %v3977
    %v3979 = vld [vmem:[%s57] sm:$0xff]
    %v3980 = vld [vmem:[%s57 + $0x8] sm:$0xff]
    %v3981 = vld [vmem:[%s57 + $0x10] sm:$0xff]
    %v3982 = vld [vmem:[%s57 + $0x18] sm:$0xff]
    %v3983 = vld [vmem:[%s59] sm:$0xff]
    %v3984 = vld [vmem:[%s59 + $0x8] sm:$0xff]
    %v3985 = vld [vmem:[%s59 + $0x10] sm:$0xff]
    %v3986 = vld [vmem:[%s59 + $0x18] sm:$0xff]
    %v3988 = vsel %vm323, %v3978, 0
    %3990 = vmatprep.subr.mxu0 0.0
    %3991 = vmatpush1.msra.mxu0 0.0
    %3992 = vmatprep.subr.mxu0 0.0
    %3993 = vmatpush1.msra.mxu0 0.0
    %3994 = vmatprep.subr.mxu0 0.0
    %3995 = vmatpush1.msra.mxu0 0.0
    %3996 = vmatprep.subr.mxu0 0.0
    %3997 = vmatpush1.msra.mxu0 0.0
    %3998 = vmatprep.subr.mxu0 0.0
    %3999 = vmatpush1.msra.mxu0 0.0
    %4000 = vmatprep.subr.mxu0 0.0
    %4001 = vmatpush1.msra.mxu0 0.0
    %4002 = vmatprep.subr.mxu0 0.0
    %4003 = vmatpush1.msra.mxu0 0.0
    %4004 = vmatprep.subr.mxu0 0.0
    %4005 = vmatpush1.msra.mxu0 0.0
    %4006 = vmatprep.subr.mxu0 0.0
    %4007 = vmatpush1.msra.mxu0 0.0
    %4008 = vmatprep.subr.mxu0 0.0
    %4009 = vmatpush1.msra.mxu0 0.0
    %4010 = vmatprep.subr.mxu0 0.0
    %4011 = vmatpush1.msra.mxu0 0.0
    %4012 = vmatprep.subr.mxu0 0.0
    %4013 = vmatpush1.msra.mxu0 0.0
    %4014 = vmatprep.subr.mxu0 0.0
    %4015 = vmatpush1.msra.mxu0 %v3986
    %4016 = vmatprep.subr.mxu0 0.0
    %4017 = vmatpush1.msra.mxu0 %v3985
    %4018 = vmatprep.subr.mxu0 0.0
    %4019 = vmatpush1.msra.mxu0 %v3984
    %4020 = vmatprep.subr.mxu0 0.0
    %4021 = vmatpush1.msra.mxu0 %v3983
    %4022 = vmatprep.subr.mxu0 0.0
    %4023 = vmatpush2.msra.mxu0 0.0
    %4024 = vmatprep.subr.mxu0 0.0
    %4025 = vmatpush2.msra.mxu0 0.0
    %4026 = vmatprep.subr.mxu0 0.0
    %4027 = vmatpush2.msra.mxu0 0.0
    %4028 = vmatprep.subr.mxu0 0.0
    %4029 = vmatpush2.msra.mxu0 0.0
    %4030 = vmatprep.subr.mxu0 0.0
    %4031 = vmatpush2.msra.mxu0 0.0
    %4032 = vmatprep.subr.mxu0 0.0
    %4033 = vmatpush2.msra.mxu0 0.0
    %4034 = vmatprep.subr.mxu0 0.0
    %4035 = vmatpush2.msra.mxu0 0.0
    %4036 = vmatprep.subr.mxu0 0.0
    %4037 = vmatpush2.msra.mxu0 0.0
    %4038 = vmatprep.subr.mxu0 0.0
    %4039 = vmatpush2.msra.mxu0 0.0
    %4040 = vmatprep.subr.mxu0 0.0
    %4041 = vmatpush2.msra.mxu0 0.0
    %4042 = vmatprep.subr.mxu0 0.0
    %4043 = vmatpush2.msra.mxu0 0.0
    %4044 = vmatprep.subr.mxu0 0.0
    %4045 = vmatpush2.msra.mxu0 0.0
    %4046 = vmatprep.subr.mxu0 0.0
    %4047 = vmatpush2.msra.mxu0 0.0
    %4048 = vmatprep.subr.mxu0 0.0
    %4049 = vmatpush2.msra.mxu0 0.0
    %4050 = vmatprep.subr.mxu0 0.0
    %4051 = vmatpush2.msra.mxu0 0.0
    %4052 = vmatprep.subr.mxu0 0.0
    %4053 = vmatpush2.msra.mxu0 0.0
    %4054 = vmatprep.mubr.f32.mxu0 0.0
    %4055 = vmatmul.mubr.f32.gmra.mxu0 %v3988
    %v4056 = vpop.f32.mrf.mxu0
    %v4057 = vadd.f32 0.0, %v4056
    %v4058 = vpop.f32.mrf.mxu0
    %4059 = vdwg.mxu0
    %v4061 = vsel %vm323, %v3975, 0
    %4063 = vmatprep.subr.mxu0 0.0
    %4064 = vmatpush1.msra.mxu0 0.0
    %4065 = vmatprep.subr.mxu0 0.0
    %4066 = vmatpush1.msra.mxu0 0.0
    %4067 = vmatprep.subr.mxu0 0.0
    %4068 = vmatpush1.msra.mxu0 0.0
    %4069 = vmatprep.subr.mxu0 0.0
    %4070 = vmatpush1.msra.mxu0 0.0
    %4071 = vmatprep.subr.mxu0 0.0
    %4072 = vmatpush1.msra.mxu0 0.0
    %4073 = vmatprep.subr.mxu0 0.0
    %4074 = vmatpush1.msra.mxu0 0.0
    %4075 = vmatprep.subr.mxu0 0.0
    %4076 = vmatpush1.msra.mxu0 0.0
    %4077 = vmatprep.subr.mxu0 0.0
    %4078 = vmatpush1.msra.mxu0 0.0
    %4079 = vmatprep.subr.mxu0 0.0
    %4080 = vmatpush1.msra.mxu0 0.0
    %4081 = vmatprep.subr.mxu0 0.0
    %4082 = vmatpush1.msra.mxu0 0.0
    %4083 = vmatprep.subr.mxu0 0.0
    %4084 = vmatpush1.msra.mxu0 0.0
    %4085 = vmatprep.subr.mxu0 0.0
    %4086 = vmatpush1.msra.mxu0 0.0
    %4087 = vmatprep.subr.mxu0 0.0
    %4088 = vmatpush1.msra.mxu0 %v3982
    %4089 = vmatprep.subr.mxu0 0.0
    %4090 = vmatpush1.msra.mxu0 %v3981
    %4091 = vmatprep.subr.mxu0 0.0
    %4092 = vmatpush1.msra.mxu0 %v3980
    %4093 = vmatprep.subr.mxu0 0.0
    %4094 = vmatpush1.msra.mxu0 %v3979
    %4095 = vmatprep.subr.mxu0 0.0
    %4096 = vmatpush2.msra.mxu0 0.0
    %4097 = vmatprep.subr.mxu0 0.0
    %4098 = vmatpush2.msra.mxu0 0.0
    %4099 = vmatprep.subr.mxu0 0.0
    %4100 = vmatpush2.msra.mxu0 0.0
    %4101 = vmatprep.subr.mxu0 0.0
    %4102 = vmatpush2.msra.mxu0 0.0
    %4103 = vmatprep.subr.mxu0 0.0
    %4104 = vmatpush2.msra.mxu0 0.0
    %4105 = vmatprep.subr.mxu0 0.0
    %4106 = vmatpush2.msra.mxu0 0.0
    %4107 = vmatprep.subr.mxu0 0.0
    %4108 = vmatpush2.msra.mxu0 0.0
    %4109 = vmatprep.subr.mxu0 0.0
    %4110 = vmatpush2.msra.mxu0 0.0
    %4111 = vmatprep.subr.mxu0 0.0
    %4112 = vmatpush2.msra.mxu0 0.0
    %4113 = vmatprep.subr.mxu0 0.0
    %4114 = vmatpush2.msra.mxu0 0.0
    %4115 = vmatprep.subr.mxu0 0.0
    %4116 = vmatpush2.msra.mxu0 0.0
    %4117 = vmatprep.subr.mxu0 0.0
    %4118 = vmatpush2.msra.mxu0 0.0
    %4119 = vmatprep.subr.mxu0 0.0
    %4120 = vmatpush2.msra.mxu0 0.0
    %4121 = vmatprep.subr.mxu0 0.0
    %4122 = vmatpush2.msra.mxu0 0.0
    %4123 = vmatprep.subr.mxu0 0.0
    %4124 = vmatpush2.msra.mxu0 0.0
    %4125 = vmatprep.subr.mxu0 0.0
    %4126 = vmatpush2.msra.mxu0 0.0
    %4127 = vmatprep.mubr.f32.mxu0 0.0
    %4128 = vmatmul.mubr.f32.gmra.mxu0 %v4061
    %v4129 = vpop.f32.mrf.mxu0
    %v4130 = vadd.f32 %v4057, %v4129
    %v4131 = vpop.f32.mrf.mxu0
    %4132 = vdwg.mxu0
    %v4133 = vld [vmem:[#allocation16] sm:$0xff]
    %v4134 = vld [vmem:[#allocation16 + $0x8] sm:$0xff]
    %v4135 = vld [vmem:[#allocation16 + $0x10] sm:$0xff]
    %v4136 = vld [vmem:[#allocation16 + $0x18] sm:$0xff]
    %4137 = vmatprep.subr.mxu0 0.0
    %4138 = vmatpush1.msra.mxu0 0.0
    %4139 = vmatprep.subr.mxu0 0.0
    %4140 = vmatpush1.msra.mxu0 0.0
    %4141 = vmatprep.subr.mxu0 0.0
    %4142 = vmatpush1.msra.mxu0 0.0
    %4143 = vmatprep.subr.mxu0 0.0
    %4144 = vmatpush1.msra.mxu0 0.0
    %4145 = vmatprep.subr.mxu0 0.0
    %4146 = vmatpush1.msra.mxu0 0.0
    %4147 = vmatprep.subr.mxu0 0.0
    %4148 = vmatpush1.msra.mxu0 0.0
    %4149 = vmatprep.subr.mxu0 0.0
    %4150 = vmatpush1.msra.mxu0 0.0
    %4151 = vmatprep.subr.mxu0 0.0
    %4152 = vmatpush1.msra.mxu0 0.0
    %4153 = vmatprep.subr.mxu0 0.0
    %4154 = vmatpush1.msra.mxu0 0.0
    %4155 = vmatprep.subr.mxu0 0.0
    %4156 = vmatpush1.msra.mxu0 0.0
    %4157 = vmatprep.subr.mxu0 0.0
    %4158 = vmatpush1.msra.mxu0 0.0
    %4159 = vmatprep.subr.mxu0 0.0
    %4160 = vmatpush1.msra.mxu0 0.0
    %4161 = vmatprep.subr.mxu0 0.0
    %4162 = vmatpush1.msra.mxu0 %v4136
    %4163 = vmatprep.subr.mxu0 0.0
    %4164 = vmatpush1.msra.mxu0 %v4135
    %4165 = vmatprep.subr.mxu0 0.0
    %4166 = vmatpush1.msra.mxu0 %v4134
    %4167 = vmatprep.subr.mxu0 0.0
    %4168 = vmatpush1.msra.mxu0 %v4133
    %4169 = vmatprep.subr.mxu0 0.0
    %4170 = vmatpush2.msra.mxu0 0.0
    %4171 = vmatprep.subr.mxu0 0.0
    %4172 = vmatpush2.msra.mxu0 0.0
    %4173 = vmatprep.subr.mxu0 0.0
    %4174 = vmatpush2.msra.mxu0 0.0
    %4175 = vmatprep.subr.mxu0 0.0
    %4176 = vmatpush2.msra.mxu0 0.0
    %4177 = vmatprep.subr.mxu0 0.0
    %4178 = vmatpush2.msra.mxu0 0.0
    %4179 = vmatprep.subr.mxu0 0.0
    %4180 = vmatpush2.msra.mxu0 0.0
    %4181 = vmatprep.subr.mxu0 0.0
    %4182 = vmatpush2.msra.mxu0 0.0
    %4183 = vmatprep.subr.mxu0 0.0
    %4184 = vmatpush2.msra.mxu0 0.0
    %4185 = vmatprep.subr.mxu0 0.0
    %4186 = vmatpush2.msra.mxu0 0.0
    %4187 = vmatprep.subr.mxu0 0.0
    %4188 = vmatpush2.msra.mxu0 0.0
    %4189 = vmatprep.subr.mxu0 0.0
    %4190 = vmatpush2.msra.mxu0 0.0
    %4191 = vmatprep.subr.mxu0 0.0
    %4192 = vmatpush2.msra.mxu0 0.0
    %4193 = vmatprep.subr.mxu0 0.0
    %4194 = vmatpush2.msra.mxu0 0.0
    %4195 = vmatprep.subr.mxu0 0.0
    %4196 = vmatpush2.msra.mxu0 0.0
    %4197 = vmatprep.subr.mxu0 0.0
    %4198 = vmatpush2.msra.mxu0 0.0
    %4199 = vmatprep.subr.mxu0 0.0
    %4200 = vmatpush2.msra.mxu0 0.0
    %4201 = vmatprep.mubr.f32.mxu0 0.0
    %4202 = vmatmul.mubr.f32.gmra.mxu0 %v433
    %v4203 = vpop.f32.mrf.mxu0
    %v4204 = vadd.f32 0.0, %v4203
    %v4205 = vpop.f32.mrf.mxu0
    %4206 = vdwg.mxu0
    %v4207 = vadd.f32 %v4130, %v4204
    %v4208 = vld [vmem:[#allocation17] sm:$0x1]
    %v4210 = vlaneseq
    %v4211 = vshrl.u32 %v4210, 7
    %v4212 = vsub.s32 0, %v4211
    %v4213 = vrot.slane %v4208, %v4212
    %v4215 = vadd.f32 %v4207, %v4213
    %v4216 = vtanh.pop %v4215
    %v4217 = vld [vmem:[#allocation19] sm:$0xff]
    %v4218 = vld [vmem:[#allocation19 + $0x8] sm:$0xff]
    %v4219 = vld [vmem:[#allocation19 + $0x10] sm:$0xff]
    %v4220 = vld [vmem:[#allocation19 + $0x18] sm:$0xff]
    %v4221 = vld [vmem:[#allocation20] sm:$0x1]
    %v4223 = vlaneseq
    %v4224 = vshrl.u32 %v4223, 7
    %v4225 = vsub.s32 0, %v4224
    %v4226 = vrot.slane %v4221, %v4225
    %v4229 = vsel %vm323, %v4216, 0
    %4231 = vmatprep.subr.mxu0 0.0
    %4232 = vmatpush1.msra.mxu0 0.0
    %4233 = vmatprep.subr.mxu0 0.0
    %4234 = vmatpush1.msra.mxu0 0.0
    %4235 = vmatprep.subr.mxu0 0.0
    %4236 = vmatpush1.msra.mxu0 0.0
    %4237 = vmatprep.subr.mxu0 0.0
    %4238 = vmatpush1.msra.mxu0 0.0
    %4239 = vmatprep.subr.mxu0 0.0
    %4240 = vmatpush1.msra.mxu0 0.0
    %4241 = vmatprep.subr.mxu0 0.0
    %4242 = vmatpush1.msra.mxu0 0.0
    %4243 = vmatprep.subr.mxu0 0.0
    %4244 = vmatpush1.msra.mxu0 0.0
    %4245 = vmatprep.subr.mxu0 0.0
    %4246 = vmatpush1.msra.mxu0 0.0
    %4247 = vmatprep.subr.mxu0 0.0
    %4248 = vmatpush1.msra.mxu0 0.0
    %4249 = vmatprep.subr.mxu0 0.0
    %4250 = vmatpush1.msra.mxu0 0.0
    %4251 = vmatprep.subr.mxu0 0.0
    %4252 = vmatpush1.msra.mxu0 0.0
    %4253 = vmatprep.subr.mxu0 0.0
    %4254 = vmatpush1.msra.mxu0 0.0
    %4255 = vmatprep.subr.mxu0 0.0
    %4256 = vmatpush1.msra.mxu0 %v4220
    %4257 = vmatprep.subr.mxu0 0.0
    %4258 = vmatpush1.msra.mxu0 %v4219
    %4259 = vmatprep.subr.mxu0 0.0
    %4260 = vmatpush1.msra.mxu0 %v4218
    %4261 = vmatprep.subr.mxu0 0.0
    %4262 = vmatpush1.msra.mxu0 %v4217
    %4263 = vmatprep.subr.mxu0 0.0
    %4264 = vmatpush2.msra.mxu0 0.0
    %4265 = vmatprep.subr.mxu0 0.0
    %4266 = vmatpush2.msra.mxu0 0.0
    %4267 = vmatprep.subr.mxu0 0.0
    %4268 = vmatpush2.msra.mxu0 0.0
    %4269 = vmatprep.subr.mxu0 0.0
    %4270 = vmatpush2.msra.mxu0 0.0
    %4271 = vmatprep.subr.mxu0 0.0
    %4272 = vmatpush2.msra.mxu0 0.0
    %4273 = vmatprep.subr.mxu0 0.0
    %4274 = vmatpush2.msra.mxu0 0.0
    %4275 = vmatprep.subr.mxu0 0.0
    %4276 = vmatpush2.msra.mxu0 0.0
    %4277 = vmatprep.subr.mxu0 0.0
    %4278 = vmatpush2.msra.mxu0 0.0
    %4279 = vmatprep.subr.mxu0 0.0
    %4280 = vmatpush2.msra.mxu0 0.0
    %4281 = vmatprep.subr.mxu0 0.0
    %4282 = vmatpush2.msra.mxu0 0.0
    %4283 = vmatprep.subr.mxu0 0.0
    %4284 = vmatpush2.msra.mxu0 0.0
    %4285 = vmatprep.subr.mxu0 0.0
    %4286 = vmatpush2.msra.mxu0 0.0
    %4287 = vmatprep.subr.mxu0 0.0
    %4288 = vmatpush2.msra.mxu0 0.0
    %4289 = vmatprep.subr.mxu0 0.0
    %4290 = vmatpush2.msra.mxu0 0.0
    %4291 = vmatprep.subr.mxu0 0.0
    %4292 = vmatpush2.msra.mxu0 0.0
    %4293 = vmatprep.subr.mxu0 0.0
    %4294 = vmatpush2.msra.mxu0 0.0
    %4295 = vmatprep.mubr.f32.mxu0 0.0
    %4296 = vmatmul.mubr.f32.gmra.mxu0 %v4229
    %v4297 = vpop.f32.mrf.mxu0
    %v4298 = vadd.f32 %v4226, %v4297
    %v4299 = vpop.f32.mrf.mxu0
    %4300 = vdwg.mxu0
    %4301 = vst.msk [vmem:[%s71] sm:$0x3] %vm3886, %v4298
    %4303 = vrot.lane.b32.xlu0 %v4298, 120
    %v4304 = vpop.permute.xlu0 %4303
    %4306 = vst.msk [vmem:[%s71 + $0x2] sm:$0x3] %vm3886, %v4304
    %4307 = vrot.lane.b32.xlu0 %v4298, 112
    %v4308 = vpop.permute.xlu0 %4307
    %4310 = vst.msk [vmem:[%s71 + $0x4] sm:$0x3] %vm3886, %v4308
    %4311 = vrot.lane.b32.xlu0 %v4298, 104
    %v4312 = vpop.permute.xlu0 %4311
    %4314 = vst.msk [vmem:[%s71 + $0x6] sm:$0x3] %vm3886, %v4312
    %4315 = vrot.lane.b32.xlu0 %v4298, 96
    %v4316 = vpop.permute.xlu0 %4315
    %4318 = vst.msk [vmem:[%s71 + $0x8] sm:$0x3] %vm3886, %v4316
    %4319 = vrot.lane.b32.xlu0 %v4298, 88
    %v4320 = vpop.permute.xlu0 %4319
    %4322 = vst.msk [vmem:[%s71 + $0xa] sm:$0x3] %vm3886, %v4320
    // Predicated region
    $region162: #{forward.1} parent=1 // pred_check
      _
    $region163: #{forward.1} parent=1 // pred_check_branch
      %4324 = sbr.rel (0) target = $region165
    $region164: #{forward.1} parent=1 // pred_region
      %s4326 = ssub.s32 256, 256
      %4327 = vsyncadd [#allocation13], %s4326
      %s4328 = sshll.u32 [#allocation22], 4
      %s4329 = int_to_ptr.vmem [resolvable:$true] %s4328
      %4334 = dma.vmem_to_hbm [thread:$0]  %s4329, 256, %s69, [#allocation13], 128, 128, 8
    $region165: #{forward.1} parent=1 // pred_fallthru
      _
    // Predicated region
    $region166: #{forward.1} parent=1 // pred_check
      _
    $region167: #{forward.1} parent=1 // pred_check_branch
      %4336 = sbr.rel (0) target = $region169
    $region168: #{forward.1} parent=1 // pred_region
      _
    $region169: #{forward.1} parent=1 // pred_fallthru
      _
    // Predicated region
    $region170: #{forward.1} parent=1 // pred_check
      _
    $region171: #{forward.1} parent=1 // pred_check_branch
      %4338 = sbr.rel (0) target = $region173
    $region172: #{forward.1} parent=1 // pred_region
      %4339 = dma.done [#allocation13], 256
    $region173: #{forward.1} parent=1 // pred_fallthru
      _
    // Predicated region
    $region174: #{forward.1} parent=1 // pred_check
      _
    $region175: #{forward.1} parent=1 // pred_check_branch
      %4341 = sbr.rel (0) target = $region177
    $region176: #{forward.1} parent=1 // pred_region
      _
    $region177: #{forward.1} parent=1 // pred_fallthru
      _
    %4342 = vsyncpa [#allocation12], 1
    %4343 = vsyncpa [#allocation15], 1
    %4344 = vsyncpa [#allocation18], 1
    %4345 = vsyncpa [#allocation21], 1
    %4346 = vsyncpa [#allocation13], 1

</llo_original>
